<compile_context>
chip_gen: v6e
topology: v6e:2x2x1
jax: 0.10.0
libtpu: 0.0.40
codegen_flags: <defaults>
</compile_context>

<pallas_src>
import functools

import jax
import jax.numpy as jnp
from jax import lax
from jax.experimental import pallas as pl
from jax.experimental.pallas import tpu as pltpu

# ---- module constants (from game/train_simple.py) ----
CHARSET_LEN = 9 + 26 + 26              # '1'-'9' + uppercase + lowercase
NUM_CLASSES = CHARSET_LEN              # 61
SEQ_LEN = 5
IMG_H, IMG_W = 16, 16                  # small synthetic image size
HEAD_COLS = SEQ_LEN * NUM_CLASSES      # 305
HEAD_COLS_PAD = 3 * 128                # 384, lane-dense logits store width

BATCH_TILE = 8                         # images per grid step

# Flat padded row counts (pad: 1 top / 2 bottom / 1 left / 1 right -> wrap trick):
_ROWS1 = (16 + 3) * (16 + 2)           # 342  (layer-1 input, from HBM)
_ROWS2 = (8 + 3) * (8 + 2)             # 110  (layer-2 input, VMEM scratch)
_ROWS3 = (4 + 3) * (4 + 2)             # 42   (layer-3 input, VMEM scratch)


# ----------------------------------------------------------------------------
# Fused forward kernel: conv x3 (+ReLU+pool) + fc + heads for one batch tile
# ----------------------------------------------------------------------------
def _fused_forward_kernel(x_ref, w1_ref, b1_ref, w2_ref, b2_ref, w3_ref, b3_ref,
                          fcw_ref, fcb_ref, hw_ref, hb_ref,
                          o_ref,
                          pad2_ref, pad3_ref, feat_ref,
                          tmp1_ref, tmp2_ref, tmp3_ref,
                          *, bt):
    # Zero the padded-activation scratches once per step: borders must be zero,
    # interiors are fully overwritten below.  (Cheap: < 1 MB total.)
    pad2_ref[...] = jnp.zeros_like(pad2_ref)
    pad3_ref[...] = jnp.zeros_like(pad3_ref)

    def conv_chunk(src_ref, img, row_off, n_rows, wp2, w_ref, b_ref):
        """3x3 conv + bias + ReLU over `n_rows` flat zero-padded rows of one image.

        In-kernel im2col via the pad trick: each of the 9 taps is one CONTIGUOUS
        row-range load feeding an accumulating MXU dot (each weight push is
        amortized over n_rows >= 24 rows; batching images per grid step amortizes
        it further across the tile)."""
        cout = w_ref.shape[-1]
        acc = jnp.zeros((n_rows, cout), jnp.float32)
        for kh in range(3):
            for kw in range(3):
                tap = src_ref[img, pl.ds(row_off + kh * wp2 + kw, n_rows), :]
                acc = acc + jnp.dot(tap.astype(jnp.bfloat16), w_ref[kh * 3 + kw],
                                    preferred_element_type=jnp.float32)
        return jnp.maximum(acc + b_ref[...], 0.0)

    def pool_row(y, r, wp2, wh, tmp_ref):
        """2x2 max-pool of conv rows (2r, 2r+1) of y -> (wh, C) f32.

        H-pool = elementwise max of two contiguous row slabs; W-pool = max of two
        sublane-strided reads from a tiny VMEM temporary (drops the junk columns
        of the wrap trick for free)."""
        top = y[(2 * r) * wp2:(2 * r + 1) * wp2, :]
        bot = y[(2 * r + 1) * wp2:(2 * r + 2) * wp2, :]
        tmp_ref[...] = jnp.maximum(top, bot)                        # pool along H
        return jnp.maximum(tmp_ref[pl.ds(0, wh, stride=2), :],      # pool along W
                           tmp_ref[pl.ds(1, wh, stride=2), :])

    def per_image(img, carry):
        # layer 1: conv(3->32)+ReLU+pool, 16x16 -> 8x8.  Two 8-conv-row chunks keep
        # the f32 accumulator at (144, 32) = 18 vregs (vreg-pressure feedback).
        for c in range(2):
            y = conv_chunk(x_ref, img, c * 8 * 18, 8 * 18, 18, w1_ref, b1_ref)
            for r in range(4):
                hp = c * 4 + r
                p = pool_row(y, r, 18, 8, tmp1_ref)                          # (8, 32)
                pad2_ref[img, pl.ds((hp + 1) * 10 + 1, 8), :] = p            # interior write
        # layer 2: conv(32->64)+ReLU+pool, 8x8 -> 4x4
        y = conv_chunk(pad2_ref, img, 0, 8 * 10, 10, w2_ref, b2_ref)
        for hp in range(4):
            p = pool_row(y, hp, 10, 4, tmp2_ref)                             # (4, 64)
            pad3_ref[img, pl.ds((hp + 1) * 6 + 1, 4), :] = p
        # layer 3: conv(64->128)+ReLU+pool, 4x4 -> 2x2; store NHWC-flattened features
        y = conv_chunk(pad3_ref, img, 0, 4 * 6, 6, w3_ref, b3_ref)
        for hp in range(2):
            p = pool_row(y, hp, 6, 2, tmp3_ref)                              # (2, 128)
            feat_ref[pl.ds(img * 4 + hp * 2, 2), :] = p                      # rows img*4 + h*2 + w
        return carry

    lax.fori_loop(0, bt, per_image, 0)

    # fc(512->256) + ReLU (+Dropout eval = identity) + 5 stacked heads, batched over
    # the whole tile.  The 512-long feature is consumed as 4 x 128 lane-slabs.
    acc = jnp.zeros((bt, 256), jnp.float32)
    for r in range(4):
        feat_r = feat_ref[pl.ds(r, bt, stride=4), :].astype(jnp.bfloat16)    # (bt, 128)
        acc = acc + jnp.dot(feat_r, fcw_ref[r], preferred_element_type=jnp.float32)
    hidden = jnp.maximum(acc + fcb_ref[...], 0.0)
    # TODO(synk): nn.Dropout(0.5) is identity in eval mode; training-mode masking not implemented.
    logits = jnp.dot(hidden.astype(hw_ref.dtype), hw_ref[...],
                     preferred_element_type=jnp.float32) + hb_ref[...]
    o_ref[...] = logits.astype(o_ref.dtype)


def _fused_forward(xf, w1, b1, w2, b2, w3, b3, fcw, fcb, hw, hb, *, bt):
    n_pad = xf.shape[0]
    kernel = functools.partial(_fused_forward_kernel, bt=bt)
    return pl.pallas_call(
        kernel,
        out_shape=jax.ShapeDtypeStruct((n_pad, HEAD_COLS_PAD), jnp.float32),
        grid=(n_pad // bt,),
        in_specs=[
            pl.BlockSpec((bt, _ROWS1, 3), lambda n: (n, 0, 0)),        # padded input tile
            pl.BlockSpec((9, 3, 32), lambda n: (0, 0, 0)),             # weights: VMEM-resident
            pl.BlockSpec((1, 32), lambda n: (0, 0)),
            pl.BlockSpec((9, 32, 64), lambda n: (0, 0, 0)),
            pl.BlockSpec((1, 64), lambda n: (0, 0)),
            pl.BlockSpec((9, 64, 128), lambda n: (0, 0, 0)),
            pl.BlockSpec((1, 128), lambda n: (0, 0)),
            pl.BlockSpec((4, 128, 256), lambda n: (0, 0, 0)),
            pl.BlockSpec((1, 256), lambda n: (0, 0)),
            pl.BlockSpec((256, HEAD_COLS_PAD), lambda n: (0, 0)),
            pl.BlockSpec((1, HEAD_COLS_PAD), lambda n: (0, 0)),
        ],
        out_specs=pl.BlockSpec((bt, HEAD_COLS_PAD), lambda n: (n, 0)),
        scratch_shapes=[
            pltpu.VMEM((bt, _ROWS2, 32), jnp.float32),   # zero-padded layer-2 input
            pltpu.VMEM((bt, _ROWS3, 64), jnp.float32),   # zero-padded layer-3 input
            pltpu.VMEM((bt * 4, 128), jnp.float32),      # NHWC-flattened pooled conv3 features
            pltpu.VMEM((18, 32), jnp.float32),           # per-pooled-row H-pool temporaries
            pltpu.VMEM((10, 64), jnp.float32),
            pltpu.VMEM((6, 128), jnp.float32),
        ],
        compiler_params=pltpu.CompilerParams(
            dimension_semantics=("parallel",),
            vmem_limit_bytes=32 * 1024 * 1024),
    )(xf, w1, b1, w2, b2, w3, b3, fcw, fcb, hw, hb)


# ----------------------------------------------------------------------------
# SimpleCNN parameters + forward
# ----------------------------------------------------------------------------
def init_params(key):
    def w(key, shape, fan_in, dtype=jnp.bfloat16):
        return (jax.random.normal(key, shape, jnp.float32)
                / jnp.sqrt(fan_in)).astype(dtype)

    keys = jax.random.split(key, 10)
    params = {
        # Conv weights per-tap (9, Cin, Cout); from a PyTorch checkpoint (Cout,Cin,3,3):
        #   w_pt.permute(2, 3, 1, 0).reshape(9, Cin, Cout)
        "convs": [
            (w(keys[0], (9, 3, 32), 3 * 9),    w(keys[1], (32,), 3 * 9, jnp.float32)),
            (w(keys[2], (9, 32, 64), 32 * 9),  w(keys[3], (64,), 32 * 9, jnp.float32)),
            (w(keys[4], (9, 64, 128), 64 * 9), w(keys[5], (128,), 64 * 9, jnp.float32)),
        ],
        # fc weight as (4, 128, 256): slab r = h*2+w (NHWC flatten), channel c, out.
        # From a PyTorch checkpoint fc.weight (256, 512) (rows flatten NCHW (128,2,2)):
        #   w_pt.T.reshape(128, 2, 2, 256).transpose(1, 2, 0, 3).reshape(4, 128, 256)
        "fc_w": w(keys[6], (4, 128, 256), 512),
        "fc_b": w(keys[7], (256,), 512, jnp.float32),
        # 5 heads (256 -> 61) stacked along columns, zero-padded 305 -> 384 (= 3*128)
        # for a lane-dense logits store.
        "heads_w": jnp.pad(w(keys[8], (256, HEAD_COLS), 256),
                           ((0, 0), (0, HEAD_COLS_PAD - HEAD_COLS))),
        "heads_b": jnp.pad(w(keys[9], (HEAD_COLS,), 256, jnp.float32),
                           (0, HEAD_COLS_PAD - HEAD_COLS)),
    }
    return params


@jax.jit
def simple_cnn_forward(x_nchw, params):
    n = x_nchw.shape[0]
    x = jnp.transpose(x_nchw, (0, 2, 3, 1)).astype(jnp.bfloat16)      # NCHW -> NHWC, bf16
    # wrap-trick pad (1 top / 2 bottom / 1 left / 1 right) -> every tap is contiguous
    xp = jnp.pad(x, ((0, 0), (1, 2), (1, 1), (0, 0)))                 # (N, 19, 18, 3)
    xf = xp.reshape(n, _ROWS1, 3)                                     # free reshape
    bt = min(BATCH_TILE, n)
    n_pad = ((n + bt - 1) // bt) * bt
    if n_pad != n:
        xf = jnp.pad(xf, ((0, n_pad - n), (0, 0), (0, 0)))
    (w1, b1), (w2, b2), (w3, b3) = params["convs"]
    logits = _fused_forward(
        xf, w1, b1.reshape(1, -1), w2, b2.reshape(1, -1), w3, b3.reshape(1, -1),
        params["fc_w"], params["fc_b"].reshape(1, -1),
        params["heads_w"], params["heads_b"].reshape(1, -1), bt=bt)
    logits = logits[:n]
    return [logits[:, i * NUM_CLASSES:(i + 1) * NUM_CLASSES] for i in range(SEQ_LEN)]


if __name__ == "__main__":
    key = jax.random.PRNGKey(0)
    k_x, k_p = jax.random.split(key)
    x = jax.random.normal(k_x, (2, 3, IMG_H, IMG_W), jnp.float32)     # NCHW like PyTorch
    params = init_params(k_p)

    outs = simple_cnn_forward(x, params)
    for o in outs:
        jax.block_until_ready(o)

    assert len(outs) == SEQ_LEN
    assert all(o.shape == (2, NUM_CLASSES) for o in outs)
    print("KERNEL_OK")
</pallas_src>

<mosaic_0001>
module attributes {stable_mosaic.version = 11 : i64} {
  func.func @_fused_forward_kernel(%arg0: i32, %arg1: memref<2x342x3xbf16, #tpu.memory_space<vmem>>, %arg2: memref<9x3x32xbf16, #tpu.memory_space<vmem>>, %arg3: memref<1x32xf32, #tpu.memory_space<vmem>>, %arg4: memref<9x32x64xbf16, #tpu.memory_space<vmem>>, %arg5: memref<1x64xf32, #tpu.memory_space<vmem>>, %arg6: memref<9x64x128xbf16, #tpu.memory_space<vmem>>, %arg7: memref<1x128xf32, #tpu.memory_space<vmem>>, %arg8: memref<4x128x256xbf16, #tpu.memory_space<vmem>>, %arg9: memref<1x256xf32, #tpu.memory_space<vmem>>, %arg10: memref<256x384xbf16, #tpu.memory_space<vmem>>, %arg11: memref<1x384xf32, #tpu.memory_space<vmem>>, %arg12: memref<2x384xf32, #tpu.memory_space<vmem>>, %arg13: memref<2x110x32xf32, #tpu.memory_space<vmem>>, %arg14: memref<2x42x64xf32, #tpu.memory_space<vmem>>, %arg15: memref<8x128xf32, #tpu.memory_space<vmem>>, %arg16: memref<18x32xf32, #tpu.memory_space<vmem>>, %arg17: memref<10x64xf32, #tpu.memory_space<vmem>>, %arg18: memref<6x128xf32, #tpu.memory_space<vmem>>) attributes {dimension_semantics = [#tpu.dimension_semantics<parallel>], iteration_bounds = array<i64: 1>, scalar_prefetch = 0 : i64, scratch_operands = 6 : i64, tpu.core_type = #tpu.core_type<tc>, window_params = [{transform_indices = @transform_0, window_bounds = array<i64: 2, 342, 3>}, {pipeline_mode = #tpu.pipeline_mode<synchronous>, transform_indices = @transform_1, window_bounds = array<i64: 9, 3, 32>}, {pipeline_mode = #tpu.pipeline_mode<synchronous>, transform_indices = @transform_2, window_bounds = array<i64: 1, 32>}, {pipeline_mode = #tpu.pipeline_mode<synchronous>, transform_indices = @transform_3, window_bounds = array<i64: 9, 32, 64>}, {pipeline_mode = #tpu.pipeline_mode<synchronous>, transform_indices = @transform_4, window_bounds = array<i64: 1, 64>}, {pipeline_mode = #tpu.pipeline_mode<synchronous>, transform_indices = @transform_5, window_bounds = array<i64: 9, 64, 128>}, {pipeline_mode = #tpu.pipeline_mode<synchronous>, transform_indices = @transform_6, window_bounds = array<i64: 1, 128>}, {pipeline_mode = #tpu.pipeline_mode<synchronous>, transform_indices = @transform_7, window_bounds = array<i64: 4, 128, 256>}, {pipeline_mode = #tpu.pipeline_mode<synchronous>, transform_indices = @transform_8, window_bounds = array<i64: 1, 256>}, {pipeline_mode = #tpu.pipeline_mode<synchronous>, transform_indices = @transform_9, window_bounds = array<i64: 256, 384>}, {pipeline_mode = #tpu.pipeline_mode<synchronous>, transform_indices = @transform_10, window_bounds = array<i64: 1, 384>}, {transform_indices = @transform_11, window_bounds = array<i64: 2, 384>}]} {
    %cst = arith.constant 0.000000e+00 : f32
    %0 = vector.broadcast %cst : f32 to vector<2x110x32xf32>
    %c0 = arith.constant 0 : index
    %c0_0 = arith.constant 0 : index
    %c0_1 = arith.constant 0 : index
    %1 = vector.load %arg13[%c0, %c0_0, %c0_1] : memref<2x110x32xf32, #tpu.memory_space<vmem>>, vector<2x110x32xf32>
    tpu.vector_store %arg13[%c0, %c0_0, %c0_1], %0 {strides = array<i32>} : memref<2x110x32xf32, #tpu.memory_space<vmem>>, vector<2x110x32xf32>,
    %cst_2 = arith.constant 0.000000e+00 : f32
    %2 = vector.broadcast %cst_2 : f32 to vector<2x42x64xf32>
    %c0_3 = arith.constant 0 : index
    %c0_4 = arith.constant 0 : index
    %c0_5 = arith.constant 0 : index
    %3 = vector.load %arg14[%c0_3, %c0_4, %c0_5] : memref<2x42x64xf32, #tpu.memory_space<vmem>>, vector<2x42x64xf32>
    tpu.vector_store %arg14[%c0_3, %c0_4, %c0_5], %2 {strides = array<i32>} : memref<2x42x64xf32, #tpu.memory_space<vmem>>, vector<2x42x64xf32>,
    %c0_i32 = arith.constant 0 : i32
    %c2_i32 = arith.constant 2 : i32
    %4 = arith.addi %c0_i32, %c2_i32 : i32
    %c1_i32 = arith.constant 1 : i32
    scf.for %arg19 = %c0_i32 to %4 step %c1_i32  : i32 {
      %cst_39 = arith.constant 0.000000e+00 : f32
      %42 = vector.broadcast %cst_39 : f32 to vector<144x32xf32>
      %43 = arith.index_cast %arg19 : i32 to index
      %c0_40 = arith.constant 0 : index
      %c0_41 = arith.constant 0 : index
      %44 = vector.load %arg1[%43, %c0_40, %c0_41] : memref<2x342x3xbf16, #tpu.memory_space<vmem>>, vector<1x144x3xbf16>
      %45 = vector.shape_cast %44 : vector<1x144x3xbf16> to vector<144x3xbf16>
      %c0_42 = arith.constant 0 : index
      %c0_43 = arith.constant 0 : index
      %c0_44 = arith.constant 0 : index
      %46 = vector.load %arg2[%c0_42, %c0_43, %c0_44] : memref<9x3x32xbf16, #tpu.memory_space<vmem>>, vector<1x3x32xbf16>
      %47 = vector.shape_cast %46 : vector<1x3x32xbf16> to vector<3x32xbf16>
      %cst_45 = arith.constant dense<0.000000e+00> : vector<144x32xf32>
      %48 = tpu.matmul %45, %47, %cst_45 {dimension_numbers = #tpu.dot_dimension_numbers<[1], [0], [0], [1], [0, 0, 1, 1], [], []>} : vector<144x3xbf16>, vector<3x32xbf16>, vector<144x32xf32> -> vector<144x32xf32>
      %49 = arith.addf %42, %48 : vector<144x32xf32>
      %50 = arith.index_cast %arg19 : i32 to index
      %c1_46 = arith.constant 1 : index
      %c0_47 = arith.constant 0 : index
      %51 = vector.load %arg1[%50, %c1_46, %c0_47] : memref<2x342x3xbf16, #tpu.memory_space<vmem>>, vector<1x144x3xbf16>
      %52 = vector.shape_cast %51 : vector<1x144x3xbf16> to vector<144x3xbf16>
      %c1_48 = arith.constant 1 : index
      %c0_49 = arith.constant 0 : index
      %c0_50 = arith.constant 0 : index
      %53 = vector.load %arg2[%c1_48, %c0_49, %c0_50] : memref<9x3x32xbf16, #tpu.memory_space<vmem>>, vector<1x3x32xbf16>
      %54 = vector.shape_cast %53 : vector<1x3x32xbf16> to vector<3x32xbf16>
      %cst_51 = arith.constant dense<0.000000e+00> : vector<144x32xf32>
      %55 = tpu.matmul %52, %54, %cst_51 {dimension_numbers = #tpu.dot_dimension_numbers<[1], [0], [0], [1], [0, 0, 1, 1], [], []>} : vector<144x3xbf16>, vector<3x32xbf16>, vector<144x32xf32> -> vector<144x32xf32>
      %56 = arith.addf %49, %55 : vector<144x32xf32>
      %57 = arith.index_cast %arg19 : i32 to index
      %c2_52 = arith.constant 2 : index
      %c0_53 = arith.constant 0 : index
      %58 = vector.load %arg1[%57, %c2_52, %c0_53] : memref<2x342x3xbf16, #tpu.memory_space<vmem>>, vector<1x144x3xbf16>
      %59 = vector.shape_cast %58 : vector<1x144x3xbf16> to vector<144x3xbf16>
      %c2_54 = arith.constant 2 : index
      %c0_55 = arith.constant 0 : index
      %c0_56 = arith.constant 0 : index
      %60 = vector.load %arg2[%c2_54, %c0_55, %c0_56] : memref<9x3x32xbf16, #tpu.memory_space<vmem>>, vector<1x3x32xbf16>
      %61 = vector.shape_cast %60 : vector<1x3x32xbf16> to vector<3x32xbf16>
      %cst_57 = arith.constant dense<0.000000e+00> : vector<144x32xf32>
      %62 = tpu.matmul %59, %61, %cst_57 {dimension_numbers = #tpu.dot_dimension_numbers<[1], [0], [0], [1], [0, 0, 1, 1], [], []>} : vector<144x3xbf16>, vector<3x32xbf16>, vector<144x32xf32> -> vector<144x32xf32>
      %63 = arith.addf %56, %62 : vector<144x32xf32>
      %64 = arith.index_cast %arg19 : i32 to index
      %c18 = arith.constant 18 : index
      %c0_58 = arith.constant 0 : index
      %65 = vector.load %arg1[%64, %c18, %c0_58] : memref<2x342x3xbf16, #tpu.memory_space<vmem>>, vector<1x144x3xbf16>
      %66 = vector.shape_cast %65 : vector<1x144x3xbf16> to vector<144x3xbf16>
      %c3_59 = arith.constant 3 : index
      %c0_60 = arith.constant 0 : index
      %c0_61 = arith.constant 0 : index
      %67 = vector.load %arg2[%c3_59, %c0_60, %c0_61] : memref<9x3x32xbf16, #tpu.memory_space<vmem>>, vector<1x3x32xbf16>
      %68 = vector.shape_cast %67 : vector<1x3x32xbf16> to vector<3x32xbf16>
      %cst_62 = arith.constant dense<0.000000e+00> : vector<144x32xf32>
      %69 = tpu.matmul %66, %68, %cst_62 {dimension_numbers = #tpu.dot_dimension_numbers<[1], [0], [0], [1], [0, 0, 1, 1], [], []>} : vector<144x3xbf16>, vector<3x32xbf16>, vector<144x32xf32> -> vector<144x32xf32>
      %70 = arith.addf %63, %69 : vector<144x32xf32>
      %71 = arith.index_cast %arg19 : i32 to index
      %c19 = arith.constant 19 : index
      %c0_63 = arith.constant 0 : index
      %72 = vector.load %arg1[%71, %c19, %c0_63] : memref<2x342x3xbf16, #tpu.memory_space<vmem>>, vector<1x144x3xbf16>
      %73 = vector.shape_cast %72 : vector<1x144x3xbf16> to vector<144x3xbf16>
      %c4 = arith.constant 4 : index
      %c0_64 = arith.constant 0 : index
      %c0_65 = arith.constant 0 : index
      %74 = vector.load %arg2[%c4, %c0_64, %c0_65] : memref<9x3x32xbf16, #tpu.memory_space<vmem>>, vector<1x3x32xbf16>
      %75 = vector.shape_cast %74 : vector<1x3x32xbf16> to vector<3x32xbf16>
      %cst_66 = arith.constant dense<0.000000e+00> : vector<144x32xf32>
      %76 = tpu.matmul %73, %75, %cst_66 {dimension_numbers = #tpu.dot_dimension_numbers<[1], [0], [0], [1], [0, 0, 1, 1], [], []>} : vector<144x3xbf16>, vector<3x32xbf16>, vector<144x32xf32> -> vector<144x32xf32>
      %77 = arith.addf %70, %76 : vector<144x32xf32>
      %78 = arith.index_cast %arg19 : i32 to index
      %c20 = arith.constant 20 : index
      %c0_67 = arith.constant 0 : index
      %79 = vector.load %arg1[%78, %c20, %c0_67] : memref<2x342x3xbf16, #tpu.memory_space<vmem>>, vector<1x144x3xbf16>
      %80 = vector.shape_cast %79 : vector<1x144x3xbf16> to vector<144x3xbf16>
      %c5 = arith.constant 5 : index
      %c0_68 = arith.constant 0 : index
      %c0_69 = arith.constant 0 : index
      %81 = vector.load %arg2[%c5, %c0_68, %c0_69] : memref<9x3x32xbf16, #tpu.memory_space<vmem>>, vector<1x3x32xbf16>
      %82 = vector.shape_cast %81 : vector<1x3x32xbf16> to vector<3x32xbf16>
      %cst_70 = arith.constant dense<0.000000e+00> : vector<144x32xf32>
      %83 = tpu.matmul %80, %82, %cst_70 {dimension_numbers = #tpu.dot_dimension_numbers<[1], [0], [0], [1], [0, 0, 1, 1], [], []>} : vector<144x3xbf16>, vector<3x32xbf16>, vector<144x32xf32> -> vector<144x32xf32>
      %84 = arith.addf %77, %83 : vector<144x32xf32>
      %85 = arith.index_cast %arg19 : i32 to index
      %c36 = arith.constant 36 : index
      %c0_71 = arith.constant 0 : index
      %86 = vector.load %arg1[%85, %c36, %c0_71] : memref<2x342x3xbf16, #tpu.memory_space<vmem>>, vector<1x144x3xbf16>
      %87 = vector.shape_cast %86 : vector<1x144x3xbf16> to vector<144x3xbf16>
      %c6 = arith.constant 6 : index
      %c0_72 = arith.constant 0 : index
      %c0_73 = arith.constant 0 : index
      %88 = vector.load %arg2[%c6, %c0_72, %c0_73] : memref<9x3x32xbf16, #tpu.memory_space<vmem>>, vector<1x3x32xbf16>
      %89 = vector.shape_cast %88 : vector<1x3x32xbf16> to vector<3x32xbf16>
      %cst_74 = arith.constant dense<0.000000e+00> : vector<144x32xf32>
      %90 = tpu.matmul %87, %89, %cst_74 {dimension_numbers = #tpu.dot_dimension_numbers<[1], [0], [0], [1], [0, 0, 1, 1], [], []>} : vector<144x3xbf16>, vector<3x32xbf16>, vector<144x32xf32> -> vector<144x32xf32>
      %91 = arith.addf %84, %90 : vector<144x32xf32>
      %92 = arith.index_cast %arg19 : i32 to index
      %c37 = arith.constant 37 : index
      %c0_75 = arith.constant 0 : index
      %93 = vector.load %arg1[%92, %c37, %c0_75] : memref<2x342x3xbf16, #tpu.memory_space<vmem>>, vector<1x144x3xbf16>
      %94 = vector.shape_cast %93 : vector<1x144x3xbf16> to vector<144x3xbf16>
      %c7 = arith.constant 7 : index
      %c0_76 = arith.constant 0 : index
      %c0_77 = arith.constant 0 : index
      %95 = vector.load %arg2[%c7, %c0_76, %c0_77] : memref<9x3x32xbf16, #tpu.memory_space<vmem>>, vector<1x3x32xbf16>
      %96 = vector.shape_cast %95 : vector<1x3x32xbf16> to vector<3x32xbf16>
      %cst_78 = arith.constant dense<0.000000e+00> : vector<144x32xf32>
      %97 = tpu.matmul %94, %96, %cst_78 {dimension_numbers = #tpu.dot_dimension_numbers<[1], [0], [0], [1], [0, 0, 1, 1], [], []>} : vector<144x3xbf16>, vector<3x32xbf16>, vector<144x32xf32> -> vector<144x32xf32>
      %98 = arith.addf %91, %97 : vector<144x32xf32>
      %99 = arith.index_cast %arg19 : i32 to index
      %c38 = arith.constant 38 : index
      %c0_79 = arith.constant 0 : index
      %100 = vector.load %arg1[%99, %c38, %c0_79] : memref<2x342x3xbf16, #tpu.memory_space<vmem>>, vector<1x144x3xbf16>
      %101 = vector.shape_cast %100 : vector<1x144x3xbf16> to vector<144x3xbf16>
      %c8 = arith.constant 8 : index
      %c0_80 = arith.constant 0 : index
      %c0_81 = arith.constant 0 : index
      %102 = vector.load %arg2[%c8, %c0_80, %c0_81] : memref<9x3x32xbf16, #tpu.memory_space<vmem>>, vector<1x3x32xbf16>
      %103 = vector.shape_cast %102 : vector<1x3x32xbf16> to vector<3x32xbf16>
      %cst_82 = arith.constant dense<0.000000e+00> : vector<144x32xf32>
      %104 = tpu.matmul %101, %103, %cst_82 {dimension_numbers = #tpu.dot_dimension_numbers<[1], [0], [0], [1], [0, 0, 1, 1], [], []>} : vector<144x3xbf16>, vector<3x32xbf16>, vector<144x32xf32> -> vector<144x32xf32>
      %105 = arith.addf %98, %104 : vector<144x32xf32>
      %c0_83 = arith.constant 0 : index
      %c0_84 = arith.constant 0 : index
      %106 = vector.load %arg3[%c0_83, %c0_84] : memref<1x32xf32, #tpu.memory_space<vmem>>, vector<1x32xf32>
      %107 = vector.broadcast %106 : vector<1x32xf32> to vector<144x32xf32>
      %108 = arith.addf %105, %107 : vector<144x32xf32>
      %cst_85 = arith.constant 0.000000e+00 : f32
      %109 = vector.broadcast %cst_85 : f32 to vector<144x32xf32>
      %110 = arith.maximumf %108, %109 : vector<144x32xf32>
      %111 = vector.extract_strided_slice %110 {offsets = [0, 0], sizes = [18, 32], strides = [1, 1]} : vector<144x32xf32> to vector<18x32xf32>
      %112 = vector.extract_strided_slice %110 {offsets = [18, 0], sizes = [18, 32], strides = [1, 1]} : vector<144x32xf32> to vector<18x32xf32>
      %113 = arith.maximumf %111, %112 : vector<18x32xf32>
      %c0_86 = arith.constant 0 : index
      %c0_87 = arith.constant 0 : index
      %114 = vector.load %arg16[%c0_86, %c0_87] : memref<18x32xf32, #tpu.memory_space<vmem>>, vector<18x32xf32>
      tpu.vector_store %arg16[%c0_86, %c0_87], %113 {strides = array<i32>} : memref<18x32xf32, #tpu.memory_space<vmem>>, vector<18x32xf32>,
      %c0_88 = arith.constant 0 : index
      %c0_89 = arith.constant 0 : index
      %115 = tpu.strided_load %arg16[%c0_88, %c0_89] {strides = array<i32: 2, 1>} : memref<18x32xf32, #tpu.memory_space<vmem>>, vector<8x32xf32>
      %c1_90 = arith.constant 1 : index
      %c0_91 = arith.constant 0 : index
      %116 = tpu.strided_load %arg16[%c1_90, %c0_91] {strides = array<i32: 2, 1>} : memref<18x32xf32, #tpu.memory_space<vmem>>, vector<8x32xf32>
      %117 = arith.maximumf %115, %116 : vector<8x32xf32>
      %118 = arith.index_cast %arg19 : i32 to index
      %c11 = arith.constant 11 : index
      %c0_92 = arith.constant 0 : index
      %119 = vector.load %arg13[%118, %c11, %c0_92] : memref<2x110x32xf32, #tpu.memory_space<vmem>>, vector<1x8x32xf32>
      %120 = vector.shape_cast %119 : vector<1x8x32xf32> to vector<8x32xf32>
      %121 = vector.shape_cast %117 : vector<8x32xf32> to vector<1x8x32xf32>
      tpu.vector_store %arg13[%118, %c11, %c0_92], %121 {strides = array<i32>} : memref<2x110x32xf32, #tpu.memory_space<vmem>>, vector<1x8x32xf32>,
      %122 = vector.extract_strided_slice %110 {offsets = [36, 0], sizes = [18, 32], strides = [1, 1]} : vector<144x32xf32> to vector<18x32xf32>
      %123 = vector.extract_strided_slice %110 {offsets = [54, 0], sizes = [18, 32], strides = [1, 1]} : vector<144x32xf32> to vector<18x32xf32>
      %124 = arith.maximumf %122, %123 : vector<18x32xf32>
      %c0_93 = arith.constant 0 : index
      %c0_94 = arith.constant 0 : index
      %125 = vector.load %arg16[%c0_93, %c0_94] : memref<18x32xf32, #tpu.memory_space<vmem>>, vector<18x32xf32>
      tpu.vector_store %arg16[%c0_93, %c0_94], %124 {strides = array<i32>} : memref<18x32xf32, #tpu.memory_space<vmem>>, vector<18x32xf32>,
      %c0_95 = arith.constant 0 : index
      %c0_96 = arith.constant 0 : index
      %126 = tpu.strided_load %arg16[%c0_95, %c0_96] {strides = array<i32: 2, 1>} : memref<18x32xf32, #tpu.memory_space<vmem>>, vector<8x32xf32>
      %c1_97 = arith.constant 1 : index
      %c0_98 = arith.constant 0 : index
      %127 = tpu.strided_load %arg16[%c1_97, %c0_98] {strides = array<i32: 2, 1>} : memref<18x32xf32, #tpu.memory_space<vmem>>, vector<8x32xf32>
      %128 = arith.maximumf %126, %127 : vector<8x32xf32>
      %129 = arith.index_cast %arg19 : i32 to index
      %c21 = arith.constant 21 : index
      %c0_99 = arith.constant 0 : index
      %130 = vector.load %arg13[%129, %c21, %c0_99] : memref<2x110x32xf32, #tpu.memory_space<vmem>>, vector<1x8x32xf32>
      %131 = vector.shape_cast %130 : vector<1x8x32xf32> to vector<8x32xf32>
      %132 = vector.shape_cast %128 : vector<8x32xf32> to vector<1x8x32xf32>
      tpu.vector_store %arg13[%129, %c21, %c0_99], %132 {strides = array<i32>} : memref<2x110x32xf32, #tpu.memory_space<vmem>>, vector<1x8x32xf32>,
      %133 = vector.extract_strided_slice %110 {offsets = [72, 0], sizes = [18, 32], strides = [1, 1]} : vector<144x32xf32> to vector<18x32xf32>
      %134 = vector.extract_strided_slice %110 {offsets = [90, 0], sizes = [18, 32], strides = [1, 1]} : vector<144x32xf32> to vector<18x32xf32>
      %135 = arith.maximumf %133, %134 : vector<18x32xf32>
      %c0_100 = arith.constant 0 : index
      %c0_101 = arith.constant 0 : index
      %136 = vector.load %arg16[%c0_100, %c0_101] : memref<18x32xf32, #tpu.memory_space<vmem>>, vector<18x32xf32>
      tpu.vector_store %arg16[%c0_100, %c0_101], %135 {strides = array<i32>} : memref<18x32xf32, #tpu.memory_space<vmem>>, vector<18x32xf32>,
      %c0_102 = arith.constant 0 : index
      %c0_103 = arith.constant 0 : index
      %137 = tpu.strided_load %arg16[%c0_102, %c0_103] {strides = array<i32: 2, 1>} : memref<18x32xf32, #tpu.memory_space<vmem>>, vector<8x32xf32>
      %c1_104 = arith.constant 1 : index
      %c0_105 = arith.constant 0 : index
      %138 = tpu.strided_load %arg16[%c1_104, %c0_105] {strides = array<i32: 2, 1>} : memref<18x32xf32, #tpu.memory_space<vmem>>, vector<8x32xf32>
      %139 = arith.maximumf %137, %138 : vector<8x32xf32>
      %140 = arith.index_cast %arg19 : i32 to index
      %c31 = arith.constant 31 : index
      %c0_106 = arith.constant 0 : index
      %141 = vector.load %arg13[%140, %c31, %c0_106] : memref<2x110x32xf32, #tpu.memory_space<vmem>>, vector<1x8x32xf32>
      %142 = vector.shape_cast %141 : vector<1x8x32xf32> to vector<8x32xf32>
      %143 = vector.shape_cast %139 : vector<8x32xf32> to vector<1x8x32xf32>
      tpu.vector_store %arg13[%140, %c31, %c0_106], %143 {strides = array<i32>} : memref<2x110x32xf32, #tpu.memory_space<vmem>>, vector<1x8x32xf32>,
      %144 = vector.extract_strided_slice %110 {offsets = [108, 0], sizes = [18, 32], strides = [1, 1]} : vector<144x32xf32> to vector<18x32xf32>
      %145 = vector.extract_strided_slice %110 {offsets = [126, 0], sizes = [18, 32], strides = [1, 1]} : vector<144x32xf32> to vector<18x32xf32>
      %146 = arith.maximumf %144, %145 : vector<18x32xf32>
      %c0_107 = arith.constant 0 : index
      %c0_108 = arith.constant 0 : index
      %147 = vector.load %arg16[%c0_107, %c0_108] : memref<18x32xf32, #tpu.memory_space<vmem>>, vector<18x32xf32>
      tpu.vector_store %arg16[%c0_107, %c0_108], %146 {strides = array<i32>} : memref<18x32xf32, #tpu.memory_space<vmem>>, vector<18x32xf32>,
      %c0_109 = arith.constant 0 : index
      %c0_110 = arith.constant 0 : index
      %148 = tpu.strided_load %arg16[%c0_109, %c0_110] {strides = array<i32: 2, 1>} : memref<18x32xf32, #tpu.memory_space<vmem>>, vector<8x32xf32>
      %c1_111 = arith.constant 1 : index
      %c0_112 = arith.constant 0 : index
      %149 = tpu.strided_load %arg16[%c1_111, %c0_112] {strides = array<i32: 2, 1>} : memref<18x32xf32, #tpu.memory_space<vmem>>, vector<8x32xf32>
      %150 = arith.maximumf %148, %149 : vector<8x32xf32>
      %151 = arith.index_cast %arg19 : i32 to index
      %c41 = arith.constant 41 : index
      %c0_113 = arith.constant 0 : index
      %152 = vector.load %arg13[%151, %c41, %c0_113] : memref<2x110x32xf32, #tpu.memory_space<vmem>>, vector<1x8x32xf32>
      %153 = vector.shape_cast %152 : vector<1x8x32xf32> to vector<8x32xf32>
      %154 = vector.shape_cast %150 : vector<8x32xf32> to vector<1x8x32xf32>
      tpu.vector_store %arg13[%151, %c41, %c0_113], %154 {strides = array<i32>} : memref<2x110x32xf32, #tpu.memory_space<vmem>>, vector<1x8x32xf32>,
      %cst_114 = arith.constant 0.000000e+00 : f32
      %155 = vector.broadcast %cst_114 : f32 to vector<144x32xf32>
      %156 = arith.index_cast %arg19 : i32 to index
      %c144 = arith.constant 144 : index
      %c0_115 = arith.constant 0 : index
      %157 = vector.load %arg1[%156, %c144, %c0_115] : memref<2x342x3xbf16, #tpu.memory_space<vmem>>, vector<1x144x3xbf16>
      %158 = vector.shape_cast %157 : vector<1x144x3xbf16> to vector<144x3xbf16>
      %c0_116 = arith.constant 0 : index
      %c0_117 = arith.constant 0 : index
      %c0_118 = arith.constant 0 : index
      %159 = vector.load %arg2[%c0_116, %c0_117, %c0_118] : memref<9x3x32xbf16, #tpu.memory_space<vmem>>, vector<1x3x32xbf16>
      %160 = vector.shape_cast %159 : vector<1x3x32xbf16> to vector<3x32xbf16>
      %cst_119 = arith.constant dense<0.000000e+00> : vector<144x32xf32>
      %161 = tpu.matmul %158, %160, %cst_119 {dimension_numbers = #tpu.dot_dimension_numbers<[1], [0], [0], [1], [0, 0, 1, 1], [], []>} : vector<144x3xbf16>, vector<3x32xbf16>, vector<144x32xf32> -> vector<144x32xf32>
      %162 = arith.addf %155, %161 : vector<144x32xf32>
      %163 = arith.index_cast %arg19 : i32 to index
      %c145 = arith.constant 145 : index
      %c0_120 = arith.constant 0 : index
      %164 = vector.load %arg1[%163, %c145, %c0_120] : memref<2x342x3xbf16, #tpu.memory_space<vmem>>, vector<1x144x3xbf16>
      %165 = vector.shape_cast %164 : vector<1x144x3xbf16> to vector<144x3xbf16>
      %c1_121 = arith.constant 1 : index
      %c0_122 = arith.constant 0 : index
      %c0_123 = arith.constant 0 : index
      %166 = vector.load %arg2[%c1_121, %c0_122, %c0_123] : memref<9x3x32xbf16, #tpu.memory_space<vmem>>, vector<1x3x32xbf16>
      %167 = vector.shape_cast %166 : vector<1x3x32xbf16> to vector<3x32xbf16>
      %cst_124 = arith.constant dense<0.000000e+00> : vector<144x32xf32>
      %168 = tpu.matmul %165, %167, %cst_124 {dimension_numbers = #tpu.dot_dimension_numbers<[1], [0], [0], [1], [0, 0, 1, 1], [], []>} : vector<144x3xbf16>, vector<3x32xbf16>, vector<144x32xf32> -> vector<144x32xf32>
      %169 = arith.addf %162, %168 : vector<144x32xf32>
      %170 = arith.index_cast %arg19 : i32 to index
      %c146 = arith.constant 146 : index
      %c0_125 = arith.constant 0 : index
      %171 = vector.load %arg1[%170, %c146, %c0_125] : memref<2x342x3xbf16, #tpu.memory_space<vmem>>, vector<1x144x3xbf16>
      %172 = vector.shape_cast %171 : vector<1x144x3xbf16> to vector<144x3xbf16>
      %c2_126 = arith.constant 2 : index
      %c0_127 = arith.constant 0 : index
      %c0_128 = arith.constant 0 : index
      %173 = vector.load %arg2[%c2_126, %c0_127, %c0_128] : memref<9x3x32xbf16, #tpu.memory_space<vmem>>, vector<1x3x32xbf16>
      %174 = vector.shape_cast %173 : vector<1x3x32xbf16> to vector<3x32xbf16>
      %cst_129 = arith.constant dense<0.000000e+00> : vector<144x32xf32>
      %175 = tpu.matmul %172, %174, %cst_129 {dimension_numbers = #tpu.dot_dimension_numbers<[1], [0], [0], [1], [0, 0, 1, 1], [], []>} : vector<144x3xbf16>, vector<3x32xbf16>, vector<144x32xf32> -> vector<144x32xf32>
      %176 = arith.addf %169, %175 : vector<144x32xf32>
      %177 = arith.index_cast %arg19 : i32 to index
      %c162 = arith.constant 162 : index
      %c0_130 = arith.constant 0 : index
      %178 = vector.load %arg1[%177, %c162, %c0_130] : memref<2x342x3xbf16, #tpu.memory_space<vmem>>, vector<1x144x3xbf16>
      %179 = vector.shape_cast %178 : vector<1x144x3xbf16> to vector<144x3xbf16>
      %c3_131 = arith.constant 3 : index
      %c0_132 = arith.constant 0 : index
      %c0_133 = arith.constant 0 : index
      %180 = vector.load %arg2[%c3_131, %c0_132, %c0_133] : memref<9x3x32xbf16, #tpu.memory_space<vmem>>, vector<1x3x32xbf16>
      %181 = vector.shape_cast %180 : vector<1x3x32xbf16> to vector<3x32xbf16>
      %cst_134 = arith.constant dense<0.000000e+00> : vector<144x32xf32>
      %182 = tpu.matmul %179, %181, %cst_134 {dimension_numbers = #tpu.dot_dimension_numbers<[1], [0], [0], [1], [0, 0, 1, 1], [], []>} : vector<144x3xbf16>, vector<3x32xbf16>, vector<144x32xf32> -> vector<144x32xf32>
      %183 = arith.addf %176, %182 : vector<144x32xf32>
      %184 = arith.index_cast %arg19 : i32 to index
      %c163 = arith.constant 163 : index
      %c0_135 = arith.constant 0 : index
      %185 = vector.load %arg1[%184, %c163, %c0_135] : memref<2x342x3xbf16, #tpu.memory_space<vmem>>, vector<1x144x3xbf16>
      %186 = vector.shape_cast %185 : vector<1x144x3xbf16> to vector<144x3xbf16>
      %c4_136 = arith.constant 4 : index
      %c0_137 = arith.constant 0 : index
      %c0_138 = arith.constant 0 : index
      %187 = vector.load %arg2[%c4_136, %c0_137, %c0_138] : memref<9x3x32xbf16, #tpu.memory_space<vmem>>, vector<1x3x32xbf16>
      %188 = vector.shape_cast %187 : vector<1x3x32xbf16> to vector<3x32xbf16>
      %cst_139 = arith.constant dense<0.000000e+00> : vector<144x32xf32>
      %189 = tpu.matmul %186, %188, %cst_139 {dimension_numbers = #tpu.dot_dimension_numbers<[1], [0], [0], [1], [0, 0, 1, 1], [], []>} : vector<144x3xbf16>, vector<3x32xbf16>, vector<144x32xf32> -> vector<144x32xf32>
      %190 = arith.addf %183, %189 : vector<144x32xf32>
      %191 = arith.index_cast %arg19 : i32 to index
      %c164 = arith.constant 164 : index
      %c0_140 = arith.constant 0 : index
      %192 = vector.load %arg1[%191, %c164, %c0_140] : memref<2x342x3xbf16, #tpu.memory_space<vmem>>, vector<1x144x3xbf16>
      %193 = vector.shape_cast %192 : vector<1x144x3xbf16> to vector<144x3xbf16>
      %c5_141 = arith.constant 5 : index
      %c0_142 = arith.constant 0 : index
      %c0_143 = arith.constant 0 : index
      %194 = vector.load %arg2[%c5_141, %c0_142, %c0_143] : memref<9x3x32xbf16, #tpu.memory_space<vmem>>, vector<1x3x32xbf16>
      %195 = vector.shape_cast %194 : vector<1x3x32xbf16> to vector<3x32xbf16>
      %cst_144 = arith.constant dense<0.000000e+00> : vector<144x32xf32>
      %196 = tpu.matmul %193, %195, %cst_144 {dimension_numbers = #tpu.dot_dimension_numbers<[1], [0], [0], [1], [0, 0, 1, 1], [], []>} : vector<144x3xbf16>, vector<3x32xbf16>, vector<144x32xf32> -> vector<144x32xf32>
      %197 = arith.addf %190, %196 : vector<144x32xf32>
      %198 = arith.index_cast %arg19 : i32 to index
      %c180 = arith.constant 180 : index
      %c0_145 = arith.constant 0 : index
      %199 = vector.load %arg1[%198, %c180, %c0_145] : memref<2x342x3xbf16, #tpu.memory_space<vmem>>, vector<1x144x3xbf16>
      %200 = vector.shape_cast %199 : vector<1x144x3xbf16> to vector<144x3xbf16>
      %c6_146 = arith.constant 6 : index
      %c0_147 = arith.constant 0 : index
      %c0_148 = arith.constant 0 : index
      %201 = vector.load %arg2[%c6_146, %c0_147, %c0_148] : memref<9x3x32xbf16, #tpu.memory_space<vmem>>, vector<1x3x32xbf16>
      %202 = vector.shape_cast %201 : vector<1x3x32xbf16> to vector<3x32xbf16>
      %cst_149 = arith.constant dense<0.000000e+00> : vector<144x32xf32>
      %203 = tpu.matmul %200, %202, %cst_149 {dimension_numbers = #tpu.dot_dimension_numbers<[1], [0], [0], [1], [0, 0, 1, 1], [], []>} : vector<144x3xbf16>, vector<3x32xbf16>, vector<144x32xf32> -> vector<144x32xf32>
      %204 = arith.addf %197, %203 : vector<144x32xf32>
      %205 = arith.index_cast %arg19 : i32 to index
      %c181 = arith.constant 181 : index
      %c0_150 = arith.constant 0 : index
      %206 = vector.load %arg1[%205, %c181, %c0_150] : memref<2x342x3xbf16, #tpu.memory_space<vmem>>, vector<1x144x3xbf16>
      %207 = vector.shape_cast %206 : vector<1x144x3xbf16> to vector<144x3xbf16>
      %c7_151 = arith.constant 7 : index
      %c0_152 = arith.constant 0 : index
      %c0_153 = arith.constant 0 : index
      %208 = vector.load %arg2[%c7_151, %c0_152, %c0_153] : memref<9x3x32xbf16, #tpu.memory_space<vmem>>, vector<1x3x32xbf16>
      %209 = vector.shape_cast %208 : vector<1x3x32xbf16> to vector<3x32xbf16>
      %cst_154 = arith.constant dense<0.000000e+00> : vector<144x32xf32>
      %210 = tpu.matmul %207, %209, %cst_154 {dimension_numbers = #tpu.dot_dimension_numbers<[1], [0], [0], [1], [0, 0, 1, 1], [], []>} : vector<144x3xbf16>, vector<3x32xbf16>, vector<144x32xf32> -> vector<144x32xf32>
      %211 = arith.addf %204, %210 : vector<144x32xf32>
      %212 = arith.index_cast %arg19 : i32 to index
      %c182 = arith.constant 182 : index
      %c0_155 = arith.constant 0 : index
      %213 = vector.load %arg1[%212, %c182, %c0_155] : memref<2x342x3xbf16, #tpu.memory_space<vmem>>, vector<1x144x3xbf16>
      %214 = vector.shape_cast %213 : vector<1x144x3xbf16> to vector<144x3xbf16>
      %c8_156 = arith.constant 8 : index
      %c0_157 = arith.constant 0 : index
      %c0_158 = arith.constant 0 : index
      %215 = vector.load %arg2[%c8_156, %c0_157, %c0_158] : memref<9x3x32xbf16, #tpu.memory_space<vmem>>, vector<1x3x32xbf16>
      %216 = vector.shape_cast %215 : vector<1x3x32xbf16> to vector<3x32xbf16>
      %cst_159 = arith.constant dense<0.000000e+00> : vector<144x32xf32>
      %217 = tpu.matmul %214, %216, %cst_159 {dimension_numbers = #tpu.dot_dimension_numbers<[1], [0], [0], [1], [0, 0, 1, 1], [], []>} : vector<144x3xbf16>, vector<3x32xbf16>, vector<144x32xf32> -> vector<144x32xf32>
      %218 = arith.addf %211, %217 : vector<144x32xf32>
      %c0_160 = arith.constant 0 : index
      %c0_161 = arith.constant 0 : index
      %219 = vector.load %arg3[%c0_160, %c0_161] : memref<1x32xf32, #tpu.memory_space<vmem>>, vector<1x32xf32>
      %220 = vector.broadcast %219 : vector<1x32xf32> to vector<144x32xf32>
      %221 = arith.addf %218, %220 : vector<144x32xf32>
      %cst_162 = arith.constant 0.000000e+00 : f32
      %222 = vector.broadcast %cst_162 : f32 to vector<144x32xf32>
      %223 = arith.maximumf %221, %222 : vector<144x32xf32>
      %224 = vector.extract_strided_slice %223 {offsets = [0, 0], sizes = [18, 32], strides = [1, 1]} : vector<144x32xf32> to vector<18x32xf32>
      %225 = vector.extract_strided_slice %223 {offsets = [18, 0], sizes = [18, 32], strides = [1, 1]} : vector<144x32xf32> to vector<18x32xf32>
      %226 = arith.maximumf %224, %225 : vector<18x32xf32>
      %c0_163 = arith.constant 0 : index
      %c0_164 = arith.constant 0 : index
      %227 = vector.load %arg16[%c0_163, %c0_164] : memref<18x32xf32, #tpu.memory_space<vmem>>, vector<18x32xf32>
      tpu.vector_store %arg16[%c0_163, %c0_164], %226 {strides = array<i32>} : memref<18x32xf32, #tpu.memory_space<vmem>>, vector<18x32xf32>,
      %c0_165 = arith.constant 0 : index
      %c0_166 = arith.constant 0 : index
      %228 = tpu.strided_load %arg16[%c0_165, %c0_166] {strides = array<i32: 2, 1>} : memref<18x32xf32, #tpu.memory_space<vmem>>, vector<8x32xf32>
      %c1_167 = arith.constant 1 : index
      %c0_168 = arith.constant 0 : index
      %229 = tpu.strided_load %arg16[%c1_167, %c0_168] {strides = array<i32: 2, 1>} : memref<18x32xf32, #tpu.memory_space<vmem>>, vector<8x32xf32>
      %230 = arith.maximumf %228, %229 : vector<8x32xf32>
      %231 = arith.index_cast %arg19 : i32 to index
      %c51 = arith.constant 51 : index
      %c0_169 = arith.constant 0 : index
      %232 = vector.load %arg13[%231, %c51, %c0_169] : memref<2x110x32xf32, #tpu.memory_space<vmem>>, vector<1x8x32xf32>
      %233 = vector.shape_cast %232 : vector<1x8x32xf32> to vector<8x32xf32>
      %234 = vector.shape_cast %230 : vector<8x32xf32> to vector<1x8x32xf32>
      tpu.vector_store %arg13[%231, %c51, %c0_169], %234 {strides = array<i32>} : memref<2x110x32xf32, #tpu.memory_space<vmem>>, vector<1x8x32xf32>,
      %235 = vector.extract_strided_slice %223 {offsets = [36, 0], sizes = [18, 32], strides = [1, 1]} : vector<144x32xf32> to vector<18x32xf32>
      %236 = vector.extract_strided_slice %223 {offsets = [54, 0], sizes = [18, 32], strides = [1, 1]} : vector<144x32xf32> to vector<18x32xf32>
      %237 = arith.maximumf %235, %236 : vector<18x32xf32>
      %c0_170 = arith.constant 0 : index
      %c0_171 = arith.constant 0 : index
      %238 = vector.load %arg16[%c0_170, %c0_171] : memref<18x32xf32, #tpu.memory_space<vmem>>, vector<18x32xf32>
      tpu.vector_store %arg16[%c0_170, %c0_171], %237 {strides = array<i32>} : memref<18x32xf32, #tpu.memory_space<vmem>>, vector<18x32xf32>,
      %c0_172 = arith.constant 0 : index
      %c0_173 = arith.constant 0 : index
      %239 = tpu.strided_load %arg16[%c0_172, %c0_173] {strides = array<i32: 2, 1>} : memref<18x32xf32, #tpu.memory_space<vmem>>, vector<8x32xf32>
      %c1_174 = arith.constant 1 : index
      %c0_175 = arith.constant 0 : index
      %240 = tpu.strided_load %arg16[%c1_174, %c0_175] {strides = array<i32: 2, 1>} : memref<18x32xf32, #tpu.memory_space<vmem>>, vector<8x32xf32>
      %241 = arith.maximumf %239, %240 : vector<8x32xf32>
      %242 = arith.index_cast %arg19 : i32 to index
      %c61 = arith.constant 61 : index
      %c0_176 = arith.constant 0 : index
      %243 = vector.load %arg13[%242, %c61, %c0_176] : memref<2x110x32xf32, #tpu.memory_space<vmem>>, vector<1x8x32xf32>
      %244 = vector.shape_cast %243 : vector<1x8x32xf32> to vector<8x32xf32>
      %245 = vector.shape_cast %241 : vector<8x32xf32> to vector<1x8x32xf32>
      tpu.vector_store %arg13[%242, %c61, %c0_176], %245 {strides = array<i32>} : memref<2x110x32xf32, #tpu.memory_space<vmem>>, vector<1x8x32xf32>,
      %246 = vector.extract_strided_slice %223 {offsets = [72, 0], sizes = [18, 32], strides = [1, 1]} : vector<144x32xf32> to vector<18x32xf32>
      %247 = vector.extract_strided_slice %223 {offsets = [90, 0], sizes = [18, 32], strides = [1, 1]} : vector<144x32xf32> to vector<18x32xf32>
      %248 = arith.maximumf %246, %247 : vector<18x32xf32>
      %c0_177 = arith.constant 0 : index
      %c0_178 = arith.constant 0 : index
      %249 = vector.load %arg16[%c0_177, %c0_178] : memref<18x32xf32, #tpu.memory_space<vmem>>, vector<18x32xf32>
      tpu.vector_store %arg16[%c0_177, %c0_178], %248 {strides = array<i32>} : memref<18x32xf32, #tpu.memory_space<vmem>>, vector<18x32xf32>,
      %c0_179 = arith.constant 0 : index
      %c0_180 = arith.constant 0 : index
      %250 = tpu.strided_load %arg16[%c0_179, %c0_180] {strides = array<i32: 2, 1>} : memref<18x32xf32, #tpu.memory_space<vmem>>, vector<8x32xf32>
      %c1_181 = arith.constant 1 : index
      %c0_182 = arith.constant 0 : index
      %251 = tpu.strided_load %arg16[%c1_181, %c0_182] {strides = array<i32: 2, 1>} : memref<18x32xf32, #tpu.memory_space<vmem>>, vector<8x32xf32>
      %252 = arith.maximumf %250, %251 : vector<8x32xf32>
      %253 = arith.index_cast %arg19 : i32 to index
      %c71 = arith.constant 71 : index
      %c0_183 = arith.constant 0 : index
      %254 = vector.load %arg13[%253, %c71, %c0_183] : memref<2x110x32xf32, #tpu.memory_space<vmem>>, vector<1x8x32xf32>
      %255 = vector.shape_cast %254 : vector<1x8x32xf32> to vector<8x32xf32>
      %256 = vector.shape_cast %252 : vector<8x32xf32> to vector<1x8x32xf32>
      tpu.vector_store %arg13[%253, %c71, %c0_183], %256 {strides = array<i32>} : memref<2x110x32xf32, #tpu.memory_space<vmem>>, vector<1x8x32xf32>,
      %257 = vector.extract_strided_slice %223 {offsets = [108, 0], sizes = [18, 32], strides = [1, 1]} : vector<144x32xf32> to vector<18x32xf32>
      %258 = vector.extract_strided_slice %223 {offsets = [126, 0], sizes = [18, 32], strides = [1, 1]} : vector<144x32xf32> to vector<18x32xf32>
      %259 = arith.maximumf %257, %258 : vector<18x32xf32>
      %c0_184 = arith.constant 0 : index
      %c0_185 = arith.constant 0 : index
      %260 = vector.load %arg16[%c0_184, %c0_185] : memref<18x32xf32, #tpu.memory_space<vmem>>, vector<18x32xf32>
      tpu.vector_store %arg16[%c0_184, %c0_185], %259 {strides = array<i32>} : memref<18x32xf32, #tpu.memory_space<vmem>>, vector<18x32xf32>,
      %c0_186 = arith.constant 0 : index
      %c0_187 = arith.constant 0 : index
      %261 = tpu.strided_load %arg16[%c0_186, %c0_187] {strides = array<i32: 2, 1>} : memref<18x32xf32, #tpu.memory_space<vmem>>, vector<8x32xf32>
      %c1_188 = arith.constant 1 : index
      %c0_189 = arith.constant 0 : index
      %262 = tpu.strided_load %arg16[%c1_188, %c0_189] {strides = array<i32: 2, 1>} : memref<18x32xf32, #tpu.memory_space<vmem>>, vector<8x32xf32>
      %263 = arith.maximumf %261, %262 : vector<8x32xf32>
      %264 = arith.index_cast %arg19 : i32 to index
      %c81 = arith.constant 81 : index
      %c0_190 = arith.constant 0 : index
      %265 = vector.load %arg13[%264, %c81, %c0_190] : memref<2x110x32xf32, #tpu.memory_space<vmem>>, vector<1x8x32xf32>
      %266 = vector.shape_cast %265 : vector<1x8x32xf32> to vector<8x32xf32>
      %267 = vector.shape_cast %263 : vector<8x32xf32> to vector<1x8x32xf32>
      tpu.vector_store %arg13[%264, %c81, %c0_190], %267 {strides = array<i32>} : memref<2x110x32xf32, #tpu.memory_space<vmem>>, vector<1x8x32xf32>,
      %cst_191 = arith.constant 0.000000e+00 : f32
      %268 = vector.broadcast %cst_191 : f32 to vector<80x64xf32>
      %269 = arith.index_cast %arg19 : i32 to index
      %c0_192 = arith.constant 0 : index
      %c0_193 = arith.constant 0 : index
      %270 = vector.load %arg13[%269, %c0_192, %c0_193] : memref<2x110x32xf32, #tpu.memory_space<vmem>>, vector<1x80x32xf32>
      %271 = vector.shape_cast %270 : vector<1x80x32xf32> to vector<80x32xf32>
      %272 = arith.truncf %271 : vector<80x32xf32> to vector<80x32xbf16>
      %c0_194 = arith.constant 0 : index
      %c0_195 = arith.constant 0 : index
      %c0_196 = arith.constant 0 : index
      %273 = vector.load %arg4[%c0_194, %c0_195, %c0_196] : memref<9x32x64xbf16, #tpu.memory_space<vmem>>, vector<1x32x64xbf16>
      %274 = vector.shape_cast %273 : vector<1x32x64xbf16> to vector<32x64xbf16>
      %cst_197 = arith.constant dense<0.000000e+00> : vector<80x64xf32>
      %275 = tpu.matmul %272, %274, %cst_197 {dimension_numbers = #tpu.dot_dimension_numbers<[1], [0], [0], [1], [0, 0, 1, 1], [], []>} : vector<80x32xbf16>, vector<32x64xbf16>, vector<80x64xf32> -> vector<80x64xf32>
      %276 = arith.addf %268, %275 : vector<80x64xf32>
      %277 = arith.index_cast %arg19 : i32 to index
      %c1_198 = arith.constant 1 : index
      %c0_199 = arith.constant 0 : index
      %278 = vector.load %arg13[%277, %c1_198, %c0_199] : memref<2x110x32xf32, #tpu.memory_space<vmem>>, vector<1x80x32xf32>
      %279 = vector.shape_cast %278 : vector<1x80x32xf32> to vector<80x32xf32>
      %280 = arith.truncf %279 : vector<80x32xf32> to vector<80x32xbf16>
      %c1_200 = arith.constant 1 : index
      %c0_201 = arith.constant 0 : index
      %c0_202 = arith.constant 0 : index
      %281 = vector.load %arg4[%c1_200, %c0_201, %c0_202] : memref<9x32x64xbf16, #tpu.memory_space<vmem>>, vector<1x32x64xbf16>
      %282 = vector.shape_cast %281 : vector<1x32x64xbf16> to vector<32x64xbf16>
      %cst_203 = arith.constant dense<0.000000e+00> : vector<80x64xf32>
      %283 = tpu.matmul %280, %282, %cst_203 {dimension_numbers = #tpu.dot_dimension_numbers<[1], [0], [0], [1], [0, 0, 1, 1], [], []>} : vector<80x32xbf16>, vector<32x64xbf16>, vector<80x64xf32> -> vector<80x64xf32>
      %284 = arith.addf %276, %283 : vector<80x64xf32>
      %285 = arith.index_cast %arg19 : i32 to index
      %c2_204 = arith.constant 2 : index
      %c0_205 = arith.constant 0 : index
      %286 = vector.load %arg13[%285, %c2_204, %c0_205] : memref<2x110x32xf32, #tpu.memory_space<vmem>>, vector<1x80x32xf32>
      %287 = vector.shape_cast %286 : vector<1x80x32xf32> to vector<80x32xf32>
      %288 = arith.truncf %287 : vector<80x32xf32> to vector<80x32xbf16>
      %c2_206 = arith.constant 2 : index
      %c0_207 = arith.constant 0 : index
      %c0_208 = arith.constant 0 : index
      %289 = vector.load %arg4[%c2_206, %c0_207, %c0_208] : memref<9x32x64xbf16, #tpu.memory_space<vmem>>, vector<1x32x64xbf16>
      %290 = vector.shape_cast %289 : vector<1x32x64xbf16> to vector<32x64xbf16>
      %cst_209 = arith.constant dense<0.000000e+00> : vector<80x64xf32>
      %291 = tpu.matmul %288, %290, %cst_209 {dimension_numbers = #tpu.dot_dimension_numbers<[1], [0], [0], [1], [0, 0, 1, 1], [], []>} : vector<80x32xbf16>, vector<32x64xbf16>, vector<80x64xf32> -> vector<80x64xf32>
      %292 = arith.addf %284, %291 : vector<80x64xf32>
      %293 = arith.index_cast %arg19 : i32 to index
      %c10 = arith.constant 10 : index
      %c0_210 = arith.constant 0 : index
      %294 = vector.load %arg13[%293, %c10, %c0_210] : memref<2x110x32xf32, #tpu.memory_space<vmem>>, vector<1x80x32xf32>
      %295 = vector.shape_cast %294 : vector<1x80x32xf32> to vector<80x32xf32>
      %296 = arith.truncf %295 : vector<80x32xf32> to vector<80x32xbf16>
      %c3_211 = arith.constant 3 : index
      %c0_212 = arith.constant 0 : index
      %c0_213 = arith.constant 0 : index
      %297 = vector.load %arg4[%c3_211, %c0_212, %c0_213] : memref<9x32x64xbf16, #tpu.memory_space<vmem>>, vector<1x32x64xbf16>
      %298 = vector.shape_cast %297 : vector<1x32x64xbf16> to vector<32x64xbf16>
      %cst_214 = arith.constant dense<0.000000e+00> : vector<80x64xf32>
      %299 = tpu.matmul %296, %298, %cst_214 {dimension_numbers = #tpu.dot_dimension_numbers<[1], [0], [0], [1], [0, 0, 1, 1], [], []>} : vector<80x32xbf16>, vector<32x64xbf16>, vector<80x64xf32> -> vector<80x64xf32>
      %300 = arith.addf %292, %299 : vector<80x64xf32>
      %301 = arith.index_cast %arg19 : i32 to index
      %c11_215 = arith.constant 11 : index
      %c0_216 = arith.constant 0 : index
      %302 = vector.load %arg13[%301, %c11_215, %c0_216] : memref<2x110x32xf32, #tpu.memory_space<vmem>>, vector<1x80x32xf32>
      %303 = vector.shape_cast %302 : vector<1x80x32xf32> to vector<80x32xf32>
      %304 = arith.truncf %303 : vector<80x32xf32> to vector<80x32xbf16>
      %c4_217 = arith.constant 4 : index
      %c0_218 = arith.constant 0 : index
      %c0_219 = arith.constant 0 : index
      %305 = vector.load %arg4[%c4_217, %c0_218, %c0_219] : memref<9x32x64xbf16, #tpu.memory_space<vmem>>, vector<1x32x64xbf16>
      %306 = vector.shape_cast %305 : vector<1x32x64xbf16> to vector<32x64xbf16>
      %cst_220 = arith.constant dense<0.000000e+00> : vector<80x64xf32>
      %307 = tpu.matmul %304, %306, %cst_220 {dimension_numbers = #tpu.dot_dimension_numbers<[1], [0], [0], [1], [0, 0, 1, 1], [], []>} : vector<80x32xbf16>, vector<32x64xbf16>, vector<80x64xf32> -> vector<80x64xf32>
      %308 = arith.addf %300, %307 : vector<80x64xf32>
      %309 = arith.index_cast %arg19 : i32 to index
      %c12 = arith.constant 12 : index
      %c0_221 = arith.constant 0 : index
      %310 = vector.load %arg13[%309, %c12, %c0_221] : memref<2x110x32xf32, #tpu.memory_space<vmem>>, vector<1x80x32xf32>
      %311 = vector.shape_cast %310 : vector<1x80x32xf32> to vector<80x32xf32>
      %312 = arith.truncf %311 : vector<80x32xf32> to vector<80x32xbf16>
      %c5_222 = arith.constant 5 : index
      %c0_223 = arith.constant 0 : index
      %c0_224 = arith.constant 0 : index
      %313 = vector.load %arg4[%c5_222, %c0_223, %c0_224] : memref<9x32x64xbf16, #tpu.memory_space<vmem>>, vector<1x32x64xbf16>
      %314 = vector.shape_cast %313 : vector<1x32x64xbf16> to vector<32x64xbf16>
      %cst_225 = arith.constant dense<0.000000e+00> : vector<80x64xf32>
      %315 = tpu.matmul %312, %314, %cst_225 {dimension_numbers = #tpu.dot_dimension_numbers<[1], [0], [0], [1], [0, 0, 1, 1], [], []>} : vector<80x32xbf16>, vector<32x64xbf16>, vector<80x64xf32> -> vector<80x64xf32>
      %316 = arith.addf %308, %315 : vector<80x64xf32>
      %317 = arith.index_cast %arg19 : i32 to index
      %c20_226 = arith.constant 20 : index
      %c0_227 = arith.constant 0 : index
      %318 = vector.load %arg13[%317, %c20_226, %c0_227] : memref<2x110x32xf32, #tpu.memory_space<vmem>>, vector<1x80x32xf32>
      %319 = vector.shape_cast %318 : vector<1x80x32xf32> to vector<80x32xf32>
      %320 = arith.truncf %319 : vector<80x32xf32> to vector<80x32xbf16>
      %c6_228 = arith.constant 6 : index
      %c0_229 = arith.constant 0 : index
      %c0_230 = arith.constant 0 : index
      %321 = vector.load %arg4[%c6_228, %c0_229, %c0_230] : memref<9x32x64xbf16, #tpu.memory_space<vmem>>, vector<1x32x64xbf16>
      %322 = vector.shape_cast %321 : vector<1x32x64xbf16> to vector<32x64xbf16>
      %cst_231 = arith.constant dense<0.000000e+00> : vector<80x64xf32>
      %323 = tpu.matmul %320, %322, %cst_231 {dimension_numbers = #tpu.dot_dimension_numbers<[1], [0], [0], [1], [0, 0, 1, 1], [], []>} : vector<80x32xbf16>, vector<32x64xbf16>, vector<80x64xf32> -> vector<80x64xf32>
      %324 = arith.addf %316, %323 : vector<80x64xf32>
      %325 = arith.index_cast %arg19 : i32 to index
      %c21_232 = arith.constant 21 : index
      %c0_233 = arith.constant 0 : index
      %326 = vector.load %arg13[%325, %c21_232, %c0_233] : memref<2x110x32xf32, #tpu.memory_space<vmem>>, vector<1x80x32xf32>
      %327 = vector.shape_cast %326 : vector<1x80x32xf32> to vector<80x32xf32>
      %328 = arith.truncf %327 : vector<80x32xf32> to vector<80x32xbf16>
      %c7_234 = arith.constant 7 : index
      %c0_235 = arith.constant 0 : index
      %c0_236 = arith.constant 0 : index
      %329 = vector.load %arg4[%c7_234, %c0_235, %c0_236] : memref<9x32x64xbf16, #tpu.memory_space<vmem>>, vector<1x32x64xbf16>
      %330 = vector.shape_cast %329 : vector<1x32x64xbf16> to vector<32x64xbf16>
      %cst_237 = arith.constant dense<0.000000e+00> : vector<80x64xf32>
      %331 = tpu.matmul %328, %330, %cst_237 {dimension_numbers = #tpu.dot_dimension_numbers<[1], [0], [0], [1], [0, 0, 1, 1], [], []>} : vector<80x32xbf16>, vector<32x64xbf16>, vector<80x64xf32> -> vector<80x64xf32>
      %332 = arith.addf %324, %331 : vector<80x64xf32>
      %333 = arith.index_cast %arg19 : i32 to index
      %c22 = arith.constant 22 : index
      %c0_238 = arith.constant 0 : index
      %334 = vector.load %arg13[%333, %c22, %c0_238] : memref<2x110x32xf32, #tpu.memory_space<vmem>>, vector<1x80x32xf32>
      %335 = vector.shape_cast %334 : vector<1x80x32xf32> to vector<80x32xf32>
      %336 = arith.truncf %335 : vector<80x32xf32> to vector<80x32xbf16>
      %c8_239 = arith.constant 8 : index
      %c0_240 = arith.constant 0 : index
      %c0_241 = arith.constant 0 : index
      %337 = vector.load %arg4[%c8_239, %c0_240, %c0_241] : memref<9x32x64xbf16, #tpu.memory_space<vmem>>, vector<1x32x64xbf16>
      %338 = vector.shape_cast %337 : vector<1x32x64xbf16> to vector<32x64xbf16>
      %cst_242 = arith.constant dense<0.000000e+00> : vector<80x64xf32>
      %339 = tpu.matmul %336, %338, %cst_242 {dimension_numbers = #tpu.dot_dimension_numbers<[1], [0], [0], [1], [0, 0, 1, 1], [], []>} : vector<80x32xbf16>, vector<32x64xbf16>, vector<80x64xf32> -> vector<80x64xf32>
      %340 = arith.addf %332, %339 : vector<80x64xf32>
      %c0_243 = arith.constant 0 : index
      %c0_244 = arith.constant 0 : index
      %341 = vector.load %arg5[%c0_243, %c0_244] : memref<1x64xf32, #tpu.memory_space<vmem>>, vector<1x64xf32>
      %342 = vector.broadcast %341 : vector<1x64xf32> to vector<80x64xf32>
      %343 = arith.addf %340, %342 : vector<80x64xf32>
      %cst_245 = arith.constant 0.000000e+00 : f32
      %344 = vector.broadcast %cst_245 : f32 to vector<80x64xf32>
      %345 = arith.maximumf %343, %344 : vector<80x64xf32>
      %346 = vector.extract_strided_slice %345 {offsets = [0, 0], sizes = [10, 64], strides = [1, 1]} : vector<80x64xf32> to vector<10x64xf32>
      %347 = vector.extract_strided_slice %345 {offsets = [10, 0], sizes = [10, 64], strides = [1, 1]} : vector<80x64xf32> to vector<10x64xf32>
      %348 = arith.maximumf %346, %347 : vector<10x64xf32>
      %c0_246 = arith.constant 0 : index
      %c0_247 = arith.constant 0 : index
      %349 = vector.load %arg17[%c0_246, %c0_247] : memref<10x64xf32, #tpu.memory_space<vmem>>, vector<10x64xf32>
      tpu.vector_store %arg17[%c0_246, %c0_247], %348 {strides = array<i32>} : memref<10x64xf32, #tpu.memory_space<vmem>>, vector<10x64xf32>,
      %c0_248 = arith.constant 0 : index
      %c0_249 = arith.constant 0 : index
      %350 = tpu.strided_load %arg17[%c0_248, %c0_249] {strides = array<i32: 2, 1>} : memref<10x64xf32, #tpu.memory_space<vmem>>, vector<4x64xf32>
      %c1_250 = arith.constant 1 : index
      %c0_251 = arith.constant 0 : index
      %351 = tpu.strided_load %arg17[%c1_250, %c0_251] {strides = array<i32: 2, 1>} : memref<10x64xf32, #tpu.memory_space<vmem>>, vector<4x64xf32>
      %352 = arith.maximumf %350, %351 : vector<4x64xf32>
      %353 = arith.index_cast %arg19 : i32 to index
      %c7_252 = arith.constant 7 : index
      %c0_253 = arith.constant 0 : index
      %354 = vector.load %arg14[%353, %c7_252, %c0_253] : memref<2x42x64xf32, #tpu.memory_space<vmem>>, vector<1x4x64xf32>
      %355 = vector.shape_cast %354 : vector<1x4x64xf32> to vector<4x64xf32>
      %356 = vector.shape_cast %352 : vector<4x64xf32> to vector<1x4x64xf32>
      tpu.vector_store %arg14[%353, %c7_252, %c0_253], %356 {strides = array<i32>} : memref<2x42x64xf32, #tpu.memory_space<vmem>>, vector<1x4x64xf32>,
      %357 = vector.extract_strided_slice %345 {offsets = [20, 0], sizes = [10, 64], strides = [1, 1]} : vector<80x64xf32> to vector<10x64xf32>
      %358 = vector.extract_strided_slice %345 {offsets = [30, 0], sizes = [10, 64], strides = [1, 1]} : vector<80x64xf32> to vector<10x64xf32>
      %359 = arith.maximumf %357, %358 : vector<10x64xf32>
      %c0_254 = arith.constant 0 : index
      %c0_255 = arith.constant 0 : index
      %360 = vector.load %arg17[%c0_254, %c0_255] : memref<10x64xf32, #tpu.memory_space<vmem>>, vector<10x64xf32>
      tpu.vector_store %arg17[%c0_254, %c0_255], %359 {strides = array<i32>} : memref<10x64xf32, #tpu.memory_space<vmem>>, vector<10x64xf32>,
      %c0_256 = arith.constant 0 : index
      %c0_257 = arith.constant 0 : index
      %361 = tpu.strided_load %arg17[%c0_256, %c0_257] {strides = array<i32: 2, 1>} : memref<10x64xf32, #tpu.memory_space<vmem>>, vector<4x64xf32>
      %c1_258 = arith.constant 1 : index
      %c0_259 = arith.constant 0 : index
      %362 = tpu.strided_load %arg17[%c1_258, %c0_259] {strides = array<i32: 2, 1>} : memref<10x64xf32, #tpu.memory_space<vmem>>, vector<4x64xf32>
      %363 = arith.maximumf %361, %362 : vector<4x64xf32>
      %364 = arith.index_cast %arg19 : i32 to index
      %c13 = arith.constant 13 : index
      %c0_260 = arith.constant 0 : index
      %365 = vector.load %arg14[%364, %c13, %c0_260] : memref<2x42x64xf32, #tpu.memory_space<vmem>>, vector<1x4x64xf32>
      %366 = vector.shape_cast %365 : vector<1x4x64xf32> to vector<4x64xf32>
      %367 = vector.shape_cast %363 : vector<4x64xf32> to vector<1x4x64xf32>
      tpu.vector_store %arg14[%364, %c13, %c0_260], %367 {strides = array<i32>} : memref<2x42x64xf32, #tpu.memory_space<vmem>>, vector<1x4x64xf32>,
      %368 = vector.extract_strided_slice %345 {offsets = [40, 0], sizes = [10, 64], strides = [1, 1]} : vector<80x64xf32> to vector<10x64xf32>
      %369 = vector.extract_strided_slice %345 {offsets = [50, 0], sizes = [10, 64], strides = [1, 1]} : vector<80x64xf32> to vector<10x64xf32>
      %370 = arith.maximumf %368, %369 : vector<10x64xf32>
      %c0_261 = arith.constant 0 : index
      %c0_262 = arith.constant 0 : index
      %371 = vector.load %arg17[%c0_261, %c0_262] : memref<10x64xf32, #tpu.memory_space<vmem>>, vector<10x64xf32>
      tpu.vector_store %arg17[%c0_261, %c0_262], %370 {strides = array<i32>} : memref<10x64xf32, #tpu.memory_space<vmem>>, vector<10x64xf32>,
      %c0_263 = arith.constant 0 : index
      %c0_264 = arith.constant 0 : index
      %372 = tpu.strided_load %arg17[%c0_263, %c0_264] {strides = array<i32: 2, 1>} : memref<10x64xf32, #tpu.memory_space<vmem>>, vector<4x64xf32>
      %c1_265 = arith.constant 1 : index
      %c0_266 = arith.constant 0 : index
      %373 = tpu.strided_load %arg17[%c1_265, %c0_266] {strides = array<i32: 2, 1>} : memref<10x64xf32, #tpu.memory_space<vmem>>, vector<4x64xf32>
      %374 = arith.maximumf %372, %373 : vector<4x64xf32>
      %375 = arith.index_cast %arg19 : i32 to index
      %c19_267 = arith.constant 19 : index
      %c0_268 = arith.constant 0 : index
      %376 = vector.load %arg14[%375, %c19_267, %c0_268] : memref<2x42x64xf32, #tpu.memory_space<vmem>>, vector<1x4x64xf32>
      %377 = vector.shape_cast %376 : vector<1x4x64xf32> to vector<4x64xf32>
      %378 = vector.shape_cast %374 : vector<4x64xf32> to vector<1x4x64xf32>
      tpu.vector_store %arg14[%375, %c19_267, %c0_268], %378 {strides = array<i32>} : memref<2x42x64xf32, #tpu.memory_space<vmem>>, vector<1x4x64xf32>,
      %379 = vector.extract_strided_slice %345 {offsets = [60, 0], sizes = [10, 64], strides = [1, 1]} : vector<80x64xf32> to vector<10x64xf32>
      %380 = vector.extract_strided_slice %345 {offsets = [70, 0], sizes = [10, 64], strides = [1, 1]} : vector<80x64xf32> to vector<10x64xf32>
      %381 = arith.maximumf %379, %380 : vector<10x64xf32>
      %c0_269 = arith.constant 0 : index
      %c0_270 = arith.constant 0 : index
      %382 = vector.load %arg17[%c0_269, %c0_270] : memref<10x64xf32, #tpu.memory_space<vmem>>, vector<10x64xf32>
      tpu.vector_store %arg17[%c0_269, %c0_270], %381 {strides = array<i32>} : memref<10x64xf32, #tpu.memory_space<vmem>>, vector<10x64xf32>,
      %c0_271 = arith.constant 0 : index
      %c0_272 = arith.constant 0 : index
      %383 = tpu.strided_load %arg17[%c0_271, %c0_272] {strides = array<i32: 2, 1>} : memref<10x64xf32, #tpu.memory_space<vmem>>, vector<4x64xf32>
      %c1_273 = arith.constant 1 : index
      %c0_274 = arith.constant 0 : index
      %384 = tpu.strided_load %arg17[%c1_273, %c0_274] {strides = array<i32: 2, 1>} : memref<10x64xf32, #tpu.memory_space<vmem>>, vector<4x64xf32>
      %385 = arith.maximumf %383, %384 : vector<4x64xf32>
      %386 = arith.index_cast %arg19 : i32 to index
      %c25 = arith.constant 25 : index
      %c0_275 = arith.constant 0 : index
      %387 = vector.load %arg14[%386, %c25, %c0_275] : memref<2x42x64xf32, #tpu.memory_space<vmem>>, vector<1x4x64xf32>
      %388 = vector.shape_cast %387 : vector<1x4x64xf32> to vector<4x64xf32>
      %389 = vector.shape_cast %385 : vector<4x64xf32> to vector<1x4x64xf32>
      tpu.vector_store %arg14[%386, %c25, %c0_275], %389 {strides = array<i32>} : memref<2x42x64xf32, #tpu.memory_space<vmem>>, vector<1x4x64xf32>,
      %cst_276 = arith.constant 0.000000e+00 : f32
      %390 = vector.broadcast %cst_276 : f32 to vector<24x128xf32>
      %391 = arith.index_cast %arg19 : i32 to index
      %c0_277 = arith.constant 0 : index
      %c0_278 = arith.constant 0 : index
      %392 = vector.load %arg14[%391, %c0_277, %c0_278] : memref<2x42x64xf32, #tpu.memory_space<vmem>>, vector<1x24x64xf32>
      %393 = vector.shape_cast %392 : vector<1x24x64xf32> to vector<24x64xf32>
      %394 = arith.truncf %393 : vector<24x64xf32> to vector<24x64xbf16>
      %c0_279 = arith.constant 0 : index
      %c0_280 = arith.constant 0 : index
      %c0_281 = arith.constant 0 : index
      %395 = vector.load %arg6[%c0_279, %c0_280, %c0_281] : memref<9x64x128xbf16, #tpu.memory_space<vmem>>, vector<1x64x128xbf16>
      %396 = vector.shape_cast %395 : vector<1x64x128xbf16> to vector<64x128xbf16>
      %cst_282 = arith.constant dense<0.000000e+00> : vector<24x128xf32>
      %397 = tpu.matmul %394, %396, %cst_282 {dimension_numbers = #tpu.dot_dimension_numbers<[1], [0], [0], [1], [0, 0, 1, 1], [], []>} : vector<24x64xbf16>, vector<64x128xbf16>, vector<24x128xf32> -> vector<24x128xf32>
      %398 = arith.addf %390, %397 : vector<24x128xf32>
      %399 = arith.index_cast %arg19 : i32 to index
      %c1_283 = arith.constant 1 : index
      %c0_284 = arith.constant 0 : index
      %400 = vector.load %arg14[%399, %c1_283, %c0_284] : memref<2x42x64xf32, #tpu.memory_space<vmem>>, vector<1x24x64xf32>
      %401 = vector.shape_cast %400 : vector<1x24x64xf32> to vector<24x64xf32>
      %402 = arith.truncf %401 : vector<24x64xf32> to vector<24x64xbf16>
      %c1_285 = arith.constant 1 : index
      %c0_286 = arith.constant 0 : index
      %c0_287 = arith.constant 0 : index
      %403 = vector.load %arg6[%c1_285, %c0_286, %c0_287] : memref<9x64x128xbf16, #tpu.memory_space<vmem>>, vector<1x64x128xbf16>
      %404 = vector.shape_cast %403 : vector<1x64x128xbf16> to vector<64x128xbf16>
      %cst_288 = arith.constant dense<0.000000e+00> : vector<24x128xf32>
      %405 = tpu.matmul %402, %404, %cst_288 {dimension_numbers = #tpu.dot_dimension_numbers<[1], [0], [0], [1], [0, 0, 1, 1], [], []>} : vector<24x64xbf16>, vector<64x128xbf16>, vector<24x128xf32> -> vector<24x128xf32>
      %406 = arith.addf %398, %405 : vector<24x128xf32>
      %407 = arith.index_cast %arg19 : i32 to index
      %c2_289 = arith.constant 2 : index
      %c0_290 = arith.constant 0 : index
      %408 = vector.load %arg14[%407, %c2_289, %c0_290] : memref<2x42x64xf32, #tpu.memory_space<vmem>>, vector<1x24x64xf32>
      %409 = vector.shape_cast %408 : vector<1x24x64xf32> to vector<24x64xf32>
      %410 = arith.truncf %409 : vector<24x64xf32> to vector<24x64xbf16>
      %c2_291 = arith.constant 2 : index
      %c0_292 = arith.constant 0 : index
      %c0_293 = arith.constant 0 : index
      %411 = vector.load %arg6[%c2_291, %c0_292, %c0_293] : memref<9x64x128xbf16, #tpu.memory_space<vmem>>, vector<1x64x128xbf16>
      %412 = vector.shape_cast %411 : vector<1x64x128xbf16> to vector<64x128xbf16>
      %cst_294 = arith.constant dense<0.000000e+00> : vector<24x128xf32>
      %413 = tpu.matmul %410, %412, %cst_294 {dimension_numbers = #tpu.dot_dimension_numbers<[1], [0], [0], [1], [0, 0, 1, 1], [], []>} : vector<24x64xbf16>, vector<64x128xbf16>, vector<24x128xf32> -> vector<24x128xf32>
      %414 = arith.addf %406, %413 : vector<24x128xf32>
      %415 = arith.index_cast %arg19 : i32 to index
      %c6_295 = arith.constant 6 : index
      %c0_296 = arith.constant 0 : index
      %416 = vector.load %arg14[%415, %c6_295, %c0_296] : memref<2x42x64xf32, #tpu.memory_space<vmem>>, vector<1x24x64xf32>
      %417 = vector.shape_cast %416 : vector<1x24x64xf32> to vector<24x64xf32>
      %418 = arith.truncf %417 : vector<24x64xf32> to vector<24x64xbf16>
      %c3_297 = arith.constant 3 : index
      %c0_298 = arith.constant 0 : index
      %c0_299 = arith.constant 0 : index
      %419 = vector.load %arg6[%c3_297, %c0_298, %c0_299] : memref<9x64x128xbf16, #tpu.memory_space<vmem>>, vector<1x64x128xbf16>
      %420 = vector.shape_cast %419 : vector<1x64x128xbf16> to vector<64x128xbf16>
      %cst_300 = arith.constant dense<0.000000e+00> : vector<24x128xf32>
      %421 = tpu.matmul %418, %420, %cst_300 {dimension_numbers = #tpu.dot_dimension_numbers<[1], [0], [0], [1], [0, 0, 1, 1], [], []>} : vector<24x64xbf16>, vector<64x128xbf16>, vector<24x128xf32> -> vector<24x128xf32>
      %422 = arith.addf %414, %421 : vector<24x128xf32>
      %423 = arith.index_cast %arg19 : i32 to index
      %c7_301 = arith.constant 7 : index
      %c0_302 = arith.constant 0 : index
      %424 = vector.load %arg14[%423, %c7_301, %c0_302] : memref<2x42x64xf32, #tpu.memory_space<vmem>>, vector<1x24x64xf32>
      %425 = vector.shape_cast %424 : vector<1x24x64xf32> to vector<24x64xf32>
      %426 = arith.truncf %425 : vector<24x64xf32> to vector<24x64xbf16>
      %c4_303 = arith.constant 4 : index
      %c0_304 = arith.constant 0 : index
      %c0_305 = arith.constant 0 : index
      %427 = vector.load %arg6[%c4_303, %c0_304, %c0_305] : memref<9x64x128xbf16, #tpu.memory_space<vmem>>, vector<1x64x128xbf16>
      %428 = vector.shape_cast %427 : vector<1x64x128xbf16> to vector<64x128xbf16>
      %cst_306 = arith.constant dense<0.000000e+00> : vector<24x128xf32>
      %429 = tpu.matmul %426, %428, %cst_306 {dimension_numbers = #tpu.dot_dimension_numbers<[1], [0], [0], [1], [0, 0, 1, 1], [], []>} : vector<24x64xbf16>, vector<64x128xbf16>, vector<24x128xf32> -> vector<24x128xf32>
      %430 = arith.addf %422, %429 : vector<24x128xf32>
      %431 = arith.index_cast %arg19 : i32 to index
      %c8_307 = arith.constant 8 : index
      %c0_308 = arith.constant 0 : index
      %432 = vector.load %arg14[%431, %c8_307, %c0_308] : memref<2x42x64xf32, #tpu.memory_space<vmem>>, vector<1x24x64xf32>
      %433 = vector.shape_cast %432 : vector<1x24x64xf32> to vector<24x64xf32>
      %434 = arith.truncf %433 : vector<24x64xf32> to vector<24x64xbf16>
      %c5_309 = arith.constant 5 : index
      %c0_310 = arith.constant 0 : index
      %c0_311 = arith.constant 0 : index
      %435 = vector.load %arg6[%c5_309, %c0_310, %c0_311] : memref<9x64x128xbf16, #tpu.memory_space<vmem>>, vector<1x64x128xbf16>
      %436 = vector.shape_cast %435 : vector<1x64x128xbf16> to vector<64x128xbf16>
      %cst_312 = arith.constant dense<0.000000e+00> : vector<24x128xf32>
      %437 = tpu.matmul %434, %436, %cst_312 {dimension_numbers = #tpu.dot_dimension_numbers<[1], [0], [0], [1], [0, 0, 1, 1], [], []>} : vector<24x64xbf16>, vector<64x128xbf16>, vector<24x128xf32> -> vector<24x128xf32>
      %438 = arith.addf %430, %437 : vector<24x128xf32>
      %439 = arith.index_cast %arg19 : i32 to index
      %c12_313 = arith.constant 12 : index
      %c0_314 = arith.constant 0 : index
      %440 = vector.load %arg14[%439, %c12_313, %c0_314] : memref<2x42x64xf32, #tpu.memory_space<vmem>>, vector<1x24x64xf32>
      %441 = vector.shape_cast %440 : vector<1x24x64xf32> to vector<24x64xf32>
      %442 = arith.truncf %441 : vector<24x64xf32> to vector<24x64xbf16>
      %c6_315 = arith.constant 6 : index
      %c0_316 = arith.constant 0 : index
      %c0_317 = arith.constant 0 : index
      %443 = vector.load %arg6[%c6_315, %c0_316, %c0_317] : memref<9x64x128xbf16, #tpu.memory_space<vmem>>, vector<1x64x128xbf16>
      %444 = vector.shape_cast %443 : vector<1x64x128xbf16> to vector<64x128xbf16>
      %cst_318 = arith.constant dense<0.000000e+00> : vector<24x128xf32>
      %445 = tpu.matmul %442, %444, %cst_318 {dimension_numbers = #tpu.dot_dimension_numbers<[1], [0], [0], [1], [0, 0, 1, 1], [], []>} : vector<24x64xbf16>, vector<64x128xbf16>, vector<24x128xf32> -> vector<24x128xf32>
      %446 = arith.addf %438, %445 : vector<24x128xf32>
      %447 = arith.index_cast %arg19 : i32 to index
      %c13_319 = arith.constant 13 : index
      %c0_320 = arith.constant 0 : index
      %448 = vector.load %arg14[%447, %c13_319, %c0_320] : memref<2x42x64xf32, #tpu.memory_space<vmem>>, vector<1x24x64xf32>
      %449 = vector.shape_cast %448 : vector<1x24x64xf32> to vector<24x64xf32>
      %450 = arith.truncf %449 : vector<24x64xf32> to vector<24x64xbf16>
      %c7_321 = arith.constant 7 : index
      %c0_322 = arith.constant 0 : index
      %c0_323 = arith.constant 0 : index
      %451 = vector.load %arg6[%c7_321, %c0_322, %c0_323] : memref<9x64x128xbf16, #tpu.memory_space<vmem>>, vector<1x64x128xbf16>
      %452 = vector.shape_cast %451 : vector<1x64x128xbf16> to vector<64x128xbf16>
      %cst_324 = arith.constant dense<0.000000e+00> : vector<24x128xf32>
      %453 = tpu.matmul %450, %452, %cst_324 {dimension_numbers = #tpu.dot_dimension_numbers<[1], [0], [0], [1], [0, 0, 1, 1], [], []>} : vector<24x64xbf16>, vector<64x128xbf16>, vector<24x128xf32> -> vector<24x128xf32>
      %454 = arith.addf %446, %453 : vector<24x128xf32>
      %455 = arith.index_cast %arg19 : i32 to index
      %c14 = arith.constant 14 : index
      %c0_325 = arith.constant 0 : index
      %456 = vector.load %arg14[%455, %c14, %c0_325] : memref<2x42x64xf32, #tpu.memory_space<vmem>>, vector<1x24x64xf32>
      %457 = vector.shape_cast %456 : vector<1x24x64xf32> to vector<24x64xf32>
      %458 = arith.truncf %457 : vector<24x64xf32> to vector<24x64xbf16>
      %c8_326 = arith.constant 8 : index
      %c0_327 = arith.constant 0 : index
      %c0_328 = arith.constant 0 : index
      %459 = vector.load %arg6[%c8_326, %c0_327, %c0_328] : memref<9x64x128xbf16, #tpu.memory_space<vmem>>, vector<1x64x128xbf16>
      %460 = vector.shape_cast %459 : vector<1x64x128xbf16> to vector<64x128xbf16>
      %cst_329 = arith.constant dense<0.000000e+00> : vector<24x128xf32>
      %461 = tpu.matmul %458, %460, %cst_329 {dimension_numbers = #tpu.dot_dimension_numbers<[1], [0], [0], [1], [0, 0, 1, 1], [], []>} : vector<24x64xbf16>, vector<64x128xbf16>, vector<24x128xf32> -> vector<24x128xf32>
      %462 = arith.addf %454, %461 : vector<24x128xf32>
      %c0_330 = arith.constant 0 : index
      %c0_331 = arith.constant 0 : index
      %463 = vector.load %arg7[%c0_330, %c0_331] : memref<1x128xf32, #tpu.memory_space<vmem>>, vector<1x128xf32>
      %464 = vector.broadcast %463 : vector<1x128xf32> to vector<24x128xf32>
      %465 = arith.addf %462, %464 : vector<24x128xf32>
      %cst_332 = arith.constant 0.000000e+00 : f32
      %466 = vector.broadcast %cst_332 : f32 to vector<24x128xf32>
      %467 = arith.maximumf %465, %466 : vector<24x128xf32>
      %468 = vector.extract_strided_slice %467 {offsets = [0, 0], sizes = [6, 128], strides = [1, 1]} : vector<24x128xf32> to vector<6x128xf32>
      %469 = vector.extract_strided_slice %467 {offsets = [6, 0], sizes = [6, 128], strides = [1, 1]} : vector<24x128xf32> to vector<6x128xf32>
      %470 = arith.maximumf %468, %469 : vector<6x128xf32>
      %c0_333 = arith.constant 0 : index
      %c0_334 = arith.constant 0 : index
      %471 = vector.load %arg18[%c0_333, %c0_334] : memref<6x128xf32, #tpu.memory_space<vmem>>, vector<6x128xf32>
      tpu.vector_store %arg18[%c0_333, %c0_334], %470 {strides = array<i32>} : memref<6x128xf32, #tpu.memory_space<vmem>>, vector<6x128xf32>,
      %c0_335 = arith.constant 0 : index
      %c0_336 = arith.constant 0 : index
      %472 = tpu.strided_load %arg18[%c0_335, %c0_336] {strides = array<i32: 2, 1>} : memref<6x128xf32, #tpu.memory_space<vmem>>, vector<2x128xf32>
      %c1_337 = arith.constant 1 : index
      %c0_338 = arith.constant 0 : index
      %473 = tpu.strided_load %arg18[%c1_337, %c0_338] {strides = array<i32: 2, 1>} : memref<6x128xf32, #tpu.memory_space<vmem>>, vector<2x128xf32>
      %474 = arith.maximumf %472, %473 : vector<2x128xf32>
      %c4_i32 = arith.constant 4 : i32
      %475 = arith.muli %arg19, %c4_i32 : i32
      %c0_i32_339 = arith.constant 0 : i32
      %476 = arith.addi %475, %c0_i32_339 : i32
      %477 = arith.index_cast %476 : i32 to index
      %c0_340 = arith.constant 0 : index
      %478 = vector.load %arg15[%477, %c0_340] : memref<8x128xf32, #tpu.memory_space<vmem>>, vector<2x128xf32>
      tpu.vector_store %arg15[%477, %c0_340], %474 {strides = array<i32>} : memref<8x128xf32, #tpu.memory_space<vmem>>, vector<2x128xf32>,
      %479 = vector.extract_strided_slice %467 {offsets = [12, 0], sizes = [6, 128], strides = [1, 1]} : vector<24x128xf32> to vector<6x128xf32>
      %480 = vector.extract_strided_slice %467 {offsets = [18, 0], sizes = [6, 128], strides = [1, 1]} : vector<24x128xf32> to vector<6x128xf32>
      %481 = arith.maximumf %479, %480 : vector<6x128xf32>
      %c0_341 = arith.constant 0 : index
      %c0_342 = arith.constant 0 : index
      %482 = vector.load %arg18[%c0_341, %c0_342] : memref<6x128xf32, #tpu.memory_space<vmem>>, vector<6x128xf32>
      tpu.vector_store %arg18[%c0_341, %c0_342], %481 {strides = array<i32>} : memref<6x128xf32, #tpu.memory_space<vmem>>, vector<6x128xf32>,
      %c0_343 = arith.constant 0 : index
      %c0_344 = arith.constant 0 : index
      %483 = tpu.strided_load %arg18[%c0_343, %c0_344] {strides = array<i32: 2, 1>} : memref<6x128xf32, #tpu.memory_space<vmem>>, vector<2x128xf32>
      %c1_345 = arith.constant 1 : index
      %c0_346 = arith.constant 0 : index
      %484 = tpu.strided_load %arg18[%c1_345, %c0_346] {strides = array<i32: 2, 1>} : memref<6x128xf32, #tpu.memory_space<vmem>>, vector<2x128xf32>
      %485 = arith.maximumf %483, %484 : vector<2x128xf32>
      %c4_i32_347 = arith.constant 4 : i32
      %486 = arith.muli %arg19, %c4_i32_347 : i32
      %c2_i32_348 = arith.constant 2 : i32
      %487 = arith.addi %486, %c2_i32_348 : i32
      %488 = arith.index_cast %487 : i32 to index
      %c0_349 = arith.constant 0 : index
      %489 = vector.load %arg15[%488, %c0_349] : memref<8x128xf32, #tpu.memory_space<vmem>>, vector<2x128xf32>
      tpu.vector_store %arg15[%488, %c0_349], %485 {strides = array<i32>} : memref<8x128xf32, #tpu.memory_space<vmem>>, vector<2x128xf32>,
    }
    %c2_i32_6 = arith.constant 2 : i32
    %cst_7 = arith.constant 0.000000e+00 : f32
    %5 = vector.broadcast %cst_7 : f32 to vector<2x256xf32>
    %c0_8 = arith.constant 0 : index
    %c0_9 = arith.constant 0 : index
    %6 = tpu.strided_load %arg15[%c0_8, %c0_9] {strides = array<i32: 4, 1>} : memref<8x128xf32, #tpu.memory_space<vmem>>, vector<2x128xf32>
    %7 = arith.truncf %6 : vector<2x128xf32> to vector<2x128xbf16>
    %c0_10 = arith.constant 0 : index
    %c0_11 = arith.constant 0 : index
    %c0_12 = arith.constant 0 : index
    %8 = vector.load %arg8[%c0_10, %c0_11, %c0_12] : memref<4x128x256xbf16, #tpu.memory_space<vmem>>, vector<1x128x256xbf16>
    %9 = vector.shape_cast %8 : vector<1x128x256xbf16> to vector<128x256xbf16>
    %cst_13 = arith.constant dense<0.000000e+00> : vector<2x256xf32>
    %10 = tpu.matmul %7, %9, %cst_13 {dimension_numbers = #tpu.dot_dimension_numbers<[1], [0], [0], [1], [0, 0, 1, 1], [], []>} : vector<2x128xbf16>, vector<128x256xbf16>, vector<2x256xf32> -> vector<2x256xf32>
    %11 = arith.addf %5, %10 : vector<2x256xf32>
    %c1 = arith.constant 1 : index
    %c0_14 = arith.constant 0 : index
    %12 = tpu.strided_load %arg15[%c1, %c0_14] {strides = array<i32: 4, 1>} : memref<8x128xf32, #tpu.memory_space<vmem>>, vector<2x128xf32>
    %13 = arith.truncf %12 : vector<2x128xf32> to vector<2x128xbf16>
    %c1_15 = arith.constant 1 : index
    %c0_16 = arith.constant 0 : index
    %c0_17 = arith.constant 0 : index
    %14 = vector.load %arg8[%c1_15, %c0_16, %c0_17] : memref<4x128x256xbf16, #tpu.memory_space<vmem>>, vector<1x128x256xbf16>
    %15 = vector.shape_cast %14 : vector<1x128x256xbf16> to vector<128x256xbf16>
    %cst_18 = arith.constant dense<0.000000e+00> : vector<2x256xf32>
    %16 = tpu.matmul %13, %15, %cst_18 {dimension_numbers = #tpu.dot_dimension_numbers<[1], [0], [0], [1], [0, 0, 1, 1], [], []>} : vector<2x128xbf16>, vector<128x256xbf16>, vector<2x256xf32> -> vector<2x256xf32>
    %17 = arith.addf %11, %16 : vector<2x256xf32>
    %c2 = arith.constant 2 : index
    %c0_19 = arith.constant 0 : index
    %18 = tpu.strided_load %arg15[%c2, %c0_19] {strides = array<i32: 4, 1>} : memref<8x128xf32, #tpu.memory_space<vmem>>, vector<2x128xf32>
    %19 = arith.truncf %18 : vector<2x128xf32> to vector<2x128xbf16>
    %c2_20 = arith.constant 2 : index
    %c0_21 = arith.constant 0 : index
    %c0_22 = arith.constant 0 : index
    %20 = vector.load %arg8[%c2_20, %c0_21, %c0_22] : memref<4x128x256xbf16, #tpu.memory_space<vmem>>, vector<1x128x256xbf16>
    %21 = vector.shape_cast %20 : vector<1x128x256xbf16> to vector<128x256xbf16>
    %cst_23 = arith.constant dense<0.000000e+00> : vector<2x256xf32>
    %22 = tpu.matmul %19, %21, %cst_23 {dimension_numbers = #tpu.dot_dimension_numbers<[1], [0], [0], [1], [0, 0, 1, 1], [], []>} : vector<2x128xbf16>, vector<128x256xbf16>, vector<2x256xf32> -> vector<2x256xf32>
    %23 = arith.addf %17, %22 : vector<2x256xf32>
    %c3 = arith.constant 3 : index
    %c0_24 = arith.constant 0 : index
    %24 = tpu.strided_load %arg15[%c3, %c0_24] {strides = array<i32: 4, 1>} : memref<8x128xf32, #tpu.memory_space<vmem>>, vector<2x128xf32>
    %25 = arith.truncf %24 : vector<2x128xf32> to vector<2x128xbf16>
    %c3_25 = arith.constant 3 : index
    %c0_26 = arith.constant 0 : index
    %c0_27 = arith.constant 0 : index
    %26 = vector.load %arg8[%c3_25, %c0_26, %c0_27] : memref<4x128x256xbf16, #tpu.memory_space<vmem>>, vector<1x128x256xbf16>
    %27 = vector.shape_cast %26 : vector<1x128x256xbf16> to vector<128x256xbf16>
    %cst_28 = arith.constant dense<0.000000e+00> : vector<2x256xf32>
    %28 = tpu.matmul %25, %27, %cst_28 {dimension_numbers = #tpu.dot_dimension_numbers<[1], [0], [0], [1], [0, 0, 1, 1], [], []>} : vector<2x128xbf16>, vector<128x256xbf16>, vector<2x256xf32> -> vector<2x256xf32>
    %29 = arith.addf %23, %28 : vector<2x256xf32>
    %c0_29 = arith.constant 0 : index
    %c0_30 = arith.constant 0 : index
    %30 = vector.load %arg9[%c0_29, %c0_30] : memref<1x256xf32, #tpu.memory_space<vmem>>, vector<1x256xf32>
    %31 = vector.broadcast %30 : vector<1x256xf32> to vector<2x256xf32>
    %32 = arith.addf %29, %31 : vector<2x256xf32>
    %cst_31 = arith.constant 0.000000e+00 : f32
    %33 = vector.broadcast %cst_31 : f32 to vector<2x256xf32>
    %34 = arith.maximumf %32, %33 : vector<2x256xf32>
    %35 = arith.truncf %34 : vector<2x256xf32> to vector<2x256xbf16>
    %c0_32 = arith.constant 0 : index
    %c0_33 = arith.constant 0 : index
    %36 = vector.load %arg10[%c0_32, %c0_33] : memref<256x384xbf16, #tpu.memory_space<vmem>>, vector<256x384xbf16>
    %cst_34 = arith.constant dense<0.000000e+00> : vector<2x384xf32>
    %37 = tpu.matmul %35, %36, %cst_34 {dimension_numbers = #tpu.dot_dimension_numbers<[1], [0], [0], [1], [0, 0, 1, 1], [], []>} : vector<2x256xbf16>, vector<256x384xbf16>, vector<2x384xf32> -> vector<2x384xf32>
    %c0_35 = arith.constant 0 : index
    %c0_36 = arith.constant 0 : index
    %38 = vector.load %arg11[%c0_35, %c0_36] : memref<1x384xf32, #tpu.memory_space<vmem>>, vector<1x384xf32>
    %39 = vector.broadcast %38 : vector<1x384xf32> to vector<2x384xf32>
    %40 = arith.addf %37, %39 : vector<2x384xf32>
    %c0_37 = arith.constant 0 : index
    %c0_38 = arith.constant 0 : index
    %41 = vector.load %arg12[%c0_37, %c0_38] : memref<2x384xf32, #tpu.memory_space<vmem>>, vector<2x384xf32>
    tpu.vector_store %arg12[%c0_37, %c0_38], %40 {strides = array<i32>} : memref<2x384xf32, #tpu.memory_space<vmem>>, vector<2x384xf32>,
    return
  }
  func.func @transform_0(%arg0: i32) -> (i32, i32, i32) {
    %c0_i32 = arith.constant 0 : i32
    %c0_i32_0 = arith.constant 0 : i32
    %c0_i32_1 = arith.constant 0 : i32
    return %arg0, %c0_i32, %c0_i32_0 : i32, i32, i32
  }
  func.func @transform_1(%arg0: i32) -> (i32, i32, i32) {
    %c0_i32 = arith.constant 0 : i32
    %c0_i32_0 = arith.constant 0 : i32
    %c0_i32_1 = arith.constant 0 : i32
    %c0_i32_2 = arith.constant 0 : i32
    return %c0_i32, %c0_i32_0, %c0_i32_1 : i32, i32, i32
  }
  func.func @transform_2(%arg0: i32) -> (i32, i32) {
    %c0_i32 = arith.constant 0 : i32
    %c0_i32_0 = arith.constant 0 : i32
    %c0_i32_1 = arith.constant 0 : i32
    return %c0_i32, %c0_i32_0 : i32, i32
  }
  func.func @transform_3(%arg0: i32) -> (i32, i32, i32) {
    %c0_i32 = arith.constant 0 : i32
    %c0_i32_0 = arith.constant 0 : i32
    %c0_i32_1 = arith.constant 0 : i32
    %c0_i32_2 = arith.constant 0 : i32
    return %c0_i32, %c0_i32_0, %c0_i32_1 : i32, i32, i32
  }
  func.func @transform_4(%arg0: i32) -> (i32, i32) {
    %c0_i32 = arith.constant 0 : i32
    %c0_i32_0 = arith.constant 0 : i32
    %c0_i32_1 = arith.constant 0 : i32
    return %c0_i32, %c0_i32_0 : i32, i32
  }
  func.func @transform_5(%arg0: i32) -> (i32, i32, i32) {
    %c0_i32 = arith.constant 0 : i32
    %c0_i32_0 = arith.constant 0 : i32
    %c0_i32_1 = arith.constant 0 : i32
    %c0_i32_2 = arith.constant 0 : i32
    return %c0_i32, %c0_i32_0, %c0_i32_1 : i32, i32, i32
  }
  func.func @transform_6(%arg0: i32) -> (i32, i32) {
    %c0_i32 = arith.constant 0 : i32
    %c0_i32_0 = arith.constant 0 : i32
    %c0_i32_1 = arith.constant 0 : i32
    return %c0_i32, %c0_i32_0 : i32, i32
  }
  func.func @transform_7(%arg0: i32) -> (i32, i32, i32) {
    %c0_i32 = arith.constant 0 : i32
    %c0_i32_0 = arith.constant 0 : i32
    %c0_i32_1 = arith.constant 0 : i32
    %c0_i32_2 = arith.constant 0 : i32
    return %c0_i32, %c0_i32_0, %c0_i32_1 : i32, i32, i32
  }
  func.func @transform_8(%arg0: i32) -> (i32, i32) {
    %c0_i32 = arith.constant 0 : i32
    %c0_i32_0 = arith.constant 0 : i32
    %c0_i32_1 = arith.constant 0 : i32
    return %c0_i32, %c0_i32_0 : i32, i32
  }
  func.func @transform_9(%arg0: i32) -> (i32, i32) {
    %c0_i32 = arith.constant 0 : i32
    %c0_i32_0 = arith.constant 0 : i32
    %c0_i32_1 = arith.constant 0 : i32
    return %c0_i32, %c0_i32_0 : i32, i32
  }
  func.func @transform_10(%arg0: i32) -> (i32, i32) {
    %c0_i32 = arith.constant 0 : i32
    %c0_i32_0 = arith.constant 0 : i32
    %c0_i32_1 = arith.constant 0 : i32
    return %c0_i32, %c0_i32_0 : i32, i32
  }
  func.func @transform_11(%arg0: i32) -> (i32, i32) {
    %c0_i32 = arith.constant 0 : i32
    %c0_i32_0 = arith.constant 0 : i32
    return %arg0, %c0_i32 : i32, i32
  }
}

</mosaic_0001>

<llo_original>
// kernel: simple_cnn_forward.1
$region0: #{simple_cnn_forward.1}
  #allocation0 [shape = 'u32[]', space=smem, size = 0x4, offset = 0x4, fixed_abs, tag = 'smem constant byte address 0x4 - core index']
  #allocation1 [shape = 'u32[144,128]{1,0:T(1,128)}', space=vmem, size = 0x12000, scoped, tag = 'internal scratch']
  #allocation2 [shape = 'f32[2,110,32]{2,1,0:T(8,128)}', space=vmem, size = 0x1c000, scoped, tag = 'scratch operand']
  #allocation3 [shape = 'f32[2,42,64]{2,1,0:T(8,128)}', space=vmem, size = 0xc000, scoped, tag = 'scratch operand']
  #allocation4 [shape = 'f32[8,128]{1,0:T(8,128)}', space=vmem, size = 0x1000, scoped, tag = 'scratch operand']
  #allocation5 [shape = 'f32[18,32]{1,0:T(8,128)}', space=vmem, size = 0x3000, scoped, tag = 'scratch operand']
  #allocation6 [shape = 'f32[10,64]{1,0:T(8,128)}', space=vmem, size = 0x2000, scoped, tag = 'scratch operand']
  #allocation7 [shape = 'f32[6,128]{1,0:T(8,128)}', space=vmem, size = 0x1000, scoped, tag = 'scratch operand']
  %s0 = inlined_call_operand.vmem [shape: bf16[2,342,3], index: 0, kind: input, shape index: {}]
  %s1 = inlined_call_operand.vmem [shape: bf16[9,3,32], index: 1, kind: input, shape index: {}]
  %s2 = inlined_call_operand.vmem [shape: f32[1,32], index: 2, kind: input, shape index: {}]
  %s3 = inlined_call_operand.vmem [shape: bf16[9,32,64], index: 3, kind: input, shape index: {}]
  %s4 = inlined_call_operand.vmem [shape: f32[1,64], index: 4, kind: input, shape index: {}]
  %s5 = inlined_call_operand.hbm [shape: bf16[9,64,128], index: 5, kind: input, shape index: {}]
  %s6 = inlined_call_operand.vmem [shape: f32[1,128], index: 6, kind: input, shape index: {}]
  %s7 = inlined_call_operand.vmem [shape: bf16[4,128,256], index: 7, kind: input, shape index: {}]
  %s8 = inlined_call_operand.vmem [shape: f32[1,256], index: 8, kind: input, shape index: {}]
  %s9 = inlined_call_operand.hbm [shape: bf16[256,384], index: 9, kind: input, shape index: {}]
  %s10 = inlined_call_operand.vmem [shape: f32[1,384], index: 10, kind: input, shape index: {}]
  %s11 = inlined_call_operand.vmem [shape: f32[2,384], index: 11, kind: output, shape index: {}]
  %s12 = sld [smem:[#allocation0]]
  $region69: #{simple_cnn_forward.1} parent=0
    _
  %s14 = ssub.s32 1, %s12
  %s15 = scalar_select 0, %s14, %s12
  $region1: #{simple_cnn_forward.1} parent=0
    #allocation8 [shape = 'u8[147456]{0}', space=vmem, size = 0x24000, scoped, tag = 'input window, operand 5, single buffered']
    #allocation9 [shape = 's32[1]{0}', space=sflag, size = 0x4, scoped, tag = 'scoped memory for simple_cnn_forward.1']
    #allocation10 [shape = 'u8[196608]{0}', space=vmem, size = 0x30000, scoped, tag = 'input window, operand 9, single buffered']
    #allocation11 [shape = 's32[1]{0}', space=sflag, size = 0x4, scoped, tag = 'scoped memory for simple_cnn_forward.1']
    %16 = vsyncpa [#allocation9], 0
    %17 = vsyncpa [#allocation11], 0
    // Predicated region
    $region2: #{simple_cnn_forward.1} parent=1 // pred_check
      _
    $region3: #{simple_cnn_forward.1} parent=1 // pred_check_branch
      %19 = sbr.rel (0) target = $region5
    $region4: #{simple_cnn_forward.1} parent=1 // pred_region
      _
    $region5: #{simple_cnn_forward.1} parent=1 // pred_fallthru
      _
    // Predicated region
    $region6: #{simple_cnn_forward.1} parent=1 // pred_check
      _
    $region7: #{simple_cnn_forward.1} parent=1 // pred_check_branch
      %21 = sbr.rel (0) target = $region9
    $region8: #{simple_cnn_forward.1} parent=1 // pred_region
      _
    $region9: #{simple_cnn_forward.1} parent=1 // pred_fallthru
      _
    // Predicated region
    $region10: #{simple_cnn_forward.1} parent=1 // pred_check
      _
    $region11: #{simple_cnn_forward.1} parent=1 // pred_check_branch
      %23 = sbr.rel (0) target = $region13
    $region12: #{simple_cnn_forward.1} parent=1 // pred_region
      _
    $region13: #{simple_cnn_forward.1} parent=1 // pred_fallthru
      _
    // Predicated region
    $region14: #{simple_cnn_forward.1} parent=1 // pred_check
      _
    $region15: #{simple_cnn_forward.1} parent=1 // pred_check_branch
      %25 = sbr.rel (0) target = $region17
    $region16: #{simple_cnn_forward.1} parent=1 // pred_region
      _
    $region17: #{simple_cnn_forward.1} parent=1 // pred_fallthru
      _
    // Predicated region
    $region18: #{simple_cnn_forward.1} parent=1 // pred_check
      _
    $region19: #{simple_cnn_forward.1} parent=1 // pred_check_branch
      %27 = sbr.rel (0) target = $region21
    $region20: #{simple_cnn_forward.1} parent=1 // pred_region
      _
    $region21: #{simple_cnn_forward.1} parent=1 // pred_fallthru
      _
    // Predicated region
    $region22: #{simple_cnn_forward.1} parent=1 // pred_check
      _
    $region23: #{simple_cnn_forward.1} parent=1 // pred_check_branch
      %29 = sbr.rel (0) target = $region25
    $region24: #{simple_cnn_forward.1} parent=1 // pred_region
      %s31 = ssub.s32 4608, 4608
      %32 = vsyncadd [#allocation9], %s31
      %s33 = sshll.u32 [#allocation8], 4
      %s34 = int_to_ptr.vmem [resolvable:$true] %s33
      %39 = dma.hbm_to_vmem [thread:$0]  %s5, 4608, %s34, [#allocation9], 64, 64, 4
    $region25: #{simple_cnn_forward.1} parent=1 // pred_fallthru
      _
    // Predicated region
    $region26: #{simple_cnn_forward.1} parent=1 // pred_check
      _
    $region27: #{simple_cnn_forward.1} parent=1 // pred_check_branch
      %41 = sbr.rel (0) target = $region29
    $region28: #{simple_cnn_forward.1} parent=1 // pred_region
      _
    $region29: #{simple_cnn_forward.1} parent=1 // pred_fallthru
      _
    // Predicated region
    $region30: #{simple_cnn_forward.1} parent=1 // pred_check
      _
    $region31: #{simple_cnn_forward.1} parent=1 // pred_check_branch
      %43 = sbr.rel (0) target = $region33
    $region32: #{simple_cnn_forward.1} parent=1 // pred_region
      _
    $region33: #{simple_cnn_forward.1} parent=1 // pred_fallthru
      _
    // Predicated region
    $region34: #{simple_cnn_forward.1} parent=1 // pred_check
      _
    $region35: #{simple_cnn_forward.1} parent=1 // pred_check_branch
      %45 = sbr.rel (0) target = $region37
    $region36: #{simple_cnn_forward.1} parent=1 // pred_region
      _
    $region37: #{simple_cnn_forward.1} parent=1 // pred_fallthru
      _
    // Predicated region
    $region38: #{simple_cnn_forward.1} parent=1 // pred_check
      _
    $region39: #{simple_cnn_forward.1} parent=1 // pred_check_branch
      %47 = sbr.rel (0) target = $region41
    $region40: #{simple_cnn_forward.1} parent=1 // pred_region
      %s49 = ssub.s32 6144, 6144
      %50 = vsyncadd [#allocation11], %s49
      %s51 = sshll.u32 [#allocation10], 4
      %s52 = int_to_ptr.vmem [resolvable:$true] %s51
      %57 = dma.hbm_to_vmem [thread:$0]  %s9, 6144, %s52, [#allocation11], 192, 192, 12
    $region41: #{simple_cnn_forward.1} parent=1 // pred_fallthru
      _
    // Predicated region
    $region42: #{simple_cnn_forward.1} parent=1 // pred_check
      _
    $region43: #{simple_cnn_forward.1} parent=1 // pred_check_branch
      %59 = sbr.rel (0) target = $region45
    $region44: #{simple_cnn_forward.1} parent=1 // pred_region
      _
    $region45: #{simple_cnn_forward.1} parent=1 // pred_fallthru
      _
    // Predicated region
    $region46: #{simple_cnn_forward.1} parent=1 // pred_check
      _
    $region47: #{simple_cnn_forward.1} parent=1 // pred_check_branch
      %61 = sbr.rel (0) target = $region49
    $region48: #{simple_cnn_forward.1} parent=1 // pred_region
      %62 = dma.done [#allocation9], 4608
    $region49: #{simple_cnn_forward.1} parent=1 // pred_fallthru
      _
    // Predicated region
    $region50: #{simple_cnn_forward.1} parent=1 // pred_check
      _
    $region51: #{simple_cnn_forward.1} parent=1 // pred_check_branch
      %64 = sbr.rel (0) target = $region53
    $region52: #{simple_cnn_forward.1} parent=1 // pred_region
      %65 = dma.done [#allocation11], 6144
    $region53: #{simple_cnn_forward.1} parent=1 // pred_fallthru
      _
    %vm67 = vcmask 261120
    %68 = vst.msk [vmem:[#allocation2] sm:$0xff] %vm67, 0.0
    %69 = vst.msk [vmem:[#allocation2 + $0x8] sm:$0xff] %vm67, 0.0
    %70 = vst.msk [vmem:[#allocation2 + $0x10] sm:$0xff] %vm67, 0.0
    %71 = vst.msk [vmem:[#allocation2 + $0x18] sm:$0xff] %vm67, 0.0
    %72 = vst.msk [vmem:[#allocation2 + $0x20] sm:$0xff] %vm67, 0.0
    %73 = vst.msk [vmem:[#allocation2 + $0x28] sm:$0xff] %vm67, 0.0
    %74 = vst.msk [vmem:[#allocation2 + $0x30] sm:$0xff] %vm67, 0.0
    %75 = vst.msk [vmem:[#allocation2 + $0x38] sm:$0xff] %vm67, 0.0
    %76 = vst.msk [vmem:[#allocation2 + $0x40] sm:$0xff] %vm67, 0.0
    %77 = vst.msk [vmem:[#allocation2 + $0x48] sm:$0xff] %vm67, 0.0
    %78 = vst.msk [vmem:[#allocation2 + $0x50] sm:$0xff] %vm67, 0.0
    %79 = vst.msk [vmem:[#allocation2 + $0x58] sm:$0xff] %vm67, 0.0
    %80 = vst.msk [vmem:[#allocation2 + $0x60] sm:$0xff] %vm67, 0.0
    %vm81 = vcmask 259072
    %82 = vst.msk [vmem:[#allocation2 + $0x68] sm:$0x3f] %vm81, 0.0
    %83 = vst.msk [vmem:[#allocation2 + $0x70] sm:$0xff] %vm67, 0.0
    %84 = vst.msk [vmem:[#allocation2 + $0x78] sm:$0xff] %vm67, 0.0
    %85 = vst.msk [vmem:[#allocation2 + $0x80] sm:$0xff] %vm67, 0.0
    %86 = vst.msk [vmem:[#allocation2 + $0x88] sm:$0xff] %vm67, 0.0
    %87 = vst.msk [vmem:[#allocation2 + $0x90] sm:$0xff] %vm67, 0.0
    %88 = vst.msk [vmem:[#allocation2 + $0x98] sm:$0xff] %vm67, 0.0
    %89 = vst.msk [vmem:[#allocation2 + $0xa0] sm:$0xff] %vm67, 0.0
    %90 = vst.msk [vmem:[#allocation2 + $0xa8] sm:$0xff] %vm67, 0.0
    %91 = vst.msk [vmem:[#allocation2 + $0xb0] sm:$0xff] %vm67, 0.0
    %92 = vst.msk [vmem:[#allocation2 + $0xb8] sm:$0xff] %vm67, 0.0
    %93 = vst.msk [vmem:[#allocation2 + $0xc0] sm:$0xff] %vm67, 0.0
    %94 = vst.msk [vmem:[#allocation2 + $0xc8] sm:$0xff] %vm67, 0.0
    %95 = vst.msk [vmem:[#allocation2 + $0xd0] sm:$0xff] %vm67, 0.0
    %96 = vst.msk [vmem:[#allocation2 + $0xd8] sm:$0x3f] %vm81, 0.0
    %vm97 = vcmask 523264
    %98 = vst.msk [vmem:[#allocation3] sm:$0xff] %vm97, 0.0
    %99 = vst.msk [vmem:[#allocation3 + $0x8] sm:$0xff] %vm97, 0.0
    %100 = vst.msk [vmem:[#allocation3 + $0x10] sm:$0xff] %vm97, 0.0
    %101 = vst.msk [vmem:[#allocation3 + $0x18] sm:$0xff] %vm97, 0.0
    %102 = vst.msk [vmem:[#allocation3 + $0x20] sm:$0xff] %vm97, 0.0
    %vm103 = vcmask 517120
    %104 = vst.msk [vmem:[#allocation3 + $0x28] sm:$0x3] %vm103, 0.0
    %105 = vst.msk [vmem:[#allocation3 + $0x30] sm:$0xff] %vm97, 0.0
    %106 = vst.msk [vmem:[#allocation3 + $0x38] sm:$0xff] %vm97, 0.0
    %107 = vst.msk [vmem:[#allocation3 + $0x40] sm:$0xff] %vm97, 0.0
    %108 = vst.msk [vmem:[#allocation3 + $0x48] sm:$0xff] %vm97, 0.0
    %109 = vst.msk [vmem:[#allocation3 + $0x50] sm:$0xff] %vm97, 0.0
    %110 = vst.msk [vmem:[#allocation3 + $0x58] sm:$0x3] %vm103, 0.0
    loop: start=0, step=1, limit=2
    $region54: #{simple_cnn_forward.1} parent=1 // loop_pre_header
      _
    $region55: #{simple_cnn_forward.1} parent=1 // loop_header
      %s112 = sphi 0, %s116
      %p113 = scmp.ge.s32.totalorder %s112, 2
    $region56: #{simple_cnn_forward.1} parent=1 // loop_header_branch
      %115 = sbr.rel (%p113) target = $region60
    $region57: #{simple_cnn_forward.1} parent=1 // loop_body
      %s117 = smul.u32 %s112, 43
      %s118 = smul.addr %s117, 4
      %s119 = scalar_lea.vmem %s0, %s118
      %v120 = vld [vmem:[%s119] sm:$0xf]
      %v121 = vld [vmem:[%s119 + $0x4] sm:$0xf]
      %v122 = vld [vmem:[%s119 + $0x8] sm:$0xf]
      %v123 = vld [vmem:[%s119 + $0xc] sm:$0xf]
      %v124 = vld [vmem:[%s119 + $0x10] sm:$0xf]
      %v125 = vld [vmem:[%s119 + $0x14] sm:$0xf]
      %v126 = vld [vmem:[%s119 + $0x18] sm:$0xf]
      %v127 = vld [vmem:[%s119 + $0x1c] sm:$0xf]
      %v128 = vld [vmem:[%s119 + $0x20] sm:$0xf]
      %v129 = vld [vmem:[%s119 + $0x24] sm:$0xf]
      %v130 = vld [vmem:[%s119 + $0x28] sm:$0xf]
      %v131 = vld [vmem:[%s119 + $0x2c] sm:$0xf]
      %v132 = vld [vmem:[%s119 + $0x30] sm:$0xf]
      %v133 = vld [vmem:[%s119 + $0x34] sm:$0xf]
      %v134 = vld [vmem:[%s119 + $0x38] sm:$0xf]
      %v135 = vld [vmem:[%s119 + $0x3c] sm:$0xf]
      %v136 = vld [vmem:[%s119 + $0x40] sm:$0xf]
      %v137 = vld [vmem:[%s119 + $0x44] sm:$0xf]
      %v138 = vld [vmem:[%s1] sm:$0x3]
      %v139 = vld [vmem:[%s119 + $0x48] sm:$0x1]
      %s140 = scalar_lea.vmem %s1, 2
      %v141 = vld [vmem:[%s140] sm:$0x3]
      %v161 = vunpack.c.l.b16 %v120
      %v162 = vunpack.c.l.b16 %v121
      %v163 = vunpack.c.l.b16 %v122
      %v164 = vunpack.c.l.b16 %v123
      %v165 = vunpack.c.l.b16 %v124
      %v166 = vunpack.c.l.b16 %v125
      %v167 = vunpack.c.l.b16 %v126
      %v168 = vunpack.c.l.b16 %v127
      %v169 = vunpack.c.l.b16 %v128
      %v170 = vunpack.c.l.b16 %v129
      %v171 = vunpack.c.l.b16 %v130
      %v172 = vunpack.c.l.b16 %v131
      %v173 = vunpack.c.l.b16 %v132
      %v174 = vunpack.c.l.b16 %v133
      %v175 = vunpack.c.l.b16 %v134
      %v176 = vunpack.c.l.b16 %v135
      %v177 = vunpack.c.l.b16 %v136
      %v178 = vunpack.c.l.b16 %v137
      %v179 = vunpack.c.l.b16 %v139
      %v180 = vpack.c.b16 %v162, %v161
      %v181 = vpack.c.b16 %v164, %v163
      %v182 = vpack.c.b16 %v166, %v165
      %v183 = vpack.c.b16 %v168, %v167
      %v184 = vpack.c.b16 %v170, %v169
      %v185 = vpack.c.b16 %v172, %v171
      %v186 = vpack.c.b16 %v174, %v173
      %v187 = vpack.c.b16 %v176, %v175
      %v188 = vpack.c.b16 %v178, %v177
      %v189 = vpack.c.b16 %v179, %v179
      %vm190 = vsmask.f32 7424
      %v192 = vshrl.u32 %v180, 16
      %v194 = vshll.u32 %v180, 16
      %v196 = vrot.slane %v194, 1
      %v197 = vor.u32 %v192, %v196
      %v199 = vshll.u32 %v181, 16
      %v201 = vrot.slane %v199, 1
      %v202 = vsel %vm190, %v197, %v201
      %v203 = vshrl.u32 %v181, 16
      %v205 = vor.u32 %v203, %v201
      %v207 = vshll.u32 %v182, 16
      %v209 = vrot.slane %v207, 1
      %v210 = vsel %vm190, %v205, %v209
      %v211 = vshrl.u32 %v182, 16
      %v213 = vor.u32 %v211, %v209
      %v215 = vshll.u32 %v183, 16
      %v217 = vrot.slane %v215, 1
      %v218 = vsel %vm190, %v213, %v217
      %v219 = vshrl.u32 %v183, 16
      %v221 = vor.u32 %v219, %v217
      %v223 = vshll.u32 %v184, 16
      %v225 = vrot.slane %v223, 1
      %v226 = vsel %vm190, %v221, %v225
      %v227 = vshrl.u32 %v184, 16
      %v229 = vor.u32 %v227, %v225
      %v231 = vshll.u32 %v185, 16
      %v233 = vrot.slane %v231, 1
      %v234 = vsel %vm190, %v229, %v233
      %v235 = vshrl.u32 %v185, 16
      %v237 = vor.u32 %v235, %v233
      %v239 = vshll.u32 %v186, 16
      %v241 = vrot.slane %v239, 1
      %v242 = vsel %vm190, %v237, %v241
      %v243 = vshrl.u32 %v186, 16
      %v245 = vor.u32 %v243, %v241
      %v247 = vshll.u32 %v187, 16
      %v249 = vrot.slane %v247, 1
      %v250 = vsel %vm190, %v245, %v249
      %v251 = vshrl.u32 %v187, 16
      %v253 = vor.u32 %v251, %v249
      %v255 = vshll.u32 %v188, 16
      %v257 = vrot.slane %v255, 1
      %v258 = vsel %vm190, %v253, %v257
      %v259 = vshrl.u32 %v188, 16
      %v261 = vor.u32 %v259, %v257
      %v263 = vshll.u32 %v189, 16
      %v265 = vrot.slane %v263, 1
      %v266 = vsel %vm190, %v261, %v265
      %vm267 = vcmask 23552
      %v269 = vsel %vm267, %v202, 0
      %v272 = vsel %vm267, %v210, 0
      %v275 = vsel %vm267, %v218, 0
      %v278 = vsel %vm267, %v226, 0
      %v281 = vsel %vm267, %v234, 0
      %v284 = vsel %vm267, %v242, 0
      %v287 = vsel %vm267, %v250, 0
      %v290 = vsel %vm267, %v258, 0
      %v293 = vsel %vm267, %v266, 0
      %vm295 = vcmask 1040384
      %vm296 = vcmask 1041408
      %v297 = vsel %vm295, 4294967295, 65535
      %v298 = vsel %vm296, %v297, 0
      %v300 = vand.u32 %v141, %v298
      %302 = vmatprep.subr.bf16.mxu0 0
      %303 = vmatpush1.bf16.msra.mxu0 0
      %304 = vmatprep.subr.bf16.mxu0 0
      %305 = vmatpush1.bf16.msra.mxu0 0
      %306 = vmatprep.subr.bf16.mxu0 0
      %307 = vmatpush1.bf16.msra.mxu0 0
      %308 = vmatprep.subr.bf16.mxu0 0
      %309 = vmatpush1.bf16.msra.mxu0 0
      %310 = vmatprep.subr.bf16.mxu0 0
      %311 = vmatpush1.bf16.msra.mxu0 0
      %312 = vmatprep.subr.bf16.mxu0 0
      %313 = vmatpush1.bf16.msra.mxu0 0
      %314 = vmatprep.subr.bf16.mxu0 0
      %315 = vmatpush1.bf16.msra.mxu0 0
      %316 = vmatprep.subr.bf16.mxu0 0
      %317 = vmatpush1.bf16.msra.mxu0 %v300
      %318 = vmatprep.subr.bf16.mxu0 0
      %319 = vmatpush2.bf16.msra.mxu0 0
      %320 = vmatprep.subr.bf16.mxu0 0
      %321 = vmatpush2.bf16.msra.mxu0 0
      %322 = vmatprep.subr.bf16.mxu0 0
      %323 = vmatpush2.bf16.msra.mxu0 0
      %324 = vmatprep.subr.bf16.mxu0 0
      %325 = vmatpush2.bf16.msra.mxu0 0
      %326 = vmatprep.subr.bf16.mxu0 0
      %327 = vmatpush2.bf16.msra.mxu0 0
      %328 = vmatprep.subr.bf16.mxu0 0
      %329 = vmatpush2.bf16.msra.mxu0 0
      %330 = vmatprep.subr.bf16.mxu0 0
      %331 = vmatpush2.bf16.msra.mxu0 0
      %332 = vmatprep.subr.bf16.mxu0 0
      %333 = vmatpush2.bf16.msra.mxu0 0
      %334 = vmatprep.mubr.bf16.mxu0 0
      %335 = vmatmul.mubr.bf16.gmra.mxu0 %v269
      %v336 = vpop.f32.mrf.mxu0
      %v337 = vadd.f32 0.0, %v336
      %v338 = vpop.f32.mrf.mxu0
      %v339 = vpop.f32.mrf.mxu0
      %v340 = vadd.f32 0.0, %v339
      %v341 = vpop.f32.mrf.mxu0
      %342 = vmatprep.mubr.bf16.mxu0 0
      %343 = vmatmul.mubr.bf16.gmra.mxu0 %v272
      %v344 = vpop.f32.mrf.mxu0
      %v345 = vadd.f32 0.0, %v344
      %v346 = vpop.f32.mrf.mxu0
      %v347 = vpop.f32.mrf.mxu0
      %v348 = vadd.f32 0.0, %v347
      %v349 = vpop.f32.mrf.mxu0
      %350 = vmatprep.mubr.bf16.mxu0 0
      %351 = vmatmul.mubr.bf16.gmra.mxu0 %v275
      %v352 = vpop.f32.mrf.mxu0
      %v353 = vadd.f32 0.0, %v352
      %v354 = vpop.f32.mrf.mxu0
      %v355 = vpop.f32.mrf.mxu0
      %v356 = vadd.f32 0.0, %v355
      %v357 = vpop.f32.mrf.mxu0
      %358 = vmatprep.mubr.bf16.mxu0 0
      %359 = vmatmul.mubr.bf16.gmra.mxu0 %v278
      %v360 = vpop.f32.mrf.mxu0
      %v361 = vadd.f32 0.0, %v360
      %v362 = vpop.f32.mrf.mxu0
      %v363 = vpop.f32.mrf.mxu0
      %v364 = vadd.f32 0.0, %v363
      %v365 = vpop.f32.mrf.mxu0
      %366 = vmatprep.mubr.bf16.mxu0 0
      %367 = vmatmul.mubr.bf16.gmra.mxu0 %v281
      %v368 = vpop.f32.mrf.mxu0
      %v369 = vadd.f32 0.0, %v368
      %v370 = vpop.f32.mrf.mxu0
      %v371 = vpop.f32.mrf.mxu0
      %v372 = vadd.f32 0.0, %v371
      %v373 = vpop.f32.mrf.mxu0
      %374 = vmatprep.mubr.bf16.mxu0 0
      %375 = vmatmul.mubr.bf16.gmra.mxu0 %v284
      %v376 = vpop.f32.mrf.mxu0
      %v377 = vadd.f32 0.0, %v376
      %v378 = vpop.f32.mrf.mxu0
      %v379 = vpop.f32.mrf.mxu0
      %v380 = vadd.f32 0.0, %v379
      %v381 = vpop.f32.mrf.mxu0
      %382 = vmatprep.mubr.bf16.mxu0 0
      %383 = vmatmul.mubr.bf16.gmra.mxu0 %v287
      %v384 = vpop.f32.mrf.mxu0
      %v385 = vadd.f32 0.0, %v384
      %v386 = vpop.f32.mrf.mxu0
      %v387 = vpop.f32.mrf.mxu0
      %v388 = vadd.f32 0.0, %v387
      %v389 = vpop.f32.mrf.mxu0
      %390 = vmatprep.mubr.bf16.mxu0 0
      %391 = vmatmul.mubr.bf16.gmra.mxu0 %v290
      %v392 = vpop.f32.mrf.mxu0
      %v393 = vadd.f32 0.0, %v392
      %v394 = vpop.f32.mrf.mxu0
      %v395 = vpop.f32.mrf.mxu0
      %v396 = vadd.f32 0.0, %v395
      %v397 = vpop.f32.mrf.mxu0
      %398 = vmatprep.mubr.bf16.mxu0 0
      %399 = vmatmul.mubr.bf16.gmra.mxu0 %v293
      %v400 = vpop.f32.mrf.mxu0
      %v401 = vadd.f32 0.0, %v400
      %v402 = vpop.f32.mrf.mxu0
      %v403 = vpop.f32.mrf.mxu0
      %v404 = vadd.f32 0.0, %v403
      %v405 = vpop.f32.mrf.mxu0
      %406 = vdwg.mxu0
      %v407 = vsel %vm267, %v180, 0
      %v409 = vsel %vm267, %v181, 0
      %v411 = vsel %vm267, %v182, 0
      %v413 = vsel %vm267, %v183, 0
      %v415 = vsel %vm267, %v184, 0
      %v417 = vsel %vm267, %v185, 0
      %v419 = vsel %vm267, %v186, 0
      %v421 = vsel %vm267, %v187, 0
      %v423 = vsel %vm267, %v188, 0
      %v426 = vand.u32 %v138, %v298
      %428 = vmatprep.subr.bf16.mxu0 0
      %429 = vmatpush1.bf16.msra.mxu0 0
      %430 = vmatprep.subr.bf16.mxu0 0
      %431 = vmatpush1.bf16.msra.mxu0 0
      %432 = vmatprep.subr.bf16.mxu0 0
      %433 = vmatpush1.bf16.msra.mxu0 0
      %434 = vmatprep.subr.bf16.mxu0 0
      %435 = vmatpush1.bf16.msra.mxu0 0
      %436 = vmatprep.subr.bf16.mxu0 0
      %437 = vmatpush1.bf16.msra.mxu0 0
      %438 = vmatprep.subr.bf16.mxu0 0
      %439 = vmatpush1.bf16.msra.mxu0 0
      %440 = vmatprep.subr.bf16.mxu0 0
      %441 = vmatpush1.bf16.msra.mxu0 0
      %442 = vmatprep.subr.bf16.mxu0 0
      %443 = vmatpush1.bf16.msra.mxu0 %v426
      %444 = vmatprep.subr.bf16.mxu0 0
      %445 = vmatpush2.bf16.msra.mxu0 0
      %446 = vmatprep.subr.bf16.mxu0 0
      %447 = vmatpush2.bf16.msra.mxu0 0
      %448 = vmatprep.subr.bf16.mxu0 0
      %449 = vmatpush2.bf16.msra.mxu0 0
      %450 = vmatprep.subr.bf16.mxu0 0
      %451 = vmatpush2.bf16.msra.mxu0 0
      %452 = vmatprep.subr.bf16.mxu0 0
      %453 = vmatpush2.bf16.msra.mxu0 0
      %454 = vmatprep.subr.bf16.mxu0 0
      %455 = vmatpush2.bf16.msra.mxu0 0
      %456 = vmatprep.subr.bf16.mxu0 0
      %457 = vmatpush2.bf16.msra.mxu0 0
      %458 = vmatprep.subr.bf16.mxu0 0
      %459 = vmatpush2.bf16.msra.mxu0 0
      %460 = vmatprep.mubr.bf16.mxu0 0
      %461 = vmatmul.mubr.bf16.gmra.mxu0 %v407
      %v462 = vpop.f32.mrf.mxu0
      %v463 = vadd.f32 %v337, %v462
      %v464 = vpop.f32.mrf.mxu0
      %v465 = vpop.f32.mrf.mxu0
      %v466 = vadd.f32 %v340, %v465
      %v467 = vpop.f32.mrf.mxu0
      %468 = vmatprep.mubr.bf16.mxu0 0
      %469 = vmatmul.mubr.bf16.gmra.mxu0 %v409
      %v470 = vpop.f32.mrf.mxu0
      %v471 = vadd.f32 %v345, %v470
      %v472 = vpop.f32.mrf.mxu0
      %v473 = vpop.f32.mrf.mxu0
      %v474 = vadd.f32 %v348, %v473
      %v475 = vpop.f32.mrf.mxu0
      %476 = vmatprep.mubr.bf16.mxu0 0
      %477 = vmatmul.mubr.bf16.gmra.mxu0 %v411
      %v478 = vpop.f32.mrf.mxu0
      %v479 = vadd.f32 %v353, %v478
      %v480 = vpop.f32.mrf.mxu0
      %v481 = vpop.f32.mrf.mxu0
      %v482 = vadd.f32 %v356, %v481
      %v483 = vpop.f32.mrf.mxu0
      %484 = vmatprep.mubr.bf16.mxu0 0
      %485 = vmatmul.mubr.bf16.gmra.mxu0 %v413
      %v486 = vpop.f32.mrf.mxu0
      %v487 = vadd.f32 %v361, %v486
      %v488 = vpop.f32.mrf.mxu0
      %v489 = vpop.f32.mrf.mxu0
      %v490 = vadd.f32 %v364, %v489
      %v491 = vpop.f32.mrf.mxu0
      %492 = vmatprep.mubr.bf16.mxu0 0
      %493 = vmatmul.mubr.bf16.gmra.mxu0 %v415
      %v494 = vpop.f32.mrf.mxu0
      %v495 = vadd.f32 %v369, %v494
      %v496 = vpop.f32.mrf.mxu0
      %v497 = vpop.f32.mrf.mxu0
      %v498 = vadd.f32 %v372, %v497
      %v499 = vpop.f32.mrf.mxu0
      %500 = vmatprep.mubr.bf16.mxu0 0
      %501 = vmatmul.mubr.bf16.gmra.mxu0 %v417
      %v502 = vpop.f32.mrf.mxu0
      %v503 = vadd.f32 %v377, %v502
      %v504 = vpop.f32.mrf.mxu0
      %v505 = vpop.f32.mrf.mxu0
      %v506 = vadd.f32 %v380, %v505
      %v507 = vpop.f32.mrf.mxu0
      %508 = vmatprep.mubr.bf16.mxu0 0
      %509 = vmatmul.mubr.bf16.gmra.mxu0 %v419
      %v510 = vpop.f32.mrf.mxu0
      %v511 = vadd.f32 %v385, %v510
      %v512 = vpop.f32.mrf.mxu0
      %v513 = vpop.f32.mrf.mxu0
      %v514 = vadd.f32 %v388, %v513
      %v515 = vpop.f32.mrf.mxu0
      %516 = vmatprep.mubr.bf16.mxu0 0
      %517 = vmatmul.mubr.bf16.gmra.mxu0 %v421
      %v518 = vpop.f32.mrf.mxu0
      %v519 = vadd.f32 %v393, %v518
      %v520 = vpop.f32.mrf.mxu0
      %v521 = vpop.f32.mrf.mxu0
      %v522 = vadd.f32 %v396, %v521
      %v523 = vpop.f32.mrf.mxu0
      %524 = vmatprep.mubr.bf16.mxu0 0
      %525 = vmatmul.mubr.bf16.gmra.mxu0 %v423
      %v526 = vpop.f32.mrf.mxu0
      %v527 = vadd.f32 %v401, %v526
      %v528 = vpop.f32.mrf.mxu0
      %v529 = vpop.f32.mrf.mxu0
      %v530 = vadd.f32 %v404, %v529
      %v531 = vpop.f32.mrf.mxu0
      %532 = vdwg.mxu0
      %v533 = vld [vmem:[%s119] sm:$0xe]
      %s534 = scalar_lea.vmem %s1, 4
      %v535 = vld [vmem:[%s534] sm:$0x3]
      %v537 = vunpack.c.l.b16 %v533
      %v538 = vpack.c.b16 %v162, %v537
      %vm539 = vcmask 1046528
      %v540 = vrot.slane %v538, 1
      %v541 = vrot.slane %v181, 1
      %v542 = vsel %vm539, %v540, %v541
      %v543 = vrot.slane %v182, 1
      %v544 = vsel %vm539, %v541, %v543
      %v545 = vrot.slane %v183, 1
      %v546 = vsel %vm539, %v543, %v545
      %v547 = vrot.slane %v184, 1
      %v548 = vsel %vm539, %v545, %v547
      %v549 = vrot.slane %v185, 1
      %v550 = vsel %vm539, %v547, %v549
      %v551 = vrot.slane %v186, 1
      %v552 = vsel %vm539, %v549, %v551
      %v553 = vrot.slane %v187, 1
      %v554 = vsel %vm539, %v551, %v553
      %v555 = vrot.slane %v188, 1
      %v556 = vsel %vm539, %v553, %v555
      %v557 = vrot.slane %v189, 1
      %v558 = vsel %vm539, %v555, %v557
      %v560 = vsel %vm267, %v542, 0
      %v563 = vsel %vm267, %v544, 0
      %v566 = vsel %vm267, %v546, 0
      %v569 = vsel %vm267, %v548, 0
      %v572 = vsel %vm267, %v550, 0
      %v575 = vsel %vm267, %v552, 0
      %v578 = vsel %vm267, %v554, 0
      %v581 = vsel %vm267, %v556, 0
      %v584 = vsel %vm267, %v558, 0
      %v587 = vand.u32 %v535, %v298
      %589 = vmatprep.subr.bf16.mxu0 0
      %590 = vmatpush1.bf16.msra.mxu0 0
      %591 = vmatprep.subr.bf16.mxu0 0
      %592 = vmatpush1.bf16.msra.mxu0 0
      %593 = vmatprep.subr.bf16.mxu0 0
      %594 = vmatpush1.bf16.msra.mxu0 0
      %595 = vmatprep.subr.bf16.mxu0 0
      %596 = vmatpush1.bf16.msra.mxu0 0
      %597 = vmatprep.subr.bf16.mxu0 0
      %598 = vmatpush1.bf16.msra.mxu0 0
      %599 = vmatprep.subr.bf16.mxu0 0
      %600 = vmatpush1.bf16.msra.mxu0 0
      %601 = vmatprep.subr.bf16.mxu0 0
      %602 = vmatpush1.bf16.msra.mxu0 0
      %603 = vmatprep.subr.bf16.mxu0 0
      %604 = vmatpush1.bf16.msra.mxu0 %v587
      %605 = vmatprep.subr.bf16.mxu0 0
      %606 = vmatpush2.bf16.msra.mxu0 0
      %607 = vmatprep.subr.bf16.mxu0 0
      %608 = vmatpush2.bf16.msra.mxu0 0
      %609 = vmatprep.subr.bf16.mxu0 0
      %610 = vmatpush2.bf16.msra.mxu0 0
      %611 = vmatprep.subr.bf16.mxu0 0
      %612 = vmatpush2.bf16.msra.mxu0 0
      %613 = vmatprep.subr.bf16.mxu0 0
      %614 = vmatpush2.bf16.msra.mxu0 0
      %615 = vmatprep.subr.bf16.mxu0 0
      %616 = vmatpush2.bf16.msra.mxu0 0
      %617 = vmatprep.subr.bf16.mxu0 0
      %618 = vmatpush2.bf16.msra.mxu0 0
      %619 = vmatprep.subr.bf16.mxu0 0
      %620 = vmatpush2.bf16.msra.mxu0 0
      %621 = vmatprep.mubr.bf16.mxu0 0
      %622 = vmatmul.mubr.bf16.gmra.mxu0 %v560
      %v623 = vpop.f32.mrf.mxu0
      %v624 = vadd.f32 0.0, %v623
      %v625 = vpop.f32.mrf.mxu0
      %v626 = vpop.f32.mrf.mxu0
      %v627 = vadd.f32 0.0, %v626
      %v628 = vpop.f32.mrf.mxu0
      %629 = vmatprep.mubr.bf16.mxu0 0
      %630 = vmatmul.mubr.bf16.gmra.mxu0 %v563
      %v631 = vpop.f32.mrf.mxu0
      %v632 = vadd.f32 0.0, %v631
      %v633 = vpop.f32.mrf.mxu0
      %v634 = vpop.f32.mrf.mxu0
      %v635 = vadd.f32 0.0, %v634
      %v636 = vpop.f32.mrf.mxu0
      %637 = vmatprep.mubr.bf16.mxu0 0
      %638 = vmatmul.mubr.bf16.gmra.mxu0 %v566
      %v639 = vpop.f32.mrf.mxu0
      %v640 = vadd.f32 0.0, %v639
      %v641 = vpop.f32.mrf.mxu0
      %v642 = vpop.f32.mrf.mxu0
      %v643 = vadd.f32 0.0, %v642
      %v644 = vpop.f32.mrf.mxu0
      %645 = vmatprep.mubr.bf16.mxu0 0
      %646 = vmatmul.mubr.bf16.gmra.mxu0 %v569
      %v647 = vpop.f32.mrf.mxu0
      %v648 = vadd.f32 0.0, %v647
      %v649 = vpop.f32.mrf.mxu0
      %v650 = vpop.f32.mrf.mxu0
      %v651 = vadd.f32 0.0, %v650
      %v652 = vpop.f32.mrf.mxu0
      %653 = vmatprep.mubr.bf16.mxu0 0
      %654 = vmatmul.mubr.bf16.gmra.mxu0 %v572
      %v655 = vpop.f32.mrf.mxu0
      %v656 = vadd.f32 0.0, %v655
      %v657 = vpop.f32.mrf.mxu0
      %v658 = vpop.f32.mrf.mxu0
      %v659 = vadd.f32 0.0, %v658
      %v660 = vpop.f32.mrf.mxu0
      %661 = vmatprep.mubr.bf16.mxu0 0
      %662 = vmatmul.mubr.bf16.gmra.mxu0 %v575
      %v663 = vpop.f32.mrf.mxu0
      %v664 = vadd.f32 0.0, %v663
      %v665 = vpop.f32.mrf.mxu0
      %v666 = vpop.f32.mrf.mxu0
      %v667 = vadd.f32 0.0, %v666
      %v668 = vpop.f32.mrf.mxu0
      %669 = vmatprep.mubr.bf16.mxu0 0
      %670 = vmatmul.mubr.bf16.gmra.mxu0 %v578
      %v671 = vpop.f32.mrf.mxu0
      %v672 = vadd.f32 0.0, %v671
      %v673 = vpop.f32.mrf.mxu0
      %v674 = vpop.f32.mrf.mxu0
      %v675 = vadd.f32 0.0, %v674
      %v676 = vpop.f32.mrf.mxu0
      %677 = vmatprep.mubr.bf16.mxu0 0
      %678 = vmatmul.mubr.bf16.gmra.mxu0 %v581
      %v679 = vpop.f32.mrf.mxu0
      %v680 = vadd.f32 0.0, %v679
      %v681 = vpop.f32.mrf.mxu0
      %v682 = vpop.f32.mrf.mxu0
      %v683 = vadd.f32 0.0, %v682
      %v684 = vpop.f32.mrf.mxu0
      %685 = vmatprep.mubr.bf16.mxu0 0
      %686 = vmatmul.mubr.bf16.gmra.mxu0 %v584
      %v687 = vpop.f32.mrf.mxu0
      %v688 = vadd.f32 0.0, %v687
      %v689 = vpop.f32.mrf.mxu0
      %v690 = vpop.f32.mrf.mxu0
      %v691 = vadd.f32 0.0, %v690
      %v692 = vpop.f32.mrf.mxu0
      %693 = vdwg.mxu0
      %v694 = vadd.f32 %v463, %v624
      %v695 = vadd.f32 %v466, %v627
      %v696 = vadd.f32 %v471, %v632
      %v697 = vadd.f32 %v474, %v635
      %v698 = vadd.f32 %v479, %v640
      %v699 = vadd.f32 %v482, %v643
      %v700 = vadd.f32 %v487, %v648
      %v701 = vadd.f32 %v490, %v651
      %v702 = vadd.f32 %v495, %v656
      %v703 = vadd.f32 %v498, %v659
      %v704 = vadd.f32 %v503, %v664
      %v705 = vadd.f32 %v506, %v667
      %v706 = vadd.f32 %v511, %v672
      %v707 = vadd.f32 %v514, %v675
      %v708 = vadd.f32 %v519, %v680
      %v709 = vadd.f32 %v522, %v683
      %v710 = vadd.f32 %v527, %v688
      %v711 = vadd.f32 %v530, %v691
      %v712 = vld [vmem:[%s119 + $0x8] sm:$0xe]
      %v713 = vld [vmem:[%s119 + $0xc] sm:$0xf]
      %v714 = vld [vmem:[%s119 + $0x10] sm:$0xf]
      %v715 = vld [vmem:[%s119 + $0x14] sm:$0xf]
      %v716 = vld [vmem:[%s119 + $0x18] sm:$0xf]
      %v717 = vld [vmem:[%s119 + $0x1c] sm:$0xf]
      %v718 = vld [vmem:[%s119 + $0x20] sm:$0xf]
      %v719 = vld [vmem:[%s119 + $0x24] sm:$0xf]
      %v720 = vld [vmem:[%s119 + $0x28] sm:$0xf]
      %v721 = vld [vmem:[%s119 + $0x2c] sm:$0xf]
      %v722 = vld [vmem:[%s119 + $0x30] sm:$0xf]
      %v723 = vld [vmem:[%s119 + $0x34] sm:$0xf]
      %v724 = vld [vmem:[%s119 + $0x38] sm:$0xf]
      %v725 = vld [vmem:[%s119 + $0x3c] sm:$0xf]
      %v726 = vld [vmem:[%s119 + $0x40] sm:$0xf]
      %v727 = vld [vmem:[%s119 + $0x44] sm:$0xf]
      %v728 = vld [vmem:[%s119 + $0x48] sm:$0xf]
      %v729 = vld [vmem:[%s119 + $0x4c] sm:$0xf]
      %v730 = vld [vmem:[%s119 + $0x50] sm:$0x1]
      %s731 = scalar_lea.vmem %s1, 6
      %v732 = vld [vmem:[%s731] sm:$0x3]
      %v752 = vunpack.c.l.b16 %v712
      %v753 = vunpack.c.l.b16 %v713
      %v754 = vunpack.c.l.b16 %v714
      %v755 = vunpack.c.l.b16 %v715
      %v756 = vunpack.c.l.b16 %v716
      %v757 = vunpack.c.l.b16 %v717
      %v758 = vunpack.c.l.b16 %v718
      %v759 = vunpack.c.l.b16 %v719
      %v760 = vunpack.c.l.b16 %v720
      %v761 = vunpack.c.l.b16 %v721
      %v762 = vunpack.c.l.b16 %v722
      %v763 = vunpack.c.l.b16 %v723
      %v764 = vunpack.c.l.b16 %v724
      %v765 = vunpack.c.l.b16 %v725
      %v766 = vunpack.c.l.b16 %v726
      %v767 = vunpack.c.l.b16 %v727
      %v768 = vunpack.c.l.b16 %v728
      %v769 = vunpack.c.l.b16 %v729
      %v770 = vunpack.c.l.b16 %v730
      %v771 = vpack.c.b16 %v753, %v752
      %v772 = vpack.c.b16 %v755, %v754
      %v773 = vpack.c.b16 %v757, %v756
      %v774 = vpack.c.b16 %v759, %v758
      %v775 = vpack.c.b16 %v761, %v760
      %v776 = vpack.c.b16 %v763, %v762
      %v777 = vpack.c.b16 %v765, %v764
      %v778 = vpack.c.b16 %v767, %v766
      %v779 = vpack.c.b16 %v769, %v768
      %v780 = vpack.c.b16 %v770, %v770
      %v781 = vrot.slane %v771, 1
      %v782 = vrot.slane %v772, 1
      %v783 = vsel %vm539, %v781, %v782
      %v784 = vrot.slane %v773, 1
      %v785 = vsel %vm539, %v782, %v784
      %v786 = vrot.slane %v774, 1
      %v787 = vsel %vm539, %v784, %v786
      %v788 = vrot.slane %v775, 1
      %v789 = vsel %vm539, %v786, %v788
      %v790 = vrot.slane %v776, 1
      %v791 = vsel %vm539, %v788, %v790
      %v792 = vrot.slane %v777, 1
      %v793 = vsel %vm539, %v790, %v792
      %v794 = vrot.slane %v778, 1
      %v795 = vsel %vm539, %v792, %v794
      %v796 = vrot.slane %v779, 1
      %v797 = vsel %vm539, %v794, %v796
      %v798 = vrot.slane %v780, 1
      %v799 = vsel %vm539, %v796, %v798
      %v801 = vsel %vm267, %v783, 0
      %v804 = vsel %vm267, %v785, 0
      %v807 = vsel %vm267, %v787, 0
      %v810 = vsel %vm267, %v789, 0
      %v813 = vsel %vm267, %v791, 0
      %v816 = vsel %vm267, %v793, 0
      %v819 = vsel %vm267, %v795, 0
      %v822 = vsel %vm267, %v797, 0
      %v825 = vsel %vm267, %v799, 0
      %v828 = vand.u32 %v732, %v298
      %830 = vmatprep.subr.bf16.mxu0 0
      %831 = vmatpush1.bf16.msra.mxu0 0
      %832 = vmatprep.subr.bf16.mxu0 0
      %833 = vmatpush1.bf16.msra.mxu0 0
      %834 = vmatprep.subr.bf16.mxu0 0
      %835 = vmatpush1.bf16.msra.mxu0 0
      %836 = vmatprep.subr.bf16.mxu0 0
      %837 = vmatpush1.bf16.msra.mxu0 0
      %838 = vmatprep.subr.bf16.mxu0 0
      %839 = vmatpush1.bf16.msra.mxu0 0
      %840 = vmatprep.subr.bf16.mxu0 0
      %841 = vmatpush1.bf16.msra.mxu0 0
      %842 = vmatprep.subr.bf16.mxu0 0
      %843 = vmatpush1.bf16.msra.mxu0 0
      %844 = vmatprep.subr.bf16.mxu0 0
      %845 = vmatpush1.bf16.msra.mxu0 %v828
      %846 = vmatprep.subr.bf16.mxu0 0
      %847 = vmatpush2.bf16.msra.mxu0 0
      %848 = vmatprep.subr.bf16.mxu0 0
      %849 = vmatpush2.bf16.msra.mxu0 0
      %850 = vmatprep.subr.bf16.mxu0 0
      %851 = vmatpush2.bf16.msra.mxu0 0
      %852 = vmatprep.subr.bf16.mxu0 0
      %853 = vmatpush2.bf16.msra.mxu0 0
      %854 = vmatprep.subr.bf16.mxu0 0
      %855 = vmatpush2.bf16.msra.mxu0 0
      %856 = vmatprep.subr.bf16.mxu0 0
      %857 = vmatpush2.bf16.msra.mxu0 0
      %858 = vmatprep.subr.bf16.mxu0 0
      %859 = vmatpush2.bf16.msra.mxu0 0
      %860 = vmatprep.subr.bf16.mxu0 0
      %861 = vmatpush2.bf16.msra.mxu0 0
      %862 = vmatprep.mubr.bf16.mxu0 0
      %863 = vmatmul.mubr.bf16.gmra.mxu0 %v801
      %v864 = vpop.f32.mrf.mxu0
      %v865 = vadd.f32 0.0, %v864
      %v866 = vpop.f32.mrf.mxu0
      %v867 = vpop.f32.mrf.mxu0
      %v868 = vadd.f32 0.0, %v867
      %v869 = vpop.f32.mrf.mxu0
      %870 = vmatprep.mubr.bf16.mxu0 0
      %871 = vmatmul.mubr.bf16.gmra.mxu0 %v804
      %v872 = vpop.f32.mrf.mxu0
      %v873 = vadd.f32 0.0, %v872
      %v874 = vpop.f32.mrf.mxu0
      %v875 = vpop.f32.mrf.mxu0
      %v876 = vadd.f32 0.0, %v875
      %v877 = vpop.f32.mrf.mxu0
      %878 = vmatprep.mubr.bf16.mxu0 0
      %879 = vmatmul.mubr.bf16.gmra.mxu0 %v807
      %v880 = vpop.f32.mrf.mxu0
      %v881 = vadd.f32 0.0, %v880
      %v882 = vpop.f32.mrf.mxu0
      %v883 = vpop.f32.mrf.mxu0
      %v884 = vadd.f32 0.0, %v883
      %v885 = vpop.f32.mrf.mxu0
      %886 = vmatprep.mubr.bf16.mxu0 0
      %887 = vmatmul.mubr.bf16.gmra.mxu0 %v810
      %v888 = vpop.f32.mrf.mxu0
      %v889 = vadd.f32 0.0, %v888
      %v890 = vpop.f32.mrf.mxu0
      %v891 = vpop.f32.mrf.mxu0
      %v892 = vadd.f32 0.0, %v891
      %v893 = vpop.f32.mrf.mxu0
      %894 = vmatprep.mubr.bf16.mxu0 0
      %895 = vmatmul.mubr.bf16.gmra.mxu0 %v813
      %v896 = vpop.f32.mrf.mxu0
      %v897 = vadd.f32 0.0, %v896
      %v898 = vpop.f32.mrf.mxu0
      %v899 = vpop.f32.mrf.mxu0
      %v900 = vadd.f32 0.0, %v899
      %v901 = vpop.f32.mrf.mxu0
      %902 = vmatprep.mubr.bf16.mxu0 0
      %903 = vmatmul.mubr.bf16.gmra.mxu0 %v816
      %v904 = vpop.f32.mrf.mxu0
      %v905 = vadd.f32 0.0, %v904
      %v906 = vpop.f32.mrf.mxu0
      %v907 = vpop.f32.mrf.mxu0
      %v908 = vadd.f32 0.0, %v907
      %v909 = vpop.f32.mrf.mxu0
      %910 = vmatprep.mubr.bf16.mxu0 0
      %911 = vmatmul.mubr.bf16.gmra.mxu0 %v819
      %v912 = vpop.f32.mrf.mxu0
      %v913 = vadd.f32 0.0, %v912
      %v914 = vpop.f32.mrf.mxu0
      %v915 = vpop.f32.mrf.mxu0
      %v916 = vadd.f32 0.0, %v915
      %v917 = vpop.f32.mrf.mxu0
      %918 = vmatprep.mubr.bf16.mxu0 0
      %919 = vmatmul.mubr.bf16.gmra.mxu0 %v822
      %v920 = vpop.f32.mrf.mxu0
      %v921 = vadd.f32 0.0, %v920
      %v922 = vpop.f32.mrf.mxu0
      %v923 = vpop.f32.mrf.mxu0
      %v924 = vadd.f32 0.0, %v923
      %v925 = vpop.f32.mrf.mxu0
      %926 = vmatprep.mubr.bf16.mxu0 0
      %927 = vmatmul.mubr.bf16.gmra.mxu0 %v825
      %v928 = vpop.f32.mrf.mxu0
      %v929 = vadd.f32 0.0, %v928
      %v930 = vpop.f32.mrf.mxu0
      %v931 = vpop.f32.mrf.mxu0
      %v932 = vadd.f32 0.0, %v931
      %v933 = vpop.f32.mrf.mxu0
      %934 = vdwg.mxu0
      %v935 = vadd.f32 %v694, %v865
      %v936 = vadd.f32 %v695, %v868
      %v937 = vadd.f32 %v696, %v873
      %v938 = vadd.f32 %v697, %v876
      %v939 = vadd.f32 %v698, %v881
      %v940 = vadd.f32 %v699, %v884
      %v941 = vadd.f32 %v700, %v889
      %v942 = vadd.f32 %v701, %v892
      %v943 = vadd.f32 %v702, %v897
      %v944 = vadd.f32 %v703, %v900
      %v945 = vadd.f32 %v704, %v905
      %v946 = vadd.f32 %v705, %v908
      %v947 = vadd.f32 %v706, %v913
      %v948 = vadd.f32 %v707, %v916
      %v949 = vadd.f32 %v708, %v921
      %v950 = vadd.f32 %v709, %v924
      %v951 = vadd.f32 %v710, %v929
      %v952 = vadd.f32 %v711, %v932
      %v953 = vld [vmem:[%s119 + $0x50] sm:$0x3]
      %s954 = scalar_lea.vmem %s1, 8
      %v955 = vld [vmem:[%s954] sm:$0x3]
      %v957 = vunpack.c.l.b16 %v953
      %v958 = vpack.c.b16 %v957, %v957
      %vm959 = vsmask.f32 6400
      %v961 = vshrl.u32 %v771, 16
      %v963 = vrot.slane %v961, 1
      %v964 = vshll.u32 %v771, 16
      %v966 = vrot.slane %v964, 2
      %v967 = vor.u32 %v963, %v966
      %v969 = vshrl.u32 %v772, 16
      %v971 = vrot.slane %v969, 1
      %v972 = vshll.u32 %v772, 16
      %v974 = vrot.slane %v972, 2
      %v975 = vor.u32 %v971, %v974
      %v976 = vsel %vm959, %v967, %v975
      %v978 = vshrl.u32 %v773, 16
      %v980 = vrot.slane %v978, 1
      %v981 = vshll.u32 %v773, 16
      %v983 = vrot.slane %v981, 2
      %v984 = vor.u32 %v980, %v983
      %v985 = vsel %vm959, %v975, %v984
      %v987 = vshrl.u32 %v774, 16
      %v989 = vrot.slane %v987, 1
      %v990 = vshll.u32 %v774, 16
      %v992 = vrot.slane %v990, 2
      %v993 = vor.u32 %v989, %v992
      %v994 = vsel %vm959, %v984, %v993
      %v996 = vshrl.u32 %v775, 16
      %v998 = vrot.slane %v996, 1
      %v999 = vshll.u32 %v775, 16
      %v1001 = vrot.slane %v999, 2
      %v1002 = vor.u32 %v998, %v1001
      %v1003 = vsel %vm959, %v993, %v1002
      %v1005 = vshrl.u32 %v776, 16
      %v1007 = vrot.slane %v1005, 1
      %v1008 = vshll.u32 %v776, 16
      %v1010 = vrot.slane %v1008, 2
      %v1011 = vor.u32 %v1007, %v1010
      %v1012 = vsel %vm959, %v1002, %v1011
      %v1014 = vshrl.u32 %v777, 16
      %v1016 = vrot.slane %v1014, 1
      %v1017 = vshll.u32 %v777, 16
      %v1019 = vrot.slane %v1017, 2
      %v1020 = vor.u32 %v1016, %v1019
      %v1021 = vsel %vm959, %v1011, %v1020
      %v1023 = vshrl.u32 %v778, 16
      %v1025 = vrot.slane %v1023, 1
      %v1026 = vshll.u32 %v778, 16
      %v1028 = vrot.slane %v1026, 2
      %v1029 = vor.u32 %v1025, %v1028
      %v1030 = vsel %vm959, %v1020, %v1029
      %v1032 = vshrl.u32 %v779, 16
      %v1034 = vrot.slane %v1032, 1
      %v1035 = vshll.u32 %v779, 16
      %v1037 = vrot.slane %v1035, 2
      %v1038 = vor.u32 %v1034, %v1037
      %v1039 = vsel %vm959, %v1029, %v1038
      %v1041 = vshrl.u32 %v958, 16
      %v1043 = vrot.slane %v1041, 1
      %v1044 = vshll.u32 %v958, 16
      %v1046 = vrot.slane %v1044, 2
      %v1047 = vor.u32 %v1043, %v1046
      %v1048 = vsel %vm959, %v1038, %v1047
      %v1050 = vsel %vm267, %v976, 0
      %v1053 = vsel %vm267, %v985, 0
      %v1056 = vsel %vm267, %v994, 0
      %v1059 = vsel %vm267, %v1003, 0
      %v1062 = vsel %vm267, %v1012, 0
      %v1065 = vsel %vm267, %v1021, 0
      %v1068 = vsel %vm267, %v1030, 0
      %v1071 = vsel %vm267, %v1039, 0
      %v1074 = vsel %vm267, %v1048, 0
      %v1077 = vand.u32 %v955, %v298
      %1079 = vmatprep.subr.bf16.mxu0 0
      %1080 = vmatpush1.bf16.msra.mxu0 0
      %1081 = vmatprep.subr.bf16.mxu0 0
      %1082 = vmatpush1.bf16.msra.mxu0 0
      %1083 = vmatprep.subr.bf16.mxu0 0
      %1084 = vmatpush1.bf16.msra.mxu0 0
      %1085 = vmatprep.subr.bf16.mxu0 0
      %1086 = vmatpush1.bf16.msra.mxu0 0
      %1087 = vmatprep.subr.bf16.mxu0 0
      %1088 = vmatpush1.bf16.msra.mxu0 0
      %1089 = vmatprep.subr.bf16.mxu0 0
      %1090 = vmatpush1.bf16.msra.mxu0 0
      %1091 = vmatprep.subr.bf16.mxu0 0
      %1092 = vmatpush1.bf16.msra.mxu0 0
      %1093 = vmatprep.subr.bf16.mxu0 0
      %1094 = vmatpush1.bf16.msra.mxu0 %v1077
      %1095 = vmatprep.subr.bf16.mxu0 0
      %1096 = vmatpush2.bf16.msra.mxu0 0
      %1097 = vmatprep.subr.bf16.mxu0 0
      %1098 = vmatpush2.bf16.msra.mxu0 0
      %1099 = vmatprep.subr.bf16.mxu0 0
      %1100 = vmatpush2.bf16.msra.mxu0 0
      %1101 = vmatprep.subr.bf16.mxu0 0
      %1102 = vmatpush2.bf16.msra.mxu0 0
      %1103 = vmatprep.subr.bf16.mxu0 0
      %1104 = vmatpush2.bf16.msra.mxu0 0
      %1105 = vmatprep.subr.bf16.mxu0 0
      %1106 = vmatpush2.bf16.msra.mxu0 0
      %1107 = vmatprep.subr.bf16.mxu0 0
      %1108 = vmatpush2.bf16.msra.mxu0 0
      %1109 = vmatprep.subr.bf16.mxu0 0
      %1110 = vmatpush2.bf16.msra.mxu0 0
      %1111 = vmatprep.mubr.bf16.mxu0 0
      %1112 = vmatmul.mubr.bf16.gmra.mxu0 %v1050
      %v1113 = vpop.f32.mrf.mxu0
      %v1114 = vadd.f32 0.0, %v1113
      %v1115 = vpop.f32.mrf.mxu0
      %v1116 = vpop.f32.mrf.mxu0
      %v1117 = vadd.f32 0.0, %v1116
      %v1118 = vpop.f32.mrf.mxu0
      %1119 = vmatprep.mubr.bf16.mxu0 0
      %1120 = vmatmul.mubr.bf16.gmra.mxu0 %v1053
      %v1121 = vpop.f32.mrf.mxu0
      %v1122 = vadd.f32 0.0, %v1121
      %v1123 = vpop.f32.mrf.mxu0
      %v1124 = vpop.f32.mrf.mxu0
      %v1125 = vadd.f32 0.0, %v1124
      %v1126 = vpop.f32.mrf.mxu0
      %1127 = vmatprep.mubr.bf16.mxu0 0
      %1128 = vmatmul.mubr.bf16.gmra.mxu0 %v1056
      %v1129 = vpop.f32.mrf.mxu0
      %v1130 = vadd.f32 0.0, %v1129
      %v1131 = vpop.f32.mrf.mxu0
      %v1132 = vpop.f32.mrf.mxu0
      %v1133 = vadd.f32 0.0, %v1132
      %v1134 = vpop.f32.mrf.mxu0
      %1135 = vmatprep.mubr.bf16.mxu0 0
      %1136 = vmatmul.mubr.bf16.gmra.mxu0 %v1059
      %v1137 = vpop.f32.mrf.mxu0
      %v1138 = vadd.f32 0.0, %v1137
      %v1139 = vpop.f32.mrf.mxu0
      %v1140 = vpop.f32.mrf.mxu0
      %v1141 = vadd.f32 0.0, %v1140
      %v1142 = vpop.f32.mrf.mxu0
      %1143 = vmatprep.mubr.bf16.mxu0 0
      %1144 = vmatmul.mubr.bf16.gmra.mxu0 %v1062
      %v1145 = vpop.f32.mrf.mxu0
      %v1146 = vadd.f32 0.0, %v1145
      %v1147 = vpop.f32.mrf.mxu0
      %v1148 = vpop.f32.mrf.mxu0
      %v1149 = vadd.f32 0.0, %v1148
      %v1150 = vpop.f32.mrf.mxu0
      %1151 = vmatprep.mubr.bf16.mxu0 0
      %1152 = vmatmul.mubr.bf16.gmra.mxu0 %v1065
      %v1153 = vpop.f32.mrf.mxu0
      %v1154 = vadd.f32 0.0, %v1153
      %v1155 = vpop.f32.mrf.mxu0
      %v1156 = vpop.f32.mrf.mxu0
      %v1157 = vadd.f32 0.0, %v1156
      %v1158 = vpop.f32.mrf.mxu0
      %1159 = vmatprep.mubr.bf16.mxu0 0
      %1160 = vmatmul.mubr.bf16.gmra.mxu0 %v1068
      %v1161 = vpop.f32.mrf.mxu0
      %v1162 = vadd.f32 0.0, %v1161
      %v1163 = vpop.f32.mrf.mxu0
      %v1164 = vpop.f32.mrf.mxu0
      %v1165 = vadd.f32 0.0, %v1164
      %v1166 = vpop.f32.mrf.mxu0
      %1167 = vmatprep.mubr.bf16.mxu0 0
      %1168 = vmatmul.mubr.bf16.gmra.mxu0 %v1071
      %v1169 = vpop.f32.mrf.mxu0
      %v1170 = vadd.f32 0.0, %v1169
      %v1171 = vpop.f32.mrf.mxu0
      %v1172 = vpop.f32.mrf.mxu0
      %v1173 = vadd.f32 0.0, %v1172
      %v1174 = vpop.f32.mrf.mxu0
      %1175 = vmatprep.mubr.bf16.mxu0 0
      %1176 = vmatmul.mubr.bf16.gmra.mxu0 %v1074
      %v1177 = vpop.f32.mrf.mxu0
      %v1178 = vadd.f32 0.0, %v1177
      %v1179 = vpop.f32.mrf.mxu0
      %v1180 = vpop.f32.mrf.mxu0
      %v1181 = vadd.f32 0.0, %v1180
      %v1182 = vpop.f32.mrf.mxu0
      %1183 = vdwg.mxu0
      %v1184 = vadd.f32 %v935, %v1114
      %v1185 = vadd.f32 %v936, %v1117
      %v1186 = vadd.f32 %v937, %v1122
      %v1187 = vadd.f32 %v938, %v1125
      %v1188 = vadd.f32 %v939, %v1130
      %v1189 = vadd.f32 %v940, %v1133
      %v1190 = vadd.f32 %v941, %v1138
      %v1191 = vadd.f32 %v942, %v1141
      %v1192 = vadd.f32 %v943, %v1146
      %v1193 = vadd.f32 %v944, %v1149
      %v1194 = vadd.f32 %v945, %v1154
      %v1195 = vadd.f32 %v946, %v1157
      %v1196 = vadd.f32 %v947, %v1162
      %v1197 = vadd.f32 %v948, %v1165
      %v1198 = vadd.f32 %v949, %v1170
      %v1199 = vadd.f32 %v950, %v1173
      %v1200 = vadd.f32 %v951, %v1178
      %v1201 = vadd.f32 %v952, %v1181
      %v1202 = vld [vmem:[%s119 + $0x8] sm:$0xc]
      %s1203 = scalar_lea.vmem %s1, 10
      %v1204 = vld [vmem:[%s1203] sm:$0x3]
      %v1206 = vunpack.c.l.b16 %v1202
      %v1207 = vpack.c.b16 %v753, %v1206
      %vm1208 = vcmask 1045504
      %v1209 = vrot.slane %v1207, 2
      %v1210 = vrot.slane %v772, 2
      %v1211 = vsel %vm1208, %v1209, %v1210
      %v1212 = vrot.slane %v773, 2
      %v1213 = vsel %vm1208, %v1210, %v1212
      %v1214 = vrot.slane %v774, 2
      %v1215 = vsel %vm1208, %v1212, %v1214
      %v1216 = vrot.slane %v775, 2
      %v1217 = vsel %vm1208, %v1214, %v1216
      %v1218 = vrot.slane %v776, 2
      %v1219 = vsel %vm1208, %v1216, %v1218
      %v1220 = vrot.slane %v777, 2
      %v1221 = vsel %vm1208, %v1218, %v1220
      %v1222 = vrot.slane %v778, 2
      %v1223 = vsel %vm1208, %v1220, %v1222
      %v1224 = vrot.slane %v779, 2
      %v1225 = vsel %vm1208, %v1222, %v1224
      %v1226 = vrot.slane %v958, 2
      %v1227 = vsel %vm1208, %v1224, %v1226
      %v1229 = vsel %vm267, %v1211, 0
      %v1232 = vsel %vm267, %v1213, 0
      %v1235 = vsel %vm267, %v1215, 0
      %v1238 = vsel %vm267, %v1217, 0
      %v1241 = vsel %vm267, %v1219, 0
      %v1244 = vsel %vm267, %v1221, 0
      %v1247 = vsel %vm267, %v1223, 0
      %v1250 = vsel %vm267, %v1225, 0
      %v1253 = vsel %vm267, %v1227, 0
      %v1256 = vand.u32 %v1204, %v298
      %1258 = vmatprep.subr.bf16.mxu0 0
      %1259 = vmatpush1.bf16.msra.mxu0 0
      %1260 = vmatprep.subr.bf16.mxu0 0
      %1261 = vmatpush1.bf16.msra.mxu0 0
      %1262 = vmatprep.subr.bf16.mxu0 0
      %1263 = vmatpush1.bf16.msra.mxu0 0
      %1264 = vmatprep.subr.bf16.mxu0 0
      %1265 = vmatpush1.bf16.msra.mxu0 0
      %1266 = vmatprep.subr.bf16.mxu0 0
      %1267 = vmatpush1.bf16.msra.mxu0 0
      %1268 = vmatprep.subr.bf16.mxu0 0
      %1269 = vmatpush1.bf16.msra.mxu0 0
      %1270 = vmatprep.subr.bf16.mxu0 0
      %1271 = vmatpush1.bf16.msra.mxu0 0
      %1272 = vmatprep.subr.bf16.mxu0 0
      %1273 = vmatpush1.bf16.msra.mxu0 %v1256
      %1274 = vmatprep.subr.bf16.mxu0 0
      %1275 = vmatpush2.bf16.msra.mxu0 0
      %1276 = vmatprep.subr.bf16.mxu0 0
      %1277 = vmatpush2.bf16.msra.mxu0 0
      %1278 = vmatprep.subr.bf16.mxu0 0
      %1279 = vmatpush2.bf16.msra.mxu0 0
      %1280 = vmatprep.subr.bf16.mxu0 0
      %1281 = vmatpush2.bf16.msra.mxu0 0
      %1282 = vmatprep.subr.bf16.mxu0 0
      %1283 = vmatpush2.bf16.msra.mxu0 0
      %1284 = vmatprep.subr.bf16.mxu0 0
      %1285 = vmatpush2.bf16.msra.mxu0 0
      %1286 = vmatprep.subr.bf16.mxu0 0
      %1287 = vmatpush2.bf16.msra.mxu0 0
      %1288 = vmatprep.subr.bf16.mxu0 0
      %1289 = vmatpush2.bf16.msra.mxu0 0
      %1290 = vmatprep.mubr.bf16.mxu0 0
      %1291 = vmatmul.mubr.bf16.gmra.mxu0 %v1229
      %v1292 = vpop.f32.mrf.mxu0
      %v1293 = vadd.f32 0.0, %v1292
      %v1294 = vpop.f32.mrf.mxu0
      %v1295 = vpop.f32.mrf.mxu0
      %v1296 = vadd.f32 0.0, %v1295
      %v1297 = vpop.f32.mrf.mxu0
      %1298 = vmatprep.mubr.bf16.mxu0 0
      %1299 = vmatmul.mubr.bf16.gmra.mxu0 %v1232
      %v1300 = vpop.f32.mrf.mxu0
      %v1301 = vadd.f32 0.0, %v1300
      %v1302 = vpop.f32.mrf.mxu0
      %v1303 = vpop.f32.mrf.mxu0
      %v1304 = vadd.f32 0.0, %v1303
      %v1305 = vpop.f32.mrf.mxu0
      %1306 = vmatprep.mubr.bf16.mxu0 0
      %1307 = vmatmul.mubr.bf16.gmra.mxu0 %v1235
      %v1308 = vpop.f32.mrf.mxu0
      %v1309 = vadd.f32 0.0, %v1308
      %v1310 = vpop.f32.mrf.mxu0
      %v1311 = vpop.f32.mrf.mxu0
      %v1312 = vadd.f32 0.0, %v1311
      %v1313 = vpop.f32.mrf.mxu0
      %1314 = vmatprep.mubr.bf16.mxu0 0
      %1315 = vmatmul.mubr.bf16.gmra.mxu0 %v1238
      %v1316 = vpop.f32.mrf.mxu0
      %v1317 = vadd.f32 0.0, %v1316
      %v1318 = vpop.f32.mrf.mxu0
      %v1319 = vpop.f32.mrf.mxu0
      %v1320 = vadd.f32 0.0, %v1319
      %v1321 = vpop.f32.mrf.mxu0
      %1322 = vmatprep.mubr.bf16.mxu0 0
      %1323 = vmatmul.mubr.bf16.gmra.mxu0 %v1241
      %v1324 = vpop.f32.mrf.mxu0
      %v1325 = vadd.f32 0.0, %v1324
      %v1326 = vpop.f32.mrf.mxu0
      %v1327 = vpop.f32.mrf.mxu0
      %v1328 = vadd.f32 0.0, %v1327
      %v1329 = vpop.f32.mrf.mxu0
      %1330 = vmatprep.mubr.bf16.mxu0 0
      %1331 = vmatmul.mubr.bf16.gmra.mxu0 %v1244
      %v1332 = vpop.f32.mrf.mxu0
      %v1333 = vadd.f32 0.0, %v1332
      %v1334 = vpop.f32.mrf.mxu0
      %v1335 = vpop.f32.mrf.mxu0
      %v1336 = vadd.f32 0.0, %v1335
      %v1337 = vpop.f32.mrf.mxu0
      %1338 = vmatprep.mubr.bf16.mxu0 0
      %1339 = vmatmul.mubr.bf16.gmra.mxu0 %v1247
      %v1340 = vpop.f32.mrf.mxu0
      %v1341 = vadd.f32 0.0, %v1340
      %v1342 = vpop.f32.mrf.mxu0
      %v1343 = vpop.f32.mrf.mxu0
      %v1344 = vadd.f32 0.0, %v1343
      %v1345 = vpop.f32.mrf.mxu0
      %1346 = vmatprep.mubr.bf16.mxu0 0
      %1347 = vmatmul.mubr.bf16.gmra.mxu0 %v1250
      %v1348 = vpop.f32.mrf.mxu0
      %v1349 = vadd.f32 0.0, %v1348
      %v1350 = vpop.f32.mrf.mxu0
      %v1351 = vpop.f32.mrf.mxu0
      %v1352 = vadd.f32 0.0, %v1351
      %v1353 = vpop.f32.mrf.mxu0
      %1354 = vmatprep.mubr.bf16.mxu0 0
      %1355 = vmatmul.mubr.bf16.gmra.mxu0 %v1253
      %v1356 = vpop.f32.mrf.mxu0
      %v1357 = vadd.f32 0.0, %v1356
      %v1358 = vpop.f32.mrf.mxu0
      %v1359 = vpop.f32.mrf.mxu0
      %v1360 = vadd.f32 0.0, %v1359
      %v1361 = vpop.f32.mrf.mxu0
      %1362 = vdwg.mxu0
      %v1363 = vadd.f32 %v1184, %v1293
      %v1364 = vadd.f32 %v1185, %v1296
      %v1365 = vadd.f32 %v1186, %v1301
      %v1366 = vadd.f32 %v1187, %v1304
      %v1367 = vadd.f32 %v1188, %v1309
      %v1368 = vadd.f32 %v1189, %v1312
      %v1369 = vadd.f32 %v1190, %v1317
      %v1370 = vadd.f32 %v1191, %v1320
      %v1371 = vadd.f32 %v1192, %v1325
      %v1372 = vadd.f32 %v1193, %v1328
      %v1373 = vadd.f32 %v1194, %v1333
      %v1374 = vadd.f32 %v1195, %v1336
      %v1375 = vadd.f32 %v1196, %v1341
      %v1376 = vadd.f32 %v1197, %v1344
      %v1377 = vadd.f32 %v1198, %v1349
      %v1378 = vadd.f32 %v1199, %v1352
      %v1379 = vadd.f32 %v1200, %v1357
      %v1380 = vadd.f32 %v1201, %v1360
      %v1381 = vld [vmem:[%s119 + $0x10] sm:$0xc]
      %v1382 = vld [vmem:[%s119 + $0x14] sm:$0xf]
      %v1383 = vld [vmem:[%s119 + $0x18] sm:$0xf]
      %v1384 = vld [vmem:[%s119 + $0x1c] sm:$0xf]
      %v1385 = vld [vmem:[%s119 + $0x20] sm:$0xf]
      %v1386 = vld [vmem:[%s119 + $0x24] sm:$0xf]
      %v1387 = vld [vmem:[%s119 + $0x28] sm:$0xf]
      %v1388 = vld [vmem:[%s119 + $0x2c] sm:$0xf]
      %v1389 = vld [vmem:[%s119 + $0x30] sm:$0xf]
      %v1390 = vld [vmem:[%s119 + $0x34] sm:$0xf]
      %v1391 = vld [vmem:[%s119 + $0x38] sm:$0xf]
      %v1392 = vld [vmem:[%s119 + $0x3c] sm:$0xf]
      %v1393 = vld [vmem:[%s119 + $0x40] sm:$0xf]
      %v1394 = vld [vmem:[%s119 + $0x44] sm:$0xf]
      %v1395 = vld [vmem:[%s119 + $0x48] sm:$0xf]
      %v1396 = vld [vmem:[%s119 + $0x4c] sm:$0xf]
      %v1397 = vld [vmem:[%s119 + $0x50] sm:$0xf]
      %v1398 = vld [vmem:[%s119 + $0x54] sm:$0xf]
      %v1399 = vld [vmem:[%s119 + $0x58] sm:$0x3]
      %s1400 = scalar_lea.vmem %s1, 12
      %v1401 = vld [vmem:[%s1400] sm:$0x3]
      %v1421 = vunpack.c.l.b16 %v1381
      %v1422 = vunpack.c.l.b16 %v1382
      %v1423 = vunpack.c.l.b16 %v1383
      %v1424 = vunpack.c.l.b16 %v1384
      %v1425 = vunpack.c.l.b16 %v1385
      %v1426 = vunpack.c.l.b16 %v1386
      %v1427 = vunpack.c.l.b16 %v1387
      %v1428 = vunpack.c.l.b16 %v1388
      %v1429 = vunpack.c.l.b16 %v1389
      %v1430 = vunpack.c.l.b16 %v1390
      %v1431 = vunpack.c.l.b16 %v1391
      %v1432 = vunpack.c.l.b16 %v1392
      %v1433 = vunpack.c.l.b16 %v1393
      %v1434 = vunpack.c.l.b16 %v1394
      %v1435 = vunpack.c.l.b16 %v1395
      %v1436 = vunpack.c.l.b16 %v1396
      %v1437 = vunpack.c.l.b16 %v1397
      %v1438 = vunpack.c.l.b16 %v1398
      %v1439 = vunpack.c.l.b16 %v1399
      %v1440 = vpack.c.b16 %v1422, %v1421
      %v1441 = vpack.c.b16 %v1424, %v1423
      %v1442 = vpack.c.b16 %v1426, %v1425
      %v1443 = vpack.c.b16 %v1428, %v1427
      %v1444 = vpack.c.b16 %v1430, %v1429
      %v1445 = vpack.c.b16 %v1432, %v1431
      %v1446 = vpack.c.b16 %v1434, %v1433
      %v1447 = vpack.c.b16 %v1436, %v1435
      %v1448 = vpack.c.b16 %v1438, %v1437
      %v1449 = vpack.c.b16 %v1439, %v1439
      %v1450 = vrot.slane %v1440, 2
      %v1451 = vrot.slane %v1441, 2
      %v1452 = vsel %vm1208, %v1450, %v1451
      %v1453 = vrot.slane %v1442, 2
      %v1454 = vsel %vm1208, %v1451, %v1453
      %v1455 = vrot.slane %v1443, 2
      %v1456 = vsel %vm1208, %v1453, %v1455
      %v1457 = vrot.slane %v1444, 2
      %v1458 = vsel %vm1208, %v1455, %v1457
      %v1459 = vrot.slane %v1445, 2
      %v1460 = vsel %vm1208, %v1457, %v1459
      %v1461 = vrot.slane %v1446, 2
      %v1462 = vsel %vm1208, %v1459, %v1461
      %v1463 = vrot.slane %v1447, 2
      %v1464 = vsel %vm1208, %v1461, %v1463
      %v1465 = vrot.slane %v1448, 2
      %v1466 = vsel %vm1208, %v1463, %v1465
      %v1467 = vrot.slane %v1449, 2
      %v1468 = vsel %vm1208, %v1465, %v1467
      %v1470 = vsel %vm267, %v1452, 0
      %v1473 = vsel %vm267, %v1454, 0
      %v1476 = vsel %vm267, %v1456, 0
      %v1479 = vsel %vm267, %v1458, 0
      %v1482 = vsel %vm267, %v1460, 0
      %v1485 = vsel %vm267, %v1462, 0
      %v1488 = vsel %vm267, %v1464, 0
      %v1491 = vsel %vm267, %v1466, 0
      %v1494 = vsel %vm267, %v1468, 0
      %v1497 = vand.u32 %v1401, %v298
      %1499 = vmatprep.subr.bf16.mxu0 0
      %1500 = vmatpush1.bf16.msra.mxu0 0
      %1501 = vmatprep.subr.bf16.mxu0 0
      %1502 = vmatpush1.bf16.msra.mxu0 0
      %1503 = vmatprep.subr.bf16.mxu0 0
      %1504 = vmatpush1.bf16.msra.mxu0 0
      %1505 = vmatprep.subr.bf16.mxu0 0
      %1506 = vmatpush1.bf16.msra.mxu0 0
      %1507 = vmatprep.subr.bf16.mxu0 0
      %1508 = vmatpush1.bf16.msra.mxu0 0
      %1509 = vmatprep.subr.bf16.mxu0 0
      %1510 = vmatpush1.bf16.msra.mxu0 0
      %1511 = vmatprep.subr.bf16.mxu0 0
      %1512 = vmatpush1.bf16.msra.mxu0 0
      %1513 = vmatprep.subr.bf16.mxu0 0
      %1514 = vmatpush1.bf16.msra.mxu0 %v1497
      %1515 = vmatprep.subr.bf16.mxu0 0
      %1516 = vmatpush2.bf16.msra.mxu0 0
      %1517 = vmatprep.subr.bf16.mxu0 0
      %1518 = vmatpush2.bf16.msra.mxu0 0
      %1519 = vmatprep.subr.bf16.mxu0 0
      %1520 = vmatpush2.bf16.msra.mxu0 0
      %1521 = vmatprep.subr.bf16.mxu0 0
      %1522 = vmatpush2.bf16.msra.mxu0 0
      %1523 = vmatprep.subr.bf16.mxu0 0
      %1524 = vmatpush2.bf16.msra.mxu0 0
      %1525 = vmatprep.subr.bf16.mxu0 0
      %1526 = vmatpush2.bf16.msra.mxu0 0
      %1527 = vmatprep.subr.bf16.mxu0 0
      %1528 = vmatpush2.bf16.msra.mxu0 0
      %1529 = vmatprep.subr.bf16.mxu0 0
      %1530 = vmatpush2.bf16.msra.mxu0 0
      %1531 = vmatprep.mubr.bf16.mxu0 0
      %1532 = vmatmul.mubr.bf16.gmra.mxu0 %v1470
      %v1533 = vpop.f32.mrf.mxu0
      %v1534 = vadd.f32 0.0, %v1533
      %v1535 = vpop.f32.mrf.mxu0
      %v1536 = vpop.f32.mrf.mxu0
      %v1537 = vadd.f32 0.0, %v1536
      %v1538 = vpop.f32.mrf.mxu0
      %1539 = vmatprep.mubr.bf16.mxu0 0
      %1540 = vmatmul.mubr.bf16.gmra.mxu0 %v1473
      %v1541 = vpop.f32.mrf.mxu0
      %v1542 = vadd.f32 0.0, %v1541
      %v1543 = vpop.f32.mrf.mxu0
      %v1544 = vpop.f32.mrf.mxu0
      %v1545 = vadd.f32 0.0, %v1544
      %v1546 = vpop.f32.mrf.mxu0
      %1547 = vmatprep.mubr.bf16.mxu0 0
      %1548 = vmatmul.mubr.bf16.gmra.mxu0 %v1476
      %v1549 = vpop.f32.mrf.mxu0
      %v1550 = vadd.f32 0.0, %v1549
      %v1551 = vpop.f32.mrf.mxu0
      %v1552 = vpop.f32.mrf.mxu0
      %v1553 = vadd.f32 0.0, %v1552
      %v1554 = vpop.f32.mrf.mxu0
      %1555 = vmatprep.mubr.bf16.mxu0 0
      %1556 = vmatmul.mubr.bf16.gmra.mxu0 %v1479
      %v1557 = vpop.f32.mrf.mxu0
      %v1558 = vadd.f32 0.0, %v1557
      %v1559 = vpop.f32.mrf.mxu0
      %v1560 = vpop.f32.mrf.mxu0
      %v1561 = vadd.f32 0.0, %v1560
      %v1562 = vpop.f32.mrf.mxu0
      %1563 = vmatprep.mubr.bf16.mxu0 0
      %1564 = vmatmul.mubr.bf16.gmra.mxu0 %v1482
      %v1565 = vpop.f32.mrf.mxu0
      %v1566 = vadd.f32 0.0, %v1565
      %v1567 = vpop.f32.mrf.mxu0
      %v1568 = vpop.f32.mrf.mxu0
      %v1569 = vadd.f32 0.0, %v1568
      %v1570 = vpop.f32.mrf.mxu0
      %1571 = vmatprep.mubr.bf16.mxu0 0
      %1572 = vmatmul.mubr.bf16.gmra.mxu0 %v1485
      %v1573 = vpop.f32.mrf.mxu0
      %v1574 = vadd.f32 0.0, %v1573
      %v1575 = vpop.f32.mrf.mxu0
      %v1576 = vpop.f32.mrf.mxu0
      %v1577 = vadd.f32 0.0, %v1576
      %v1578 = vpop.f32.mrf.mxu0
      %1579 = vmatprep.mubr.bf16.mxu0 0
      %1580 = vmatmul.mubr.bf16.gmra.mxu0 %v1488
      %v1581 = vpop.f32.mrf.mxu0
      %v1582 = vadd.f32 0.0, %v1581
      %v1583 = vpop.f32.mrf.mxu0
      %v1584 = vpop.f32.mrf.mxu0
      %v1585 = vadd.f32 0.0, %v1584
      %v1586 = vpop.f32.mrf.mxu0
      %1587 = vmatprep.mubr.bf16.mxu0 0
      %1588 = vmatmul.mubr.bf16.gmra.mxu0 %v1491
      %v1589 = vpop.f32.mrf.mxu0
      %v1590 = vadd.f32 0.0, %v1589
      %v1591 = vpop.f32.mrf.mxu0
      %v1592 = vpop.f32.mrf.mxu0
      %v1593 = vadd.f32 0.0, %v1592
      %v1594 = vpop.f32.mrf.mxu0
      %1595 = vmatprep.mubr.bf16.mxu0 0
      %1596 = vmatmul.mubr.bf16.gmra.mxu0 %v1494
      %v1597 = vpop.f32.mrf.mxu0
      %v1598 = vadd.f32 0.0, %v1597
      %v1599 = vpop.f32.mrf.mxu0
      %v1600 = vpop.f32.mrf.mxu0
      %v1601 = vadd.f32 0.0, %v1600
      %v1602 = vpop.f32.mrf.mxu0
      %1603 = vdwg.mxu0
      %v1604 = vadd.f32 %v1363, %v1534
      %v1605 = vadd.f32 %v1364, %v1537
      %v1606 = vadd.f32 %v1365, %v1542
      %v1607 = vadd.f32 %v1366, %v1545
      %v1608 = vadd.f32 %v1367, %v1550
      %v1609 = vadd.f32 %v1368, %v1553
      %v1610 = vadd.f32 %v1369, %v1558
      %v1611 = vadd.f32 %v1370, %v1561
      %v1612 = vadd.f32 %v1371, %v1566
      %v1613 = vadd.f32 %v1372, %v1569
      %v1614 = vadd.f32 %v1373, %v1574
      %v1615 = vadd.f32 %v1374, %v1577
      %v1616 = vadd.f32 %v1375, %v1582
      %v1617 = vadd.f32 %v1376, %v1585
      %v1618 = vadd.f32 %v1377, %v1590
      %v1619 = vadd.f32 %v1378, %v1593
      %v1620 = vadd.f32 %v1379, %v1598
      %v1621 = vadd.f32 %v1380, %v1601
      %v1622 = vld [vmem:[%s119 + $0x58] sm:$0x7]
      %s1623 = scalar_lea.vmem %s1, 14
      %v1624 = vld [vmem:[%s1623] sm:$0x3]
      %v1626 = vunpack.c.l.b16 %v1622
      %v1627 = vpack.c.b16 %v1626, %v1626
      %vm1628 = vsmask.f32 5376
      %v1630 = vshrl.u32 %v1440, 16
      %v1632 = vrot.slane %v1630, 2
      %v1633 = vshll.u32 %v1440, 16
      %v1635 = vrot.slane %v1633, 3
      %v1636 = vor.u32 %v1632, %v1635
      %v1638 = vshrl.u32 %v1441, 16
      %v1640 = vrot.slane %v1638, 2
      %v1641 = vshll.u32 %v1441, 16
      %v1643 = vrot.slane %v1641, 3
      %v1644 = vor.u32 %v1640, %v1643
      %v1645 = vsel %vm1628, %v1636, %v1644
      %v1647 = vshrl.u32 %v1442, 16
      %v1649 = vrot.slane %v1647, 2
      %v1650 = vshll.u32 %v1442, 16
      %v1652 = vrot.slane %v1650, 3
      %v1653 = vor.u32 %v1649, %v1652
      %v1654 = vsel %vm1628, %v1644, %v1653
      %v1656 = vshrl.u32 %v1443, 16
      %v1658 = vrot.slane %v1656, 2
      %v1659 = vshll.u32 %v1443, 16
      %v1661 = vrot.slane %v1659, 3
      %v1662 = vor.u32 %v1658, %v1661
      %v1663 = vsel %vm1628, %v1653, %v1662
      %v1665 = vshrl.u32 %v1444, 16
      %v1667 = vrot.slane %v1665, 2
      %v1668 = vshll.u32 %v1444, 16
      %v1670 = vrot.slane %v1668, 3
      %v1671 = vor.u32 %v1667, %v1670
      %v1672 = vsel %vm1628, %v1662, %v1671
      %v1674 = vshrl.u32 %v1445, 16
      %v1676 = vrot.slane %v1674, 2
      %v1677 = vshll.u32 %v1445, 16
      %v1679 = vrot.slane %v1677, 3
      %v1680 = vor.u32 %v1676, %v1679
      %v1681 = vsel %vm1628, %v1671, %v1680
      %v1683 = vshrl.u32 %v1446, 16
      %v1685 = vrot.slane %v1683, 2
      %v1686 = vshll.u32 %v1446, 16
      %v1688 = vrot.slane %v1686, 3
      %v1689 = vor.u32 %v1685, %v1688
      %v1690 = vsel %vm1628, %v1680, %v1689
      %v1692 = vshrl.u32 %v1447, 16
      %v1694 = vrot.slane %v1692, 2
      %v1695 = vshll.u32 %v1447, 16
      %v1697 = vrot.slane %v1695, 3
      %v1698 = vor.u32 %v1694, %v1697
      %v1699 = vsel %vm1628, %v1689, %v1698
      %v1701 = vshrl.u32 %v1448, 16
      %v1703 = vrot.slane %v1701, 2
      %v1704 = vshll.u32 %v1448, 16
      %v1706 = vrot.slane %v1704, 3
      %v1707 = vor.u32 %v1703, %v1706
      %v1708 = vsel %vm1628, %v1698, %v1707
      %v1710 = vshrl.u32 %v1627, 16
      %v1712 = vrot.slane %v1710, 2
      %v1713 = vshll.u32 %v1627, 16
      %v1715 = vrot.slane %v1713, 3
      %v1716 = vor.u32 %v1712, %v1715
      %v1717 = vsel %vm1628, %v1707, %v1716
      %v1719 = vsel %vm267, %v1645, 0
      %v1722 = vsel %vm267, %v1654, 0
      %v1725 = vsel %vm267, %v1663, 0
      %v1728 = vsel %vm267, %v1672, 0
      %v1731 = vsel %vm267, %v1681, 0
      %v1734 = vsel %vm267, %v1690, 0
      %v1737 = vsel %vm267, %v1699, 0
      %v1740 = vsel %vm267, %v1708, 0
      %v1743 = vsel %vm267, %v1717, 0
      %v1746 = vand.u32 %v1624, %v298
      %1748 = vmatprep.subr.bf16.mxu0 0
      %1749 = vmatpush1.bf16.msra.mxu0 0
      %1750 = vmatprep.subr.bf16.mxu0 0
      %1751 = vmatpush1.bf16.msra.mxu0 0
      %1752 = vmatprep.subr.bf16.mxu0 0
      %1753 = vmatpush1.bf16.msra.mxu0 0
      %1754 = vmatprep.subr.bf16.mxu0 0
      %1755 = vmatpush1.bf16.msra.mxu0 0
      %1756 = vmatprep.subr.bf16.mxu0 0
      %1757 = vmatpush1.bf16.msra.mxu0 0
      %1758 = vmatprep.subr.bf16.mxu0 0
      %1759 = vmatpush1.bf16.msra.mxu0 0
      %1760 = vmatprep.subr.bf16.mxu0 0
      %1761 = vmatpush1.bf16.msra.mxu0 0
      %1762 = vmatprep.subr.bf16.mxu0 0
      %1763 = vmatpush1.bf16.msra.mxu0 %v1746
      %1764 = vmatprep.subr.bf16.mxu0 0
      %1765 = vmatpush2.bf16.msra.mxu0 0
      %1766 = vmatprep.subr.bf16.mxu0 0
      %1767 = vmatpush2.bf16.msra.mxu0 0
      %1768 = vmatprep.subr.bf16.mxu0 0
      %1769 = vmatpush2.bf16.msra.mxu0 0
      %1770 = vmatprep.subr.bf16.mxu0 0
      %1771 = vmatpush2.bf16.msra.mxu0 0
      %1772 = vmatprep.subr.bf16.mxu0 0
      %1773 = vmatpush2.bf16.msra.mxu0 0
      %1774 = vmatprep.subr.bf16.mxu0 0
      %1775 = vmatpush2.bf16.msra.mxu0 0
      %1776 = vmatprep.subr.bf16.mxu0 0
      %1777 = vmatpush2.bf16.msra.mxu0 0
      %1778 = vmatprep.subr.bf16.mxu0 0
      %1779 = vmatpush2.bf16.msra.mxu0 0
      %1780 = vmatprep.mubr.bf16.mxu0 0
      %1781 = vmatmul.mubr.bf16.gmra.mxu0 %v1719
      %v1782 = vpop.f32.mrf.mxu0
      %v1783 = vadd.f32 0.0, %v1782
      %v1784 = vpop.f32.mrf.mxu0
      %v1785 = vpop.f32.mrf.mxu0
      %v1786 = vadd.f32 0.0, %v1785
      %v1787 = vpop.f32.mrf.mxu0
      %1788 = vmatprep.mubr.bf16.mxu0 0
      %1789 = vmatmul.mubr.bf16.gmra.mxu0 %v1722
      %v1790 = vpop.f32.mrf.mxu0
      %v1791 = vadd.f32 0.0, %v1790
      %v1792 = vpop.f32.mrf.mxu0
      %v1793 = vpop.f32.mrf.mxu0
      %v1794 = vadd.f32 0.0, %v1793
      %v1795 = vpop.f32.mrf.mxu0
      %1796 = vmatprep.mubr.bf16.mxu0 0
      %1797 = vmatmul.mubr.bf16.gmra.mxu0 %v1725
      %v1798 = vpop.f32.mrf.mxu0
      %v1799 = vadd.f32 0.0, %v1798
      %v1800 = vpop.f32.mrf.mxu0
      %v1801 = vpop.f32.mrf.mxu0
      %v1802 = vadd.f32 0.0, %v1801
      %v1803 = vpop.f32.mrf.mxu0
      %1804 = vmatprep.mubr.bf16.mxu0 0
      %1805 = vmatmul.mubr.bf16.gmra.mxu0 %v1728
      %v1806 = vpop.f32.mrf.mxu0
      %v1807 = vadd.f32 0.0, %v1806
      %v1808 = vpop.f32.mrf.mxu0
      %v1809 = vpop.f32.mrf.mxu0
      %v1810 = vadd.f32 0.0, %v1809
      %v1811 = vpop.f32.mrf.mxu0
      %1812 = vmatprep.mubr.bf16.mxu0 0
      %1813 = vmatmul.mubr.bf16.gmra.mxu0 %v1731
      %v1814 = vpop.f32.mrf.mxu0
      %v1815 = vadd.f32 0.0, %v1814
      %v1816 = vpop.f32.mrf.mxu0
      %v1817 = vpop.f32.mrf.mxu0
      %v1818 = vadd.f32 0.0, %v1817
      %v1819 = vpop.f32.mrf.mxu0
      %1820 = vmatprep.mubr.bf16.mxu0 0
      %1821 = vmatmul.mubr.bf16.gmra.mxu0 %v1734
      %v1822 = vpop.f32.mrf.mxu0
      %v1823 = vadd.f32 0.0, %v1822
      %v1824 = vpop.f32.mrf.mxu0
      %v1825 = vpop.f32.mrf.mxu0
      %v1826 = vadd.f32 0.0, %v1825
      %v1827 = vpop.f32.mrf.mxu0
      %1828 = vmatprep.mubr.bf16.mxu0 0
      %1829 = vmatmul.mubr.bf16.gmra.mxu0 %v1737
      %v1830 = vpop.f32.mrf.mxu0
      %v1831 = vadd.f32 0.0, %v1830
      %v1832 = vpop.f32.mrf.mxu0
      %v1833 = vpop.f32.mrf.mxu0
      %v1834 = vadd.f32 0.0, %v1833
      %v1835 = vpop.f32.mrf.mxu0
      %1836 = vmatprep.mubr.bf16.mxu0 0
      %1837 = vmatmul.mubr.bf16.gmra.mxu0 %v1740
      %v1838 = vpop.f32.mrf.mxu0
      %v1839 = vadd.f32 0.0, %v1838
      %v1840 = vpop.f32.mrf.mxu0
      %v1841 = vpop.f32.mrf.mxu0
      %v1842 = vadd.f32 0.0, %v1841
      %v1843 = vpop.f32.mrf.mxu0
      %1844 = vmatprep.mubr.bf16.mxu0 0
      %1845 = vmatmul.mubr.bf16.gmra.mxu0 %v1743
      %v1846 = vpop.f32.mrf.mxu0
      %v1847 = vadd.f32 0.0, %v1846
      %v1848 = vpop.f32.mrf.mxu0
      %v1849 = vpop.f32.mrf.mxu0
      %v1850 = vadd.f32 0.0, %v1849
      %v1851 = vpop.f32.mrf.mxu0
      %1852 = vdwg.mxu0
      %v1853 = vadd.f32 %v1604, %v1783
      %v1854 = vadd.f32 %v1605, %v1786
      %v1855 = vadd.f32 %v1606, %v1791
      %v1856 = vadd.f32 %v1607, %v1794
      %v1857 = vadd.f32 %v1608, %v1799
      %v1858 = vadd.f32 %v1609, %v1802
      %v1859 = vadd.f32 %v1610, %v1807
      %v1860 = vadd.f32 %v1611, %v1810
      %v1861 = vadd.f32 %v1612, %v1815
      %v1862 = vadd.f32 %v1613, %v1818
      %v1863 = vadd.f32 %v1614, %v1823
      %v1864 = vadd.f32 %v1615, %v1826
      %v1865 = vadd.f32 %v1616, %v1831
      %v1866 = vadd.f32 %v1617, %v1834
      %v1867 = vadd.f32 %v1618, %v1839
      %v1868 = vadd.f32 %v1619, %v1842
      %v1869 = vadd.f32 %v1620, %v1847
      %v1870 = vadd.f32 %v1621, %v1850
      %v1871 = vld [vmem:[%s119 + $0x10] sm:$0x8]
      %s1872 = scalar_lea.vmem %s1, 16
      %v1873 = vld [vmem:[%s1872] sm:$0x3]
      %v1875 = vunpack.c.l.b16 %v1871
      %v1876 = vpack.c.b16 %v1422, %v1875
      %vm1877 = vcmask 1044480
      %v1878 = vrot.slane %v1876, 3
      %v1879 = vrot.slane %v1441, 3
      %v1880 = vsel %vm1877, %v1878, %v1879
      %v1881 = vrot.slane %v1442, 3
      %v1882 = vsel %vm1877, %v1879, %v1881
      %v1883 = vrot.slane %v1443, 3
      %v1884 = vsel %vm1877, %v1881, %v1883
      %v1885 = vrot.slane %v1444, 3
      %v1886 = vsel %vm1877, %v1883, %v1885
      %v1887 = vrot.slane %v1445, 3
      %v1888 = vsel %vm1877, %v1885, %v1887
      %v1889 = vrot.slane %v1446, 3
      %v1890 = vsel %vm1877, %v1887, %v1889
      %v1891 = vrot.slane %v1447, 3
      %v1892 = vsel %vm1877, %v1889, %v1891
      %v1893 = vrot.slane %v1448, 3
      %v1894 = vsel %vm1877, %v1891, %v1893
      %v1895 = vrot.slane %v1627, 3
      %v1896 = vsel %vm1877, %v1893, %v1895
      %v1898 = vsel %vm267, %v1880, 0
      %v1901 = vsel %vm267, %v1882, 0
      %v1904 = vsel %vm267, %v1884, 0
      %v1907 = vsel %vm267, %v1886, 0
      %v1910 = vsel %vm267, %v1888, 0
      %v1913 = vsel %vm267, %v1890, 0
      %v1916 = vsel %vm267, %v1892, 0
      %v1919 = vsel %vm267, %v1894, 0
      %v1922 = vsel %vm267, %v1896, 0
      %v1925 = vand.u32 %v1873, %v298
      %1927 = vmatprep.subr.bf16.mxu0 0
      %1928 = vmatpush1.bf16.msra.mxu0 0
      %1929 = vmatprep.subr.bf16.mxu0 0
      %1930 = vmatpush1.bf16.msra.mxu0 0
      %1931 = vmatprep.subr.bf16.mxu0 0
      %1932 = vmatpush1.bf16.msra.mxu0 0
      %1933 = vmatprep.subr.bf16.mxu0 0
      %1934 = vmatpush1.bf16.msra.mxu0 0
      %1935 = vmatprep.subr.bf16.mxu0 0
      %1936 = vmatpush1.bf16.msra.mxu0 0
      %1937 = vmatprep.subr.bf16.mxu0 0
      %1938 = vmatpush1.bf16.msra.mxu0 0
      %1939 = vmatprep.subr.bf16.mxu0 0
      %1940 = vmatpush1.bf16.msra.mxu0 0
      %1941 = vmatprep.subr.bf16.mxu0 0
      %1942 = vmatpush1.bf16.msra.mxu0 %v1925
      %1943 = vmatprep.subr.bf16.mxu0 0
      %1944 = vmatpush2.bf16.msra.mxu0 0
      %1945 = vmatprep.subr.bf16.mxu0 0
      %1946 = vmatpush2.bf16.msra.mxu0 0
      %1947 = vmatprep.subr.bf16.mxu0 0
      %1948 = vmatpush2.bf16.msra.mxu0 0
      %1949 = vmatprep.subr.bf16.mxu0 0
      %1950 = vmatpush2.bf16.msra.mxu0 0
      %1951 = vmatprep.subr.bf16.mxu0 0
      %1952 = vmatpush2.bf16.msra.mxu0 0
      %1953 = vmatprep.subr.bf16.mxu0 0
      %1954 = vmatpush2.bf16.msra.mxu0 0
      %1955 = vmatprep.subr.bf16.mxu0 0
      %1956 = vmatpush2.bf16.msra.mxu0 0
      %1957 = vmatprep.subr.bf16.mxu0 0
      %1958 = vmatpush2.bf16.msra.mxu0 0
      %1959 = vmatprep.mubr.bf16.mxu0 0
      %1960 = vmatmul.mubr.bf16.gmra.mxu0 %v1898
      %v1961 = vpop.f32.mrf.mxu0
      %v1962 = vadd.f32 0.0, %v1961
      %v1963 = vpop.f32.mrf.mxu0
      %v1964 = vpop.f32.mrf.mxu0
      %v1965 = vadd.f32 0.0, %v1964
      %v1966 = vpop.f32.mrf.mxu0
      %1967 = vmatprep.mubr.bf16.mxu0 0
      %1968 = vmatmul.mubr.bf16.gmra.mxu0 %v1901
      %v1969 = vpop.f32.mrf.mxu0
      %v1970 = vadd.f32 0.0, %v1969
      %v1971 = vpop.f32.mrf.mxu0
      %v1972 = vpop.f32.mrf.mxu0
      %v1973 = vadd.f32 0.0, %v1972
      %v1974 = vpop.f32.mrf.mxu0
      %1975 = vmatprep.mubr.bf16.mxu0 0
      %1976 = vmatmul.mubr.bf16.gmra.mxu0 %v1904
      %v1977 = vpop.f32.mrf.mxu0
      %v1978 = vadd.f32 0.0, %v1977
      %v1979 = vpop.f32.mrf.mxu0
      %v1980 = vpop.f32.mrf.mxu0
      %v1981 = vadd.f32 0.0, %v1980
      %v1982 = vpop.f32.mrf.mxu0
      %1983 = vmatprep.mubr.bf16.mxu0 0
      %1984 = vmatmul.mubr.bf16.gmra.mxu0 %v1907
      %v1985 = vpop.f32.mrf.mxu0
      %v1986 = vadd.f32 0.0, %v1985
      %v1987 = vpop.f32.mrf.mxu0
      %v1988 = vpop.f32.mrf.mxu0
      %v1989 = vadd.f32 0.0, %v1988
      %v1990 = vpop.f32.mrf.mxu0
      %1991 = vmatprep.mubr.bf16.mxu0 0
      %1992 = vmatmul.mubr.bf16.gmra.mxu0 %v1910
      %v1993 = vpop.f32.mrf.mxu0
      %v1994 = vadd.f32 0.0, %v1993
      %v1995 = vpop.f32.mrf.mxu0
      %v1996 = vpop.f32.mrf.mxu0
      %v1997 = vadd.f32 0.0, %v1996
      %v1998 = vpop.f32.mrf.mxu0
      %1999 = vmatprep.mubr.bf16.mxu0 0
      %2000 = vmatmul.mubr.bf16.gmra.mxu0 %v1913
      %v2001 = vpop.f32.mrf.mxu0
      %v2002 = vadd.f32 0.0, %v2001
      %v2003 = vpop.f32.mrf.mxu0
      %v2004 = vpop.f32.mrf.mxu0
      %v2005 = vadd.f32 0.0, %v2004
      %v2006 = vpop.f32.mrf.mxu0
      %2007 = vmatprep.mubr.bf16.mxu0 0
      %2008 = vmatmul.mubr.bf16.gmra.mxu0 %v1916
      %v2009 = vpop.f32.mrf.mxu0
      %v2010 = vadd.f32 0.0, %v2009
      %v2011 = vpop.f32.mrf.mxu0
      %v2012 = vpop.f32.mrf.mxu0
      %v2013 = vadd.f32 0.0, %v2012
      %v2014 = vpop.f32.mrf.mxu0
      %2015 = vmatprep.mubr.bf16.mxu0 0
      %2016 = vmatmul.mubr.bf16.gmra.mxu0 %v1919
      %v2017 = vpop.f32.mrf.mxu0
      %v2018 = vadd.f32 0.0, %v2017
      %v2019 = vpop.f32.mrf.mxu0
      %v2020 = vpop.f32.mrf.mxu0
      %v2021 = vadd.f32 0.0, %v2020
      %v2022 = vpop.f32.mrf.mxu0
      %2023 = vmatprep.mubr.bf16.mxu0 0
      %2024 = vmatmul.mubr.bf16.gmra.mxu0 %v1922
      %v2025 = vpop.f32.mrf.mxu0
      %v2026 = vadd.f32 0.0, %v2025
      %v2027 = vpop.f32.mrf.mxu0
      %v2028 = vpop.f32.mrf.mxu0
      %v2029 = vadd.f32 0.0, %v2028
      %v2030 = vpop.f32.mrf.mxu0
      %2031 = vdwg.mxu0
      %v2032 = vadd.f32 %v1853, %v1962
      %v2033 = vadd.f32 %v1854, %v1965
      %v2034 = vadd.f32 %v1855, %v1970
      %v2035 = vadd.f32 %v1856, %v1973
      %v2036 = vadd.f32 %v1857, %v1978
      %v2037 = vadd.f32 %v1858, %v1981
      %v2038 = vadd.f32 %v1859, %v1986
      %v2039 = vadd.f32 %v1860, %v1989
      %v2040 = vadd.f32 %v1861, %v1994
      %v2041 = vadd.f32 %v1862, %v1997
      %v2042 = vadd.f32 %v1863, %v2002
      %v2043 = vadd.f32 %v1864, %v2005
      %v2044 = vadd.f32 %v1865, %v2010
      %v2045 = vadd.f32 %v1866, %v2013
      %v2046 = vadd.f32 %v1867, %v2018
      %v2047 = vadd.f32 %v1868, %v2021
      %v2048 = vadd.f32 %v1869, %v2026
      %v2049 = vadd.f32 %v1870, %v2029
      %v2050 = vld [vmem:[%s2] sm:$0x1]
      %v2052 = vlaneseq
      %v2053 = vshrl.u32 %v2052, 7
      %v2054 = vsub.s32 0, %v2053
      %v2055 = vrot.slane %v2050, %v2054
      %v2057 = vadd.f32 %v2032, %v2055
      %v2058 = vadd.f32 %v2033, %v2055
      %v2059 = vadd.f32 %v2034, %v2055
      %v2060 = vadd.f32 %v2035, %v2055
      %v2061 = vadd.f32 %v2036, %v2055
      %v2062 = vadd.f32 %v2037, %v2055
      %v2063 = vadd.f32 %v2038, %v2055
      %v2064 = vadd.f32 %v2039, %v2055
      %v2065 = vadd.f32 %v2040, %v2055
      %v2066 = vadd.f32 %v2041, %v2055
      %v2067 = vadd.f32 %v2042, %v2055
      %v2068 = vadd.f32 %v2043, %v2055
      %v2069 = vadd.f32 %v2044, %v2055
      %v2070 = vadd.f32 %v2045, %v2055
      %v2071 = vadd.f32 %v2046, %v2055
      %v2072 = vadd.f32 %v2047, %v2055
      %v2073 = vadd.f32 %v2048, %v2055
      %v2074 = vadd.f32 %v2049, %v2055
      %v2075 = vmax.f32 %v2057, 0.0
      %v2076 = vmax.f32 %v2058, 0.0
      %v2077 = vmax.f32 %v2059, 0.0
      %v2078 = vmax.f32 %v2060, 0.0
      %v2079 = vmax.f32 %v2061, 0.0
      %v2080 = vmax.f32 %v2062, 0.0
      %v2081 = vmax.f32 %v2063, 0.0
      %v2082 = vmax.f32 %v2064, 0.0
      %v2083 = vmax.f32 %v2065, 0.0
      %v2084 = vmax.f32 %v2066, 0.0
      %v2085 = vmax.f32 %v2067, 0.0
      %v2086 = vmax.f32 %v2068, 0.0
      %v2087 = vmax.f32 %v2069, 0.0
      %v2088 = vmax.f32 %v2070, 0.0
      %v2089 = vmax.f32 %v2071, 0.0
      %v2090 = vmax.f32 %v2072, 0.0
      %v2091 = vmax.f32 %v2073, 0.0
      %v2092 = vmax.f32 %v2074, 0.0
      %vm2096 = vcmask 1045504
      %v2097 = vrot.slane %v2077, 2
      %v2098 = vrot.slane %v2078, 2
      %v2099 = vsel %vm2096, %v2097, %v2098
      %v2100 = vrot.slane %v2079, 2
      %v2101 = vsel %vm2096, %v2098, %v2100
      %v2105 = vmax.f32 %v2075, %v2099
      %v2106 = vmax.f32 %v2076, %v2101
      %v2107 = vmax.f32 %v2077, %v2100
      %2108 = vst.msk [vmem:[#allocation5] sm:$0xff] %vm67, %v2105
      %2109 = vst.msk [vmem:[#allocation5 + $0x8] sm:$0xff] %vm67, %v2106
      %vm2110 = vcmask 254976
      %2111 = vst.msk [vmem:[#allocation5 + $0x10] sm:$0x3] %vm2110, %v2107
      %v2112 = vld [vmem:[#allocation5] ss:$2 sm:$0xff]
      %s2113 = scalar_lea.vmem [#allocation5], 1
      %v2114 = vld [vmem:[%s2113] ss:$2 sm:$0xff]
      %v2115 = vmax.f32 %v2112, %v2114
      %s2116 = smul.u32 %s112, 112
      %s2117 = scalar_lea.vmem [#allocation2], %s2116
      %2118 = vst.msk [vmem:[%s2117 + $0xb] sm:$0xff] %vm67, %v2115
      %v2122 = vrot.slane %v2081, 2
      %v2123 = vrot.slane %v2082, 2
      %v2124 = vsel %vm2096, %v2122, %v2123
      %v2125 = vrot.slane %v2083, 2
      %v2126 = vsel %vm2096, %v2123, %v2125
      %v2130 = vmax.f32 %v2079, %v2124
      %v2131 = vmax.f32 %v2080, %v2126
      %v2132 = vmax.f32 %v2081, %v2125
      %vm2133 = vcmask 261124
      %2134 = vst.msk [vmem:[#allocation5 - $0x4] sm:$0xf0] %vm2133, %v2130
      %2135 = vst.msk [vmem:[#allocation5 + $0x4] sm:$0xff] %vm67, %v2131
      %2136 = vst.msk [vmem:[#allocation5 + $0xc] sm:$0x3f] %vm81, %v2132
      %v2137 = vld [vmem:[#allocation5] ss:$2 sm:$0xff]
      %v2138 = vld [vmem:[%s2113] ss:$2 sm:$0xff]
      %v2139 = vmax.f32 %v2137, %v2138
      %2140 = vst.msk [vmem:[%s2117 + $0x15] sm:$0xff] %vm67, %v2139
      %v2144 = vrot.slane %v2086, 2
      %v2145 = vrot.slane %v2087, 2
      %v2146 = vsel %vm2096, %v2144, %v2145
      %v2147 = vrot.slane %v2088, 2
      %v2148 = vsel %vm2096, %v2145, %v2147
      %v2152 = vmax.f32 %v2084, %v2146
      %v2153 = vmax.f32 %v2085, %v2148
      %v2154 = vmax.f32 %v2086, %v2147
      %2155 = vst.msk [vmem:[#allocation5] sm:$0xff] %vm67, %v2152
      %2156 = vst.msk [vmem:[#allocation5 + $0x8] sm:$0xff] %vm67, %v2153
      %2157 = vst.msk [vmem:[#allocation5 + $0x10] sm:$0x3] %vm2110, %v2154
      %v2158 = vld [vmem:[#allocation5] ss:$2 sm:$0xff]
      %v2159 = vld [vmem:[%s2113] ss:$2 sm:$0xff]
      %v2160 = vmax.f32 %v2158, %v2159
      %2161 = vst.msk [vmem:[%s2117 + $0x1f] sm:$0xff] %vm67, %v2160
      %v2165 = vrot.slane %v2090, 2
      %v2166 = vrot.slane %v2091, 2
      %v2167 = vsel %vm2096, %v2165, %v2166
      %v2168 = vrot.slane %v2092, 2
      %v2169 = vsel %vm2096, %v2166, %v2168
      %v2173 = vmax.f32 %v2088, %v2167
      %v2174 = vmax.f32 %v2089, %v2169
      %v2175 = vmax.f32 %v2090, %v2168
      %2176 = vst.msk [vmem:[#allocation5 - $0x4] sm:$0xf0] %vm2133, %v2173
      %2177 = vst.msk [vmem:[#allocation5 + $0x4] sm:$0xff] %vm67, %v2174
      %2178 = vst.msk [vmem:[#allocation5 + $0xc] sm:$0x3f] %vm81, %v2175
      %v2179 = vld [vmem:[#allocation5] ss:$2 sm:$0xff]
      %v2180 = vld [vmem:[%s2113] ss:$2 sm:$0xff]
      %v2181 = vmax.f32 %v2179, %v2180
      %2182 = vst.msk [vmem:[%s2117 + $0x29] sm:$0xff] %vm67, %v2181
      %v2183 = vld [vmem:[%s119 + $0x48] sm:$0xf]
      %v2184 = vld [vmem:[%s119 + $0x4c] sm:$0xf]
      %v2185 = vld [vmem:[%s119 + $0x50] sm:$0xf]
      %v2186 = vld [vmem:[%s119 + $0x54] sm:$0xf]
      %v2187 = vld [vmem:[%s119 + $0x58] sm:$0xf]
      %v2188 = vld [vmem:[%s119 + $0x5c] sm:$0xf]
      %v2189 = vld [vmem:[%s119 + $0x60] sm:$0xf]
      %v2190 = vld [vmem:[%s119 + $0x64] sm:$0xf]
      %v2191 = vld [vmem:[%s119 + $0x68] sm:$0xf]
      %v2192 = vld [vmem:[%s119 + $0x6c] sm:$0xf]
      %v2193 = vld [vmem:[%s119 + $0x70] sm:$0xf]
      %v2194 = vld [vmem:[%s119 + $0x74] sm:$0xf]
      %v2195 = vld [vmem:[%s119 + $0x78] sm:$0xf]
      %v2196 = vld [vmem:[%s119 + $0x7c] sm:$0xf]
      %v2197 = vld [vmem:[%s119 + $0x80] sm:$0xf]
      %v2198 = vld [vmem:[%s119 + $0x84] sm:$0xf]
      %v2199 = vld [vmem:[%s119 + $0x88] sm:$0xf]
      %v2200 = vld [vmem:[%s119 + $0x8c] sm:$0xf]
      %v2201 = vld [vmem:[%s1] sm:$0x3]
      %v2202 = vld [vmem:[%s119 + $0x90] sm:$0x1]
      %v2203 = vld [vmem:[%s140] sm:$0x3]
      %v2223 = vunpack.c.l.b16 %v2183
      %v2224 = vunpack.c.l.b16 %v2184
      %v2225 = vunpack.c.l.b16 %v2185
      %v2226 = vunpack.c.l.b16 %v2186
      %v2227 = vunpack.c.l.b16 %v2187
      %v2228 = vunpack.c.l.b16 %v2188
      %v2229 = vunpack.c.l.b16 %v2189
      %v2230 = vunpack.c.l.b16 %v2190
      %v2231 = vunpack.c.l.b16 %v2191
      %v2232 = vunpack.c.l.b16 %v2192
      %v2233 = vunpack.c.l.b16 %v2193
      %v2234 = vunpack.c.l.b16 %v2194
      %v2235 = vunpack.c.l.b16 %v2195
      %v2236 = vunpack.c.l.b16 %v2196
      %v2237 = vunpack.c.l.b16 %v2197
      %v2238 = vunpack.c.l.b16 %v2198
      %v2239 = vunpack.c.l.b16 %v2199
      %v2240 = vunpack.c.l.b16 %v2200
      %v2241 = vunpack.c.l.b16 %v2202
      %v2242 = vpack.c.b16 %v2224, %v2223
      %v2243 = vpack.c.b16 %v2226, %v2225
      %v2244 = vpack.c.b16 %v2228, %v2227
      %v2245 = vpack.c.b16 %v2230, %v2229
      %v2246 = vpack.c.b16 %v2232, %v2231
      %v2247 = vpack.c.b16 %v2234, %v2233
      %v2248 = vpack.c.b16 %v2236, %v2235
      %v2249 = vpack.c.b16 %v2238, %v2237
      %v2250 = vpack.c.b16 %v2240, %v2239
      %v2251 = vpack.c.b16 %v2241, %v2241
      %v2253 = vshrl.u32 %v2242, 16
      %v2255 = vshll.u32 %v2242, 16
      %v2257 = vrot.slane %v2255, 1
      %v2258 = vor.u32 %v2253, %v2257
      %v2260 = vshll.u32 %v2243, 16
      %v2262 = vrot.slane %v2260, 1
      %v2263 = vsel %vm190, %v2258, %v2262
      %v2264 = vshrl.u32 %v2243, 16
      %v2266 = vor.u32 %v2264, %v2262
      %v2268 = vshll.u32 %v2244, 16
      %v2270 = vrot.slane %v2268, 1
      %v2271 = vsel %vm190, %v2266, %v2270
      %v2272 = vshrl.u32 %v2244, 16
      %v2274 = vor.u32 %v2272, %v2270
      %v2276 = vshll.u32 %v2245, 16
      %v2278 = vrot.slane %v2276, 1
      %v2279 = vsel %vm190, %v2274, %v2278
      %v2280 = vshrl.u32 %v2245, 16
      %v2282 = vor.u32 %v2280, %v2278
      %v2284 = vshll.u32 %v2246, 16
      %v2286 = vrot.slane %v2284, 1
      %v2287 = vsel %vm190, %v2282, %v2286
      %v2288 = vshrl.u32 %v2246, 16
      %v2290 = vor.u32 %v2288, %v2286
      %v2292 = vshll.u32 %v2247, 16
      %v2294 = vrot.slane %v2292, 1
      %v2295 = vsel %vm190, %v2290, %v2294
      %v2296 = vshrl.u32 %v2247, 16
      %v2298 = vor.u32 %v2296, %v2294
      %v2300 = vshll.u32 %v2248, 16
      %v2302 = vrot.slane %v2300, 1
      %v2303 = vsel %vm190, %v2298, %v2302
      %v2304 = vshrl.u32 %v2248, 16
      %v2306 = vor.u32 %v2304, %v2302
      %v2308 = vshll.u32 %v2249, 16
      %v2310 = vrot.slane %v2308, 1
      %v2311 = vsel %vm190, %v2306, %v2310
      %v2312 = vshrl.u32 %v2249, 16
      %v2314 = vor.u32 %v2312, %v2310
      %v2316 = vshll.u32 %v2250, 16
      %v2318 = vrot.slane %v2316, 1
      %v2319 = vsel %vm190, %v2314, %v2318
      %v2320 = vshrl.u32 %v2250, 16
      %v2322 = vor.u32 %v2320, %v2318
      %v2324 = vshll.u32 %v2251, 16
      %v2326 = vrot.slane %v2324, 1
      %v2327 = vsel %vm190, %v2322, %v2326
      %v2329 = vsel %vm267, %v2263, 0
      %v2332 = vsel %vm267, %v2271, 0
      %v2335 = vsel %vm267, %v2279, 0
      %v2338 = vsel %vm267, %v2287, 0
      %v2341 = vsel %vm267, %v2295, 0
      %v2344 = vsel %vm267, %v2303, 0
      %v2347 = vsel %vm267, %v2311, 0
      %v2350 = vsel %vm267, %v2319, 0
      %v2353 = vsel %vm267, %v2327, 0
      %v2356 = vand.u32 %v2203, %v298
      %2358 = vmatprep.subr.bf16.mxu0 0
      %2359 = vmatpush1.bf16.msra.mxu0 0
      %2360 = vmatprep.subr.bf16.mxu0 0
      %2361 = vmatpush1.bf16.msra.mxu0 0
      %2362 = vmatprep.subr.bf16.mxu0 0
      %2363 = vmatpush1.bf16.msra.mxu0 0
      %2364 = vmatprep.subr.bf16.mxu0 0
      %2365 = vmatpush1.bf16.msra.mxu0 0
      %2366 = vmatprep.subr.bf16.mxu0 0
      %2367 = vmatpush1.bf16.msra.mxu0 0
      %2368 = vmatprep.subr.bf16.mxu0 0
      %2369 = vmatpush1.bf16.msra.mxu0 0
      %2370 = vmatprep.subr.bf16.mxu0 0
      %2371 = vmatpush1.bf16.msra.mxu0 0
      %2372 = vmatprep.subr.bf16.mxu0 0
      %2373 = vmatpush1.bf16.msra.mxu0 %v2356
      %2374 = vmatprep.subr.bf16.mxu0 0
      %2375 = vmatpush2.bf16.msra.mxu0 0
      %2376 = vmatprep.subr.bf16.mxu0 0
      %2377 = vmatpush2.bf16.msra.mxu0 0
      %2378 = vmatprep.subr.bf16.mxu0 0
      %2379 = vmatpush2.bf16.msra.mxu0 0
      %2380 = vmatprep.subr.bf16.mxu0 0
      %2381 = vmatpush2.bf16.msra.mxu0 0
      %2382 = vmatprep.subr.bf16.mxu0 0
      %2383 = vmatpush2.bf16.msra.mxu0 0
      %2384 = vmatprep.subr.bf16.mxu0 0
      %2385 = vmatpush2.bf16.msra.mxu0 0
      %2386 = vmatprep.subr.bf16.mxu0 0
      %2387 = vmatpush2.bf16.msra.mxu0 0
      %2388 = vmatprep.subr.bf16.mxu0 0
      %2389 = vmatpush2.bf16.msra.mxu0 0
      %2390 = vmatprep.mubr.bf16.mxu0 0
      %2391 = vmatmul.mubr.bf16.gmra.mxu0 %v2329
      %v2392 = vpop.f32.mrf.mxu0
      %v2393 = vadd.f32 0.0, %v2392
      %v2394 = vpop.f32.mrf.mxu0
      %v2395 = vpop.f32.mrf.mxu0
      %v2396 = vadd.f32 0.0, %v2395
      %v2397 = vpop.f32.mrf.mxu0
      %2398 = vmatprep.mubr.bf16.mxu0 0
      %2399 = vmatmul.mubr.bf16.gmra.mxu0 %v2332
      %v2400 = vpop.f32.mrf.mxu0
      %v2401 = vadd.f32 0.0, %v2400
      %v2402 = vpop.f32.mrf.mxu0
      %v2403 = vpop.f32.mrf.mxu0
      %v2404 = vadd.f32 0.0, %v2403
      %v2405 = vpop.f32.mrf.mxu0
      %2406 = vmatprep.mubr.bf16.mxu0 0
      %2407 = vmatmul.mubr.bf16.gmra.mxu0 %v2335
      %v2408 = vpop.f32.mrf.mxu0
      %v2409 = vadd.f32 0.0, %v2408
      %v2410 = vpop.f32.mrf.mxu0
      %v2411 = vpop.f32.mrf.mxu0
      %v2412 = vadd.f32 0.0, %v2411
      %v2413 = vpop.f32.mrf.mxu0
      %2414 = vmatprep.mubr.bf16.mxu0 0
      %2415 = vmatmul.mubr.bf16.gmra.mxu0 %v2338
      %v2416 = vpop.f32.mrf.mxu0
      %v2417 = vadd.f32 0.0, %v2416
      %v2418 = vpop.f32.mrf.mxu0
      %v2419 = vpop.f32.mrf.mxu0
      %v2420 = vadd.f32 0.0, %v2419
      %v2421 = vpop.f32.mrf.mxu0
      %2422 = vmatprep.mubr.bf16.mxu0 0
      %2423 = vmatmul.mubr.bf16.gmra.mxu0 %v2341
      %v2424 = vpop.f32.mrf.mxu0
      %v2425 = vadd.f32 0.0, %v2424
      %v2426 = vpop.f32.mrf.mxu0
      %v2427 = vpop.f32.mrf.mxu0
      %v2428 = vadd.f32 0.0, %v2427
      %v2429 = vpop.f32.mrf.mxu0
      %2430 = vmatprep.mubr.bf16.mxu0 0
      %2431 = vmatmul.mubr.bf16.gmra.mxu0 %v2344
      %v2432 = vpop.f32.mrf.mxu0
      %v2433 = vadd.f32 0.0, %v2432
      %v2434 = vpop.f32.mrf.mxu0
      %v2435 = vpop.f32.mrf.mxu0
      %v2436 = vadd.f32 0.0, %v2435
      %v2437 = vpop.f32.mrf.mxu0
      %2438 = vmatprep.mubr.bf16.mxu0 0
      %2439 = vmatmul.mubr.bf16.gmra.mxu0 %v2347
      %v2440 = vpop.f32.mrf.mxu0
      %v2441 = vadd.f32 0.0, %v2440
      %v2442 = vpop.f32.mrf.mxu0
      %v2443 = vpop.f32.mrf.mxu0
      %v2444 = vadd.f32 0.0, %v2443
      %v2445 = vpop.f32.mrf.mxu0
      %2446 = vmatprep.mubr.bf16.mxu0 0
      %2447 = vmatmul.mubr.bf16.gmra.mxu0 %v2350
      %v2448 = vpop.f32.mrf.mxu0
      %v2449 = vadd.f32 0.0, %v2448
      %v2450 = vpop.f32.mrf.mxu0
      %v2451 = vpop.f32.mrf.mxu0
      %v2452 = vadd.f32 0.0, %v2451
      %v2453 = vpop.f32.mrf.mxu0
      %2454 = vmatprep.mubr.bf16.mxu0 0
      %2455 = vmatmul.mubr.bf16.gmra.mxu0 %v2353
      %v2456 = vpop.f32.mrf.mxu0
      %v2457 = vadd.f32 0.0, %v2456
      %v2458 = vpop.f32.mrf.mxu0
      %v2459 = vpop.f32.mrf.mxu0
      %v2460 = vadd.f32 0.0, %v2459
      %v2461 = vpop.f32.mrf.mxu0
      %2462 = vdwg.mxu0
      %v2463 = vsel %vm267, %v2242, 0
      %v2465 = vsel %vm267, %v2243, 0
      %v2467 = vsel %vm267, %v2244, 0
      %v2469 = vsel %vm267, %v2245, 0
      %v2471 = vsel %vm267, %v2246, 0
      %v2473 = vsel %vm267, %v2247, 0
      %v2475 = vsel %vm267, %v2248, 0
      %v2477 = vsel %vm267, %v2249, 0
      %v2479 = vsel %vm267, %v2250, 0
      %v2482 = vand.u32 %v2201, %v298
      %2484 = vmatprep.subr.bf16.mxu0 0
      %2485 = vmatpush1.bf16.msra.mxu0 0
      %2486 = vmatprep.subr.bf16.mxu0 0
      %2487 = vmatpush1.bf16.msra.mxu0 0
      %2488 = vmatprep.subr.bf16.mxu0 0
      %2489 = vmatpush1.bf16.msra.mxu0 0
      %2490 = vmatprep.subr.bf16.mxu0 0
      %2491 = vmatpush1.bf16.msra.mxu0 0
      %2492 = vmatprep.subr.bf16.mxu0 0
      %2493 = vmatpush1.bf16.msra.mxu0 0
      %2494 = vmatprep.subr.bf16.mxu0 0
      %2495 = vmatpush1.bf16.msra.mxu0 0
      %2496 = vmatprep.subr.bf16.mxu0 0
      %2497 = vmatpush1.bf16.msra.mxu0 0
      %2498 = vmatprep.subr.bf16.mxu0 0
      %2499 = vmatpush1.bf16.msra.mxu0 %v2482
      %2500 = vmatprep.subr.bf16.mxu0 0
      %2501 = vmatpush2.bf16.msra.mxu0 0
      %2502 = vmatprep.subr.bf16.mxu0 0
      %2503 = vmatpush2.bf16.msra.mxu0 0
      %2504 = vmatprep.subr.bf16.mxu0 0
      %2505 = vmatpush2.bf16.msra.mxu0 0
      %2506 = vmatprep.subr.bf16.mxu0 0
      %2507 = vmatpush2.bf16.msra.mxu0 0
      %2508 = vmatprep.subr.bf16.mxu0 0
      %2509 = vmatpush2.bf16.msra.mxu0 0
      %2510 = vmatprep.subr.bf16.mxu0 0
      %2511 = vmatpush2.bf16.msra.mxu0 0
      %2512 = vmatprep.subr.bf16.mxu0 0
      %2513 = vmatpush2.bf16.msra.mxu0 0
      %2514 = vmatprep.subr.bf16.mxu0 0
      %2515 = vmatpush2.bf16.msra.mxu0 0
      %2516 = vmatprep.mubr.bf16.mxu0 0
      %2517 = vmatmul.mubr.bf16.gmra.mxu0 %v2463
      %v2518 = vpop.f32.mrf.mxu0
      %v2519 = vadd.f32 %v2393, %v2518
      %v2520 = vpop.f32.mrf.mxu0
      %v2521 = vpop.f32.mrf.mxu0
      %v2522 = vadd.f32 %v2396, %v2521
      %v2523 = vpop.f32.mrf.mxu0
      %2524 = vmatprep.mubr.bf16.mxu0 0
      %2525 = vmatmul.mubr.bf16.gmra.mxu0 %v2465
      %v2526 = vpop.f32.mrf.mxu0
      %v2527 = vadd.f32 %v2401, %v2526
      %v2528 = vpop.f32.mrf.mxu0
      %v2529 = vpop.f32.mrf.mxu0
      %v2530 = vadd.f32 %v2404, %v2529
      %v2531 = vpop.f32.mrf.mxu0
      %2532 = vmatprep.mubr.bf16.mxu0 0
      %2533 = vmatmul.mubr.bf16.gmra.mxu0 %v2467
      %v2534 = vpop.f32.mrf.mxu0
      %v2535 = vadd.f32 %v2409, %v2534
      %v2536 = vpop.f32.mrf.mxu0
      %v2537 = vpop.f32.mrf.mxu0
      %v2538 = vadd.f32 %v2412, %v2537
      %v2539 = vpop.f32.mrf.mxu0
      %2540 = vmatprep.mubr.bf16.mxu0 0
      %2541 = vmatmul.mubr.bf16.gmra.mxu0 %v2469
      %v2542 = vpop.f32.mrf.mxu0
      %v2543 = vadd.f32 %v2417, %v2542
      %v2544 = vpop.f32.mrf.mxu0
      %v2545 = vpop.f32.mrf.mxu0
      %v2546 = vadd.f32 %v2420, %v2545
      %v2547 = vpop.f32.mrf.mxu0
      %2548 = vmatprep.mubr.bf16.mxu0 0
      %2549 = vmatmul.mubr.bf16.gmra.mxu0 %v2471
      %v2550 = vpop.f32.mrf.mxu0
      %v2551 = vadd.f32 %v2425, %v2550
      %v2552 = vpop.f32.mrf.mxu0
      %v2553 = vpop.f32.mrf.mxu0
      %v2554 = vadd.f32 %v2428, %v2553
      %v2555 = vpop.f32.mrf.mxu0
      %2556 = vmatprep.mubr.bf16.mxu0 0
      %2557 = vmatmul.mubr.bf16.gmra.mxu0 %v2473
      %v2558 = vpop.f32.mrf.mxu0
      %v2559 = vadd.f32 %v2433, %v2558
      %v2560 = vpop.f32.mrf.mxu0
      %v2561 = vpop.f32.mrf.mxu0
      %v2562 = vadd.f32 %v2436, %v2561
      %v2563 = vpop.f32.mrf.mxu0
      %2564 = vmatprep.mubr.bf16.mxu0 0
      %2565 = vmatmul.mubr.bf16.gmra.mxu0 %v2475
      %v2566 = vpop.f32.mrf.mxu0
      %v2567 = vadd.f32 %v2441, %v2566
      %v2568 = vpop.f32.mrf.mxu0
      %v2569 = vpop.f32.mrf.mxu0
      %v2570 = vadd.f32 %v2444, %v2569
      %v2571 = vpop.f32.mrf.mxu0
      %2572 = vmatprep.mubr.bf16.mxu0 0
      %2573 = vmatmul.mubr.bf16.gmra.mxu0 %v2477
      %v2574 = vpop.f32.mrf.mxu0
      %v2575 = vadd.f32 %v2449, %v2574
      %v2576 = vpop.f32.mrf.mxu0
      %v2577 = vpop.f32.mrf.mxu0
      %v2578 = vadd.f32 %v2452, %v2577
      %v2579 = vpop.f32.mrf.mxu0
      %2580 = vmatprep.mubr.bf16.mxu0 0
      %2581 = vmatmul.mubr.bf16.gmra.mxu0 %v2479
      %v2582 = vpop.f32.mrf.mxu0
      %v2583 = vadd.f32 %v2457, %v2582
      %v2584 = vpop.f32.mrf.mxu0
      %v2585 = vpop.f32.mrf.mxu0
      %v2586 = vadd.f32 %v2460, %v2585
      %v2587 = vpop.f32.mrf.mxu0
      %2588 = vdwg.mxu0
      %v2589 = vld [vmem:[%s119 + $0x48] sm:$0xe]
      %v2590 = vld [vmem:[%s534] sm:$0x3]
      %v2592 = vunpack.c.l.b16 %v2589
      %v2593 = vpack.c.b16 %v2224, %v2592
      %v2594 = vrot.slane %v2593, 1
      %v2595 = vrot.slane %v2243, 1
      %v2596 = vsel %vm539, %v2594, %v2595
      %v2597 = vrot.slane %v2244, 1
      %v2598 = vsel %vm539, %v2595, %v2597
      %v2599 = vrot.slane %v2245, 1
      %v2600 = vsel %vm539, %v2597, %v2599
      %v2601 = vrot.slane %v2246, 1
      %v2602 = vsel %vm539, %v2599, %v2601
      %v2603 = vrot.slane %v2247, 1
      %v2604 = vsel %vm539, %v2601, %v2603
      %v2605 = vrot.slane %v2248, 1
      %v2606 = vsel %vm539, %v2603, %v2605
      %v2607 = vrot.slane %v2249, 1
      %v2608 = vsel %vm539, %v2605, %v2607
      %v2609 = vrot.slane %v2250, 1
      %v2610 = vsel %vm539, %v2607, %v2609
      %v2611 = vrot.slane %v2251, 1
      %v2612 = vsel %vm539, %v2609, %v2611
      %v2614 = vsel %vm267, %v2596, 0
      %v2617 = vsel %vm267, %v2598, 0
      %v2620 = vsel %vm267, %v2600, 0
      %v2623 = vsel %vm267, %v2602, 0
      %v2626 = vsel %vm267, %v2604, 0
      %v2629 = vsel %vm267, %v2606, 0
      %v2632 = vsel %vm267, %v2608, 0
      %v2635 = vsel %vm267, %v2610, 0
      %v2638 = vsel %vm267, %v2612, 0
      %v2641 = vand.u32 %v2590, %v298
      %2643 = vmatprep.subr.bf16.mxu0 0
      %2644 = vmatpush1.bf16.msra.mxu0 0
      %2645 = vmatprep.subr.bf16.mxu0 0
      %2646 = vmatpush1.bf16.msra.mxu0 0
      %2647 = vmatprep.subr.bf16.mxu0 0
      %2648 = vmatpush1.bf16.msra.mxu0 0
      %2649 = vmatprep.subr.bf16.mxu0 0
      %2650 = vmatpush1.bf16.msra.mxu0 0
      %2651 = vmatprep.subr.bf16.mxu0 0
      %2652 = vmatpush1.bf16.msra.mxu0 0
      %2653 = vmatprep.subr.bf16.mxu0 0
      %2654 = vmatpush1.bf16.msra.mxu0 0
      %2655 = vmatprep.subr.bf16.mxu0 0
      %2656 = vmatpush1.bf16.msra.mxu0 0
      %2657 = vmatprep.subr.bf16.mxu0 0
      %2658 = vmatpush1.bf16.msra.mxu0 %v2641
      %2659 = vmatprep.subr.bf16.mxu0 0
      %2660 = vmatpush2.bf16.msra.mxu0 0
      %2661 = vmatprep.subr.bf16.mxu0 0
      %2662 = vmatpush2.bf16.msra.mxu0 0
      %2663 = vmatprep.subr.bf16.mxu0 0
      %2664 = vmatpush2.bf16.msra.mxu0 0
      %2665 = vmatprep.subr.bf16.mxu0 0
      %2666 = vmatpush2.bf16.msra.mxu0 0
      %2667 = vmatprep.subr.bf16.mxu0 0
      %2668 = vmatpush2.bf16.msra.mxu0 0
      %2669 = vmatprep.subr.bf16.mxu0 0
      %2670 = vmatpush2.bf16.msra.mxu0 0
      %2671 = vmatprep.subr.bf16.mxu0 0
      %2672 = vmatpush2.bf16.msra.mxu0 0
      %2673 = vmatprep.subr.bf16.mxu0 0
      %2674 = vmatpush2.bf16.msra.mxu0 0
      %2675 = vmatprep.mubr.bf16.mxu0 0
      %2676 = vmatmul.mubr.bf16.gmra.mxu0 %v2614
      %v2677 = vpop.f32.mrf.mxu0
      %v2678 = vadd.f32 0.0, %v2677
      %v2679 = vpop.f32.mrf.mxu0
      %v2680 = vpop.f32.mrf.mxu0
      %v2681 = vadd.f32 0.0, %v2680
      %v2682 = vpop.f32.mrf.mxu0
      %2683 = vmatprep.mubr.bf16.mxu0 0
      %2684 = vmatmul.mubr.bf16.gmra.mxu0 %v2617
      %v2685 = vpop.f32.mrf.mxu0
      %v2686 = vadd.f32 0.0, %v2685
      %v2687 = vpop.f32.mrf.mxu0
      %v2688 = vpop.f32.mrf.mxu0
      %v2689 = vadd.f32 0.0, %v2688
      %v2690 = vpop.f32.mrf.mxu0
      %2691 = vmatprep.mubr.bf16.mxu0 0
      %2692 = vmatmul.mubr.bf16.gmra.mxu0 %v2620
      %v2693 = vpop.f32.mrf.mxu0
      %v2694 = vadd.f32 0.0, %v2693
      %v2695 = vpop.f32.mrf.mxu0
      %v2696 = vpop.f32.mrf.mxu0
      %v2697 = vadd.f32 0.0, %v2696
      %v2698 = vpop.f32.mrf.mxu0
      %2699 = vmatprep.mubr.bf16.mxu0 0
      %2700 = vmatmul.mubr.bf16.gmra.mxu0 %v2623
      %v2701 = vpop.f32.mrf.mxu0
      %v2702 = vadd.f32 0.0, %v2701
      %v2703 = vpop.f32.mrf.mxu0
      %v2704 = vpop.f32.mrf.mxu0
      %v2705 = vadd.f32 0.0, %v2704
      %v2706 = vpop.f32.mrf.mxu0
      %2707 = vmatprep.mubr.bf16.mxu0 0
      %2708 = vmatmul.mubr.bf16.gmra.mxu0 %v2626
      %v2709 = vpop.f32.mrf.mxu0
      %v2710 = vadd.f32 0.0, %v2709
      %v2711 = vpop.f32.mrf.mxu0
      %v2712 = vpop.f32.mrf.mxu0
      %v2713 = vadd.f32 0.0, %v2712
      %v2714 = vpop.f32.mrf.mxu0
      %2715 = vmatprep.mubr.bf16.mxu0 0
      %2716 = vmatmul.mubr.bf16.gmra.mxu0 %v2629
      %v2717 = vpop.f32.mrf.mxu0
      %v2718 = vadd.f32 0.0, %v2717
      %v2719 = vpop.f32.mrf.mxu0
      %v2720 = vpop.f32.mrf.mxu0
      %v2721 = vadd.f32 0.0, %v2720
      %v2722 = vpop.f32.mrf.mxu0
      %2723 = vmatprep.mubr.bf16.mxu0 0
      %2724 = vmatmul.mubr.bf16.gmra.mxu0 %v2632
      %v2725 = vpop.f32.mrf.mxu0
      %v2726 = vadd.f32 0.0, %v2725
      %v2727 = vpop.f32.mrf.mxu0
      %v2728 = vpop.f32.mrf.mxu0
      %v2729 = vadd.f32 0.0, %v2728
      %v2730 = vpop.f32.mrf.mxu0
      %2731 = vmatprep.mubr.bf16.mxu0 0
      %2732 = vmatmul.mubr.bf16.gmra.mxu0 %v2635
      %v2733 = vpop.f32.mrf.mxu0
      %v2734 = vadd.f32 0.0, %v2733
      %v2735 = vpop.f32.mrf.mxu0
      %v2736 = vpop.f32.mrf.mxu0
      %v2737 = vadd.f32 0.0, %v2736
      %v2738 = vpop.f32.mrf.mxu0
      %2739 = vmatprep.mubr.bf16.mxu0 0
      %2740 = vmatmul.mubr.bf16.gmra.mxu0 %v2638
      %v2741 = vpop.f32.mrf.mxu0
      %v2742 = vadd.f32 0.0, %v2741
      %v2743 = vpop.f32.mrf.mxu0
      %v2744 = vpop.f32.mrf.mxu0
      %v2745 = vadd.f32 0.0, %v2744
      %v2746 = vpop.f32.mrf.mxu0
      %2747 = vdwg.mxu0
      %v2748 = vadd.f32 %v2519, %v2678
      %v2749 = vadd.f32 %v2522, %v2681
      %v2750 = vadd.f32 %v2527, %v2686
      %v2751 = vadd.f32 %v2530, %v2689
      %v2752 = vadd.f32 %v2535, %v2694
      %v2753 = vadd.f32 %v2538, %v2697
      %v2754 = vadd.f32 %v2543, %v2702
      %v2755 = vadd.f32 %v2546, %v2705
      %v2756 = vadd.f32 %v2551, %v2710
      %v2757 = vadd.f32 %v2554, %v2713
      %v2758 = vadd.f32 %v2559, %v2718
      %v2759 = vadd.f32 %v2562, %v2721
      %v2760 = vadd.f32 %v2567, %v2726
      %v2761 = vadd.f32 %v2570, %v2729
      %v2762 = vadd.f32 %v2575, %v2734
      %v2763 = vadd.f32 %v2578, %v2737
      %v2764 = vadd.f32 %v2583, %v2742
      %v2765 = vadd.f32 %v2586, %v2745
      %v2766 = vld [vmem:[%s119 + $0x50] sm:$0xe]
      %v2767 = vld [vmem:[%s119 + $0x54] sm:$0xf]
      %v2768 = vld [vmem:[%s119 + $0x58] sm:$0xf]
      %v2769 = vld [vmem:[%s119 + $0x5c] sm:$0xf]
      %v2770 = vld [vmem:[%s119 + $0x60] sm:$0xf]
      %v2771 = vld [vmem:[%s119 + $0x64] sm:$0xf]
      %v2772 = vld [vmem:[%s119 + $0x68] sm:$0xf]
      %v2773 = vld [vmem:[%s119 + $0x6c] sm:$0xf]
      %v2774 = vld [vmem:[%s119 + $0x70] sm:$0xf]
      %v2775 = vld [vmem:[%s119 + $0x74] sm:$0xf]
      %v2776 = vld [vmem:[%s119 + $0x78] sm:$0xf]
      %v2777 = vld [vmem:[%s119 + $0x7c] sm:$0xf]
      %v2778 = vld [vmem:[%s119 + $0x80] sm:$0xf]
      %v2779 = vld [vmem:[%s119 + $0x84] sm:$0xf]
      %v2780 = vld [vmem:[%s119 + $0x88] sm:$0xf]
      %v2781 = vld [vmem:[%s119 + $0x8c] sm:$0xf]
      %v2782 = vld [vmem:[%s119 + $0x90] sm:$0xf]
      %v2783 = vld [vmem:[%s119 + $0x94] sm:$0xf]
      %v2784 = vld [vmem:[%s119 + $0x98] sm:$0x1]
      %v2785 = vld [vmem:[%s731] sm:$0x3]
      %v2805 = vunpack.c.l.b16 %v2766
      %v2806 = vunpack.c.l.b16 %v2767
      %v2807 = vunpack.c.l.b16 %v2768
      %v2808 = vunpack.c.l.b16 %v2769
      %v2809 = vunpack.c.l.b16 %v2770
      %v2810 = vunpack.c.l.b16 %v2771
      %v2811 = vunpack.c.l.b16 %v2772
      %v2812 = vunpack.c.l.b16 %v2773
      %v2813 = vunpack.c.l.b16 %v2774
      %v2814 = vunpack.c.l.b16 %v2775
      %v2815 = vunpack.c.l.b16 %v2776
      %v2816 = vunpack.c.l.b16 %v2777
      %v2817 = vunpack.c.l.b16 %v2778
      %v2818 = vunpack.c.l.b16 %v2779
      %v2819 = vunpack.c.l.b16 %v2780
      %v2820 = vunpack.c.l.b16 %v2781
      %v2821 = vunpack.c.l.b16 %v2782
      %v2822 = vunpack.c.l.b16 %v2783
      %v2823 = vunpack.c.l.b16 %v2784
      %v2824 = vpack.c.b16 %v2806, %v2805
      %v2825 = vpack.c.b16 %v2808, %v2807
      %v2826 = vpack.c.b16 %v2810, %v2809
      %v2827 = vpack.c.b16 %v2812, %v2811
      %v2828 = vpack.c.b16 %v2814, %v2813
      %v2829 = vpack.c.b16 %v2816, %v2815
      %v2830 = vpack.c.b16 %v2818, %v2817
      %v2831 = vpack.c.b16 %v2820, %v2819
      %v2832 = vpack.c.b16 %v2822, %v2821
      %v2833 = vpack.c.b16 %v2823, %v2823
      %v2834 = vrot.slane %v2824, 1
      %v2835 = vrot.slane %v2825, 1
      %v2836 = vsel %vm539, %v2834, %v2835
      %v2837 = vrot.slane %v2826, 1
      %v2838 = vsel %vm539, %v2835, %v2837
      %v2839 = vrot.slane %v2827, 1
      %v2840 = vsel %vm539, %v2837, %v2839
      %v2841 = vrot.slane %v2828, 1
      %v2842 = vsel %vm539, %v2839, %v2841
      %v2843 = vrot.slane %v2829, 1
      %v2844 = vsel %vm539, %v2841, %v2843
      %v2845 = vrot.slane %v2830, 1
      %v2846 = vsel %vm539, %v2843, %v2845
      %v2847 = vrot.slane %v2831, 1
      %v2848 = vsel %vm539, %v2845, %v2847
      %v2849 = vrot.slane %v2832, 1
      %v2850 = vsel %vm539, %v2847, %v2849
      %v2851 = vrot.slane %v2833, 1
      %v2852 = vsel %vm539, %v2849, %v2851
      %v2854 = vsel %vm267, %v2836, 0
      %v2857 = vsel %vm267, %v2838, 0
      %v2860 = vsel %vm267, %v2840, 0
      %v2863 = vsel %vm267, %v2842, 0
      %v2866 = vsel %vm267, %v2844, 0
      %v2869 = vsel %vm267, %v2846, 0
      %v2872 = vsel %vm267, %v2848, 0
      %v2875 = vsel %vm267, %v2850, 0
      %v2878 = vsel %vm267, %v2852, 0
      %v2881 = vand.u32 %v2785, %v298
      %2883 = vmatprep.subr.bf16.mxu0 0
      %2884 = vmatpush1.bf16.msra.mxu0 0
      %2885 = vmatprep.subr.bf16.mxu0 0
      %2886 = vmatpush1.bf16.msra.mxu0 0
      %2887 = vmatprep.subr.bf16.mxu0 0
      %2888 = vmatpush1.bf16.msra.mxu0 0
      %2889 = vmatprep.subr.bf16.mxu0 0
      %2890 = vmatpush1.bf16.msra.mxu0 0
      %2891 = vmatprep.subr.bf16.mxu0 0
      %2892 = vmatpush1.bf16.msra.mxu0 0
      %2893 = vmatprep.subr.bf16.mxu0 0
      %2894 = vmatpush1.bf16.msra.mxu0 0
      %2895 = vmatprep.subr.bf16.mxu0 0
      %2896 = vmatpush1.bf16.msra.mxu0 0
      %2897 = vmatprep.subr.bf16.mxu0 0
      %2898 = vmatpush1.bf16.msra.mxu0 %v2881
      %2899 = vmatprep.subr.bf16.mxu0 0
      %2900 = vmatpush2.bf16.msra.mxu0 0
      %2901 = vmatprep.subr.bf16.mxu0 0
      %2902 = vmatpush2.bf16.msra.mxu0 0
      %2903 = vmatprep.subr.bf16.mxu0 0
      %2904 = vmatpush2.bf16.msra.mxu0 0
      %2905 = vmatprep.subr.bf16.mxu0 0
      %2906 = vmatpush2.bf16.msra.mxu0 0
      %2907 = vmatprep.subr.bf16.mxu0 0
      %2908 = vmatpush2.bf16.msra.mxu0 0
      %2909 = vmatprep.subr.bf16.mxu0 0
      %2910 = vmatpush2.bf16.msra.mxu0 0
      %2911 = vmatprep.subr.bf16.mxu0 0
      %2912 = vmatpush2.bf16.msra.mxu0 0
      %2913 = vmatprep.subr.bf16.mxu0 0
      %2914 = vmatpush2.bf16.msra.mxu0 0
      %2915 = vmatprep.mubr.bf16.mxu0 0
      %2916 = vmatmul.mubr.bf16.gmra.mxu0 %v2854
      %v2917 = vpop.f32.mrf.mxu0
      %v2918 = vadd.f32 0.0, %v2917
      %v2919 = vpop.f32.mrf.mxu0
      %v2920 = vpop.f32.mrf.mxu0
      %v2921 = vadd.f32 0.0, %v2920
      %v2922 = vpop.f32.mrf.mxu0
      %2923 = vmatprep.mubr.bf16.mxu0 0
      %2924 = vmatmul.mubr.bf16.gmra.mxu0 %v2857
      %v2925 = vpop.f32.mrf.mxu0
      %v2926 = vadd.f32 0.0, %v2925
      %v2927 = vpop.f32.mrf.mxu0
      %v2928 = vpop.f32.mrf.mxu0
      %v2929 = vadd.f32 0.0, %v2928
      %v2930 = vpop.f32.mrf.mxu0
      %2931 = vmatprep.mubr.bf16.mxu0 0
      %2932 = vmatmul.mubr.bf16.gmra.mxu0 %v2860
      %v2933 = vpop.f32.mrf.mxu0
      %v2934 = vadd.f32 0.0, %v2933
      %v2935 = vpop.f32.mrf.mxu0
      %v2936 = vpop.f32.mrf.mxu0
      %v2937 = vadd.f32 0.0, %v2936
      %v2938 = vpop.f32.mrf.mxu0
      %2939 = vmatprep.mubr.bf16.mxu0 0
      %2940 = vmatmul.mubr.bf16.gmra.mxu0 %v2863
      %v2941 = vpop.f32.mrf.mxu0
      %v2942 = vadd.f32 0.0, %v2941
      %v2943 = vpop.f32.mrf.mxu0
      %v2944 = vpop.f32.mrf.mxu0
      %v2945 = vadd.f32 0.0, %v2944
      %v2946 = vpop.f32.mrf.mxu0
      %2947 = vmatprep.mubr.bf16.mxu0 0
      %2948 = vmatmul.mubr.bf16.gmra.mxu0 %v2866
      %v2949 = vpop.f32.mrf.mxu0
      %v2950 = vadd.f32 0.0, %v2949
      %v2951 = vpop.f32.mrf.mxu0
      %v2952 = vpop.f32.mrf.mxu0
      %v2953 = vadd.f32 0.0, %v2952
      %v2954 = vpop.f32.mrf.mxu0
      %2955 = vmatprep.mubr.bf16.mxu0 0
      %2956 = vmatmul.mubr.bf16.gmra.mxu0 %v2869
      %v2957 = vpop.f32.mrf.mxu0
      %v2958 = vadd.f32 0.0, %v2957
      %v2959 = vpop.f32.mrf.mxu0
      %v2960 = vpop.f32.mrf.mxu0
      %v2961 = vadd.f32 0.0, %v2960
      %v2962 = vpop.f32.mrf.mxu0
      %2963 = vmatprep.mubr.bf16.mxu0 0
      %2964 = vmatmul.mubr.bf16.gmra.mxu0 %v2872
      %v2965 = vpop.f32.mrf.mxu0
      %v2966 = vadd.f32 0.0, %v2965
      %v2967 = vpop.f32.mrf.mxu0
      %v2968 = vpop.f32.mrf.mxu0
      %v2969 = vadd.f32 0.0, %v2968
      %v2970 = vpop.f32.mrf.mxu0
      %2971 = vmatprep.mubr.bf16.mxu0 0
      %2972 = vmatmul.mubr.bf16.gmra.mxu0 %v2875
      %v2973 = vpop.f32.mrf.mxu0
      %v2974 = vadd.f32 0.0, %v2973
      %v2975 = vpop.f32.mrf.mxu0
      %v2976 = vpop.f32.mrf.mxu0
      %v2977 = vadd.f32 0.0, %v2976
      %v2978 = vpop.f32.mrf.mxu0
      %2979 = vmatprep.mubr.bf16.mxu0 0
      %2980 = vmatmul.mubr.bf16.gmra.mxu0 %v2878
      %v2981 = vpop.f32.mrf.mxu0
      %v2982 = vadd.f32 0.0, %v2981
      %v2983 = vpop.f32.mrf.mxu0
      %v2984 = vpop.f32.mrf.mxu0
      %v2985 = vadd.f32 0.0, %v2984
      %v2986 = vpop.f32.mrf.mxu0
      %2987 = vdwg.mxu0
      %v2988 = vadd.f32 %v2748, %v2918
      %v2989 = vadd.f32 %v2749, %v2921
      %v2990 = vadd.f32 %v2750, %v2926
      %v2991 = vadd.f32 %v2751, %v2929
      %v2992 = vadd.f32 %v2752, %v2934
      %v2993 = vadd.f32 %v2753, %v2937
      %v2994 = vadd.f32 %v2754, %v2942
      %v2995 = vadd.f32 %v2755, %v2945
      %v2996 = vadd.f32 %v2756, %v2950
      %v2997 = vadd.f32 %v2757, %v2953
      %v2998 = vadd.f32 %v2758, %v2958
      %v2999 = vadd.f32 %v2759, %v2961
      %v3000 = vadd.f32 %v2760, %v2966
      %v3001 = vadd.f32 %v2761, %v2969
      %v3002 = vadd.f32 %v2762, %v2974
      %v3003 = vadd.f32 %v2763, %v2977
      %v3004 = vadd.f32 %v2764, %v2982
      %v3005 = vadd.f32 %v2765, %v2985
      %v3006 = vld [vmem:[%s119 + $0x98] sm:$0x3]
      %v3007 = vld [vmem:[%s954] sm:$0x3]
      %v3009 = vunpack.c.l.b16 %v3006
      %v3010 = vpack.c.b16 %v3009, %v3009
      %v3012 = vshrl.u32 %v2824, 16
      %v3014 = vrot.slane %v3012, 1
      %v3015 = vshll.u32 %v2824, 16
      %v3017 = vrot.slane %v3015, 2
      %v3018 = vor.u32 %v3014, %v3017
      %v3020 = vshrl.u32 %v2825, 16
      %v3022 = vrot.slane %v3020, 1
      %v3023 = vshll.u32 %v2825, 16
      %v3025 = vrot.slane %v3023, 2
      %v3026 = vor.u32 %v3022, %v3025
      %v3027 = vsel %vm959, %v3018, %v3026
      %v3029 = vshrl.u32 %v2826, 16
      %v3031 = vrot.slane %v3029, 1
      %v3032 = vshll.u32 %v2826, 16
      %v3034 = vrot.slane %v3032, 2
      %v3035 = vor.u32 %v3031, %v3034
      %v3036 = vsel %vm959, %v3026, %v3035
      %v3038 = vshrl.u32 %v2827, 16
      %v3040 = vrot.slane %v3038, 1
      %v3041 = vshll.u32 %v2827, 16
      %v3043 = vrot.slane %v3041, 2
      %v3044 = vor.u32 %v3040, %v3043
      %v3045 = vsel %vm959, %v3035, %v3044
      %v3047 = vshrl.u32 %v2828, 16
      %v3049 = vrot.slane %v3047, 1
      %v3050 = vshll.u32 %v2828, 16
      %v3052 = vrot.slane %v3050, 2
      %v3053 = vor.u32 %v3049, %v3052
      %v3054 = vsel %vm959, %v3044, %v3053
      %v3056 = vshrl.u32 %v2829, 16
      %v3058 = vrot.slane %v3056, 1
      %v3059 = vshll.u32 %v2829, 16
      %v3061 = vrot.slane %v3059, 2
      %v3062 = vor.u32 %v3058, %v3061
      %v3063 = vsel %vm959, %v3053, %v3062
      %v3065 = vshrl.u32 %v2830, 16
      %v3067 = vrot.slane %v3065, 1
      %v3068 = vshll.u32 %v2830, 16
      %v3070 = vrot.slane %v3068, 2
      %v3071 = vor.u32 %v3067, %v3070
      %v3072 = vsel %vm959, %v3062, %v3071
      %v3074 = vshrl.u32 %v2831, 16
      %v3076 = vrot.slane %v3074, 1
      %v3077 = vshll.u32 %v2831, 16
      %v3079 = vrot.slane %v3077, 2
      %v3080 = vor.u32 %v3076, %v3079
      %v3081 = vsel %vm959, %v3071, %v3080
      %v3083 = vshrl.u32 %v2832, 16
      %v3085 = vrot.slane %v3083, 1
      %v3086 = vshll.u32 %v2832, 16
      %v3088 = vrot.slane %v3086, 2
      %v3089 = vor.u32 %v3085, %v3088
      %v3090 = vsel %vm959, %v3080, %v3089
      %v3092 = vshrl.u32 %v3010, 16
      %v3094 = vrot.slane %v3092, 1
      %v3095 = vshll.u32 %v3010, 16
      %v3097 = vrot.slane %v3095, 2
      %v3098 = vor.u32 %v3094, %v3097
      %v3099 = vsel %vm959, %v3089, %v3098
      %v3101 = vsel %vm267, %v3027, 0
      %v3104 = vsel %vm267, %v3036, 0
      %v3107 = vsel %vm267, %v3045, 0
      %v3110 = vsel %vm267, %v3054, 0
      %v3113 = vsel %vm267, %v3063, 0
      %v3116 = vsel %vm267, %v3072, 0
      %v3119 = vsel %vm267, %v3081, 0
      %v3122 = vsel %vm267, %v3090, 0
      %v3125 = vsel %vm267, %v3099, 0
      %v3128 = vand.u32 %v3007, %v298
      %3130 = vmatprep.subr.bf16.mxu0 0
      %3131 = vmatpush1.bf16.msra.mxu0 0
      %3132 = vmatprep.subr.bf16.mxu0 0
      %3133 = vmatpush1.bf16.msra.mxu0 0
      %3134 = vmatprep.subr.bf16.mxu0 0
      %3135 = vmatpush1.bf16.msra.mxu0 0
      %3136 = vmatprep.subr.bf16.mxu0 0
      %3137 = vmatpush1.bf16.msra.mxu0 0
      %3138 = vmatprep.subr.bf16.mxu0 0
      %3139 = vmatpush1.bf16.msra.mxu0 0
      %3140 = vmatprep.subr.bf16.mxu0 0
      %3141 = vmatpush1.bf16.msra.mxu0 0
      %3142 = vmatprep.subr.bf16.mxu0 0
      %3143 = vmatpush1.bf16.msra.mxu0 0
      %3144 = vmatprep.subr.bf16.mxu0 0
      %3145 = vmatpush1.bf16.msra.mxu0 %v3128
      %3146 = vmatprep.subr.bf16.mxu0 0
      %3147 = vmatpush2.bf16.msra.mxu0 0
      %3148 = vmatprep.subr.bf16.mxu0 0
      %3149 = vmatpush2.bf16.msra.mxu0 0
      %3150 = vmatprep.subr.bf16.mxu0 0
      %3151 = vmatpush2.bf16.msra.mxu0 0
      %3152 = vmatprep.subr.bf16.mxu0 0
      %3153 = vmatpush2.bf16.msra.mxu0 0
      %3154 = vmatprep.subr.bf16.mxu0 0
      %3155 = vmatpush2.bf16.msra.mxu0 0
      %3156 = vmatprep.subr.bf16.mxu0 0
      %3157 = vmatpush2.bf16.msra.mxu0 0
      %3158 = vmatprep.subr.bf16.mxu0 0
      %3159 = vmatpush2.bf16.msra.mxu0 0
      %3160 = vmatprep.subr.bf16.mxu0 0
      %3161 = vmatpush2.bf16.msra.mxu0 0
      %3162 = vmatprep.mubr.bf16.mxu0 0
      %3163 = vmatmul.mubr.bf16.gmra.mxu0 %v3101
      %v3164 = vpop.f32.mrf.mxu0
      %v3165 = vadd.f32 0.0, %v3164
      %v3166 = vpop.f32.mrf.mxu0
      %v3167 = vpop.f32.mrf.mxu0
      %v3168 = vadd.f32 0.0, %v3167
      %v3169 = vpop.f32.mrf.mxu0
      %3170 = vmatprep.mubr.bf16.mxu0 0
      %3171 = vmatmul.mubr.bf16.gmra.mxu0 %v3104
      %v3172 = vpop.f32.mrf.mxu0
      %v3173 = vadd.f32 0.0, %v3172
      %v3174 = vpop.f32.mrf.mxu0
      %v3175 = vpop.f32.mrf.mxu0
      %v3176 = vadd.f32 0.0, %v3175
      %v3177 = vpop.f32.mrf.mxu0
      %3178 = vmatprep.mubr.bf16.mxu0 0
      %3179 = vmatmul.mubr.bf16.gmra.mxu0 %v3107
      %v3180 = vpop.f32.mrf.mxu0
      %v3181 = vadd.f32 0.0, %v3180
      %v3182 = vpop.f32.mrf.mxu0
      %v3183 = vpop.f32.mrf.mxu0
      %v3184 = vadd.f32 0.0, %v3183
      %v3185 = vpop.f32.mrf.mxu0
      %3186 = vmatprep.mubr.bf16.mxu0 0
      %3187 = vmatmul.mubr.bf16.gmra.mxu0 %v3110
      %v3188 = vpop.f32.mrf.mxu0
      %v3189 = vadd.f32 0.0, %v3188
      %v3190 = vpop.f32.mrf.mxu0
      %v3191 = vpop.f32.mrf.mxu0
      %v3192 = vadd.f32 0.0, %v3191
      %v3193 = vpop.f32.mrf.mxu0
      %3194 = vmatprep.mubr.bf16.mxu0 0
      %3195 = vmatmul.mubr.bf16.gmra.mxu0 %v3113
      %v3196 = vpop.f32.mrf.mxu0
      %v3197 = vadd.f32 0.0, %v3196
      %v3198 = vpop.f32.mrf.mxu0
      %v3199 = vpop.f32.mrf.mxu0
      %v3200 = vadd.f32 0.0, %v3199
      %v3201 = vpop.f32.mrf.mxu0
      %3202 = vmatprep.mubr.bf16.mxu0 0
      %3203 = vmatmul.mubr.bf16.gmra.mxu0 %v3116
      %v3204 = vpop.f32.mrf.mxu0
      %v3205 = vadd.f32 0.0, %v3204
      %v3206 = vpop.f32.mrf.mxu0
      %v3207 = vpop.f32.mrf.mxu0
      %v3208 = vadd.f32 0.0, %v3207
      %v3209 = vpop.f32.mrf.mxu0
      %3210 = vmatprep.mubr.bf16.mxu0 0
      %3211 = vmatmul.mubr.bf16.gmra.mxu0 %v3119
      %v3212 = vpop.f32.mrf.mxu0
      %v3213 = vadd.f32 0.0, %v3212
      %v3214 = vpop.f32.mrf.mxu0
      %v3215 = vpop.f32.mrf.mxu0
      %v3216 = vadd.f32 0.0, %v3215
      %v3217 = vpop.f32.mrf.mxu0
      %3218 = vmatprep.mubr.bf16.mxu0 0
      %3219 = vmatmul.mubr.bf16.gmra.mxu0 %v3122
      %v3220 = vpop.f32.mrf.mxu0
      %v3221 = vadd.f32 0.0, %v3220
      %v3222 = vpop.f32.mrf.mxu0
      %v3223 = vpop.f32.mrf.mxu0
      %v3224 = vadd.f32 0.0, %v3223
      %v3225 = vpop.f32.mrf.mxu0
      %3226 = vmatprep.mubr.bf16.mxu0 0
      %3227 = vmatmul.mubr.bf16.gmra.mxu0 %v3125
      %v3228 = vpop.f32.mrf.mxu0
      %v3229 = vadd.f32 0.0, %v3228
      %v3230 = vpop.f32.mrf.mxu0
      %v3231 = vpop.f32.mrf.mxu0
      %v3232 = vadd.f32 0.0, %v3231
      %v3233 = vpop.f32.mrf.mxu0
      %3234 = vdwg.mxu0
      %v3235 = vadd.f32 %v2988, %v3165
      %v3236 = vadd.f32 %v2989, %v3168
      %v3237 = vadd.f32 %v2990, %v3173
      %v3238 = vadd.f32 %v2991, %v3176
      %v3239 = vadd.f32 %v2992, %v3181
      %v3240 = vadd.f32 %v2993, %v3184
      %v3241 = vadd.f32 %v2994, %v3189
      %v3242 = vadd.f32 %v2995, %v3192
      %v3243 = vadd.f32 %v2996, %v3197
      %v3244 = vadd.f32 %v2997, %v3200
      %v3245 = vadd.f32 %v2998, %v3205
      %v3246 = vadd.f32 %v2999, %v3208
      %v3247 = vadd.f32 %v3000, %v3213
      %v3248 = vadd.f32 %v3001, %v3216
      %v3249 = vadd.f32 %v3002, %v3221
      %v3250 = vadd.f32 %v3003, %v3224
      %v3251 = vadd.f32 %v3004, %v3229
      %v3252 = vadd.f32 %v3005, %v3232
      %v3253 = vld [vmem:[%s119 + $0x50] sm:$0xc]
      %v3254 = vld [vmem:[%s1203] sm:$0x3]
      %v3256 = vunpack.c.l.b16 %v3253
      %v3257 = vpack.c.b16 %v2806, %v3256
      %v3258 = vrot.slane %v3257, 2
      %v3259 = vrot.slane %v2825, 2
      %v3260 = vsel %vm1208, %v3258, %v3259
      %v3261 = vrot.slane %v2826, 2
      %v3262 = vsel %vm1208, %v3259, %v3261
      %v3263 = vrot.slane %v2827, 2
      %v3264 = vsel %vm1208, %v3261, %v3263
      %v3265 = vrot.slane %v2828, 2
      %v3266 = vsel %vm1208, %v3263, %v3265
      %v3267 = vrot.slane %v2829, 2
      %v3268 = vsel %vm1208, %v3265, %v3267
      %v3269 = vrot.slane %v2830, 2
      %v3270 = vsel %vm1208, %v3267, %v3269
      %v3271 = vrot.slane %v2831, 2
      %v3272 = vsel %vm1208, %v3269, %v3271
      %v3273 = vrot.slane %v2832, 2
      %v3274 = vsel %vm1208, %v3271, %v3273
      %v3275 = vrot.slane %v3010, 2
      %v3276 = vsel %vm1208, %v3273, %v3275
      %v3278 = vsel %vm267, %v3260, 0
      %v3281 = vsel %vm267, %v3262, 0
      %v3284 = vsel %vm267, %v3264, 0
      %v3287 = vsel %vm267, %v3266, 0
      %v3290 = vsel %vm267, %v3268, 0
      %v3293 = vsel %vm267, %v3270, 0
      %v3296 = vsel %vm267, %v3272, 0
      %v3299 = vsel %vm267, %v3274, 0
      %v3302 = vsel %vm267, %v3276, 0
      %v3305 = vand.u32 %v3254, %v298
      %3307 = vmatprep.subr.bf16.mxu0 0
      %3308 = vmatpush1.bf16.msra.mxu0 0
      %3309 = vmatprep.subr.bf16.mxu0 0
      %3310 = vmatpush1.bf16.msra.mxu0 0
      %3311 = vmatprep.subr.bf16.mxu0 0
      %3312 = vmatpush1.bf16.msra.mxu0 0
      %3313 = vmatprep.subr.bf16.mxu0 0
      %3314 = vmatpush1.bf16.msra.mxu0 0
      %3315 = vmatprep.subr.bf16.mxu0 0
      %3316 = vmatpush1.bf16.msra.mxu0 0
      %3317 = vmatprep.subr.bf16.mxu0 0
      %3318 = vmatpush1.bf16.msra.mxu0 0
      %3319 = vmatprep.subr.bf16.mxu0 0
      %3320 = vmatpush1.bf16.msra.mxu0 0
      %3321 = vmatprep.subr.bf16.mxu0 0
      %3322 = vmatpush1.bf16.msra.mxu0 %v3305
      %3323 = vmatprep.subr.bf16.mxu0 0
      %3324 = vmatpush2.bf16.msra.mxu0 0
      %3325 = vmatprep.subr.bf16.mxu0 0
      %3326 = vmatpush2.bf16.msra.mxu0 0
      %3327 = vmatprep.subr.bf16.mxu0 0
      %3328 = vmatpush2.bf16.msra.mxu0 0
      %3329 = vmatprep.subr.bf16.mxu0 0
      %3330 = vmatpush2.bf16.msra.mxu0 0
      %3331 = vmatprep.subr.bf16.mxu0 0
      %3332 = vmatpush2.bf16.msra.mxu0 0
      %3333 = vmatprep.subr.bf16.mxu0 0
      %3334 = vmatpush2.bf16.msra.mxu0 0
      %3335 = vmatprep.subr.bf16.mxu0 0
      %3336 = vmatpush2.bf16.msra.mxu0 0
      %3337 = vmatprep.subr.bf16.mxu0 0
      %3338 = vmatpush2.bf16.msra.mxu0 0
      %3339 = vmatprep.mubr.bf16.mxu0 0
      %3340 = vmatmul.mubr.bf16.gmra.mxu0 %v3278
      %v3341 = vpop.f32.mrf.mxu0
      %v3342 = vadd.f32 0.0, %v3341
      %v3343 = vpop.f32.mrf.mxu0
      %v3344 = vpop.f32.mrf.mxu0
      %v3345 = vadd.f32 0.0, %v3344
      %v3346 = vpop.f32.mrf.mxu0
      %3347 = vmatprep.mubr.bf16.mxu0 0
      %3348 = vmatmul.mubr.bf16.gmra.mxu0 %v3281
      %v3349 = vpop.f32.mrf.mxu0
      %v3350 = vadd.f32 0.0, %v3349
      %v3351 = vpop.f32.mrf.mxu0
      %v3352 = vpop.f32.mrf.mxu0
      %v3353 = vadd.f32 0.0, %v3352
      %v3354 = vpop.f32.mrf.mxu0
      %3355 = vmatprep.mubr.bf16.mxu0 0
      %3356 = vmatmul.mubr.bf16.gmra.mxu0 %v3284
      %v3357 = vpop.f32.mrf.mxu0
      %v3358 = vadd.f32 0.0, %v3357
      %v3359 = vpop.f32.mrf.mxu0
      %v3360 = vpop.f32.mrf.mxu0
      %v3361 = vadd.f32 0.0, %v3360
      %v3362 = vpop.f32.mrf.mxu0
      %3363 = vmatprep.mubr.bf16.mxu0 0
      %3364 = vmatmul.mubr.bf16.gmra.mxu0 %v3287
      %v3365 = vpop.f32.mrf.mxu0
      %v3366 = vadd.f32 0.0, %v3365
      %v3367 = vpop.f32.mrf.mxu0
      %v3368 = vpop.f32.mrf.mxu0
      %v3369 = vadd.f32 0.0, %v3368
      %v3370 = vpop.f32.mrf.mxu0
      %3371 = vmatprep.mubr.bf16.mxu0 0
      %3372 = vmatmul.mubr.bf16.gmra.mxu0 %v3290
      %v3373 = vpop.f32.mrf.mxu0
      %v3374 = vadd.f32 0.0, %v3373
      %v3375 = vpop.f32.mrf.mxu0
      %v3376 = vpop.f32.mrf.mxu0
      %v3377 = vadd.f32 0.0, %v3376
      %v3378 = vpop.f32.mrf.mxu0
      %3379 = vmatprep.mubr.bf16.mxu0 0
      %3380 = vmatmul.mubr.bf16.gmra.mxu0 %v3293
      %v3381 = vpop.f32.mrf.mxu0
      %v3382 = vadd.f32 0.0, %v3381
      %v3383 = vpop.f32.mrf.mxu0
      %v3384 = vpop.f32.mrf.mxu0
      %v3385 = vadd.f32 0.0, %v3384
      %v3386 = vpop.f32.mrf.mxu0
      %3387 = vmatprep.mubr.bf16.mxu0 0
      %3388 = vmatmul.mubr.bf16.gmra.mxu0 %v3296
      %v3389 = vpop.f32.mrf.mxu0
      %v3390 = vadd.f32 0.0, %v3389
      %v3391 = vpop.f32.mrf.mxu0
      %v3392 = vpop.f32.mrf.mxu0
      %v3393 = vadd.f32 0.0, %v3392
      %v3394 = vpop.f32.mrf.mxu0
      %3395 = vmatprep.mubr.bf16.mxu0 0
      %3396 = vmatmul.mubr.bf16.gmra.mxu0 %v3299
      %v3397 = vpop.f32.mrf.mxu0
      %v3398 = vadd.f32 0.0, %v3397
      %v3399 = vpop.f32.mrf.mxu0
      %v3400 = vpop.f32.mrf.mxu0
      %v3401 = vadd.f32 0.0, %v3400
      %v3402 = vpop.f32.mrf.mxu0
      %3403 = vmatprep.mubr.bf16.mxu0 0
      %3404 = vmatmul.mubr.bf16.gmra.mxu0 %v3302
      %v3405 = vpop.f32.mrf.mxu0
      %v3406 = vadd.f32 0.0, %v3405
      %v3407 = vpop.f32.mrf.mxu0
      %v3408 = vpop.f32.mrf.mxu0
      %v3409 = vadd.f32 0.0, %v3408
      %v3410 = vpop.f32.mrf.mxu0
      %3411 = vdwg.mxu0
      %v3412 = vadd.f32 %v3235, %v3342
      %v3413 = vadd.f32 %v3236, %v3345
      %v3414 = vadd.f32 %v3237, %v3350
      %v3415 = vadd.f32 %v3238, %v3353
      %v3416 = vadd.f32 %v3239, %v3358
      %v3417 = vadd.f32 %v3240, %v3361
      %v3418 = vadd.f32 %v3241, %v3366
      %v3419 = vadd.f32 %v3242, %v3369
      %v3420 = vadd.f32 %v3243, %v3374
      %v3421 = vadd.f32 %v3244, %v3377
      %v3422 = vadd.f32 %v3245, %v3382
      %v3423 = vadd.f32 %v3246, %v3385
      %v3424 = vadd.f32 %v3247, %v3390
      %v3425 = vadd.f32 %v3248, %v3393
      %v3426 = vadd.f32 %v3249, %v3398
      %v3427 = vadd.f32 %v3250, %v3401
      %v3428 = vadd.f32 %v3251, %v3406
      %v3429 = vadd.f32 %v3252, %v3409
      %v3430 = vld [vmem:[%s119 + $0x58] sm:$0xc]
      %v3431 = vld [vmem:[%s119 + $0x5c] sm:$0xf]
      %v3432 = vld [vmem:[%s119 + $0x60] sm:$0xf]
      %v3433 = vld [vmem:[%s119 + $0x64] sm:$0xf]
      %v3434 = vld [vmem:[%s119 + $0x68] sm:$0xf]
      %v3435 = vld [vmem:[%s119 + $0x6c] sm:$0xf]
      %v3436 = vld [vmem:[%s119 + $0x70] sm:$0xf]
      %v3437 = vld [vmem:[%s119 + $0x74] sm:$0xf]
      %v3438 = vld [vmem:[%s119 + $0x78] sm:$0xf]
      %v3439 = vld [vmem:[%s119 + $0x7c] sm:$0xf]
      %v3440 = vld [vmem:[%s119 + $0x80] sm:$0xf]
      %v3441 = vld [vmem:[%s119 + $0x84] sm:$0xf]
      %v3442 = vld [vmem:[%s119 + $0x88] sm:$0xf]
      %v3443 = vld [vmem:[%s119 + $0x8c] sm:$0xf]
      %v3444 = vld [vmem:[%s119 + $0x90] sm:$0xf]
      %v3445 = vld [vmem:[%s119 + $0x94] sm:$0xf]
      %v3446 = vld [vmem:[%s119 + $0x98] sm:$0xf]
      %v3447 = vld [vmem:[%s119 + $0x9c] sm:$0xf]
      %v3448 = vld [vmem:[%s119 + $0xa0] sm:$0x3]
      %v3449 = vld [vmem:[%s1400] sm:$0x3]
      %v3469 = vunpack.c.l.b16 %v3430
      %v3470 = vunpack.c.l.b16 %v3431
      %v3471 = vunpack.c.l.b16 %v3432
      %v3472 = vunpack.c.l.b16 %v3433
      %v3473 = vunpack.c.l.b16 %v3434
      %v3474 = vunpack.c.l.b16 %v3435
      %v3475 = vunpack.c.l.b16 %v3436
      %v3476 = vunpack.c.l.b16 %v3437
      %v3477 = vunpack.c.l.b16 %v3438
      %v3478 = vunpack.c.l.b16 %v3439
      %v3479 = vunpack.c.l.b16 %v3440
      %v3480 = vunpack.c.l.b16 %v3441
      %v3481 = vunpack.c.l.b16 %v3442
      %v3482 = vunpack.c.l.b16 %v3443
      %v3483 = vunpack.c.l.b16 %v3444
      %v3484 = vunpack.c.l.b16 %v3445
      %v3485 = vunpack.c.l.b16 %v3446
      %v3486 = vunpack.c.l.b16 %v3447
      %v3487 = vunpack.c.l.b16 %v3448
      %v3488 = vpack.c.b16 %v3470, %v3469
      %v3489 = vpack.c.b16 %v3472, %v3471
      %v3490 = vpack.c.b16 %v3474, %v3473
      %v3491 = vpack.c.b16 %v3476, %v3475
      %v3492 = vpack.c.b16 %v3478, %v3477
      %v3493 = vpack.c.b16 %v3480, %v3479
      %v3494 = vpack.c.b16 %v3482, %v3481
      %v3495 = vpack.c.b16 %v3484, %v3483
      %v3496 = vpack.c.b16 %v3486, %v3485
      %v3497 = vpack.c.b16 %v3487, %v3487
      %v3498 = vrot.slane %v3488, 2
      %v3499 = vrot.slane %v3489, 2
      %v3500 = vsel %vm1208, %v3498, %v3499
      %v3501 = vrot.slane %v3490, 2
      %v3502 = vsel %vm1208, %v3499, %v3501
      %v3503 = vrot.slane %v3491, 2
      %v3504 = vsel %vm1208, %v3501, %v3503
      %v3505 = vrot.slane %v3492, 2
      %v3506 = vsel %vm1208, %v3503, %v3505
      %v3507 = vrot.slane %v3493, 2
      %v3508 = vsel %vm1208, %v3505, %v3507
      %v3509 = vrot.slane %v3494, 2
      %v3510 = vsel %vm1208, %v3507, %v3509
      %v3511 = vrot.slane %v3495, 2
      %v3512 = vsel %vm1208, %v3509, %v3511
      %v3513 = vrot.slane %v3496, 2
      %v3514 = vsel %vm1208, %v3511, %v3513
      %v3515 = vrot.slane %v3497, 2
      %v3516 = vsel %vm1208, %v3513, %v3515
      %v3518 = vsel %vm267, %v3500, 0
      %v3521 = vsel %vm267, %v3502, 0
      %v3524 = vsel %vm267, %v3504, 0
      %v3527 = vsel %vm267, %v3506, 0
      %v3530 = vsel %vm267, %v3508, 0
      %v3533 = vsel %vm267, %v3510, 0
      %v3536 = vsel %vm267, %v3512, 0
      %v3539 = vsel %vm267, %v3514, 0
      %v3542 = vsel %vm267, %v3516, 0
      %v3545 = vand.u32 %v3449, %v298
      %3547 = vmatprep.subr.bf16.mxu0 0
      %3548 = vmatpush1.bf16.msra.mxu0 0
      %3549 = vmatprep.subr.bf16.mxu0 0
      %3550 = vmatpush1.bf16.msra.mxu0 0
      %3551 = vmatprep.subr.bf16.mxu0 0
      %3552 = vmatpush1.bf16.msra.mxu0 0
      %3553 = vmatprep.subr.bf16.mxu0 0
      %3554 = vmatpush1.bf16.msra.mxu0 0
      %3555 = vmatprep.subr.bf16.mxu0 0
      %3556 = vmatpush1.bf16.msra.mxu0 0
      %3557 = vmatprep.subr.bf16.mxu0 0
      %3558 = vmatpush1.bf16.msra.mxu0 0
      %3559 = vmatprep.subr.bf16.mxu0 0
      %3560 = vmatpush1.bf16.msra.mxu0 0
      %3561 = vmatprep.subr.bf16.mxu0 0
      %3562 = vmatpush1.bf16.msra.mxu0 %v3545
      %3563 = vmatprep.subr.bf16.mxu0 0
      %3564 = vmatpush2.bf16.msra.mxu0 0
      %3565 = vmatprep.subr.bf16.mxu0 0
      %3566 = vmatpush2.bf16.msra.mxu0 0
      %3567 = vmatprep.subr.bf16.mxu0 0
      %3568 = vmatpush2.bf16.msra.mxu0 0
      %3569 = vmatprep.subr.bf16.mxu0 0
      %3570 = vmatpush2.bf16.msra.mxu0 0
      %3571 = vmatprep.subr.bf16.mxu0 0
      %3572 = vmatpush2.bf16.msra.mxu0 0
      %3573 = vmatprep.subr.bf16.mxu0 0
      %3574 = vmatpush2.bf16.msra.mxu0 0
      %3575 = vmatprep.subr.bf16.mxu0 0
      %3576 = vmatpush2.bf16.msra.mxu0 0
      %3577 = vmatprep.subr.bf16.mxu0 0
      %3578 = vmatpush2.bf16.msra.mxu0 0
      %3579 = vmatprep.mubr.bf16.mxu0 0
      %3580 = vmatmul.mubr.bf16.gmra.mxu0 %v3518
      %v3581 = vpop.f32.mrf.mxu0
      %v3582 = vadd.f32 0.0, %v3581
      %v3583 = vpop.f32.mrf.mxu0
      %v3584 = vpop.f32.mrf.mxu0
      %v3585 = vadd.f32 0.0, %v3584
      %v3586 = vpop.f32.mrf.mxu0
      %3587 = vmatprep.mubr.bf16.mxu0 0
      %3588 = vmatmul.mubr.bf16.gmra.mxu0 %v3521
      %v3589 = vpop.f32.mrf.mxu0
      %v3590 = vadd.f32 0.0, %v3589
      %v3591 = vpop.f32.mrf.mxu0
      %v3592 = vpop.f32.mrf.mxu0
      %v3593 = vadd.f32 0.0, %v3592
      %v3594 = vpop.f32.mrf.mxu0
      %3595 = vmatprep.mubr.bf16.mxu0 0
      %3596 = vmatmul.mubr.bf16.gmra.mxu0 %v3524
      %v3597 = vpop.f32.mrf.mxu0
      %v3598 = vadd.f32 0.0, %v3597
      %v3599 = vpop.f32.mrf.mxu0
      %v3600 = vpop.f32.mrf.mxu0
      %v3601 = vadd.f32 0.0, %v3600
      %v3602 = vpop.f32.mrf.mxu0
      %3603 = vmatprep.mubr.bf16.mxu0 0
      %3604 = vmatmul.mubr.bf16.gmra.mxu0 %v3527
      %v3605 = vpop.f32.mrf.mxu0
      %v3606 = vadd.f32 0.0, %v3605
      %v3607 = vpop.f32.mrf.mxu0
      %v3608 = vpop.f32.mrf.mxu0
      %v3609 = vadd.f32 0.0, %v3608
      %v3610 = vpop.f32.mrf.mxu0
      %3611 = vmatprep.mubr.bf16.mxu0 0
      %3612 = vmatmul.mubr.bf16.gmra.mxu0 %v3530
      %v3613 = vpop.f32.mrf.mxu0
      %v3614 = vadd.f32 0.0, %v3613
      %v3615 = vpop.f32.mrf.mxu0
      %v3616 = vpop.f32.mrf.mxu0
      %v3617 = vadd.f32 0.0, %v3616
      %v3618 = vpop.f32.mrf.mxu0
      %3619 = vmatprep.mubr.bf16.mxu0 0
      %3620 = vmatmul.mubr.bf16.gmra.mxu0 %v3533
      %v3621 = vpop.f32.mrf.mxu0
      %v3622 = vadd.f32 0.0, %v3621
      %v3623 = vpop.f32.mrf.mxu0
      %v3624 = vpop.f32.mrf.mxu0
      %v3625 = vadd.f32 0.0, %v3624
      %v3626 = vpop.f32.mrf.mxu0
      %3627 = vmatprep.mubr.bf16.mxu0 0
      %3628 = vmatmul.mubr.bf16.gmra.mxu0 %v3536
      %v3629 = vpop.f32.mrf.mxu0
      %v3630 = vadd.f32 0.0, %v3629
      %v3631 = vpop.f32.mrf.mxu0
      %v3632 = vpop.f32.mrf.mxu0
      %v3633 = vadd.f32 0.0, %v3632
      %v3634 = vpop.f32.mrf.mxu0
      %3635 = vmatprep.mubr.bf16.mxu0 0
      %3636 = vmatmul.mubr.bf16.gmra.mxu0 %v3539
      %v3637 = vpop.f32.mrf.mxu0
      %v3638 = vadd.f32 0.0, %v3637
      %v3639 = vpop.f32.mrf.mxu0
      %v3640 = vpop.f32.mrf.mxu0
      %v3641 = vadd.f32 0.0, %v3640
      %v3642 = vpop.f32.mrf.mxu0
      %3643 = vmatprep.mubr.bf16.mxu0 0
      %3644 = vmatmul.mubr.bf16.gmra.mxu0 %v3542
      %v3645 = vpop.f32.mrf.mxu0
      %v3646 = vadd.f32 0.0, %v3645
      %v3647 = vpop.f32.mrf.mxu0
      %v3648 = vpop.f32.mrf.mxu0
      %v3649 = vadd.f32 0.0, %v3648
      %v3650 = vpop.f32.mrf.mxu0
      %3651 = vdwg.mxu0
      %v3652 = vadd.f32 %v3412, %v3582
      %v3653 = vadd.f32 %v3413, %v3585
      %v3654 = vadd.f32 %v3414, %v3590
      %v3655 = vadd.f32 %v3415, %v3593
      %v3656 = vadd.f32 %v3416, %v3598
      %v3657 = vadd.f32 %v3417, %v3601
      %v3658 = vadd.f32 %v3418, %v3606
      %v3659 = vadd.f32 %v3419, %v3609
      %v3660 = vadd.f32 %v3420, %v3614
      %v3661 = vadd.f32 %v3421, %v3617
      %v3662 = vadd.f32 %v3422, %v3622
      %v3663 = vadd.f32 %v3423, %v3625
      %v3664 = vadd.f32 %v3424, %v3630
      %v3665 = vadd.f32 %v3425, %v3633
      %v3666 = vadd.f32 %v3426, %v3638
      %v3667 = vadd.f32 %v3427, %v3641
      %v3668 = vadd.f32 %v3428, %v3646
      %v3669 = vadd.f32 %v3429, %v3649
      %v3670 = vld [vmem:[%s119 + $0xa0] sm:$0x7]
      %v3671 = vld [vmem:[%s1623] sm:$0x3]
      %v3673 = vunpack.c.l.b16 %v3670
      %v3674 = vpack.c.b16 %v3673, %v3673
      %v3676 = vshrl.u32 %v3488, 16
      %v3678 = vrot.slane %v3676, 2
      %v3679 = vshll.u32 %v3488, 16
      %v3681 = vrot.slane %v3679, 3
      %v3682 = vor.u32 %v3678, %v3681
      %v3684 = vshrl.u32 %v3489, 16
      %v3686 = vrot.slane %v3684, 2
      %v3687 = vshll.u32 %v3489, 16
      %v3689 = vrot.slane %v3687, 3
      %v3690 = vor.u32 %v3686, %v3689
      %v3691 = vsel %vm1628, %v3682, %v3690
      %v3693 = vshrl.u32 %v3490, 16
      %v3695 = vrot.slane %v3693, 2
      %v3696 = vshll.u32 %v3490, 16
      %v3698 = vrot.slane %v3696, 3
      %v3699 = vor.u32 %v3695, %v3698
      %v3700 = vsel %vm1628, %v3690, %v3699
      %v3702 = vshrl.u32 %v3491, 16
      %v3704 = vrot.slane %v3702, 2
      %v3705 = vshll.u32 %v3491, 16
      %v3707 = vrot.slane %v3705, 3
      %v3708 = vor.u32 %v3704, %v3707
      %v3709 = vsel %vm1628, %v3699, %v3708
      %v3711 = vshrl.u32 %v3492, 16
      %v3713 = vrot.slane %v3711, 2
      %v3714 = vshll.u32 %v3492, 16
      %v3716 = vrot.slane %v3714, 3
      %v3717 = vor.u32 %v3713, %v3716
      %v3718 = vsel %vm1628, %v3708, %v3717
      %v3720 = vshrl.u32 %v3493, 16
      %v3722 = vrot.slane %v3720, 2
      %v3723 = vshll.u32 %v3493, 16
      %v3725 = vrot.slane %v3723, 3
      %v3726 = vor.u32 %v3722, %v3725
      %v3727 = vsel %vm1628, %v3717, %v3726
      %v3729 = vshrl.u32 %v3494, 16
      %v3731 = vrot.slane %v3729, 2
      %v3732 = vshll.u32 %v3494, 16
      %v3734 = vrot.slane %v3732, 3
      %v3735 = vor.u32 %v3731, %v3734
      %v3736 = vsel %vm1628, %v3726, %v3735
      %v3738 = vshrl.u32 %v3495, 16
      %v3740 = vrot.slane %v3738, 2
      %v3741 = vshll.u32 %v3495, 16
      %v3743 = vrot.slane %v3741, 3
      %v3744 = vor.u32 %v3740, %v3743
      %v3745 = vsel %vm1628, %v3735, %v3744
      %v3747 = vshrl.u32 %v3496, 16
      %v3749 = vrot.slane %v3747, 2
      %v3750 = vshll.u32 %v3496, 16
      %v3752 = vrot.slane %v3750, 3
      %v3753 = vor.u32 %v3749, %v3752
      %v3754 = vsel %vm1628, %v3744, %v3753
      %v3756 = vshrl.u32 %v3674, 16
      %v3758 = vrot.slane %v3756, 2
      %v3759 = vshll.u32 %v3674, 16
      %v3761 = vrot.slane %v3759, 3
      %v3762 = vor.u32 %v3758, %v3761
      %v3763 = vsel %vm1628, %v3753, %v3762
      %v3765 = vsel %vm267, %v3691, 0
      %v3768 = vsel %vm267, %v3700, 0
      %v3771 = vsel %vm267, %v3709, 0
      %v3774 = vsel %vm267, %v3718, 0
      %v3777 = vsel %vm267, %v3727, 0
      %v3780 = vsel %vm267, %v3736, 0
      %v3783 = vsel %vm267, %v3745, 0
      %v3786 = vsel %vm267, %v3754, 0
      %v3789 = vsel %vm267, %v3763, 0
      %v3792 = vand.u32 %v3671, %v298
      %3794 = vmatprep.subr.bf16.mxu0 0
      %3795 = vmatpush1.bf16.msra.mxu0 0
      %3796 = vmatprep.subr.bf16.mxu0 0
      %3797 = vmatpush1.bf16.msra.mxu0 0
      %3798 = vmatprep.subr.bf16.mxu0 0
      %3799 = vmatpush1.bf16.msra.mxu0 0
      %3800 = vmatprep.subr.bf16.mxu0 0
      %3801 = vmatpush1.bf16.msra.mxu0 0
      %3802 = vmatprep.subr.bf16.mxu0 0
      %3803 = vmatpush1.bf16.msra.mxu0 0
      %3804 = vmatprep.subr.bf16.mxu0 0
      %3805 = vmatpush1.bf16.msra.mxu0 0
      %3806 = vmatprep.subr.bf16.mxu0 0
      %3807 = vmatpush1.bf16.msra.mxu0 0
      %3808 = vmatprep.subr.bf16.mxu0 0
      %3809 = vmatpush1.bf16.msra.mxu0 %v3792
      %3810 = vmatprep.subr.bf16.mxu0 0
      %3811 = vmatpush2.bf16.msra.mxu0 0
      %3812 = vmatprep.subr.bf16.mxu0 0
      %3813 = vmatpush2.bf16.msra.mxu0 0
      %3814 = vmatprep.subr.bf16.mxu0 0
      %3815 = vmatpush2.bf16.msra.mxu0 0
      %3816 = vmatprep.subr.bf16.mxu0 0
      %3817 = vmatpush2.bf16.msra.mxu0 0
      %3818 = vmatprep.subr.bf16.mxu0 0
      %3819 = vmatpush2.bf16.msra.mxu0 0
      %3820 = vmatprep.subr.bf16.mxu0 0
      %3821 = vmatpush2.bf16.msra.mxu0 0
      %3822 = vmatprep.subr.bf16.mxu0 0
      %3823 = vmatpush2.bf16.msra.mxu0 0
      %3824 = vmatprep.subr.bf16.mxu0 0
      %3825 = vmatpush2.bf16.msra.mxu0 0
      %3826 = vmatprep.mubr.bf16.mxu0 0
      %3827 = vmatmul.mubr.bf16.gmra.mxu0 %v3765
      %v3828 = vpop.f32.mrf.mxu0
      %v3829 = vadd.f32 0.0, %v3828
      %v3830 = vpop.f32.mrf.mxu0
      %v3831 = vpop.f32.mrf.mxu0
      %v3832 = vadd.f32 0.0, %v3831
      %v3833 = vpop.f32.mrf.mxu0
      %3834 = vmatprep.mubr.bf16.mxu0 0
      %3835 = vmatmul.mubr.bf16.gmra.mxu0 %v3768
      %v3836 = vpop.f32.mrf.mxu0
      %v3837 = vadd.f32 0.0, %v3836
      %v3838 = vpop.f32.mrf.mxu0
      %v3839 = vpop.f32.mrf.mxu0
      %v3840 = vadd.f32 0.0, %v3839
      %v3841 = vpop.f32.mrf.mxu0
      %3842 = vmatprep.mubr.bf16.mxu0 0
      %3843 = vmatmul.mubr.bf16.gmra.mxu0 %v3771
      %v3844 = vpop.f32.mrf.mxu0
      %v3845 = vadd.f32 0.0, %v3844
      %v3846 = vpop.f32.mrf.mxu0
      %v3847 = vpop.f32.mrf.mxu0
      %v3848 = vadd.f32 0.0, %v3847
      %v3849 = vpop.f32.mrf.mxu0
      %3850 = vmatprep.mubr.bf16.mxu0 0
      %3851 = vmatmul.mubr.bf16.gmra.mxu0 %v3774
      %v3852 = vpop.f32.mrf.mxu0
      %v3853 = vadd.f32 0.0, %v3852
      %v3854 = vpop.f32.mrf.mxu0
      %v3855 = vpop.f32.mrf.mxu0
      %v3856 = vadd.f32 0.0, %v3855
      %v3857 = vpop.f32.mrf.mxu0
      %3858 = vmatprep.mubr.bf16.mxu0 0
      %3859 = vmatmul.mubr.bf16.gmra.mxu0 %v3777
      %v3860 = vpop.f32.mrf.mxu0
      %v3861 = vadd.f32 0.0, %v3860
      %v3862 = vpop.f32.mrf.mxu0
      %v3863 = vpop.f32.mrf.mxu0
      %v3864 = vadd.f32 0.0, %v3863
      %v3865 = vpop.f32.mrf.mxu0
      %3866 = vmatprep.mubr.bf16.mxu0 0
      %3867 = vmatmul.mubr.bf16.gmra.mxu0 %v3780
      %v3868 = vpop.f32.mrf.mxu0
      %v3869 = vadd.f32 0.0, %v3868
      %v3870 = vpop.f32.mrf.mxu0
      %v3871 = vpop.f32.mrf.mxu0
      %v3872 = vadd.f32 0.0, %v3871
      %v3873 = vpop.f32.mrf.mxu0
      %3874 = vmatprep.mubr.bf16.mxu0 0
      %3875 = vmatmul.mubr.bf16.gmra.mxu0 %v3783
      %v3876 = vpop.f32.mrf.mxu0
      %v3877 = vadd.f32 0.0, %v3876
      %v3878 = vpop.f32.mrf.mxu0
      %v3879 = vpop.f32.mrf.mxu0
      %v3880 = vadd.f32 0.0, %v3879
      %v3881 = vpop.f32.mrf.mxu0
      %3882 = vmatprep.mubr.bf16.mxu0 0
      %3883 = vmatmul.mubr.bf16.gmra.mxu0 %v3786
      %v3884 = vpop.f32.mrf.mxu0
      %v3885 = vadd.f32 0.0, %v3884
      %v3886 = vpop.f32.mrf.mxu0
      %v3887 = vpop.f32.mrf.mxu0
      %v3888 = vadd.f32 0.0, %v3887
      %v3889 = vpop.f32.mrf.mxu0
      %3890 = vmatprep.mubr.bf16.mxu0 0
      %3891 = vmatmul.mubr.bf16.gmra.mxu0 %v3789
      %v3892 = vpop.f32.mrf.mxu0
      %v3893 = vadd.f32 0.0, %v3892
      %v3894 = vpop.f32.mrf.mxu0
      %v3895 = vpop.f32.mrf.mxu0
      %v3896 = vadd.f32 0.0, %v3895
      %v3897 = vpop.f32.mrf.mxu0
      %3898 = vdwg.mxu0
      %v3899 = vadd.f32 %v3652, %v3829
      %v3900 = vadd.f32 %v3653, %v3832
      %v3901 = vadd.f32 %v3654, %v3837
      %v3902 = vadd.f32 %v3655, %v3840
      %v3903 = vadd.f32 %v3656, %v3845
      %v3904 = vadd.f32 %v3657, %v3848
      %v3905 = vadd.f32 %v3658, %v3853
      %v3906 = vadd.f32 %v3659, %v3856
      %v3907 = vadd.f32 %v3660, %v3861
      %v3908 = vadd.f32 %v3661, %v3864
      %v3909 = vadd.f32 %v3662, %v3869
      %v3910 = vadd.f32 %v3663, %v3872
      %v3911 = vadd.f32 %v3664, %v3877
      %v3912 = vadd.f32 %v3665, %v3880
      %v3913 = vadd.f32 %v3666, %v3885
      %v3914 = vadd.f32 %v3667, %v3888
      %v3915 = vadd.f32 %v3668, %v3893
      %v3916 = vadd.f32 %v3669, %v3896
      %v3917 = vld [vmem:[%s119 + $0x58] sm:$0x8]
      %v3918 = vld [vmem:[%s1872] sm:$0x3]
      %v3920 = vunpack.c.l.b16 %v3917
      %v3921 = vpack.c.b16 %v3470, %v3920
      %v3922 = vrot.slane %v3921, 3
      %v3923 = vrot.slane %v3489, 3
      %v3924 = vsel %vm1877, %v3922, %v3923
      %v3925 = vrot.slane %v3490, 3
      %v3926 = vsel %vm1877, %v3923, %v3925
      %v3927 = vrot.slane %v3491, 3
      %v3928 = vsel %vm1877, %v3925, %v3927
      %v3929 = vrot.slane %v3492, 3
      %v3930 = vsel %vm1877, %v3927, %v3929
      %v3931 = vrot.slane %v3493, 3
      %v3932 = vsel %vm1877, %v3929, %v3931
      %v3933 = vrot.slane %v3494, 3
      %v3934 = vsel %vm1877, %v3931, %v3933
      %v3935 = vrot.slane %v3495, 3
      %v3936 = vsel %vm1877, %v3933, %v3935
      %v3937 = vrot.slane %v3496, 3
      %v3938 = vsel %vm1877, %v3935, %v3937
      %v3939 = vrot.slane %v3674, 3
      %v3940 = vsel %vm1877, %v3937, %v3939
      %v3942 = vsel %vm267, %v3924, 0
      %v3945 = vsel %vm267, %v3926, 0
      %v3948 = vsel %vm267, %v3928, 0
      %v3951 = vsel %vm267, %v3930, 0
      %v3954 = vsel %vm267, %v3932, 0
      %v3957 = vsel %vm267, %v3934, 0
      %v3960 = vsel %vm267, %v3936, 0
      %v3963 = vsel %vm267, %v3938, 0
      %v3966 = vsel %vm267, %v3940, 0
      %v3969 = vand.u32 %v3918, %v298
      %3971 = vmatprep.subr.bf16.mxu0 0
      %3972 = vmatpush1.bf16.msra.mxu0 0
      %3973 = vmatprep.subr.bf16.mxu0 0
      %3974 = vmatpush1.bf16.msra.mxu0 0
      %3975 = vmatprep.subr.bf16.mxu0 0
      %3976 = vmatpush1.bf16.msra.mxu0 0
      %3977 = vmatprep.subr.bf16.mxu0 0
      %3978 = vmatpush1.bf16.msra.mxu0 0
      %3979 = vmatprep.subr.bf16.mxu0 0
      %3980 = vmatpush1.bf16.msra.mxu0 0
      %3981 = vmatprep.subr.bf16.mxu0 0
      %3982 = vmatpush1.bf16.msra.mxu0 0
      %3983 = vmatprep.subr.bf16.mxu0 0
      %3984 = vmatpush1.bf16.msra.mxu0 0
      %3985 = vmatprep.subr.bf16.mxu0 0
      %3986 = vmatpush1.bf16.msra.mxu0 %v3969
      %3987 = vmatprep.subr.bf16.mxu0 0
      %3988 = vmatpush2.bf16.msra.mxu0 0
      %3989 = vmatprep.subr.bf16.mxu0 0
      %3990 = vmatpush2.bf16.msra.mxu0 0
      %3991 = vmatprep.subr.bf16.mxu0 0
      %3992 = vmatpush2.bf16.msra.mxu0 0
      %3993 = vmatprep.subr.bf16.mxu0 0
      %3994 = vmatpush2.bf16.msra.mxu0 0
      %3995 = vmatprep.subr.bf16.mxu0 0
      %3996 = vmatpush2.bf16.msra.mxu0 0
      %3997 = vmatprep.subr.bf16.mxu0 0
      %3998 = vmatpush2.bf16.msra.mxu0 0
      %3999 = vmatprep.subr.bf16.mxu0 0
      %4000 = vmatpush2.bf16.msra.mxu0 0
      %4001 = vmatprep.subr.bf16.mxu0 0
      %4002 = vmatpush2.bf16.msra.mxu0 0
      %4003 = vmatprep.mubr.bf16.mxu0 0
      %4004 = vmatmul.mubr.bf16.gmra.mxu0 %v3942
      %v4005 = vpop.f32.mrf.mxu0
      %v4006 = vadd.f32 0.0, %v4005
      %v4007 = vpop.f32.mrf.mxu0
      %v4008 = vpop.f32.mrf.mxu0
      %v4009 = vadd.f32 0.0, %v4008
      %v4010 = vpop.f32.mrf.mxu0
      %4011 = vmatprep.mubr.bf16.mxu0 0
      %4012 = vmatmul.mubr.bf16.gmra.mxu0 %v3945
      %v4013 = vpop.f32.mrf.mxu0
      %v4014 = vadd.f32 0.0, %v4013
      %v4015 = vpop.f32.mrf.mxu0
      %v4016 = vpop.f32.mrf.mxu0
      %v4017 = vadd.f32 0.0, %v4016
      %v4018 = vpop.f32.mrf.mxu0
      %4019 = vmatprep.mubr.bf16.mxu0 0
      %4020 = vmatmul.mubr.bf16.gmra.mxu0 %v3948
      %v4021 = vpop.f32.mrf.mxu0
      %v4022 = vadd.f32 0.0, %v4021
      %v4023 = vpop.f32.mrf.mxu0
      %v4024 = vpop.f32.mrf.mxu0
      %v4025 = vadd.f32 0.0, %v4024
      %v4026 = vpop.f32.mrf.mxu0
      %4027 = vmatprep.mubr.bf16.mxu0 0
      %4028 = vmatmul.mubr.bf16.gmra.mxu0 %v3951
      %v4029 = vpop.f32.mrf.mxu0
      %v4030 = vadd.f32 0.0, %v4029
      %v4031 = vpop.f32.mrf.mxu0
      %v4032 = vpop.f32.mrf.mxu0
      %v4033 = vadd.f32 0.0, %v4032
      %v4034 = vpop.f32.mrf.mxu0
      %4035 = vmatprep.mubr.bf16.mxu0 0
      %4036 = vmatmul.mubr.bf16.gmra.mxu0 %v3954
      %v4037 = vpop.f32.mrf.mxu0
      %v4038 = vadd.f32 0.0, %v4037
      %v4039 = vpop.f32.mrf.mxu0
      %v4040 = vpop.f32.mrf.mxu0
      %v4041 = vadd.f32 0.0, %v4040
      %v4042 = vpop.f32.mrf.mxu0
      %4043 = vmatprep.mubr.bf16.mxu0 0
      %4044 = vmatmul.mubr.bf16.gmra.mxu0 %v3957
      %v4045 = vpop.f32.mrf.mxu0
      %v4046 = vadd.f32 0.0, %v4045
      %v4047 = vpop.f32.mrf.mxu0
      %v4048 = vpop.f32.mrf.mxu0
      %v4049 = vadd.f32 0.0, %v4048
      %v4050 = vpop.f32.mrf.mxu0
      %4051 = vmatprep.mubr.bf16.mxu0 0
      %4052 = vmatmul.mubr.bf16.gmra.mxu0 %v3960
      %v4053 = vpop.f32.mrf.mxu0
      %v4054 = vadd.f32 0.0, %v4053
      %v4055 = vpop.f32.mrf.mxu0
      %v4056 = vpop.f32.mrf.mxu0
      %v4057 = vadd.f32 0.0, %v4056
      %v4058 = vpop.f32.mrf.mxu0
      %4059 = vmatprep.mubr.bf16.mxu0 0
      %4060 = vmatmul.mubr.bf16.gmra.mxu0 %v3963
      %v4061 = vpop.f32.mrf.mxu0
      %v4062 = vadd.f32 0.0, %v4061
      %v4063 = vpop.f32.mrf.mxu0
      %v4064 = vpop.f32.mrf.mxu0
      %v4065 = vadd.f32 0.0, %v4064
      %v4066 = vpop.f32.mrf.mxu0
      %4067 = vmatprep.mubr.bf16.mxu0 0
      %4068 = vmatmul.mubr.bf16.gmra.mxu0 %v3966
      %v4069 = vpop.f32.mrf.mxu0
      %v4070 = vadd.f32 0.0, %v4069
      %v4071 = vpop.f32.mrf.mxu0
      %v4072 = vpop.f32.mrf.mxu0
      %v4073 = vadd.f32 0.0, %v4072
      %v4074 = vpop.f32.mrf.mxu0
      %4075 = vdwg.mxu0
      %v4076 = vadd.f32 %v3899, %v4006
      %v4077 = vadd.f32 %v3900, %v4009
      %v4078 = vadd.f32 %v3901, %v4014
      %v4079 = vadd.f32 %v3902, %v4017
      %v4080 = vadd.f32 %v3903, %v4022
      %v4081 = vadd.f32 %v3904, %v4025
      %v4082 = vadd.f32 %v3905, %v4030
      %v4083 = vadd.f32 %v3906, %v4033
      %v4084 = vadd.f32 %v3907, %v4038
      %v4085 = vadd.f32 %v3908, %v4041
      %v4086 = vadd.f32 %v3909, %v4046
      %v4087 = vadd.f32 %v3910, %v4049
      %v4088 = vadd.f32 %v3911, %v4054
      %v4089 = vadd.f32 %v3912, %v4057
      %v4090 = vadd.f32 %v3913, %v4062
      %v4091 = vadd.f32 %v3914, %v4065
      %v4092 = vadd.f32 %v3915, %v4070
      %v4093 = vadd.f32 %v3916, %v4073
      %v4094 = vld [vmem:[%s2] sm:$0x1]
      %v4096 = vlaneseq
      %v4097 = vshrl.u32 %v4096, 7
      %v4098 = vsub.s32 0, %v4097
      %v4099 = vrot.slane %v4094, %v4098
      %v4101 = vadd.f32 %v4076, %v4099
      %v4102 = vadd.f32 %v4077, %v4099
      %v4103 = vadd.f32 %v4078, %v4099
      %v4104 = vadd.f32 %v4079, %v4099
      %v4105 = vadd.f32 %v4080, %v4099
      %v4106 = vadd.f32 %v4081, %v4099
      %v4107 = vadd.f32 %v4082, %v4099
      %v4108 = vadd.f32 %v4083, %v4099
      %v4109 = vadd.f32 %v4084, %v4099
      %v4110 = vadd.f32 %v4085, %v4099
      %v4111 = vadd.f32 %v4086, %v4099
      %v4112 = vadd.f32 %v4087, %v4099
      %v4113 = vadd.f32 %v4088, %v4099
      %v4114 = vadd.f32 %v4089, %v4099
      %v4115 = vadd.f32 %v4090, %v4099
      %v4116 = vadd.f32 %v4091, %v4099
      %v4117 = vadd.f32 %v4092, %v4099
      %v4118 = vadd.f32 %v4093, %v4099
      %v4119 = vmax.f32 %v4101, 0.0
      %v4120 = vmax.f32 %v4102, 0.0
      %v4121 = vmax.f32 %v4103, 0.0
      %v4122 = vmax.f32 %v4104, 0.0
      %v4123 = vmax.f32 %v4105, 0.0
      %v4124 = vmax.f32 %v4106, 0.0
      %v4125 = vmax.f32 %v4107, 0.0
      %v4126 = vmax.f32 %v4108, 0.0
      %v4127 = vmax.f32 %v4109, 0.0
      %v4128 = vmax.f32 %v4110, 0.0
      %v4129 = vmax.f32 %v4111, 0.0
      %v4130 = vmax.f32 %v4112, 0.0
      %v4131 = vmax.f32 %v4113, 0.0
      %v4132 = vmax.f32 %v4114, 0.0
      %v4133 = vmax.f32 %v4115, 0.0
      %v4134 = vmax.f32 %v4116, 0.0
      %v4135 = vmax.f32 %v4117, 0.0
      %v4136 = vmax.f32 %v4118, 0.0
      %v4140 = vrot.slane %v4121, 2
      %v4141 = vrot.slane %v4122, 2
      %v4142 = vsel %vm2096, %v4140, %v4141
      %v4143 = vrot.slane %v4123, 2
      %v4144 = vsel %vm2096, %v4141, %v4143
      %v4148 = vmax.f32 %v4119, %v4142
      %v4149 = vmax.f32 %v4120, %v4144
      %v4150 = vmax.f32 %v4121, %v4143
      %4151 = vst.msk [vmem:[#allocation5] sm:$0xff] %vm67, %v4148
      %4152 = vst.msk [vmem:[#allocation5 + $0x8] sm:$0xff] %vm67, %v4149
      %4153 = vst.msk [vmem:[#allocation5 + $0x10] sm:$0x3] %vm2110, %v4150
      %v4154 = vld [vmem:[#allocation5] ss:$2 sm:$0xff]
      %v4155 = vld [vmem:[%s2113] ss:$2 sm:$0xff]
      %v4156 = vmax.f32 %v4154, %v4155
      %4157 = vst.msk [vmem:[%s2117 + $0x33] sm:$0xff] %vm67, %v4156
      %v4161 = vrot.slane %v4125, 2
      %v4162 = vrot.slane %v4126, 2
      %v4163 = vsel %vm2096, %v4161, %v4162
      %v4164 = vrot.slane %v4127, 2
      %v4165 = vsel %vm2096, %v4162, %v4164
      %v4169 = vmax.f32 %v4123, %v4163
      %v4170 = vmax.f32 %v4124, %v4165
      %v4171 = vmax.f32 %v4125, %v4164
      %4172 = vst.msk [vmem:[#allocation5 - $0x4] sm:$0xf0] %vm2133, %v4169
      %4173 = vst.msk [vmem:[#allocation5 + $0x4] sm:$0xff] %vm67, %v4170
      %4174 = vst.msk [vmem:[#allocation5 + $0xc] sm:$0x3f] %vm81, %v4171
      %v4175 = vld [vmem:[#allocation5] ss:$2 sm:$0xff]
      %v4176 = vld [vmem:[%s2113] ss:$2 sm:$0xff]
      %v4177 = vmax.f32 %v4175, %v4176
      %4178 = vst.msk [vmem:[%s2117 + $0x3d] sm:$0xff] %vm67, %v4177
      %v4182 = vrot.slane %v4130, 2
      %v4183 = vrot.slane %v4131, 2
      %v4184 = vsel %vm2096, %v4182, %v4183
      %v4185 = vrot.slane %v4132, 2
      %v4186 = vsel %vm2096, %v4183, %v4185
      %v4190 = vmax.f32 %v4128, %v4184
      %v4191 = vmax.f32 %v4129, %v4186
      %v4192 = vmax.f32 %v4130, %v4185
      %4193 = vst.msk [vmem:[#allocation5] sm:$0xff] %vm67, %v4190
      %4194 = vst.msk [vmem:[#allocation5 + $0x8] sm:$0xff] %vm67, %v4191
      %4195 = vst.msk [vmem:[#allocation5 + $0x10] sm:$0x3] %vm2110, %v4192
      %v4196 = vld [vmem:[#allocation5] ss:$2 sm:$0xff]
      %v4197 = vld [vmem:[%s2113] ss:$2 sm:$0xff]
      %v4198 = vmax.f32 %v4196, %v4197
      %4199 = vst.msk [vmem:[%s2117 + $0x47] sm:$0xff] %vm67, %v4198
      %v4203 = vrot.slane %v4134, 2
      %v4204 = vrot.slane %v4135, 2
      %v4205 = vsel %vm2096, %v4203, %v4204
      %v4206 = vrot.slane %v4136, 2
      %v4207 = vsel %vm2096, %v4204, %v4206
      %v4211 = vmax.f32 %v4132, %v4205
      %v4212 = vmax.f32 %v4133, %v4207
      %v4213 = vmax.f32 %v4134, %v4206
      %4214 = vst.msk [vmem:[#allocation5 - $0x4] sm:$0xf0] %vm2133, %v4211
      %4215 = vst.msk [vmem:[#allocation5 + $0x4] sm:$0xff] %vm67, %v4212
      %4216 = vst.msk [vmem:[#allocation5 + $0xc] sm:$0x3f] %vm81, %v4213
      %v4217 = vld [vmem:[#allocation5] ss:$2 sm:$0xff]
      %v4218 = vld [vmem:[%s2113] ss:$2 sm:$0xff]
      %v4219 = vmax.f32 %v4217, %v4218
      %4220 = vst.msk [vmem:[%s2117 + $0x51] sm:$0xff] %vm67, %v4219
      %v4221 = vld [vmem:[%s2117] sm:$0xff]
      %v4222 = vld [vmem:[%s2117 + $0x8] sm:$0xff]
      %v4223 = vld [vmem:[%s2117 + $0x10] sm:$0xff]
      %v4224 = vld [vmem:[%s2117 + $0x18] sm:$0xff]
      %v4225 = vld [vmem:[%s2117 + $0x20] sm:$0xff]
      %v4226 = vld [vmem:[%s2117 + $0x28] sm:$0xff]
      %v4227 = vld [vmem:[%s2117 + $0x30] sm:$0xff]
      %v4228 = vld [vmem:[%s2117 + $0x38] sm:$0xff]
      %v4229 = vld [vmem:[%s2117 + $0x40] sm:$0xff]
      %v4230 = vld [vmem:[%s2117 + $0x48] sm:$0xff]
      %v4231 = vpack.c.bf16 %v4222, %v4221
      %v4232 = vpack.c.bf16 %v4224, %v4223
      %v4233 = vpack.c.bf16 %v4226, %v4225
      %v4234 = vpack.c.bf16 %v4228, %v4227
      %v4235 = vpack.c.bf16 %v4230, %v4229
      %v4236 = vld [vmem:[%s3] sm:$0xf]
      %v4237 = vld [vmem:[%s3 + $0x4] sm:$0xf]
      %v4238 = vld [vmem:[%s3 + $0x8] sm:$0xf]
      %v4239 = vld [vmem:[%s3 + $0xc] sm:$0xf]
      %v4240 = vld [vmem:[%s2117 + $0x1] sm:$0xff]
      %v4241 = vld [vmem:[%s2117 + $0x9] sm:$0xff]
      %v4242 = vld [vmem:[%s2117 + $0x11] sm:$0xff]
      %v4243 = vld [vmem:[%s2117 + $0x19] sm:$0xff]
      %v4244 = vld [vmem:[%s2117 + $0x21] sm:$0xff]
      %v4245 = vld [vmem:[%s2117 + $0x29] sm:$0xff]
      %v4246 = vld [vmem:[%s2117 + $0x31] sm:$0xff]
      %v4247 = vld [vmem:[%s2117 + $0x39] sm:$0xff]
      %v4248 = vld [vmem:[%s2117 + $0x41] sm:$0xff]
      %v4249 = vld [vmem:[%s2117 + $0x49] sm:$0xff]
      %v4250 = vpack.c.bf16 %v4241, %v4240
      %v4251 = vpack.c.bf16 %v4243, %v4242
      %v4252 = vpack.c.bf16 %v4245, %v4244
      %v4253 = vpack.c.bf16 %v4247, %v4246
      %v4254 = vpack.c.bf16 %v4249, %v4248
      %s4255 = scalar_lea.vmem %s3, 16
      %v4256 = vld [vmem:[%s4255] sm:$0xf]
      %v4257 = vld [vmem:[%s4255 + $0x4] sm:$0xf]
      %v4258 = vld [vmem:[%s4255 + $0x8] sm:$0xf]
      %v4259 = vld [vmem:[%s4255 + $0xc] sm:$0xf]
      %v4264 = vunpack.c.l.b16 %v4256
      %v4265 = vunpack.c.l.b16 %v4257
      %v4266 = vunpack.c.l.b16 %v4258
      %v4267 = vunpack.c.l.b16 %v4259
      %v4268 = vpack.c.b16 %v4265, %v4264
      %v4269 = vpack.c.b16 %v4267, %v4266
      %v4273 = vsel %vm67, %v4250, 0
      %v4276 = vsel %vm67, %v4251, 0
      %v4279 = vsel %vm67, %v4252, 0
      %v4282 = vsel %vm67, %v4253, 0
      %v4285 = vsel %vm67, %v4254, 0
      %4287 = vmatprep.subr.bf16.mxu0 0
      %4288 = vmatpush1.bf16.msra.mxu0 0
      %4289 = vmatprep.subr.bf16.mxu0 0
      %4290 = vmatpush1.bf16.msra.mxu0 0
      %4291 = vmatprep.subr.bf16.mxu0 0
      %4292 = vmatpush1.bf16.msra.mxu0 0
      %4293 = vmatprep.subr.bf16.mxu0 0
      %4294 = vmatpush1.bf16.msra.mxu0 0
      %4295 = vmatprep.subr.bf16.mxu0 0
      %4296 = vmatpush1.bf16.msra.mxu0 0
      %4297 = vmatprep.subr.bf16.mxu0 0
      %4298 = vmatpush1.bf16.msra.mxu0 0
      %4299 = vmatprep.subr.bf16.mxu0 0
      %4300 = vmatpush1.bf16.msra.mxu0 %v4269
      %4301 = vmatprep.subr.bf16.mxu0 0
      %4302 = vmatpush1.bf16.msra.mxu0 %v4268
      %4303 = vmatprep.subr.bf16.mxu0 0
      %4304 = vmatpush2.bf16.msra.mxu0 0
      %4305 = vmatprep.subr.bf16.mxu0 0
      %4306 = vmatpush2.bf16.msra.mxu0 0
      %4307 = vmatprep.subr.bf16.mxu0 0
      %4308 = vmatpush2.bf16.msra.mxu0 0
      %4309 = vmatprep.subr.bf16.mxu0 0
      %4310 = vmatpush2.bf16.msra.mxu0 0
      %4311 = vmatprep.subr.bf16.mxu0 0
      %4312 = vmatpush2.bf16.msra.mxu0 0
      %4313 = vmatprep.subr.bf16.mxu0 0
      %4314 = vmatpush2.bf16.msra.mxu0 0
      %4315 = vmatprep.subr.bf16.mxu0 0
      %4316 = vmatpush2.bf16.msra.mxu0 0
      %4317 = vmatprep.subr.bf16.mxu0 0
      %4318 = vmatpush2.bf16.msra.mxu0 0
      %4319 = vmatprep.mubr.bf16.mxu0 0
      %4320 = vmatmul.mubr.bf16.gmra.mxu0 %v4273
      %v4321 = vpop.f32.mrf.mxu0
      %v4322 = vadd.f32 0.0, %v4321
      %v4323 = vpop.f32.mrf.mxu0
      %v4324 = vpop.f32.mrf.mxu0
      %v4325 = vadd.f32 0.0, %v4324
      %v4326 = vpop.f32.mrf.mxu0
      %4327 = vmatprep.mubr.bf16.mxu0 0
      %4328 = vmatmul.mubr.bf16.gmra.mxu0 %v4276
      %v4329 = vpop.f32.mrf.mxu0
      %v4330 = vadd.f32 0.0, %v4329
      %v4331 = vpop.f32.mrf.mxu0
      %v4332 = vpop.f32.mrf.mxu0
      %v4333 = vadd.f32 0.0, %v4332
      %v4334 = vpop.f32.mrf.mxu0
      %4335 = vmatprep.mubr.bf16.mxu0 0
      %4336 = vmatmul.mubr.bf16.gmra.mxu0 %v4279
      %v4337 = vpop.f32.mrf.mxu0
      %v4338 = vadd.f32 0.0, %v4337
      %v4339 = vpop.f32.mrf.mxu0
      %v4340 = vpop.f32.mrf.mxu0
      %v4341 = vadd.f32 0.0, %v4340
      %v4342 = vpop.f32.mrf.mxu0
      %4343 = vmatprep.mubr.bf16.mxu0 0
      %4344 = vmatmul.mubr.bf16.gmra.mxu0 %v4282
      %v4345 = vpop.f32.mrf.mxu0
      %v4346 = vadd.f32 0.0, %v4345
      %v4347 = vpop.f32.mrf.mxu0
      %v4348 = vpop.f32.mrf.mxu0
      %v4349 = vadd.f32 0.0, %v4348
      %v4350 = vpop.f32.mrf.mxu0
      %4351 = vmatprep.mubr.bf16.mxu0 0
      %4352 = vmatmul.mubr.bf16.gmra.mxu0 %v4285
      %v4353 = vpop.f32.mrf.mxu0
      %v4354 = vadd.f32 0.0, %v4353
      %v4355 = vpop.f32.mrf.mxu0
      %v4356 = vpop.f32.mrf.mxu0
      %v4357 = vadd.f32 0.0, %v4356
      %v4358 = vpop.f32.mrf.mxu0
      %4359 = vdwg.mxu0
      %v4364 = vunpack.c.l.b16 %v4236
      %v4365 = vunpack.c.l.b16 %v4237
      %v4366 = vunpack.c.l.b16 %v4238
      %v4367 = vunpack.c.l.b16 %v4239
      %v4368 = vpack.c.b16 %v4365, %v4364
      %v4369 = vpack.c.b16 %v4367, %v4366
      %v4373 = vsel %vm67, %v4231, 0
      %v4376 = vsel %vm67, %v4232, 0
      %v4379 = vsel %vm67, %v4233, 0
      %v4382 = vsel %vm67, %v4234, 0
      %v4385 = vsel %vm67, %v4235, 0
      %4387 = vmatprep.subr.bf16.mxu0 0
      %4388 = vmatpush1.bf16.msra.mxu0 0
      %4389 = vmatprep.subr.bf16.mxu0 0
      %4390 = vmatpush1.bf16.msra.mxu0 0
      %4391 = vmatprep.subr.bf16.mxu0 0
      %4392 = vmatpush1.bf16.msra.mxu0 0
      %4393 = vmatprep.subr.bf16.mxu0 0
      %4394 = vmatpush1.bf16.msra.mxu0 0
      %4395 = vmatprep.subr.bf16.mxu0 0
      %4396 = vmatpush1.bf16.msra.mxu0 0
      %4397 = vmatprep.subr.bf16.mxu0 0
      %4398 = vmatpush1.bf16.msra.mxu0 0
      %4399 = vmatprep.subr.bf16.mxu0 0
      %4400 = vmatpush1.bf16.msra.mxu0 %v4369
      %4401 = vmatprep.subr.bf16.mxu0 0
      %4402 = vmatpush1.bf16.msra.mxu0 %v4368
      %4403 = vmatprep.subr.bf16.mxu0 0
      %4404 = vmatpush2.bf16.msra.mxu0 0
      %4405 = vmatprep.subr.bf16.mxu0 0
      %4406 = vmatpush2.bf16.msra.mxu0 0
      %4407 = vmatprep.subr.bf16.mxu0 0
      %4408 = vmatpush2.bf16.msra.mxu0 0
      %4409 = vmatprep.subr.bf16.mxu0 0
      %4410 = vmatpush2.bf16.msra.mxu0 0
      %4411 = vmatprep.subr.bf16.mxu0 0
      %4412 = vmatpush2.bf16.msra.mxu0 0
      %4413 = vmatprep.subr.bf16.mxu0 0
      %4414 = vmatpush2.bf16.msra.mxu0 0
      %4415 = vmatprep.subr.bf16.mxu0 0
      %4416 = vmatpush2.bf16.msra.mxu0 0
      %4417 = vmatprep.subr.bf16.mxu0 0
      %4418 = vmatpush2.bf16.msra.mxu0 0
      %4419 = vmatprep.mubr.bf16.mxu0 0
      %4420 = vmatmul.mubr.bf16.gmra.mxu0 %v4373
      %v4421 = vpop.f32.mrf.mxu0
      %v4422 = vadd.f32 %v4322, %v4421
      %v4423 = vpop.f32.mrf.mxu0
      %v4424 = vpop.f32.mrf.mxu0
      %v4425 = vadd.f32 %v4325, %v4424
      %v4426 = vpop.f32.mrf.mxu0
      %4427 = vmatprep.mubr.bf16.mxu0 0
      %4428 = vmatmul.mubr.bf16.gmra.mxu0 %v4376
      %v4429 = vpop.f32.mrf.mxu0
      %v4430 = vadd.f32 %v4330, %v4429
      %v4431 = vpop.f32.mrf.mxu0
      %v4432 = vpop.f32.mrf.mxu0
      %v4433 = vadd.f32 %v4333, %v4432
      %v4434 = vpop.f32.mrf.mxu0
      %4435 = vmatprep.mubr.bf16.mxu0 0
      %4436 = vmatmul.mubr.bf16.gmra.mxu0 %v4379
      %v4437 = vpop.f32.mrf.mxu0
      %v4438 = vadd.f32 %v4338, %v4437
      %v4439 = vpop.f32.mrf.mxu0
      %v4440 = vpop.f32.mrf.mxu0
      %v4441 = vadd.f32 %v4341, %v4440
      %v4442 = vpop.f32.mrf.mxu0
      %4443 = vmatprep.mubr.bf16.mxu0 0
      %4444 = vmatmul.mubr.bf16.gmra.mxu0 %v4382
      %v4445 = vpop.f32.mrf.mxu0
      %v4446 = vadd.f32 %v4346, %v4445
      %v4447 = vpop.f32.mrf.mxu0
      %v4448 = vpop.f32.mrf.mxu0
      %v4449 = vadd.f32 %v4349, %v4448
      %v4450 = vpop.f32.mrf.mxu0
      %4451 = vmatprep.mubr.bf16.mxu0 0
      %4452 = vmatmul.mubr.bf16.gmra.mxu0 %v4385
      %v4453 = vpop.f32.mrf.mxu0
      %v4454 = vadd.f32 %v4354, %v4453
      %v4455 = vpop.f32.mrf.mxu0
      %v4456 = vpop.f32.mrf.mxu0
      %v4457 = vadd.f32 %v4357, %v4456
      %v4458 = vpop.f32.mrf.mxu0
      %4459 = vdwg.mxu0
      %v4460 = vld [vmem:[%s2117 + $0x2] sm:$0xff]
      %v4461 = vld [vmem:[%s2117 + $0xa] sm:$0xff]
      %v4462 = vld [vmem:[%s2117 + $0x12] sm:$0xff]
      %v4463 = vld [vmem:[%s2117 + $0x1a] sm:$0xff]
      %v4464 = vld [vmem:[%s2117 + $0x22] sm:$0xff]
      %v4465 = vld [vmem:[%s2117 + $0x2a] sm:$0xff]
      %v4466 = vld [vmem:[%s2117 + $0x32] sm:$0xff]
      %v4467 = vld [vmem:[%s2117 + $0x3a] sm:$0xff]
      %v4468 = vld [vmem:[%s2117 + $0x42] sm:$0xff]
      %v4469 = vld [vmem:[%s2117 + $0x4a] sm:$0xff]
      %v4470 = vpack.c.bf16 %v4461, %v4460
      %v4471 = vpack.c.bf16 %v4463, %v4462
      %v4472 = vpack.c.bf16 %v4465, %v4464
      %v4473 = vpack.c.bf16 %v4467, %v4466
      %v4474 = vpack.c.bf16 %v4469, %v4468
      %s4475 = scalar_lea.vmem %s3, 32
      %v4476 = vld [vmem:[%s4475] sm:$0xf]
      %v4477 = vld [vmem:[%s4475 + $0x4] sm:$0xf]
      %v4478 = vld [vmem:[%s4475 + $0x8] sm:$0xf]
      %v4479 = vld [vmem:[%s4475 + $0xc] sm:$0xf]
      %v4484 = vunpack.c.l.b16 %v4476
      %v4485 = vunpack.c.l.b16 %v4477
      %v4486 = vunpack.c.l.b16 %v4478
      %v4487 = vunpack.c.l.b16 %v4479
      %v4488 = vpack.c.b16 %v4485, %v4484
      %v4489 = vpack.c.b16 %v4487, %v4486
      %v4493 = vsel %vm67, %v4470, 0
      %v4496 = vsel %vm67, %v4471, 0
      %v4499 = vsel %vm67, %v4472, 0
      %v4502 = vsel %vm67, %v4473, 0
      %v4505 = vsel %vm67, %v4474, 0
      %4507 = vmatprep.subr.bf16.mxu0 0
      %4508 = vmatpush1.bf16.msra.mxu0 0
      %4509 = vmatprep.subr.bf16.mxu0 0
      %4510 = vmatpush1.bf16.msra.mxu0 0
      %4511 = vmatprep.subr.bf16.mxu0 0
      %4512 = vmatpush1.bf16.msra.mxu0 0
      %4513 = vmatprep.subr.bf16.mxu0 0
      %4514 = vmatpush1.bf16.msra.mxu0 0
      %4515 = vmatprep.subr.bf16.mxu0 0
      %4516 = vmatpush1.bf16.msra.mxu0 0
      %4517 = vmatprep.subr.bf16.mxu0 0
      %4518 = vmatpush1.bf16.msra.mxu0 0
      %4519 = vmatprep.subr.bf16.mxu0 0
      %4520 = vmatpush1.bf16.msra.mxu0 %v4489
      %4521 = vmatprep.subr.bf16.mxu0 0
      %4522 = vmatpush1.bf16.msra.mxu0 %v4488
      %4523 = vmatprep.subr.bf16.mxu0 0
      %4524 = vmatpush2.bf16.msra.mxu0 0
      %4525 = vmatprep.subr.bf16.mxu0 0
      %4526 = vmatpush2.bf16.msra.mxu0 0
      %4527 = vmatprep.subr.bf16.mxu0 0
      %4528 = vmatpush2.bf16.msra.mxu0 0
      %4529 = vmatprep.subr.bf16.mxu0 0
      %4530 = vmatpush2.bf16.msra.mxu0 0
      %4531 = vmatprep.subr.bf16.mxu0 0
      %4532 = vmatpush2.bf16.msra.mxu0 0
      %4533 = vmatprep.subr.bf16.mxu0 0
      %4534 = vmatpush2.bf16.msra.mxu0 0
      %4535 = vmatprep.subr.bf16.mxu0 0
      %4536 = vmatpush2.bf16.msra.mxu0 0
      %4537 = vmatprep.subr.bf16.mxu0 0
      %4538 = vmatpush2.bf16.msra.mxu0 0
      %4539 = vmatprep.mubr.bf16.mxu0 0
      %4540 = vmatmul.mubr.bf16.gmra.mxu0 %v4493
      %v4541 = vpop.f32.mrf.mxu0
      %v4542 = vadd.f32 0.0, %v4541
      %v4543 = vpop.f32.mrf.mxu0
      %v4544 = vpop.f32.mrf.mxu0
      %v4545 = vadd.f32 0.0, %v4544
      %v4546 = vpop.f32.mrf.mxu0
      %4547 = vmatprep.mubr.bf16.mxu0 0
      %4548 = vmatmul.mubr.bf16.gmra.mxu0 %v4496
      %v4549 = vpop.f32.mrf.mxu0
      %v4550 = vadd.f32 0.0, %v4549
      %v4551 = vpop.f32.mrf.mxu0
      %v4552 = vpop.f32.mrf.mxu0
      %v4553 = vadd.f32 0.0, %v4552
      %v4554 = vpop.f32.mrf.mxu0
      %4555 = vmatprep.mubr.bf16.mxu0 0
      %4556 = vmatmul.mubr.bf16.gmra.mxu0 %v4499
      %v4557 = vpop.f32.mrf.mxu0
      %v4558 = vadd.f32 0.0, %v4557
      %v4559 = vpop.f32.mrf.mxu0
      %v4560 = vpop.f32.mrf.mxu0
      %v4561 = vadd.f32 0.0, %v4560
      %v4562 = vpop.f32.mrf.mxu0
      %4563 = vmatprep.mubr.bf16.mxu0 0
      %4564 = vmatmul.mubr.bf16.gmra.mxu0 %v4502
      %v4565 = vpop.f32.mrf.mxu0
      %v4566 = vadd.f32 0.0, %v4565
      %v4567 = vpop.f32.mrf.mxu0
      %v4568 = vpop.f32.mrf.mxu0
      %v4569 = vadd.f32 0.0, %v4568
      %v4570 = vpop.f32.mrf.mxu0
      %4571 = vmatprep.mubr.bf16.mxu0 0
      %4572 = vmatmul.mubr.bf16.gmra.mxu0 %v4505
      %v4573 = vpop.f32.mrf.mxu0
      %v4574 = vadd.f32 0.0, %v4573
      %v4575 = vpop.f32.mrf.mxu0
      %v4576 = vpop.f32.mrf.mxu0
      %v4577 = vadd.f32 0.0, %v4576
      %v4578 = vpop.f32.mrf.mxu0
      %4579 = vdwg.mxu0
      %v4580 = vadd.f32 %v4422, %v4542
      %v4581 = vadd.f32 %v4425, %v4545
      %v4582 = vadd.f32 %v4430, %v4550
      %v4583 = vadd.f32 %v4433, %v4553
      %v4584 = vadd.f32 %v4438, %v4558
      %v4585 = vadd.f32 %v4441, %v4561
      %v4586 = vadd.f32 %v4446, %v4566
      %v4587 = vadd.f32 %v4449, %v4569
      %v4588 = vadd.f32 %v4454, %v4574
      %v4589 = vadd.f32 %v4457, %v4577
      %v4590 = vld [vmem:[%s2117 + $0xa] sm:$0xff]
      %v4591 = vld [vmem:[%s2117 + $0x12] sm:$0xff]
      %v4592 = vld [vmem:[%s2117 + $0x1a] sm:$0xff]
      %v4593 = vld [vmem:[%s2117 + $0x22] sm:$0xff]
      %v4594 = vld [vmem:[%s2117 + $0x2a] sm:$0xff]
      %v4595 = vld [vmem:[%s2117 + $0x32] sm:$0xff]
      %v4596 = vld [vmem:[%s2117 + $0x3a] sm:$0xff]
      %v4597 = vld [vmem:[%s2117 + $0x42] sm:$0xff]
      %v4598 = vld [vmem:[%s2117 + $0x4a] sm:$0xff]
      %v4599 = vld [vmem:[%s2117 + $0x52] sm:$0xff]
      %v4600 = vpack.c.bf16 %v4591, %v4590
      %v4601 = vpack.c.bf16 %v4593, %v4592
      %v4602 = vpack.c.bf16 %v4595, %v4594
      %v4603 = vpack.c.bf16 %v4597, %v4596
      %v4604 = vpack.c.bf16 %v4599, %v4598
      %s4605 = scalar_lea.vmem %s3, 48
      %v4606 = vld [vmem:[%s4605] sm:$0xf]
      %v4607 = vld [vmem:[%s4605 + $0x4] sm:$0xf]
      %v4608 = vld [vmem:[%s4605 + $0x8] sm:$0xf]
      %v4609 = vld [vmem:[%s4605 + $0xc] sm:$0xf]
      %v4614 = vunpack.c.l.b16 %v4606
      %v4615 = vunpack.c.l.b16 %v4607
      %v4616 = vunpack.c.l.b16 %v4608
      %v4617 = vunpack.c.l.b16 %v4609
      %v4618 = vpack.c.b16 %v4615, %v4614
      %v4619 = vpack.c.b16 %v4617, %v4616
      %v4623 = vsel %vm67, %v4600, 0
      %v4626 = vsel %vm67, %v4601, 0
      %v4629 = vsel %vm67, %v4602, 0
      %v4632 = vsel %vm67, %v4603, 0
      %v4635 = vsel %vm67, %v4604, 0
      %4637 = vmatprep.subr.bf16.mxu0 0
      %4638 = vmatpush1.bf16.msra.mxu0 0
      %4639 = vmatprep.subr.bf16.mxu0 0
      %4640 = vmatpush1.bf16.msra.mxu0 0
      %4641 = vmatprep.subr.bf16.mxu0 0
      %4642 = vmatpush1.bf16.msra.mxu0 0
      %4643 = vmatprep.subr.bf16.mxu0 0
      %4644 = vmatpush1.bf16.msra.mxu0 0
      %4645 = vmatprep.subr.bf16.mxu0 0
      %4646 = vmatpush1.bf16.msra.mxu0 0
      %4647 = vmatprep.subr.bf16.mxu0 0
      %4648 = vmatpush1.bf16.msra.mxu0 0
      %4649 = vmatprep.subr.bf16.mxu0 0
      %4650 = vmatpush1.bf16.msra.mxu0 %v4619
      %4651 = vmatprep.subr.bf16.mxu0 0
      %4652 = vmatpush1.bf16.msra.mxu0 %v4618
      %4653 = vmatprep.subr.bf16.mxu0 0
      %4654 = vmatpush2.bf16.msra.mxu0 0
      %4655 = vmatprep.subr.bf16.mxu0 0
      %4656 = vmatpush2.bf16.msra.mxu0 0
      %4657 = vmatprep.subr.bf16.mxu0 0
      %4658 = vmatpush2.bf16.msra.mxu0 0
      %4659 = vmatprep.subr.bf16.mxu0 0
      %4660 = vmatpush2.bf16.msra.mxu0 0
      %4661 = vmatprep.subr.bf16.mxu0 0
      %4662 = vmatpush2.bf16.msra.mxu0 0
      %4663 = vmatprep.subr.bf16.mxu0 0
      %4664 = vmatpush2.bf16.msra.mxu0 0
      %4665 = vmatprep.subr.bf16.mxu0 0
      %4666 = vmatpush2.bf16.msra.mxu0 0
      %4667 = vmatprep.subr.bf16.mxu0 0
      %4668 = vmatpush2.bf16.msra.mxu0 0
      %4669 = vmatprep.mubr.bf16.mxu0 0
      %4670 = vmatmul.mubr.bf16.gmra.mxu0 %v4623
      %v4671 = vpop.f32.mrf.mxu0
      %v4672 = vadd.f32 0.0, %v4671
      %v4673 = vpop.f32.mrf.mxu0
      %v4674 = vpop.f32.mrf.mxu0
      %v4675 = vadd.f32 0.0, %v4674
      %v4676 = vpop.f32.mrf.mxu0
      %4677 = vmatprep.mubr.bf16.mxu0 0
      %4678 = vmatmul.mubr.bf16.gmra.mxu0 %v4626
      %v4679 = vpop.f32.mrf.mxu0
      %v4680 = vadd.f32 0.0, %v4679
      %v4681 = vpop.f32.mrf.mxu0
      %v4682 = vpop.f32.mrf.mxu0
      %v4683 = vadd.f32 0.0, %v4682
      %v4684 = vpop.f32.mrf.mxu0
      %4685 = vmatprep.mubr.bf16.mxu0 0
      %4686 = vmatmul.mubr.bf16.gmra.mxu0 %v4629
      %v4687 = vpop.f32.mrf.mxu0
      %v4688 = vadd.f32 0.0, %v4687
      %v4689 = vpop.f32.mrf.mxu0
      %v4690 = vpop.f32.mrf.mxu0
      %v4691 = vadd.f32 0.0, %v4690
      %v4692 = vpop.f32.mrf.mxu0
      %4693 = vmatprep.mubr.bf16.mxu0 0
      %4694 = vmatmul.mubr.bf16.gmra.mxu0 %v4632
      %v4695 = vpop.f32.mrf.mxu0
      %v4696 = vadd.f32 0.0, %v4695
      %v4697 = vpop.f32.mrf.mxu0
      %v4698 = vpop.f32.mrf.mxu0
      %v4699 = vadd.f32 0.0, %v4698
      %v4700 = vpop.f32.mrf.mxu0
      %4701 = vmatprep.mubr.bf16.mxu0 0
      %4702 = vmatmul.mubr.bf16.gmra.mxu0 %v4635
      %v4703 = vpop.f32.mrf.mxu0
      %v4704 = vadd.f32 0.0, %v4703
      %v4705 = vpop.f32.mrf.mxu0
      %v4706 = vpop.f32.mrf.mxu0
      %v4707 = vadd.f32 0.0, %v4706
      %v4708 = vpop.f32.mrf.mxu0
      %4709 = vdwg.mxu0
      %v4710 = vadd.f32 %v4580, %v4672
      %v4711 = vadd.f32 %v4581, %v4675
      %v4712 = vadd.f32 %v4582, %v4680
      %v4713 = vadd.f32 %v4583, %v4683
      %v4714 = vadd.f32 %v4584, %v4688
      %v4715 = vadd.f32 %v4585, %v4691
      %v4716 = vadd.f32 %v4586, %v4696
      %v4717 = vadd.f32 %v4587, %v4699
      %v4718 = vadd.f32 %v4588, %v4704
      %v4719 = vadd.f32 %v4589, %v4707
      %v4720 = vld [vmem:[%s2117 + $0xb] sm:$0xff]
      %v4721 = vld [vmem:[%s2117 + $0x13] sm:$0xff]
      %v4722 = vld [vmem:[%s2117 + $0x1b] sm:$0xff]
      %v4723 = vld [vmem:[%s2117 + $0x23] sm:$0xff]
      %v4724 = vld [vmem:[%s2117 + $0x2b] sm:$0xff]
      %v4725 = vld [vmem:[%s2117 + $0x33] sm:$0xff]
      %v4726 = vld [vmem:[%s2117 + $0x3b] sm:$0xff]
      %v4727 = vld [vmem:[%s2117 + $0x43] sm:$0xff]
      %v4728 = vld [vmem:[%s2117 + $0x4b] sm:$0xff]
      %v4729 = vld [vmem:[%s2117 + $0x53] sm:$0xff]
      %v4730 = vpack.c.bf16 %v4721, %v4720
      %v4731 = vpack.c.bf16 %v4723, %v4722
      %v4732 = vpack.c.bf16 %v4725, %v4724
      %v4733 = vpack.c.bf16 %v4727, %v4726
      %v4734 = vpack.c.bf16 %v4729, %v4728
      %s4735 = scalar_lea.vmem %s3, 64
      %v4736 = vld [vmem:[%s4735] sm:$0xf]
      %v4737 = vld [vmem:[%s4735 + $0x4] sm:$0xf]
      %v4738 = vld [vmem:[%s4735 + $0x8] sm:$0xf]
      %v4739 = vld [vmem:[%s4735 + $0xc] sm:$0xf]
      %v4744 = vunpack.c.l.b16 %v4736
      %v4745 = vunpack.c.l.b16 %v4737
      %v4746 = vunpack.c.l.b16 %v4738
      %v4747 = vunpack.c.l.b16 %v4739
      %v4748 = vpack.c.b16 %v4745, %v4744
      %v4749 = vpack.c.b16 %v4747, %v4746
      %v4753 = vsel %vm67, %v4730, 0
      %v4756 = vsel %vm67, %v4731, 0
      %v4759 = vsel %vm67, %v4732, 0
      %v4762 = vsel %vm67, %v4733, 0
      %v4765 = vsel %vm67, %v4734, 0
      %4767 = vmatprep.subr.bf16.mxu0 0
      %4768 = vmatpush1.bf16.msra.mxu0 0
      %4769 = vmatprep.subr.bf16.mxu0 0
      %4770 = vmatpush1.bf16.msra.mxu0 0
      %4771 = vmatprep.subr.bf16.mxu0 0
      %4772 = vmatpush1.bf16.msra.mxu0 0
      %4773 = vmatprep.subr.bf16.mxu0 0
      %4774 = vmatpush1.bf16.msra.mxu0 0
      %4775 = vmatprep.subr.bf16.mxu0 0
      %4776 = vmatpush1.bf16.msra.mxu0 0
      %4777 = vmatprep.subr.bf16.mxu0 0
      %4778 = vmatpush1.bf16.msra.mxu0 0
      %4779 = vmatprep.subr.bf16.mxu0 0
      %4780 = vmatpush1.bf16.msra.mxu0 %v4749
      %4781 = vmatprep.subr.bf16.mxu0 0
      %4782 = vmatpush1.bf16.msra.mxu0 %v4748
      %4783 = vmatprep.subr.bf16.mxu0 0
      %4784 = vmatpush2.bf16.msra.mxu0 0
      %4785 = vmatprep.subr.bf16.mxu0 0
      %4786 = vmatpush2.bf16.msra.mxu0 0
      %4787 = vmatprep.subr.bf16.mxu0 0
      %4788 = vmatpush2.bf16.msra.mxu0 0
      %4789 = vmatprep.subr.bf16.mxu0 0
      %4790 = vmatpush2.bf16.msra.mxu0 0
      %4791 = vmatprep.subr.bf16.mxu0 0
      %4792 = vmatpush2.bf16.msra.mxu0 0
      %4793 = vmatprep.subr.bf16.mxu0 0
      %4794 = vmatpush2.bf16.msra.mxu0 0
      %4795 = vmatprep.subr.bf16.mxu0 0
      %4796 = vmatpush2.bf16.msra.mxu0 0
      %4797 = vmatprep.subr.bf16.mxu0 0
      %4798 = vmatpush2.bf16.msra.mxu0 0
      %4799 = vmatprep.mubr.bf16.mxu0 0
      %4800 = vmatmul.mubr.bf16.gmra.mxu0 %v4753
      %v4801 = vpop.f32.mrf.mxu0
      %v4802 = vadd.f32 0.0, %v4801
      %v4803 = vpop.f32.mrf.mxu0
      %v4804 = vpop.f32.mrf.mxu0
      %v4805 = vadd.f32 0.0, %v4804
      %v4806 = vpop.f32.mrf.mxu0
      %4807 = vmatprep.mubr.bf16.mxu0 0
      %4808 = vmatmul.mubr.bf16.gmra.mxu0 %v4756
      %v4809 = vpop.f32.mrf.mxu0
      %v4810 = vadd.f32 0.0, %v4809
      %v4811 = vpop.f32.mrf.mxu0
      %v4812 = vpop.f32.mrf.mxu0
      %v4813 = vadd.f32 0.0, %v4812
      %v4814 = vpop.f32.mrf.mxu0
      %4815 = vmatprep.mubr.bf16.mxu0 0
      %4816 = vmatmul.mubr.bf16.gmra.mxu0 %v4759
      %v4817 = vpop.f32.mrf.mxu0
      %v4818 = vadd.f32 0.0, %v4817
      %v4819 = vpop.f32.mrf.mxu0
      %v4820 = vpop.f32.mrf.mxu0
      %v4821 = vadd.f32 0.0, %v4820
      %v4822 = vpop.f32.mrf.mxu0
      %4823 = vmatprep.mubr.bf16.mxu0 0
      %4824 = vmatmul.mubr.bf16.gmra.mxu0 %v4762
      %v4825 = vpop.f32.mrf.mxu0
      %v4826 = vadd.f32 0.0, %v4825
      %v4827 = vpop.f32.mrf.mxu0
      %v4828 = vpop.f32.mrf.mxu0
      %v4829 = vadd.f32 0.0, %v4828
      %v4830 = vpop.f32.mrf.mxu0
      %4831 = vmatprep.mubr.bf16.mxu0 0
      %4832 = vmatmul.mubr.bf16.gmra.mxu0 %v4765
      %v4833 = vpop.f32.mrf.mxu0
      %v4834 = vadd.f32 0.0, %v4833
      %v4835 = vpop.f32.mrf.mxu0
      %v4836 = vpop.f32.mrf.mxu0
      %v4837 = vadd.f32 0.0, %v4836
      %v4838 = vpop.f32.mrf.mxu0
      %4839 = vdwg.mxu0
      %v4840 = vadd.f32 %v4710, %v4802
      %v4841 = vadd.f32 %v4711, %v4805
      %v4842 = vadd.f32 %v4712, %v4810
      %v4843 = vadd.f32 %v4713, %v4813
      %v4844 = vadd.f32 %v4714, %v4818
      %v4845 = vadd.f32 %v4715, %v4821
      %v4846 = vadd.f32 %v4716, %v4826
      %v4847 = vadd.f32 %v4717, %v4829
      %v4848 = vadd.f32 %v4718, %v4834
      %v4849 = vadd.f32 %v4719, %v4837
      %v4850 = vld [vmem:[%s2117 + $0xc] sm:$0xff]
      %v4851 = vld [vmem:[%s2117 + $0x14] sm:$0xff]
      %v4852 = vld [vmem:[%s2117 + $0x1c] sm:$0xff]
      %v4853 = vld [vmem:[%s2117 + $0x24] sm:$0xff]
      %v4854 = vld [vmem:[%s2117 + $0x2c] sm:$0xff]
      %v4855 = vld [vmem:[%s2117 + $0x34] sm:$0xff]
      %v4856 = vld [vmem:[%s2117 + $0x3c] sm:$0xff]
      %v4857 = vld [vmem:[%s2117 + $0x44] sm:$0xff]
      %v4858 = vld [vmem:[%s2117 + $0x4c] sm:$0xff]
      %v4859 = vld [vmem:[%s2117 + $0x54] sm:$0xff]
      %v4860 = vpack.c.bf16 %v4851, %v4850
      %v4861 = vpack.c.bf16 %v4853, %v4852
      %v4862 = vpack.c.bf16 %v4855, %v4854
      %v4863 = vpack.c.bf16 %v4857, %v4856
      %v4864 = vpack.c.bf16 %v4859, %v4858
      %s4865 = scalar_lea.vmem %s3, 80
      %v4866 = vld [vmem:[%s4865] sm:$0xf]
      %v4867 = vld [vmem:[%s4865 + $0x4] sm:$0xf]
      %v4868 = vld [vmem:[%s4865 + $0x8] sm:$0xf]
      %v4869 = vld [vmem:[%s4865 + $0xc] sm:$0xf]
      %v4874 = vunpack.c.l.b16 %v4866
      %v4875 = vunpack.c.l.b16 %v4867
      %v4876 = vunpack.c.l.b16 %v4868
      %v4877 = vunpack.c.l.b16 %v4869
      %v4878 = vpack.c.b16 %v4875, %v4874
      %v4879 = vpack.c.b16 %v4877, %v4876
      %v4883 = vsel %vm67, %v4860, 0
      %v4886 = vsel %vm67, %v4861, 0
      %v4889 = vsel %vm67, %v4862, 0
      %v4892 = vsel %vm67, %v4863, 0
      %v4895 = vsel %vm67, %v4864, 0
      %4897 = vmatprep.subr.bf16.mxu0 0
      %4898 = vmatpush1.bf16.msra.mxu0 0
      %4899 = vmatprep.subr.bf16.mxu0 0
      %4900 = vmatpush1.bf16.msra.mxu0 0
      %4901 = vmatprep.subr.bf16.mxu0 0
      %4902 = vmatpush1.bf16.msra.mxu0 0
      %4903 = vmatprep.subr.bf16.mxu0 0
      %4904 = vmatpush1.bf16.msra.mxu0 0
      %4905 = vmatprep.subr.bf16.mxu0 0
      %4906 = vmatpush1.bf16.msra.mxu0 0
      %4907 = vmatprep.subr.bf16.mxu0 0
      %4908 = vmatpush1.bf16.msra.mxu0 0
      %4909 = vmatprep.subr.bf16.mxu0 0
      %4910 = vmatpush1.bf16.msra.mxu0 %v4879
      %4911 = vmatprep.subr.bf16.mxu0 0
      %4912 = vmatpush1.bf16.msra.mxu0 %v4878
      %4913 = vmatprep.subr.bf16.mxu0 0
      %4914 = vmatpush2.bf16.msra.mxu0 0
      %4915 = vmatprep.subr.bf16.mxu0 0
      %4916 = vmatpush2.bf16.msra.mxu0 0
      %4917 = vmatprep.subr.bf16.mxu0 0
      %4918 = vmatpush2.bf16.msra.mxu0 0
      %4919 = vmatprep.subr.bf16.mxu0 0
      %4920 = vmatpush2.bf16.msra.mxu0 0
      %4921 = vmatprep.subr.bf16.mxu0 0
      %4922 = vmatpush2.bf16.msra.mxu0 0
      %4923 = vmatprep.subr.bf16.mxu0 0
      %4924 = vmatpush2.bf16.msra.mxu0 0
      %4925 = vmatprep.subr.bf16.mxu0 0
      %4926 = vmatpush2.bf16.msra.mxu0 0
      %4927 = vmatprep.subr.bf16.mxu0 0
      %4928 = vmatpush2.bf16.msra.mxu0 0
      %4929 = vmatprep.mubr.bf16.mxu0 0
      %4930 = vmatmul.mubr.bf16.gmra.mxu0 %v4883
      %v4931 = vpop.f32.mrf.mxu0
      %v4932 = vadd.f32 0.0, %v4931
      %v4933 = vpop.f32.mrf.mxu0
      %v4934 = vpop.f32.mrf.mxu0
      %v4935 = vadd.f32 0.0, %v4934
      %v4936 = vpop.f32.mrf.mxu0
      %4937 = vmatprep.mubr.bf16.mxu0 0
      %4938 = vmatmul.mubr.bf16.gmra.mxu0 %v4886
      %v4939 = vpop.f32.mrf.mxu0
      %v4940 = vadd.f32 0.0, %v4939
      %v4941 = vpop.f32.mrf.mxu0
      %v4942 = vpop.f32.mrf.mxu0
      %v4943 = vadd.f32 0.0, %v4942
      %v4944 = vpop.f32.mrf.mxu0
      %4945 = vmatprep.mubr.bf16.mxu0 0
      %4946 = vmatmul.mubr.bf16.gmra.mxu0 %v4889
      %v4947 = vpop.f32.mrf.mxu0
      %v4948 = vadd.f32 0.0, %v4947
      %v4949 = vpop.f32.mrf.mxu0
      %v4950 = vpop.f32.mrf.mxu0
      %v4951 = vadd.f32 0.0, %v4950
      %v4952 = vpop.f32.mrf.mxu0
      %4953 = vmatprep.mubr.bf16.mxu0 0
      %4954 = vmatmul.mubr.bf16.gmra.mxu0 %v4892
      %v4955 = vpop.f32.mrf.mxu0
      %v4956 = vadd.f32 0.0, %v4955
      %v4957 = vpop.f32.mrf.mxu0
      %v4958 = vpop.f32.mrf.mxu0
      %v4959 = vadd.f32 0.0, %v4958
      %v4960 = vpop.f32.mrf.mxu0
      %4961 = vmatprep.mubr.bf16.mxu0 0
      %4962 = vmatmul.mubr.bf16.gmra.mxu0 %v4895
      %v4963 = vpop.f32.mrf.mxu0
      %v4964 = vadd.f32 0.0, %v4963
      %v4965 = vpop.f32.mrf.mxu0
      %v4966 = vpop.f32.mrf.mxu0
      %v4967 = vadd.f32 0.0, %v4966
      %v4968 = vpop.f32.mrf.mxu0
      %4969 = vdwg.mxu0
      %v4970 = vadd.f32 %v4840, %v4932
      %v4971 = vadd.f32 %v4841, %v4935
      %v4972 = vadd.f32 %v4842, %v4940
      %v4973 = vadd.f32 %v4843, %v4943
      %v4974 = vadd.f32 %v4844, %v4948
      %v4975 = vadd.f32 %v4845, %v4951
      %v4976 = vadd.f32 %v4846, %v4956
      %v4977 = vadd.f32 %v4847, %v4959
      %v4978 = vadd.f32 %v4848, %v4964
      %v4979 = vadd.f32 %v4849, %v4967
      %v4980 = vld [vmem:[%s2117 + $0x14] sm:$0xff]
      %v4981 = vld [vmem:[%s2117 + $0x1c] sm:$0xff]
      %v4982 = vld [vmem:[%s2117 + $0x24] sm:$0xff]
      %v4983 = vld [vmem:[%s2117 + $0x2c] sm:$0xff]
      %v4984 = vld [vmem:[%s2117 + $0x34] sm:$0xff]
      %v4985 = vld [vmem:[%s2117 + $0x3c] sm:$0xff]
      %v4986 = vld [vmem:[%s2117 + $0x44] sm:$0xff]
      %v4987 = vld [vmem:[%s2117 + $0x4c] sm:$0xff]
      %v4988 = vld [vmem:[%s2117 + $0x54] sm:$0xff]
      %v4989 = vld [vmem:[%s2117 + $0x5c] sm:$0xff]
      %v4990 = vpack.c.bf16 %v4981, %v4980
      %v4991 = vpack.c.bf16 %v4983, %v4982
      %v4992 = vpack.c.bf16 %v4985, %v4984
      %v4993 = vpack.c.bf16 %v4987, %v4986
      %v4994 = vpack.c.bf16 %v4989, %v4988
      %s4995 = scalar_lea.vmem %s3, 96
      %v4996 = vld [vmem:[%s4995] sm:$0xf]
      %v4997 = vld [vmem:[%s4995 + $0x4] sm:$0xf]
      %v4998 = vld [vmem:[%s4995 + $0x8] sm:$0xf]
      %v4999 = vld [vmem:[%s4995 + $0xc] sm:$0xf]
      %v5004 = vunpack.c.l.b16 %v4996
      %v5005 = vunpack.c.l.b16 %v4997
      %v5006 = vunpack.c.l.b16 %v4998
      %v5007 = vunpack.c.l.b16 %v4999
      %v5008 = vpack.c.b16 %v5005, %v5004
      %v5009 = vpack.c.b16 %v5007, %v5006
      %v5013 = vsel %vm67, %v4990, 0
      %v5016 = vsel %vm67, %v4991, 0
      %v5019 = vsel %vm67, %v4992, 0
      %v5022 = vsel %vm67, %v4993, 0
      %v5025 = vsel %vm67, %v4994, 0
      %5027 = vmatprep.subr.bf16.mxu0 0
      %5028 = vmatpush1.bf16.msra.mxu0 0
      %5029 = vmatprep.subr.bf16.mxu0 0
      %5030 = vmatpush1.bf16.msra.mxu0 0
      %5031 = vmatprep.subr.bf16.mxu0 0
      %5032 = vmatpush1.bf16.msra.mxu0 0
      %5033 = vmatprep.subr.bf16.mxu0 0
      %5034 = vmatpush1.bf16.msra.mxu0 0
      %5035 = vmatprep.subr.bf16.mxu0 0
      %5036 = vmatpush1.bf16.msra.mxu0 0
      %5037 = vmatprep.subr.bf16.mxu0 0
      %5038 = vmatpush1.bf16.msra.mxu0 0
      %5039 = vmatprep.subr.bf16.mxu0 0
      %5040 = vmatpush1.bf16.msra.mxu0 %v5009
      %5041 = vmatprep.subr.bf16.mxu0 0
      %5042 = vmatpush1.bf16.msra.mxu0 %v5008
      %5043 = vmatprep.subr.bf16.mxu0 0
      %5044 = vmatpush2.bf16.msra.mxu0 0
      %5045 = vmatprep.subr.bf16.mxu0 0
      %5046 = vmatpush2.bf16.msra.mxu0 0
      %5047 = vmatprep.subr.bf16.mxu0 0
      %5048 = vmatpush2.bf16.msra.mxu0 0
      %5049 = vmatprep.subr.bf16.mxu0 0
      %5050 = vmatpush2.bf16.msra.mxu0 0
      %5051 = vmatprep.subr.bf16.mxu0 0
      %5052 = vmatpush2.bf16.msra.mxu0 0
      %5053 = vmatprep.subr.bf16.mxu0 0
      %5054 = vmatpush2.bf16.msra.mxu0 0
      %5055 = vmatprep.subr.bf16.mxu0 0
      %5056 = vmatpush2.bf16.msra.mxu0 0
      %5057 = vmatprep.subr.bf16.mxu0 0
      %5058 = vmatpush2.bf16.msra.mxu0 0
      %5059 = vmatprep.mubr.bf16.mxu0 0
      %5060 = vmatmul.mubr.bf16.gmra.mxu0 %v5013
      %v5061 = vpop.f32.mrf.mxu0
      %v5062 = vadd.f32 0.0, %v5061
      %v5063 = vpop.f32.mrf.mxu0
      %v5064 = vpop.f32.mrf.mxu0
      %v5065 = vadd.f32 0.0, %v5064
      %v5066 = vpop.f32.mrf.mxu0
      %5067 = vmatprep.mubr.bf16.mxu0 0
      %5068 = vmatmul.mubr.bf16.gmra.mxu0 %v5016
      %v5069 = vpop.f32.mrf.mxu0
      %v5070 = vadd.f32 0.0, %v5069
      %v5071 = vpop.f32.mrf.mxu0
      %v5072 = vpop.f32.mrf.mxu0
      %v5073 = vadd.f32 0.0, %v5072
      %v5074 = vpop.f32.mrf.mxu0
      %5075 = vmatprep.mubr.bf16.mxu0 0
      %5076 = vmatmul.mubr.bf16.gmra.mxu0 %v5019
      %v5077 = vpop.f32.mrf.mxu0
      %v5078 = vadd.f32 0.0, %v5077
      %v5079 = vpop.f32.mrf.mxu0
      %v5080 = vpop.f32.mrf.mxu0
      %v5081 = vadd.f32 0.0, %v5080
      %v5082 = vpop.f32.mrf.mxu0
      %5083 = vmatprep.mubr.bf16.mxu0 0
      %5084 = vmatmul.mubr.bf16.gmra.mxu0 %v5022
      %v5085 = vpop.f32.mrf.mxu0
      %v5086 = vadd.f32 0.0, %v5085
      %v5087 = vpop.f32.mrf.mxu0
      %v5088 = vpop.f32.mrf.mxu0
      %v5089 = vadd.f32 0.0, %v5088
      %v5090 = vpop.f32.mrf.mxu0
      %5091 = vmatprep.mubr.bf16.mxu0 0
      %5092 = vmatmul.mubr.bf16.gmra.mxu0 %v5025
      %v5093 = vpop.f32.mrf.mxu0
      %v5094 = vadd.f32 0.0, %v5093
      %v5095 = vpop.f32.mrf.mxu0
      %v5096 = vpop.f32.mrf.mxu0
      %v5097 = vadd.f32 0.0, %v5096
      %v5098 = vpop.f32.mrf.mxu0
      %5099 = vdwg.mxu0
      %v5100 = vadd.f32 %v4970, %v5062
      %v5101 = vadd.f32 %v4971, %v5065
      %v5102 = vadd.f32 %v4972, %v5070
      %v5103 = vadd.f32 %v4973, %v5073
      %v5104 = vadd.f32 %v4974, %v5078
      %v5105 = vadd.f32 %v4975, %v5081
      %v5106 = vadd.f32 %v4976, %v5086
      %v5107 = vadd.f32 %v4977, %v5089
      %v5108 = vadd.f32 %v4978, %v5094
      %v5109 = vadd.f32 %v4979, %v5097
      %v5110 = vld [vmem:[%s2117 + $0x15] sm:$0xff]
      %v5111 = vld [vmem:[%s2117 + $0x1d] sm:$0xff]
      %v5112 = vld [vmem:[%s2117 + $0x25] sm:$0xff]
      %v5113 = vld [vmem:[%s2117 + $0x2d] sm:$0xff]
      %v5114 = vld [vmem:[%s2117 + $0x35] sm:$0xff]
      %v5115 = vld [vmem:[%s2117 + $0x3d] sm:$0xff]
      %v5116 = vld [vmem:[%s2117 + $0x45] sm:$0xff]
      %v5117 = vld [vmem:[%s2117 + $0x4d] sm:$0xff]
      %v5118 = vld [vmem:[%s2117 + $0x55] sm:$0xff]
      %v5119 = vld [vmem:[%s2117 + $0x5d] sm:$0xff]
      %v5120 = vpack.c.bf16 %v5111, %v5110
      %v5121 = vpack.c.bf16 %v5113, %v5112
      %v5122 = vpack.c.bf16 %v5115, %v5114
      %v5123 = vpack.c.bf16 %v5117, %v5116
      %v5124 = vpack.c.bf16 %v5119, %v5118
      %s5125 = scalar_lea.vmem %s3, 112
      %v5126 = vld [vmem:[%s5125] sm:$0xf]
      %v5127 = vld [vmem:[%s5125 + $0x4] sm:$0xf]
      %v5128 = vld [vmem:[%s5125 + $0x8] sm:$0xf]
      %v5129 = vld [vmem:[%s5125 + $0xc] sm:$0xf]
      %v5134 = vunpack.c.l.b16 %v5126
      %v5135 = vunpack.c.l.b16 %v5127
      %v5136 = vunpack.c.l.b16 %v5128
      %v5137 = vunpack.c.l.b16 %v5129
      %v5138 = vpack.c.b16 %v5135, %v5134
      %v5139 = vpack.c.b16 %v5137, %v5136
      %v5143 = vsel %vm67, %v5120, 0
      %v5146 = vsel %vm67, %v5121, 0
      %v5149 = vsel %vm67, %v5122, 0
      %v5152 = vsel %vm67, %v5123, 0
      %v5155 = vsel %vm67, %v5124, 0
      %5157 = vmatprep.subr.bf16.mxu0 0
      %5158 = vmatpush1.bf16.msra.mxu0 0
      %5159 = vmatprep.subr.bf16.mxu0 0
      %5160 = vmatpush1.bf16.msra.mxu0 0
      %5161 = vmatprep.subr.bf16.mxu0 0
      %5162 = vmatpush1.bf16.msra.mxu0 0
      %5163 = vmatprep.subr.bf16.mxu0 0
      %5164 = vmatpush1.bf16.msra.mxu0 0
      %5165 = vmatprep.subr.bf16.mxu0 0
      %5166 = vmatpush1.bf16.msra.mxu0 0
      %5167 = vmatprep.subr.bf16.mxu0 0
      %5168 = vmatpush1.bf16.msra.mxu0 0
      %5169 = vmatprep.subr.bf16.mxu0 0
      %5170 = vmatpush1.bf16.msra.mxu0 %v5139
      %5171 = vmatprep.subr.bf16.mxu0 0
      %5172 = vmatpush1.bf16.msra.mxu0 %v5138
      %5173 = vmatprep.subr.bf16.mxu0 0
      %5174 = vmatpush2.bf16.msra.mxu0 0
      %5175 = vmatprep.subr.bf16.mxu0 0
      %5176 = vmatpush2.bf16.msra.mxu0 0
      %5177 = vmatprep.subr.bf16.mxu0 0
      %5178 = vmatpush2.bf16.msra.mxu0 0
      %5179 = vmatprep.subr.bf16.mxu0 0
      %5180 = vmatpush2.bf16.msra.mxu0 0
      %5181 = vmatprep.subr.bf16.mxu0 0
      %5182 = vmatpush2.bf16.msra.mxu0 0
      %5183 = vmatprep.subr.bf16.mxu0 0
      %5184 = vmatpush2.bf16.msra.mxu0 0
      %5185 = vmatprep.subr.bf16.mxu0 0
      %5186 = vmatpush2.bf16.msra.mxu0 0
      %5187 = vmatprep.subr.bf16.mxu0 0
      %5188 = vmatpush2.bf16.msra.mxu0 0
      %5189 = vmatprep.mubr.bf16.mxu0 0
      %5190 = vmatmul.mubr.bf16.gmra.mxu0 %v5143
      %v5191 = vpop.f32.mrf.mxu0
      %v5192 = vadd.f32 0.0, %v5191
      %v5193 = vpop.f32.mrf.mxu0
      %v5194 = vpop.f32.mrf.mxu0
      %v5195 = vadd.f32 0.0, %v5194
      %v5196 = vpop.f32.mrf.mxu0
      %5197 = vmatprep.mubr.bf16.mxu0 0
      %5198 = vmatmul.mubr.bf16.gmra.mxu0 %v5146
      %v5199 = vpop.f32.mrf.mxu0
      %v5200 = vadd.f32 0.0, %v5199
      %v5201 = vpop.f32.mrf.mxu0
      %v5202 = vpop.f32.mrf.mxu0
      %v5203 = vadd.f32 0.0, %v5202
      %v5204 = vpop.f32.mrf.mxu0
      %5205 = vmatprep.mubr.bf16.mxu0 0
      %5206 = vmatmul.mubr.bf16.gmra.mxu0 %v5149
      %v5207 = vpop.f32.mrf.mxu0
      %v5208 = vadd.f32 0.0, %v5207
      %v5209 = vpop.f32.mrf.mxu0
      %v5210 = vpop.f32.mrf.mxu0
      %v5211 = vadd.f32 0.0, %v5210
      %v5212 = vpop.f32.mrf.mxu0
      %5213 = vmatprep.mubr.bf16.mxu0 0
      %5214 = vmatmul.mubr.bf16.gmra.mxu0 %v5152
      %v5215 = vpop.f32.mrf.mxu0
      %v5216 = vadd.f32 0.0, %v5215
      %v5217 = vpop.f32.mrf.mxu0
      %v5218 = vpop.f32.mrf.mxu0
      %v5219 = vadd.f32 0.0, %v5218
      %v5220 = vpop.f32.mrf.mxu0
      %5221 = vmatprep.mubr.bf16.mxu0 0
      %5222 = vmatmul.mubr.bf16.gmra.mxu0 %v5155
      %v5223 = vpop.f32.mrf.mxu0
      %v5224 = vadd.f32 0.0, %v5223
      %v5225 = vpop.f32.mrf.mxu0
      %v5226 = vpop.f32.mrf.mxu0
      %v5227 = vadd.f32 0.0, %v5226
      %v5228 = vpop.f32.mrf.mxu0
      %5229 = vdwg.mxu0
      %v5230 = vadd.f32 %v5100, %v5192
      %v5231 = vadd.f32 %v5101, %v5195
      %v5232 = vadd.f32 %v5102, %v5200
      %v5233 = vadd.f32 %v5103, %v5203
      %v5234 = vadd.f32 %v5104, %v5208
      %v5235 = vadd.f32 %v5105, %v5211
      %v5236 = vadd.f32 %v5106, %v5216
      %v5237 = vadd.f32 %v5107, %v5219
      %v5238 = vadd.f32 %v5108, %v5224
      %v5239 = vadd.f32 %v5109, %v5227
      %v5240 = vld [vmem:[%s2117 + $0x16] sm:$0xff]
      %v5241 = vld [vmem:[%s2117 + $0x1e] sm:$0xff]
      %v5242 = vld [vmem:[%s2117 + $0x26] sm:$0xff]
      %v5243 = vld [vmem:[%s2117 + $0x2e] sm:$0xff]
      %v5244 = vld [vmem:[%s2117 + $0x36] sm:$0xff]
      %v5245 = vld [vmem:[%s2117 + $0x3e] sm:$0xff]
      %v5246 = vld [vmem:[%s2117 + $0x46] sm:$0xff]
      %v5247 = vld [vmem:[%s2117 + $0x4e] sm:$0xff]
      %v5248 = vld [vmem:[%s2117 + $0x56] sm:$0xff]
      %v5249 = vld [vmem:[%s2117 + $0x5e] sm:$0xff]
      %v5250 = vpack.c.bf16 %v5241, %v5240
      %v5251 = vpack.c.bf16 %v5243, %v5242
      %v5252 = vpack.c.bf16 %v5245, %v5244
      %v5253 = vpack.c.bf16 %v5247, %v5246
      %v5254 = vpack.c.bf16 %v5249, %v5248
      %s5255 = scalar_lea.vmem %s3, 128
      %v5256 = vld [vmem:[%s5255] sm:$0xf]
      %v5257 = vld [vmem:[%s5255 + $0x4] sm:$0xf]
      %v5258 = vld [vmem:[%s5255 + $0x8] sm:$0xf]
      %v5259 = vld [vmem:[%s5255 + $0xc] sm:$0xf]
      %v5264 = vunpack.c.l.b16 %v5256
      %v5265 = vunpack.c.l.b16 %v5257
      %v5266 = vunpack.c.l.b16 %v5258
      %v5267 = vunpack.c.l.b16 %v5259
      %v5268 = vpack.c.b16 %v5265, %v5264
      %v5269 = vpack.c.b16 %v5267, %v5266
      %v5273 = vsel %vm67, %v5250, 0
      %v5276 = vsel %vm67, %v5251, 0
      %v5279 = vsel %vm67, %v5252, 0
      %v5282 = vsel %vm67, %v5253, 0
      %v5285 = vsel %vm67, %v5254, 0
      %5287 = vmatprep.subr.bf16.mxu0 0
      %5288 = vmatpush1.bf16.msra.mxu0 0
      %5289 = vmatprep.subr.bf16.mxu0 0
      %5290 = vmatpush1.bf16.msra.mxu0 0
      %5291 = vmatprep.subr.bf16.mxu0 0
      %5292 = vmatpush1.bf16.msra.mxu0 0
      %5293 = vmatprep.subr.bf16.mxu0 0
      %5294 = vmatpush1.bf16.msra.mxu0 0
      %5295 = vmatprep.subr.bf16.mxu0 0
      %5296 = vmatpush1.bf16.msra.mxu0 0
      %5297 = vmatprep.subr.bf16.mxu0 0
      %5298 = vmatpush1.bf16.msra.mxu0 0
      %5299 = vmatprep.subr.bf16.mxu0 0
      %5300 = vmatpush1.bf16.msra.mxu0 %v5269
      %5301 = vmatprep.subr.bf16.mxu0 0
      %5302 = vmatpush1.bf16.msra.mxu0 %v5268
      %5303 = vmatprep.subr.bf16.mxu0 0
      %5304 = vmatpush2.bf16.msra.mxu0 0
      %5305 = vmatprep.subr.bf16.mxu0 0
      %5306 = vmatpush2.bf16.msra.mxu0 0
      %5307 = vmatprep.subr.bf16.mxu0 0
      %5308 = vmatpush2.bf16.msra.mxu0 0
      %5309 = vmatprep.subr.bf16.mxu0 0
      %5310 = vmatpush2.bf16.msra.mxu0 0
      %5311 = vmatprep.subr.bf16.mxu0 0
      %5312 = vmatpush2.bf16.msra.mxu0 0
      %5313 = vmatprep.subr.bf16.mxu0 0
      %5314 = vmatpush2.bf16.msra.mxu0 0
      %5315 = vmatprep.subr.bf16.mxu0 0
      %5316 = vmatpush2.bf16.msra.mxu0 0
      %5317 = vmatprep.subr.bf16.mxu0 0
      %5318 = vmatpush2.bf16.msra.mxu0 0
      %5319 = vmatprep.mubr.bf16.mxu0 0
      %5320 = vmatmul.mubr.bf16.gmra.mxu0 %v5273
      %v5321 = vpop.f32.mrf.mxu0
      %v5322 = vadd.f32 0.0, %v5321
      %v5323 = vpop.f32.mrf.mxu0
      %v5324 = vpop.f32.mrf.mxu0
      %v5325 = vadd.f32 0.0, %v5324
      %v5326 = vpop.f32.mrf.mxu0
      %5327 = vmatprep.mubr.bf16.mxu0 0
      %5328 = vmatmul.mubr.bf16.gmra.mxu0 %v5276
      %v5329 = vpop.f32.mrf.mxu0
      %v5330 = vadd.f32 0.0, %v5329
      %v5331 = vpop.f32.mrf.mxu0
      %v5332 = vpop.f32.mrf.mxu0
      %v5333 = vadd.f32 0.0, %v5332
      %v5334 = vpop.f32.mrf.mxu0
      %5335 = vmatprep.mubr.bf16.mxu0 0
      %5336 = vmatmul.mubr.bf16.gmra.mxu0 %v5279
      %v5337 = vpop.f32.mrf.mxu0
      %v5338 = vadd.f32 0.0, %v5337
      %v5339 = vpop.f32.mrf.mxu0
      %v5340 = vpop.f32.mrf.mxu0
      %v5341 = vadd.f32 0.0, %v5340
      %v5342 = vpop.f32.mrf.mxu0
      %5343 = vmatprep.mubr.bf16.mxu0 0
      %5344 = vmatmul.mubr.bf16.gmra.mxu0 %v5282
      %v5345 = vpop.f32.mrf.mxu0
      %v5346 = vadd.f32 0.0, %v5345
      %v5347 = vpop.f32.mrf.mxu0
      %v5348 = vpop.f32.mrf.mxu0
      %v5349 = vadd.f32 0.0, %v5348
      %v5350 = vpop.f32.mrf.mxu0
      %5351 = vmatprep.mubr.bf16.mxu0 0
      %5352 = vmatmul.mubr.bf16.gmra.mxu0 %v5285
      %v5353 = vpop.f32.mrf.mxu0
      %v5354 = vadd.f32 0.0, %v5353
      %v5355 = vpop.f32.mrf.mxu0
      %v5356 = vpop.f32.mrf.mxu0
      %v5357 = vadd.f32 0.0, %v5356
      %v5358 = vpop.f32.mrf.mxu0
      %5359 = vdwg.mxu0
      %v5360 = vadd.f32 %v5230, %v5322
      %v5361 = vadd.f32 %v5231, %v5325
      %v5362 = vadd.f32 %v5232, %v5330
      %v5363 = vadd.f32 %v5233, %v5333
      %v5364 = vadd.f32 %v5234, %v5338
      %v5365 = vadd.f32 %v5235, %v5341
      %v5366 = vadd.f32 %v5236, %v5346
      %v5367 = vadd.f32 %v5237, %v5349
      %v5368 = vadd.f32 %v5238, %v5354
      %v5369 = vadd.f32 %v5239, %v5357
      %v5370 = vld [vmem:[%s4] sm:$0x1]
      %v5372 = vlaneseq
      %v5373 = vshrl.u32 %v5372, 7
      %v5374 = vsub.s32 0, %v5373
      %v5375 = vrot.slane %v5370, %v5374
      %v5377 = vadd.f32 %v5360, %v5375
      %v5378 = vadd.f32 %v5361, %v5375
      %v5379 = vadd.f32 %v5362, %v5375
      %v5380 = vadd.f32 %v5363, %v5375
      %v5381 = vadd.f32 %v5364, %v5375
      %v5382 = vadd.f32 %v5365, %v5375
      %v5383 = vadd.f32 %v5366, %v5375
      %v5384 = vadd.f32 %v5367, %v5375
      %v5385 = vadd.f32 %v5368, %v5375
      %v5386 = vadd.f32 %v5369, %v5375
      %v5387 = vmax.f32 %v5377, 0.0
      %v5388 = vmax.f32 %v5378, 0.0
      %v5389 = vmax.f32 %v5379, 0.0
      %v5390 = vmax.f32 %v5380, 0.0
      %v5391 = vmax.f32 %v5381, 0.0
      %v5392 = vmax.f32 %v5382, 0.0
      %v5393 = vmax.f32 %v5383, 0.0
      %v5394 = vmax.f32 %v5384, 0.0
      %v5395 = vmax.f32 %v5385, 0.0
      %v5396 = vmax.f32 %v5386, 0.0
      %v5399 = vrot.slane %v5388, 2
      %v5400 = vrot.slane %v5389, 2
      %v5401 = vsel %vm2096, %v5399, %v5400
      %v5404 = vmax.f32 %v5387, %v5401
      %v5405 = vmax.f32 %v5388, %v5400
      %5406 = vst.msk [vmem:[#allocation6] sm:$0xff] %vm97, %v5404
      %5407 = vst.msk [vmem:[#allocation6 + $0x8] sm:$0x3] %vm103, %v5405
      %v5408 = vld [vmem:[#allocation6] ss:$2 sm:$0xf]
      %s5409 = scalar_lea.vmem [#allocation6], 1
      %v5410 = vld [vmem:[%s5409] ss:$2 sm:$0xf]
      %v5411 = vmax.f32 %v5408, %v5410
      %s5412 = smul.u32 %s112, 48
      %s5413 = scalar_lea.vmem [#allocation3], %s5412
      %vm5414 = vcmask 519168
      %5415 = vst.msk [vmem:[%s5413 + $0x7] sm:$0xf] %vm5414, %v5411
      %v5418 = vrot.slane %v5390, 2
      %v5419 = vrot.slane %v5391, 2
      %v5420 = vsel %vm2096, %v5418, %v5419
      %v5423 = vmax.f32 %v5389, %v5420
      %v5424 = vmax.f32 %v5390, %v5419
      %vm5425 = vcmask 523268
      %5426 = vst.msk [vmem:[#allocation6 - $0x4] sm:$0xf0] %vm5425, %v5423
      %vm5427 = vcmask 521216
      %5428 = vst.msk [vmem:[#allocation6 + $0x4] sm:$0x3f] %vm5427, %v5424
      %v5429 = vld [vmem:[#allocation6] ss:$2 sm:$0xf]
      %v5430 = vld [vmem:[%s5409] ss:$2 sm:$0xf]
      %v5431 = vmax.f32 %v5429, %v5430
      %5432 = vst.msk [vmem:[%s5413 + $0xd] sm:$0xf] %vm5414, %v5431
      %v5435 = vrot.slane %v5393, 2
      %v5436 = vrot.slane %v5394, 2
      %v5437 = vsel %vm2096, %v5435, %v5436
      %v5440 = vmax.f32 %v5392, %v5437
      %v5441 = vmax.f32 %v5393, %v5436
      %5442 = vst.msk [vmem:[#allocation6] sm:$0xff] %vm97, %v5440
      %5443 = vst.msk [vmem:[#allocation6 + $0x8] sm:$0x3] %vm103, %v5441
      %v5444 = vld [vmem:[#allocation6] ss:$2 sm:$0xf]
      %v5445 = vld [vmem:[%s5409] ss:$2 sm:$0xf]
      %v5446 = vmax.f32 %v5444, %v5445
      %5447 = vst.msk [vmem:[%s5413 + $0x13] sm:$0xf] %vm5414, %v5446
      %v5450 = vrot.slane %v5395, 2
      %v5451 = vrot.slane %v5396, 2
      %v5452 = vsel %vm2096, %v5450, %v5451
      %v5455 = vmax.f32 %v5394, %v5452
      %v5456 = vmax.f32 %v5395, %v5451
      %5457 = vst.msk [vmem:[#allocation6 - $0x4] sm:$0xf0] %vm5425, %v5455
      %5458 = vst.msk [vmem:[#allocation6 + $0x4] sm:$0x3f] %vm5427, %v5456
      %v5459 = vld [vmem:[#allocation6] ss:$2 sm:$0xf]
      %v5460 = vld [vmem:[%s5409] ss:$2 sm:$0xf]
      %v5461 = vmax.f32 %v5459, %v5460
      %5462 = vst.msk [vmem:[%s5413 + $0x19] sm:$0xf] %vm5414, %v5461
      %v5463 = vld [vmem:[%s5413] sm:$0xff]
      %v5464 = vld [vmem:[%s5413 + $0x8] sm:$0xff]
      %v5465 = vld [vmem:[%s5413 + $0x10] sm:$0xff]
      %v5466 = vpack.c.bf16 %v5464, %v5463
      %v5467 = vpack.c.bf16 %v5465, %v5465
      %v5468 = vld [vmem:[#allocation8] sm:$0xf]
      %v5469 = vld [vmem:[#allocation8 + $0x4] sm:$0xf]
      %v5470 = vld [vmem:[#allocation8 + $0x8] sm:$0xf]
      %v5471 = vld [vmem:[#allocation8 + $0xc] sm:$0xf]
      %v5472 = vld [vmem:[#allocation8 + $0x10] sm:$0xf]
      %v5473 = vld [vmem:[#allocation8 + $0x14] sm:$0xf]
      %v5474 = vld [vmem:[#allocation8 + $0x18] sm:$0xf]
      %v5475 = vld [vmem:[#allocation8 + $0x1c] sm:$0xf]
      %v5476 = vld [vmem:[%s5413 + $0x1] sm:$0xff]
      %v5477 = vld [vmem:[%s5413 + $0x9] sm:$0xff]
      %v5478 = vld [vmem:[%s5413 + $0x11] sm:$0xff]
      %v5479 = vpack.c.bf16 %v5477, %v5476
      %v5480 = vpack.c.bf16 %v5478, %v5478
      %s5481 = scalar_lea.vmem [#allocation8], 32
      %v5482 = vld [vmem:[%s5481] sm:$0xf]
      %v5483 = vld [vmem:[%s5481 + $0x4] sm:$0xf]
      %v5484 = vld [vmem:[%s5481 + $0x8] sm:$0xf]
      %v5485 = vld [vmem:[%s5481 + $0xc] sm:$0xf]
      %v5486 = vld [vmem:[%s5481 + $0x10] sm:$0xf]
      %v5487 = vld [vmem:[%s5481 + $0x14] sm:$0xf]
      %v5488 = vld [vmem:[%s5481 + $0x18] sm:$0xf]
      %v5489 = vld [vmem:[%s5481 + $0x1c] sm:$0xf]
      %v5498 = vunpack.c.l.b16 %v5482
      %v5499 = vunpack.c.l.b16 %v5483
      %v5500 = vunpack.c.l.b16 %v5484
      %v5501 = vunpack.c.l.b16 %v5485
      %v5502 = vunpack.c.l.b16 %v5486
      %v5503 = vunpack.c.l.b16 %v5487
      %v5504 = vunpack.c.l.b16 %v5488
      %v5505 = vunpack.c.l.b16 %v5489
      %v5506 = vpack.c.b16 %v5499, %v5498
      %v5507 = vpack.c.b16 %v5501, %v5500
      %v5508 = vpack.c.b16 %v5503, %v5502
      %v5509 = vpack.c.b16 %v5505, %v5504
      %v5515 = vsel %vm97, %v5479, 0
      %v5518 = vsel %vm97, %v5480, 0
      %5520 = vmatprep.subr.bf16.mxu0 0
      %5521 = vmatpush1.bf16.msra.mxu0 0
      %5522 = vmatprep.subr.bf16.mxu0 0
      %5523 = vmatpush1.bf16.msra.mxu0 0
      %5524 = vmatprep.subr.bf16.mxu0 0
      %5525 = vmatpush1.bf16.msra.mxu0 0
      %5526 = vmatprep.subr.bf16.mxu0 0
      %5527 = vmatpush1.bf16.msra.mxu0 0
      %5528 = vmatprep.subr.bf16.mxu0 0
      %5529 = vmatpush1.bf16.msra.mxu0 %v5509
      %5530 = vmatprep.subr.bf16.mxu0 0
      %5531 = vmatpush1.bf16.msra.mxu0 %v5508
      %5532 = vmatprep.subr.bf16.mxu0 0
      %5533 = vmatpush1.bf16.msra.mxu0 %v5507
      %5534 = vmatprep.subr.bf16.mxu0 0
      %5535 = vmatpush1.bf16.msra.mxu0 %v5506
      %5536 = vmatprep.subr.bf16.mxu0 0
      %5537 = vmatpush2.bf16.msra.mxu0 0
      %5538 = vmatprep.subr.bf16.mxu0 0
      %5539 = vmatpush2.bf16.msra.mxu0 0
      %5540 = vmatprep.subr.bf16.mxu0 0
      %5541 = vmatpush2.bf16.msra.mxu0 0
      %5542 = vmatprep.subr.bf16.mxu0 0
      %5543 = vmatpush2.bf16.msra.mxu0 0
      %5544 = vmatprep.subr.bf16.mxu0 0
      %5545 = vmatpush2.bf16.msra.mxu0 0
      %5546 = vmatprep.subr.bf16.mxu0 0
      %5547 = vmatpush2.bf16.msra.mxu0 0
      %5548 = vmatprep.subr.bf16.mxu0 0
      %5549 = vmatpush2.bf16.msra.mxu0 0
      %5550 = vmatprep.subr.bf16.mxu0 0
      %5551 = vmatpush2.bf16.msra.mxu0 0
      %5552 = vmatprep.mubr.bf16.mxu0 0
      %5553 = vmatmul.mubr.bf16.gmra.mxu0 %v5515
      %v5554 = vpop.f32.mrf.mxu0
      %v5555 = vadd.f32 0.0, %v5554
      %v5556 = vpop.f32.mrf.mxu0
      %v5557 = vpop.f32.mrf.mxu0
      %v5558 = vadd.f32 0.0, %v5557
      %v5559 = vpop.f32.mrf.mxu0
      %5560 = vmatprep.mubr.bf16.mxu0 0
      %5561 = vmatmul.mubr.bf16.gmra.mxu0 %v5518
      %v5562 = vpop.f32.mrf.mxu0
      %v5563 = vadd.f32 0.0, %v5562
      %v5564 = vpop.f32.mrf.mxu0
      %v5565 = vpop.f32.mrf.mxu0
      %v5566 = vpop.f32.mrf.mxu0
      %5567 = vdwg.mxu0
      %v5576 = vunpack.c.l.b16 %v5468
      %v5577 = vunpack.c.l.b16 %v5469
      %v5578 = vunpack.c.l.b16 %v5470
      %v5579 = vunpack.c.l.b16 %v5471
      %v5580 = vunpack.c.l.b16 %v5472
      %v5581 = vunpack.c.l.b16 %v5473
      %v5582 = vunpack.c.l.b16 %v5474
      %v5583 = vunpack.c.l.b16 %v5475
      %v5584 = vpack.c.b16 %v5577, %v5576
      %v5585 = vpack.c.b16 %v5579, %v5578
      %v5586 = vpack.c.b16 %v5581, %v5580
      %v5587 = vpack.c.b16 %v5583, %v5582
      %v5593 = vsel %vm97, %v5466, 0
      %v5596 = vsel %vm97, %v5467, 0
      %5598 = vmatprep.subr.bf16.mxu0 0
      %5599 = vmatpush1.bf16.msra.mxu0 0
      %5600 = vmatprep.subr.bf16.mxu0 0
      %5601 = vmatpush1.bf16.msra.mxu0 0
      %5602 = vmatprep.subr.bf16.mxu0 0
      %5603 = vmatpush1.bf16.msra.mxu0 0
      %5604 = vmatprep.subr.bf16.mxu0 0
      %5605 = vmatpush1.bf16.msra.mxu0 0
      %5606 = vmatprep.subr.bf16.mxu0 0
      %5607 = vmatpush1.bf16.msra.mxu0 %v5587
      %5608 = vmatprep.subr.bf16.mxu0 0
      %5609 = vmatpush1.bf16.msra.mxu0 %v5586
      %5610 = vmatprep.subr.bf16.mxu0 0
      %5611 = vmatpush1.bf16.msra.mxu0 %v5585
      %5612 = vmatprep.subr.bf16.mxu0 0
      %5613 = vmatpush1.bf16.msra.mxu0 %v5584
      %5614 = vmatprep.subr.bf16.mxu0 0
      %5615 = vmatpush2.bf16.msra.mxu0 0
      %5616 = vmatprep.subr.bf16.mxu0 0
      %5617 = vmatpush2.bf16.msra.mxu0 0
      %5618 = vmatprep.subr.bf16.mxu0 0
      %5619 = vmatpush2.bf16.msra.mxu0 0
      %5620 = vmatprep.subr.bf16.mxu0 0
      %5621 = vmatpush2.bf16.msra.mxu0 0
      %5622 = vmatprep.subr.bf16.mxu0 0
      %5623 = vmatpush2.bf16.msra.mxu0 0
      %5624 = vmatprep.subr.bf16.mxu0 0
      %5625 = vmatpush2.bf16.msra.mxu0 0
      %5626 = vmatprep.subr.bf16.mxu0 0
      %5627 = vmatpush2.bf16.msra.mxu0 0
      %5628 = vmatprep.subr.bf16.mxu0 0
      %5629 = vmatpush2.bf16.msra.mxu0 0
      %5630 = vmatprep.mubr.bf16.mxu0 0
      %5631 = vmatmul.mubr.bf16.gmra.mxu0 %v5593
      %v5632 = vpop.f32.mrf.mxu0
      %v5633 = vadd.f32 %v5555, %v5632
      %v5634 = vpop.f32.mrf.mxu0
      %v5635 = vpop.f32.mrf.mxu0
      %v5636 = vadd.f32 %v5558, %v5635
      %v5637 = vpop.f32.mrf.mxu0
      %5638 = vmatprep.mubr.bf16.mxu0 0
      %5639 = vmatmul.mubr.bf16.gmra.mxu0 %v5596
      %v5640 = vpop.f32.mrf.mxu0
      %v5641 = vadd.f32 %v5563, %v5640
      %v5642 = vpop.f32.mrf.mxu0
      %v5643 = vpop.f32.mrf.mxu0
      %v5644 = vpop.f32.mrf.mxu0
      %5645 = vdwg.mxu0
      %v5646 = vld [vmem:[%s5413 + $0x2] sm:$0xff]
      %v5647 = vld [vmem:[%s5413 + $0xa] sm:$0xff]
      %v5648 = vld [vmem:[%s5413 + $0x12] sm:$0xff]
      %v5649 = vpack.c.bf16 %v5647, %v5646
      %v5650 = vpack.c.bf16 %v5648, %v5648
      %s5651 = scalar_lea.vmem [#allocation8], 64
      %v5652 = vld [vmem:[%s5651] sm:$0xf]
      %v5653 = vld [vmem:[%s5651 + $0x4] sm:$0xf]
      %v5654 = vld [vmem:[%s5651 + $0x8] sm:$0xf]
      %v5655 = vld [vmem:[%s5651 + $0xc] sm:$0xf]
      %v5656 = vld [vmem:[%s5651 + $0x10] sm:$0xf]
      %v5657 = vld [vmem:[%s5651 + $0x14] sm:$0xf]
      %v5658 = vld [vmem:[%s5651 + $0x18] sm:$0xf]
      %v5659 = vld [vmem:[%s5651 + $0x1c] sm:$0xf]
      %v5668 = vunpack.c.l.b16 %v5652
      %v5669 = vunpack.c.l.b16 %v5653
      %v5670 = vunpack.c.l.b16 %v5654
      %v5671 = vunpack.c.l.b16 %v5655
      %v5672 = vunpack.c.l.b16 %v5656
      %v5673 = vunpack.c.l.b16 %v5657
      %v5674 = vunpack.c.l.b16 %v5658
      %v5675 = vunpack.c.l.b16 %v5659
      %v5676 = vpack.c.b16 %v5669, %v5668
      %v5677 = vpack.c.b16 %v5671, %v5670
      %v5678 = vpack.c.b16 %v5673, %v5672
      %v5679 = vpack.c.b16 %v5675, %v5674
      %v5685 = vsel %vm97, %v5649, 0
      %v5688 = vsel %vm97, %v5650, 0
      %5690 = vmatprep.subr.bf16.mxu0 0
      %5691 = vmatpush1.bf16.msra.mxu0 0
      %5692 = vmatprep.subr.bf16.mxu0 0
      %5693 = vmatpush1.bf16.msra.mxu0 0
      %5694 = vmatprep.subr.bf16.mxu0 0
      %5695 = vmatpush1.bf16.msra.mxu0 0
      %5696 = vmatprep.subr.bf16.mxu0 0
      %5697 = vmatpush1.bf16.msra.mxu0 0
      %5698 = vmatprep.subr.bf16.mxu0 0
      %5699 = vmatpush1.bf16.msra.mxu0 %v5679
      %5700 = vmatprep.subr.bf16.mxu0 0
      %5701 = vmatpush1.bf16.msra.mxu0 %v5678
      %5702 = vmatprep.subr.bf16.mxu0 0
      %5703 = vmatpush1.bf16.msra.mxu0 %v5677
      %5704 = vmatprep.subr.bf16.mxu0 0
      %5705 = vmatpush1.bf16.msra.mxu0 %v5676
      %5706 = vmatprep.subr.bf16.mxu0 0
      %5707 = vmatpush2.bf16.msra.mxu0 0
      %5708 = vmatprep.subr.bf16.mxu0 0
      %5709 = vmatpush2.bf16.msra.mxu0 0
      %5710 = vmatprep.subr.bf16.mxu0 0
      %5711 = vmatpush2.bf16.msra.mxu0 0
      %5712 = vmatprep.subr.bf16.mxu0 0
      %5713 = vmatpush2.bf16.msra.mxu0 0
      %5714 = vmatprep.subr.bf16.mxu0 0
      %5715 = vmatpush2.bf16.msra.mxu0 0
      %5716 = vmatprep.subr.bf16.mxu0 0
      %5717 = vmatpush2.bf16.msra.mxu0 0
      %5718 = vmatprep.subr.bf16.mxu0 0
      %5719 = vmatpush2.bf16.msra.mxu0 0
      %5720 = vmatprep.subr.bf16.mxu0 0
      %5721 = vmatpush2.bf16.msra.mxu0 0
      %5722 = vmatprep.mubr.bf16.mxu0 0
      %5723 = vmatmul.mubr.bf16.gmra.mxu0 %v5685
      %v5724 = vpop.f32.mrf.mxu0
      %v5725 = vadd.f32 0.0, %v5724
      %v5726 = vpop.f32.mrf.mxu0
      %v5727 = vpop.f32.mrf.mxu0
      %v5728 = vadd.f32 0.0, %v5727
      %v5729 = vpop.f32.mrf.mxu0
      %5730 = vmatprep.mubr.bf16.mxu0 0
      %5731 = vmatmul.mubr.bf16.gmra.mxu0 %v5688
      %v5732 = vpop.f32.mrf.mxu0
      %v5733 = vadd.f32 0.0, %v5732
      %v5734 = vpop.f32.mrf.mxu0
      %v5735 = vpop.f32.mrf.mxu0
      %v5736 = vpop.f32.mrf.mxu0
      %5737 = vdwg.mxu0
      %v5738 = vadd.f32 %v5633, %v5725
      %v5739 = vadd.f32 %v5636, %v5728
      %v5740 = vadd.f32 %v5641, %v5733
      %v5741 = vld [vmem:[%s5413 + $0x6] sm:$0xff]
      %v5742 = vld [vmem:[%s5413 + $0xe] sm:$0xff]
      %v5743 = vld [vmem:[%s5413 + $0x16] sm:$0xff]
      %v5744 = vpack.c.bf16 %v5742, %v5741
      %v5745 = vpack.c.bf16 %v5743, %v5743
      %s5746 = scalar_lea.vmem [#allocation8], 96
      %v5747 = vld [vmem:[%s5746] sm:$0xf]
      %v5748 = vld [vmem:[%s5746 + $0x4] sm:$0xf]
      %v5749 = vld [vmem:[%s5746 + $0x8] sm:$0xf]
      %v5750 = vld [vmem:[%s5746 + $0xc] sm:$0xf]
      %v5751 = vld [vmem:[%s5746 + $0x10] sm:$0xf]
      %v5752 = vld [vmem:[%s5746 + $0x14] sm:$0xf]
      %v5753 = vld [vmem:[%s5746 + $0x18] sm:$0xf]
      %v5754 = vld [vmem:[%s5746 + $0x1c] sm:$0xf]
      %v5763 = vunpack.c.l.b16 %v5747
      %v5764 = vunpack.c.l.b16 %v5748
      %v5765 = vunpack.c.l.b16 %v5749
      %v5766 = vunpack.c.l.b16 %v5750
      %v5767 = vunpack.c.l.b16 %v5751
      %v5768 = vunpack.c.l.b16 %v5752
      %v5769 = vunpack.c.l.b16 %v5753
      %v5770 = vunpack.c.l.b16 %v5754
      %v5771 = vpack.c.b16 %v5764, %v5763
      %v5772 = vpack.c.b16 %v5766, %v5765
      %v5773 = vpack.c.b16 %v5768, %v5767
      %v5774 = vpack.c.b16 %v5770, %v5769
      %v5780 = vsel %vm97, %v5744, 0
      %v5783 = vsel %vm97, %v5745, 0
      %5785 = vmatprep.subr.bf16.mxu0 0
      %5786 = vmatpush1.bf16.msra.mxu0 0
      %5787 = vmatprep.subr.bf16.mxu0 0
      %5788 = vmatpush1.bf16.msra.mxu0 0
      %5789 = vmatprep.subr.bf16.mxu0 0
      %5790 = vmatpush1.bf16.msra.mxu0 0
      %5791 = vmatprep.subr.bf16.mxu0 0
      %5792 = vmatpush1.bf16.msra.mxu0 0
      %5793 = vmatprep.subr.bf16.mxu0 0
      %5794 = vmatpush1.bf16.msra.mxu0 %v5774
      %5795 = vmatprep.subr.bf16.mxu0 0
      %5796 = vmatpush1.bf16.msra.mxu0 %v5773
      %5797 = vmatprep.subr.bf16.mxu0 0
      %5798 = vmatpush1.bf16.msra.mxu0 %v5772
      %5799 = vmatprep.subr.bf16.mxu0 0
      %5800 = vmatpush1.bf16.msra.mxu0 %v5771
      %5801 = vmatprep.subr.bf16.mxu0 0
      %5802 = vmatpush2.bf16.msra.mxu0 0
      %5803 = vmatprep.subr.bf16.mxu0 0
      %5804 = vmatpush2.bf16.msra.mxu0 0
      %5805 = vmatprep.subr.bf16.mxu0 0
      %5806 = vmatpush2.bf16.msra.mxu0 0
      %5807 = vmatprep.subr.bf16.mxu0 0
      %5808 = vmatpush2.bf16.msra.mxu0 0
      %5809 = vmatprep.subr.bf16.mxu0 0
      %5810 = vmatpush2.bf16.msra.mxu0 0
      %5811 = vmatprep.subr.bf16.mxu0 0
      %5812 = vmatpush2.bf16.msra.mxu0 0
      %5813 = vmatprep.subr.bf16.mxu0 0
      %5814 = vmatpush2.bf16.msra.mxu0 0
      %5815 = vmatprep.subr.bf16.mxu0 0
      %5816 = vmatpush2.bf16.msra.mxu0 0
      %5817 = vmatprep.mubr.bf16.mxu0 0
      %5818 = vmatmul.mubr.bf16.gmra.mxu0 %v5780
      %v5819 = vpop.f32.mrf.mxu0
      %v5820 = vadd.f32 0.0, %v5819
      %v5821 = vpop.f32.mrf.mxu0
      %v5822 = vpop.f32.mrf.mxu0
      %v5823 = vadd.f32 0.0, %v5822
      %v5824 = vpop.f32.mrf.mxu0
      %5825 = vmatprep.mubr.bf16.mxu0 0
      %5826 = vmatmul.mubr.bf16.gmra.mxu0 %v5783
      %v5827 = vpop.f32.mrf.mxu0
      %v5828 = vadd.f32 0.0, %v5827
      %v5829 = vpop.f32.mrf.mxu0
      %v5830 = vpop.f32.mrf.mxu0
      %v5831 = vpop.f32.mrf.mxu0
      %5832 = vdwg.mxu0
      %v5833 = vadd.f32 %v5738, %v5820
      %v5834 = vadd.f32 %v5739, %v5823
      %v5835 = vadd.f32 %v5740, %v5828
      %v5836 = vld [vmem:[%s5413 + $0x7] sm:$0xff]
      %v5837 = vld [vmem:[%s5413 + $0xf] sm:$0xff]
      %v5838 = vld [vmem:[%s5413 + $0x17] sm:$0xff]
      %v5839 = vpack.c.bf16 %v5837, %v5836
      %v5840 = vpack.c.bf16 %v5838, %v5838
      %s5841 = scalar_lea.vmem [#allocation8], 128
      %v5842 = vld [vmem:[%s5841] sm:$0xf]
      %v5843 = vld [vmem:[%s5841 + $0x4] sm:$0xf]
      %v5844 = vld [vmem:[%s5841 + $0x8] sm:$0xf]
      %v5845 = vld [vmem:[%s5841 + $0xc] sm:$0xf]
      %v5846 = vld [vmem:[%s5841 + $0x10] sm:$0xf]
      %v5847 = vld [vmem:[%s5841 + $0x14] sm:$0xf]
      %v5848 = vld [vmem:[%s5841 + $0x18] sm:$0xf]
      %v5849 = vld [vmem:[%s5841 + $0x1c] sm:$0xf]
      %v5858 = vunpack.c.l.b16 %v5842
      %v5859 = vunpack.c.l.b16 %v5843
      %v5860 = vunpack.c.l.b16 %v5844
      %v5861 = vunpack.c.l.b16 %v5845
      %v5862 = vunpack.c.l.b16 %v5846
      %v5863 = vunpack.c.l.b16 %v5847
      %v5864 = vunpack.c.l.b16 %v5848
      %v5865 = vunpack.c.l.b16 %v5849
      %v5866 = vpack.c.b16 %v5859, %v5858
      %v5867 = vpack.c.b16 %v5861, %v5860
      %v5868 = vpack.c.b16 %v5863, %v5862
      %v5869 = vpack.c.b16 %v5865, %v5864
      %v5875 = vsel %vm97, %v5839, 0
      %v5878 = vsel %vm97, %v5840, 0
      %5880 = vmatprep.subr.bf16.mxu0 0
      %5881 = vmatpush1.bf16.msra.mxu0 0
      %5882 = vmatprep.subr.bf16.mxu0 0
      %5883 = vmatpush1.bf16.msra.mxu0 0
      %5884 = vmatprep.subr.bf16.mxu0 0
      %5885 = vmatpush1.bf16.msra.mxu0 0
      %5886 = vmatprep.subr.bf16.mxu0 0
      %5887 = vmatpush1.bf16.msra.mxu0 0
      %5888 = vmatprep.subr.bf16.mxu0 0
      %5889 = vmatpush1.bf16.msra.mxu0 %v5869
      %5890 = vmatprep.subr.bf16.mxu0 0
      %5891 = vmatpush1.bf16.msra.mxu0 %v5868
      %5892 = vmatprep.subr.bf16.mxu0 0
      %5893 = vmatpush1.bf16.msra.mxu0 %v5867
      %5894 = vmatprep.subr.bf16.mxu0 0
      %5895 = vmatpush1.bf16.msra.mxu0 %v5866
      %5896 = vmatprep.subr.bf16.mxu0 0
      %5897 = vmatpush2.bf16.msra.mxu0 0
      %5898 = vmatprep.subr.bf16.mxu0 0
      %5899 = vmatpush2.bf16.msra.mxu0 0
      %5900 = vmatprep.subr.bf16.mxu0 0
      %5901 = vmatpush2.bf16.msra.mxu0 0
      %5902 = vmatprep.subr.bf16.mxu0 0
      %5903 = vmatpush2.bf16.msra.mxu0 0
      %5904 = vmatprep.subr.bf16.mxu0 0
      %5905 = vmatpush2.bf16.msra.mxu0 0
      %5906 = vmatprep.subr.bf16.mxu0 0
      %5907 = vmatpush2.bf16.msra.mxu0 0
      %5908 = vmatprep.subr.bf16.mxu0 0
      %5909 = vmatpush2.bf16.msra.mxu0 0
      %5910 = vmatprep.subr.bf16.mxu0 0
      %5911 = vmatpush2.bf16.msra.mxu0 0
      %5912 = vmatprep.mubr.bf16.mxu0 0
      %5913 = vmatmul.mubr.bf16.gmra.mxu0 %v5875
      %v5914 = vpop.f32.mrf.mxu0
      %v5915 = vadd.f32 0.0, %v5914
      %v5916 = vpop.f32.mrf.mxu0
      %v5917 = vpop.f32.mrf.mxu0
      %v5918 = vadd.f32 0.0, %v5917
      %v5919 = vpop.f32.mrf.mxu0
      %5920 = vmatprep.mubr.bf16.mxu0 0
      %5921 = vmatmul.mubr.bf16.gmra.mxu0 %v5878
      %v5922 = vpop.f32.mrf.mxu0
      %v5923 = vadd.f32 0.0, %v5922
      %v5924 = vpop.f32.mrf.mxu0
      %v5925 = vpop.f32.mrf.mxu0
      %v5926 = vpop.f32.mrf.mxu0
      %5927 = vdwg.mxu0
      %v5928 = vadd.f32 %v5833, %v5915
      %v5929 = vadd.f32 %v5834, %v5918
      %v5930 = vadd.f32 %v5835, %v5923
      %v5931 = vld [vmem:[%s5413 + $0x8] sm:$0xff]
      %v5932 = vld [vmem:[%s5413 + $0x10] sm:$0xff]
      %v5933 = vld [vmem:[%s5413 + $0x18] sm:$0xff]
      %v5934 = vpack.c.bf16 %v5932, %v5931
      %v5935 = vpack.c.bf16 %v5933, %v5933
      %s5936 = scalar_lea.vmem [#allocation8], 160
      %v5937 = vld [vmem:[%s5936] sm:$0xf]
      %v5938 = vld [vmem:[%s5936 + $0x4] sm:$0xf]
      %v5939 = vld [vmem:[%s5936 + $0x8] sm:$0xf]
      %v5940 = vld [vmem:[%s5936 + $0xc] sm:$0xf]
      %v5941 = vld [vmem:[%s5936 + $0x10] sm:$0xf]
      %v5942 = vld [vmem:[%s5936 + $0x14] sm:$0xf]
      %v5943 = vld [vmem:[%s5936 + $0x18] sm:$0xf]
      %v5944 = vld [vmem:[%s5936 + $0x1c] sm:$0xf]
      %v5953 = vunpack.c.l.b16 %v5937
      %v5954 = vunpack.c.l.b16 %v5938
      %v5955 = vunpack.c.l.b16 %v5939
      %v5956 = vunpack.c.l.b16 %v5940
      %v5957 = vunpack.c.l.b16 %v5941
      %v5958 = vunpack.c.l.b16 %v5942
      %v5959 = vunpack.c.l.b16 %v5943
      %v5960 = vunpack.c.l.b16 %v5944
      %v5961 = vpack.c.b16 %v5954, %v5953
      %v5962 = vpack.c.b16 %v5956, %v5955
      %v5963 = vpack.c.b16 %v5958, %v5957
      %v5964 = vpack.c.b16 %v5960, %v5959
      %v5970 = vsel %vm97, %v5934, 0
      %v5973 = vsel %vm97, %v5935, 0
      %5975 = vmatprep.subr.bf16.mxu0 0
      %5976 = vmatpush1.bf16.msra.mxu0 0
      %5977 = vmatprep.subr.bf16.mxu0 0
      %5978 = vmatpush1.bf16.msra.mxu0 0
      %5979 = vmatprep.subr.bf16.mxu0 0
      %5980 = vmatpush1.bf16.msra.mxu0 0
      %5981 = vmatprep.subr.bf16.mxu0 0
      %5982 = vmatpush1.bf16.msra.mxu0 0
      %5983 = vmatprep.subr.bf16.mxu0 0
      %5984 = vmatpush1.bf16.msra.mxu0 %v5964
      %5985 = vmatprep.subr.bf16.mxu0 0
      %5986 = vmatpush1.bf16.msra.mxu0 %v5963
      %5987 = vmatprep.subr.bf16.mxu0 0
      %5988 = vmatpush1.bf16.msra.mxu0 %v5962
      %5989 = vmatprep.subr.bf16.mxu0 0
      %5990 = vmatpush1.bf16.msra.mxu0 %v5961
      %5991 = vmatprep.subr.bf16.mxu0 0
      %5992 = vmatpush2.bf16.msra.mxu0 0
      %5993 = vmatprep.subr.bf16.mxu0 0
      %5994 = vmatpush2.bf16.msra.mxu0 0
      %5995 = vmatprep.subr.bf16.mxu0 0
      %5996 = vmatpush2.bf16.msra.mxu0 0
      %5997 = vmatprep.subr.bf16.mxu0 0
      %5998 = vmatpush2.bf16.msra.mxu0 0
      %5999 = vmatprep.subr.bf16.mxu0 0
      %6000 = vmatpush2.bf16.msra.mxu0 0
      %6001 = vmatprep.subr.bf16.mxu0 0
      %6002 = vmatpush2.bf16.msra.mxu0 0
      %6003 = vmatprep.subr.bf16.mxu0 0
      %6004 = vmatpush2.bf16.msra.mxu0 0
      %6005 = vmatprep.subr.bf16.mxu0 0
      %6006 = vmatpush2.bf16.msra.mxu0 0
      %6007 = vmatprep.mubr.bf16.mxu0 0
      %6008 = vmatmul.mubr.bf16.gmra.mxu0 %v5970
      %v6009 = vpop.f32.mrf.mxu0
      %v6010 = vadd.f32 0.0, %v6009
      %v6011 = vpop.f32.mrf.mxu0
      %v6012 = vpop.f32.mrf.mxu0
      %v6013 = vadd.f32 0.0, %v6012
      %v6014 = vpop.f32.mrf.mxu0
      %6015 = vmatprep.mubr.bf16.mxu0 0
      %6016 = vmatmul.mubr.bf16.gmra.mxu0 %v5973
      %v6017 = vpop.f32.mrf.mxu0
      %v6018 = vadd.f32 0.0, %v6017
      %v6019 = vpop.f32.mrf.mxu0
      %v6020 = vpop.f32.mrf.mxu0
      %v6021 = vpop.f32.mrf.mxu0
      %6022 = vdwg.mxu0
      %v6023 = vadd.f32 %v5928, %v6010
      %v6024 = vadd.f32 %v5929, %v6013
      %v6025 = vadd.f32 %v5930, %v6018
      %v6026 = vld [vmem:[%s5413 + $0xc] sm:$0xff]
      %v6027 = vld [vmem:[%s5413 + $0x14] sm:$0xff]
      %v6028 = vld [vmem:[%s5413 + $0x1c] sm:$0xff]
      %v6029 = vpack.c.bf16 %v6027, %v6026
      %v6030 = vpack.c.bf16 %v6028, %v6028
      %s6031 = scalar_lea.vmem [#allocation8], 192
      %v6032 = vld [vmem:[%s6031] sm:$0xf]
      %v6033 = vld [vmem:[%s6031 + $0x4] sm:$0xf]
      %v6034 = vld [vmem:[%s6031 + $0x8] sm:$0xf]
      %v6035 = vld [vmem:[%s6031 + $0xc] sm:$0xf]
      %v6036 = vld [vmem:[%s6031 + $0x10] sm:$0xf]
      %v6037 = vld [vmem:[%s6031 + $0x14] sm:$0xf]
      %v6038 = vld [vmem:[%s6031 + $0x18] sm:$0xf]
      %v6039 = vld [vmem:[%s6031 + $0x1c] sm:$0xf]
      %v6048 = vunpack.c.l.b16 %v6032
      %v6049 = vunpack.c.l.b16 %v6033
      %v6050 = vunpack.c.l.b16 %v6034
      %v6051 = vunpack.c.l.b16 %v6035
      %v6052 = vunpack.c.l.b16 %v6036
      %v6053 = vunpack.c.l.b16 %v6037
      %v6054 = vunpack.c.l.b16 %v6038
      %v6055 = vunpack.c.l.b16 %v6039
      %v6056 = vpack.c.b16 %v6049, %v6048
      %v6057 = vpack.c.b16 %v6051, %v6050
      %v6058 = vpack.c.b16 %v6053, %v6052
      %v6059 = vpack.c.b16 %v6055, %v6054
      %v6065 = vsel %vm97, %v6029, 0
      %v6068 = vsel %vm97, %v6030, 0
      %6070 = vmatprep.subr.bf16.mxu0 0
      %6071 = vmatpush1.bf16.msra.mxu0 0
      %6072 = vmatprep.subr.bf16.mxu0 0
      %6073 = vmatpush1.bf16.msra.mxu0 0
      %6074 = vmatprep.subr.bf16.mxu0 0
      %6075 = vmatpush1.bf16.msra.mxu0 0
      %6076 = vmatprep.subr.bf16.mxu0 0
      %6077 = vmatpush1.bf16.msra.mxu0 0
      %6078 = vmatprep.subr.bf16.mxu0 0
      %6079 = vmatpush1.bf16.msra.mxu0 %v6059
      %6080 = vmatprep.subr.bf16.mxu0 0
      %6081 = vmatpush1.bf16.msra.mxu0 %v6058
      %6082 = vmatprep.subr.bf16.mxu0 0
      %6083 = vmatpush1.bf16.msra.mxu0 %v6057
      %6084 = vmatprep.subr.bf16.mxu0 0
      %6085 = vmatpush1.bf16.msra.mxu0 %v6056
      %6086 = vmatprep.subr.bf16.mxu0 0
      %6087 = vmatpush2.bf16.msra.mxu0 0
      %6088 = vmatprep.subr.bf16.mxu0 0
      %6089 = vmatpush2.bf16.msra.mxu0 0
      %6090 = vmatprep.subr.bf16.mxu0 0
      %6091 = vmatpush2.bf16.msra.mxu0 0
      %6092 = vmatprep.subr.bf16.mxu0 0
      %6093 = vmatpush2.bf16.msra.mxu0 0
      %6094 = vmatprep.subr.bf16.mxu0 0
      %6095 = vmatpush2.bf16.msra.mxu0 0
      %6096 = vmatprep.subr.bf16.mxu0 0
      %6097 = vmatpush2.bf16.msra.mxu0 0
      %6098 = vmatprep.subr.bf16.mxu0 0
      %6099 = vmatpush2.bf16.msra.mxu0 0
      %6100 = vmatprep.subr.bf16.mxu0 0
      %6101 = vmatpush2.bf16.msra.mxu0 0
      %6102 = vmatprep.mubr.bf16.mxu0 0
      %6103 = vmatmul.mubr.bf16.gmra.mxu0 %v6065
      %v6104 = vpop.f32.mrf.mxu0
      %v6105 = vadd.f32 0.0, %v6104
      %v6106 = vpop.f32.mrf.mxu0
      %v6107 = vpop.f32.mrf.mxu0
      %v6108 = vadd.f32 0.0, %v6107
      %v6109 = vpop.f32.mrf.mxu0
      %6110 = vmatprep.mubr.bf16.mxu0 0
      %6111 = vmatmul.mubr.bf16.gmra.mxu0 %v6068
      %v6112 = vpop.f32.mrf.mxu0
      %v6113 = vadd.f32 0.0, %v6112
      %v6114 = vpop.f32.mrf.mxu0
      %v6115 = vpop.f32.mrf.mxu0
      %v6116 = vpop.f32.mrf.mxu0
      %6117 = vdwg.mxu0
      %v6118 = vadd.f32 %v6023, %v6105
      %v6119 = vadd.f32 %v6024, %v6108
      %v6120 = vadd.f32 %v6025, %v6113
      %v6121 = vld [vmem:[%s5413 + $0xd] sm:$0xff]
      %v6122 = vld [vmem:[%s5413 + $0x15] sm:$0xff]
      %v6123 = vld [vmem:[%s5413 + $0x1d] sm:$0xff]
      %v6124 = vpack.c.bf16 %v6122, %v6121
      %v6125 = vpack.c.bf16 %v6123, %v6123
      %s6126 = scalar_lea.vmem [#allocation8], 224
      %v6127 = vld [vmem:[%s6126] sm:$0xf]
      %v6128 = vld [vmem:[%s6126 + $0x4] sm:$0xf]
      %v6129 = vld [vmem:[%s6126 + $0x8] sm:$0xf]
      %v6130 = vld [vmem:[%s6126 + $0xc] sm:$0xf]
      %v6131 = vld [vmem:[%s6126 + $0x10] sm:$0xf]
      %v6132 = vld [vmem:[%s6126 + $0x14] sm:$0xf]
      %v6133 = vld [vmem:[%s6126 + $0x18] sm:$0xf]
      %v6134 = vld [vmem:[%s6126 + $0x1c] sm:$0xf]
      %v6143 = vunpack.c.l.b16 %v6127
      %v6144 = vunpack.c.l.b16 %v6128
      %v6145 = vunpack.c.l.b16 %v6129
      %v6146 = vunpack.c.l.b16 %v6130
      %v6147 = vunpack.c.l.b16 %v6131
      %v6148 = vunpack.c.l.b16 %v6132
      %v6149 = vunpack.c.l.b16 %v6133
      %v6150 = vunpack.c.l.b16 %v6134
      %v6151 = vpack.c.b16 %v6144, %v6143
      %v6152 = vpack.c.b16 %v6146, %v6145
      %v6153 = vpack.c.b16 %v6148, %v6147
      %v6154 = vpack.c.b16 %v6150, %v6149
      %v6160 = vsel %vm97, %v6124, 0
      %v6163 = vsel %vm97, %v6125, 0
      %6165 = vmatprep.subr.bf16.mxu0 0
      %6166 = vmatpush1.bf16.msra.mxu0 0
      %6167 = vmatprep.subr.bf16.mxu0 0
      %6168 = vmatpush1.bf16.msra.mxu0 0
      %6169 = vmatprep.subr.bf16.mxu0 0
      %6170 = vmatpush1.bf16.msra.mxu0 0
      %6171 = vmatprep.subr.bf16.mxu0 0
      %6172 = vmatpush1.bf16.msra.mxu0 0
      %6173 = vmatprep.subr.bf16.mxu0 0
      %6174 = vmatpush1.bf16.msra.mxu0 %v6154
      %6175 = vmatprep.subr.bf16.mxu0 0
      %6176 = vmatpush1.bf16.msra.mxu0 %v6153
      %6177 = vmatprep.subr.bf16.mxu0 0
      %6178 = vmatpush1.bf16.msra.mxu0 %v6152
      %6179 = vmatprep.subr.bf16.mxu0 0
      %6180 = vmatpush1.bf16.msra.mxu0 %v6151
      %6181 = vmatprep.subr.bf16.mxu0 0
      %6182 = vmatpush2.bf16.msra.mxu0 0
      %6183 = vmatprep.subr.bf16.mxu0 0
      %6184 = vmatpush2.bf16.msra.mxu0 0
      %6185 = vmatprep.subr.bf16.mxu0 0
      %6186 = vmatpush2.bf16.msra.mxu0 0
      %6187 = vmatprep.subr.bf16.mxu0 0
      %6188 = vmatpush2.bf16.msra.mxu0 0
      %6189 = vmatprep.subr.bf16.mxu0 0
      %6190 = vmatpush2.bf16.msra.mxu0 0
      %6191 = vmatprep.subr.bf16.mxu0 0
      %6192 = vmatpush2.bf16.msra.mxu0 0
      %6193 = vmatprep.subr.bf16.mxu0 0
      %6194 = vmatpush2.bf16.msra.mxu0 0
      %6195 = vmatprep.subr.bf16.mxu0 0
      %6196 = vmatpush2.bf16.msra.mxu0 0
      %6197 = vmatprep.mubr.bf16.mxu0 0
      %6198 = vmatmul.mubr.bf16.gmra.mxu0 %v6160
      %v6199 = vpop.f32.mrf.mxu0
      %v6200 = vadd.f32 0.0, %v6199
      %v6201 = vpop.f32.mrf.mxu0
      %v6202 = vpop.f32.mrf.mxu0
      %v6203 = vadd.f32 0.0, %v6202
      %v6204 = vpop.f32.mrf.mxu0
      %6205 = vmatprep.mubr.bf16.mxu0 0
      %6206 = vmatmul.mubr.bf16.gmra.mxu0 %v6163
      %v6207 = vpop.f32.mrf.mxu0
      %v6208 = vadd.f32 0.0, %v6207
      %v6209 = vpop.f32.mrf.mxu0
      %v6210 = vpop.f32.mrf.mxu0
      %v6211 = vpop.f32.mrf.mxu0
      %6212 = vdwg.mxu0
      %v6213 = vadd.f32 %v6118, %v6200
      %v6214 = vadd.f32 %v6119, %v6203
      %v6215 = vadd.f32 %v6120, %v6208
      %v6216 = vld [vmem:[%s5413 + $0xe] sm:$0xff]
      %v6217 = vld [vmem:[%s5413 + $0x16] sm:$0xff]
      %v6218 = vld [vmem:[%s5413 + $0x1e] sm:$0xff]
      %v6219 = vpack.c.bf16 %v6217, %v6216
      %v6220 = vpack.c.bf16 %v6218, %v6218
      %s6221 = scalar_lea.vmem [#allocation8], 256
      %v6222 = vld [vmem:[%s6221] sm:$0xf]
      %v6223 = vld [vmem:[%s6221 + $0x4] sm:$0xf]
      %v6224 = vld [vmem:[%s6221 + $0x8] sm:$0xf]
      %v6225 = vld [vmem:[%s6221 + $0xc] sm:$0xf]
      %v6226 = vld [vmem:[%s6221 + $0x10] sm:$0xf]
      %v6227 = vld [vmem:[%s6221 + $0x14] sm:$0xf]
      %v6228 = vld [vmem:[%s6221 + $0x18] sm:$0xf]
      %v6229 = vld [vmem:[%s6221 + $0x1c] sm:$0xf]
      %v6238 = vunpack.c.l.b16 %v6222
      %v6239 = vunpack.c.l.b16 %v6223
      %v6240 = vunpack.c.l.b16 %v6224
      %v6241 = vunpack.c.l.b16 %v6225
      %v6242 = vunpack.c.l.b16 %v6226
      %v6243 = vunpack.c.l.b16 %v6227
      %v6244 = vunpack.c.l.b16 %v6228
      %v6245 = vunpack.c.l.b16 %v6229
      %v6246 = vpack.c.b16 %v6239, %v6238
      %v6247 = vpack.c.b16 %v6241, %v6240
      %v6248 = vpack.c.b16 %v6243, %v6242
      %v6249 = vpack.c.b16 %v6245, %v6244
      %v6255 = vsel %vm97, %v6219, 0
      %v6258 = vsel %vm97, %v6220, 0
      %6260 = vmatprep.subr.bf16.mxu0 0
      %6261 = vmatpush1.bf16.msra.mxu0 0
      %6262 = vmatprep.subr.bf16.mxu0 0
      %6263 = vmatpush1.bf16.msra.mxu0 0
      %6264 = vmatprep.subr.bf16.mxu0 0
      %6265 = vmatpush1.bf16.msra.mxu0 0
      %6266 = vmatprep.subr.bf16.mxu0 0
      %6267 = vmatpush1.bf16.msra.mxu0 0
      %6268 = vmatprep.subr.bf16.mxu0 0
      %6269 = vmatpush1.bf16.msra.mxu0 %v6249
      %6270 = vmatprep.subr.bf16.mxu0 0
      %6271 = vmatpush1.bf16.msra.mxu0 %v6248
      %6272 = vmatprep.subr.bf16.mxu0 0
      %6273 = vmatpush1.bf16.msra.mxu0 %v6247
      %6274 = vmatprep.subr.bf16.mxu0 0
      %6275 = vmatpush1.bf16.msra.mxu0 %v6246
      %6276 = vmatprep.subr.bf16.mxu0 0
      %6277 = vmatpush2.bf16.msra.mxu0 0
      %6278 = vmatprep.subr.bf16.mxu0 0
      %6279 = vmatpush2.bf16.msra.mxu0 0
      %6280 = vmatprep.subr.bf16.mxu0 0
      %6281 = vmatpush2.bf16.msra.mxu0 0
      %6282 = vmatprep.subr.bf16.mxu0 0
      %6283 = vmatpush2.bf16.msra.mxu0 0
      %6284 = vmatprep.subr.bf16.mxu0 0
      %6285 = vmatpush2.bf16.msra.mxu0 0
      %6286 = vmatprep.subr.bf16.mxu0 0
      %6287 = vmatpush2.bf16.msra.mxu0 0
      %6288 = vmatprep.subr.bf16.mxu0 0
      %6289 = vmatpush2.bf16.msra.mxu0 0
      %6290 = vmatprep.subr.bf16.mxu0 0
      %6291 = vmatpush2.bf16.msra.mxu0 0
      %6292 = vmatprep.mubr.bf16.mxu0 0
      %6293 = vmatmul.mubr.bf16.gmra.mxu0 %v6255
      %v6294 = vpop.f32.mrf.mxu0
      %v6295 = vadd.f32 0.0, %v6294
      %v6296 = vpop.f32.mrf.mxu0
      %v6297 = vpop.f32.mrf.mxu0
      %v6298 = vadd.f32 0.0, %v6297
      %v6299 = vpop.f32.mrf.mxu0
      %6300 = vmatprep.mubr.bf16.mxu0 0
      %6301 = vmatmul.mubr.bf16.gmra.mxu0 %v6258
      %v6302 = vpop.f32.mrf.mxu0
      %v6303 = vadd.f32 0.0, %v6302
      %v6304 = vpop.f32.mrf.mxu0
      %v6305 = vpop.f32.mrf.mxu0
      %v6306 = vpop.f32.mrf.mxu0
      %6307 = vdwg.mxu0
      %v6308 = vadd.f32 %v6213, %v6295
      %v6309 = vadd.f32 %v6214, %v6298
      %v6310 = vadd.f32 %v6215, %v6303
      %v6311 = vld [vmem:[%s6] sm:$0x1]
      %v6313 = vlaneseq
      %v6314 = vshrl.u32 %v6313, 7
      %v6315 = vsub.s32 0, %v6314
      %v6316 = vrot.slane %v6311, %v6315
      %v6318 = vadd.f32 %v6308, %v6316
      %v6319 = vadd.f32 %v6309, %v6316
      %v6320 = vadd.f32 %v6310, %v6316
      %v6321 = vmax.f32 %v6318, 0.0
      %v6322 = vmax.f32 %v6319, 0.0
      %v6323 = vmax.f32 %v6320, 0.0
      %v6326 = vrot.slane %v6321, 6
      %v6327 = vrot.slane %v6322, 6
      %v6328 = vsel %vm296, %v6326, %v6327
      %v6330 = vmax.f32 %v6321, %v6328
      %6331 = vst [vmem:[#allocation7] sm:$0x3f] %v6330
      %v6332 = vld [vmem:[#allocation7] ss:$2 sm:$0x3]
      %s6333 = scalar_lea.vmem [#allocation7], 1
      %v6334 = vld [vmem:[%s6333] ss:$2 sm:$0x3]
      %v6335 = vmax.f32 %v6332, %v6334
      %s6336 = smul.u32 %s112, 4
      %s6337 = scalar_lea.vmem [#allocation4], %s6336
      %6338 = vst [vmem:[%s6337] sm:$0x3] %v6335
      %v6340 = vrot.slane %v6323, 6
      %v6342 = vmax.f32 %v6322, %v6340
      %v6343 = vmax.f32 %v6323, %v6340
      %6344 = vst [vmem:[#allocation7 - $0x4] sm:$0xf0] %v6342
      %6345 = vst [vmem:[#allocation7 + $0x4] sm:$0x3] %v6343
      %v6346 = vld [vmem:[#allocation7] ss:$2 sm:$0x3]
      %v6347 = vld [vmem:[%s6333] ss:$2 sm:$0x3]
      %v6348 = vmax.f32 %v6346, %v6347
      %s6349 = sadd.s32 %s6336, 2
      %s6350 = scalar_lea.vmem [#allocation4], %s6349
      %6351 = vst [vmem:[%s6350] sm:$0x3] %v6348
    $region58: #{simple_cnn_forward.1} parent=1 // loop_footer
      %s116 = sadd.s32 1, %s112
    $region59: #{simple_cnn_forward.1} parent=1 // loop_footer_branch
      %111 = sbr.rel target = $region55
    $region60: #{simple_cnn_forward.1} parent=1 // loop_exit
      _
    %v6352 = vld [vmem:[#allocation4] ss:$4 sm:$0x3]
    %v6353 = vpack.c.bf16 %v6352, %v6352
    %v6354 = vld [vmem:[%s7] sm:$0xff]
    %v6355 = vld [vmem:[%s7 + $0x8] sm:$0xff]
    %v6356 = vld [vmem:[%s7 + $0x10] sm:$0xff]
    %v6357 = vld [vmem:[%s7 + $0x18] sm:$0xff]
    %v6358 = vld [vmem:[%s7 + $0x20] sm:$0xff]
    %v6359 = vld [vmem:[%s7 + $0x28] sm:$0xff]
    %v6360 = vld [vmem:[%s7 + $0x30] sm:$0xff]
    %v6361 = vld [vmem:[%s7 + $0x38] sm:$0xff]
    %v6362 = vld [vmem:[%s7 + $0x40] sm:$0xff]
    %v6363 = vld [vmem:[%s7 + $0x48] sm:$0xff]
    %v6364 = vld [vmem:[%s7 + $0x50] sm:$0xff]
    %v6365 = vld [vmem:[%s7 + $0x58] sm:$0xff]
    %v6366 = vld [vmem:[%s7 + $0x60] sm:$0xff]
    %v6367 = vld [vmem:[%s7 + $0x68] sm:$0xff]
    %v6368 = vld [vmem:[%s7 + $0x70] sm:$0xff]
    %v6369 = vld [vmem:[%s7 + $0x78] sm:$0xff]
    %s6370 = scalar_lea.vmem [#allocation4], 1
    %v6371 = vld [vmem:[%s6370] ss:$4 sm:$0x3]
    %v6372 = vpack.c.bf16 %v6371, %v6371
    %s6373 = scalar_lea.vmem %s7, 128
    %v6374 = vld [vmem:[%s6373] sm:$0xff]
    %v6375 = vld [vmem:[%s6373 + $0x8] sm:$0xff]
    %v6376 = vld [vmem:[%s6373 + $0x10] sm:$0xff]
    %v6377 = vld [vmem:[%s6373 + $0x18] sm:$0xff]
    %v6378 = vld [vmem:[%s6373 + $0x20] sm:$0xff]
    %v6379 = vld [vmem:[%s6373 + $0x28] sm:$0xff]
    %v6380 = vld [vmem:[%s6373 + $0x30] sm:$0xff]
    %v6381 = vld [vmem:[%s6373 + $0x38] sm:$0xff]
    %v6382 = vld [vmem:[%s6373 + $0x40] sm:$0xff]
    %v6383 = vld [vmem:[%s6373 + $0x48] sm:$0xff]
    %v6384 = vld [vmem:[%s6373 + $0x50] sm:$0xff]
    %v6385 = vld [vmem:[%s6373 + $0x58] sm:$0xff]
    %v6386 = vld [vmem:[%s6373 + $0x60] sm:$0xff]
    %v6387 = vld [vmem:[%s6373 + $0x68] sm:$0xff]
    %v6388 = vld [vmem:[%s6373 + $0x70] sm:$0xff]
    %v6389 = vld [vmem:[%s6373 + $0x78] sm:$0xff]
    %v6406 = vunpack.c.l.b16 %v6374
    %v6407 = vunpack.c.h.b16 %v6374
    %v6408 = vunpack.c.l.b16 %v6375
    %v6409 = vunpack.c.h.b16 %v6375
    %v6410 = vunpack.c.l.b16 %v6376
    %v6411 = vunpack.c.h.b16 %v6376
    %v6412 = vunpack.c.l.b16 %v6377
    %v6413 = vunpack.c.h.b16 %v6377
    %v6414 = vunpack.c.l.b16 %v6378
    %v6415 = vunpack.c.h.b16 %v6378
    %v6416 = vunpack.c.l.b16 %v6379
    %v6417 = vunpack.c.h.b16 %v6379
    %v6418 = vunpack.c.l.b16 %v6380
    %v6419 = vunpack.c.h.b16 %v6380
    %v6420 = vunpack.c.l.b16 %v6381
    %v6421 = vunpack.c.h.b16 %v6381
    %v6422 = vunpack.c.l.b16 %v6382
    %v6423 = vunpack.c.h.b16 %v6382
    %v6424 = vunpack.c.l.b16 %v6383
    %v6425 = vunpack.c.h.b16 %v6383
    %v6426 = vunpack.c.l.b16 %v6384
    %v6427 = vunpack.c.h.b16 %v6384
    %v6428 = vunpack.c.l.b16 %v6385
    %v6429 = vunpack.c.h.b16 %v6385
    %v6430 = vunpack.c.l.b16 %v6386
    %v6431 = vunpack.c.h.b16 %v6386
    %v6432 = vunpack.c.l.b16 %v6387
    %v6433 = vunpack.c.h.b16 %v6387
    %v6434 = vunpack.c.l.b16 %v6388
    %v6435 = vunpack.c.h.b16 %v6388
    %v6436 = vunpack.c.l.b16 %v6389
    %v6437 = vunpack.c.h.b16 %v6389
    %v6438 = vpack.c.b16 %v6408, %v6406
    %v6439 = vpack.c.b16 %v6409, %v6407
    %v6440 = vpack.c.b16 %v6412, %v6410
    %v6441 = vpack.c.b16 %v6413, %v6411
    %v6442 = vpack.c.b16 %v6416, %v6414
    %v6443 = vpack.c.b16 %v6417, %v6415
    %v6444 = vpack.c.b16 %v6420, %v6418
    %v6445 = vpack.c.b16 %v6421, %v6419
    %v6446 = vpack.c.b16 %v6424, %v6422
    %v6447 = vpack.c.b16 %v6425, %v6423
    %v6448 = vpack.c.b16 %v6428, %v6426
    %v6449 = vpack.c.b16 %v6429, %v6427
    %v6450 = vpack.c.b16 %v6432, %v6430
    %v6451 = vpack.c.b16 %v6433, %v6431
    %v6452 = vpack.c.b16 %v6436, %v6434
    %v6453 = vpack.c.b16 %v6437, %v6435
    %6470 = vmatprep.subr.bf16.mxu0 %v6453
    %6471 = vmatpush1.bf16.msra.mxu0 %v6452
    %6472 = vmatprep.subr.bf16.mxu0 %v6451
    %6473 = vmatpush1.bf16.msra.mxu0 %v6450
    %6474 = vmatprep.subr.bf16.mxu0 %v6449
    %6475 = vmatpush1.bf16.msra.mxu0 %v6448
    %6476 = vmatprep.subr.bf16.mxu0 %v6447
    %6477 = vmatpush1.bf16.msra.mxu0 %v6446
    %6478 = vmatprep.subr.bf16.mxu0 %v6445
    %6479 = vmatpush1.bf16.msra.mxu0 %v6444
    %6480 = vmatprep.subr.bf16.mxu0 %v6443
    %6481 = vmatpush1.bf16.msra.mxu0 %v6442
    %6482 = vmatprep.subr.bf16.mxu0 %v6441
    %6483 = vmatpush1.bf16.msra.mxu0 %v6440
    %6484 = vmatprep.subr.bf16.mxu0 %v6439
    %6485 = vmatpush1.bf16.msra.mxu0 %v6438
    %6486 = vmatprep.subr.bf16.mxu0 0
    %6487 = vmatpush2.bf16.msra.mxu0 0
    %6488 = vmatprep.subr.bf16.mxu0 0
    %6489 = vmatpush2.bf16.msra.mxu0 0
    %6490 = vmatprep.subr.bf16.mxu0 0
    %6491 = vmatpush2.bf16.msra.mxu0 0
    %6492 = vmatprep.subr.bf16.mxu0 0
    %6493 = vmatpush2.bf16.msra.mxu0 0
    %6494 = vmatprep.subr.bf16.mxu0 0
    %6495 = vmatpush2.bf16.msra.mxu0 0
    %6496 = vmatprep.subr.bf16.mxu0 0
    %6497 = vmatpush2.bf16.msra.mxu0 0
    %6498 = vmatprep.subr.bf16.mxu0 0
    %6499 = vmatpush2.bf16.msra.mxu0 0
    %6500 = vmatprep.subr.bf16.mxu0 0
    %6501 = vmatpush2.bf16.msra.mxu0 0
    %6502 = vmatprep.mubr.bf16.mxu0 0
    %6503 = vmatmul.mubr.bf16.gmra.mxu0 %v6372
    %v6504 = vpop.f32.mrf.mxu0
    %v6505 = vadd.f32 0.0, %v6504
    %v6506 = vpop.f32.mrf.mxu0
    %v6507 = vadd.f32 0.0, %v6506
    %v6508 = vpop.f32.mrf.mxu0
    %v6509 = vpop.f32.mrf.mxu0
    %6510 = vdwg.mxu0
    %v6527 = vunpack.c.l.b16 %v6354
    %v6528 = vunpack.c.h.b16 %v6354
    %v6529 = vunpack.c.l.b16 %v6355
    %v6530 = vunpack.c.h.b16 %v6355
    %v6531 = vunpack.c.l.b16 %v6356
    %v6532 = vunpack.c.h.b16 %v6356
    %v6533 = vunpack.c.l.b16 %v6357
    %v6534 = vunpack.c.h.b16 %v6357
    %v6535 = vunpack.c.l.b16 %v6358
    %v6536 = vunpack.c.h.b16 %v6358
    %v6537 = vunpack.c.l.b16 %v6359
    %v6538 = vunpack.c.h.b16 %v6359
    %v6539 = vunpack.c.l.b16 %v6360
    %v6540 = vunpack.c.h.b16 %v6360
    %v6541 = vunpack.c.l.b16 %v6361
    %v6542 = vunpack.c.h.b16 %v6361
    %v6543 = vunpack.c.l.b16 %v6362
    %v6544 = vunpack.c.h.b16 %v6362
    %v6545 = vunpack.c.l.b16 %v6363
    %v6546 = vunpack.c.h.b16 %v6363
    %v6547 = vunpack.c.l.b16 %v6364
    %v6548 = vunpack.c.h.b16 %v6364
    %v6549 = vunpack.c.l.b16 %v6365
    %v6550 = vunpack.c.h.b16 %v6365
    %v6551 = vunpack.c.l.b16 %v6366
    %v6552 = vunpack.c.h.b16 %v6366
    %v6553 = vunpack.c.l.b16 %v6367
    %v6554 = vunpack.c.h.b16 %v6367
    %v6555 = vunpack.c.l.b16 %v6368
    %v6556 = vunpack.c.h.b16 %v6368
    %v6557 = vunpack.c.l.b16 %v6369
    %v6558 = vunpack.c.h.b16 %v6369
    %v6559 = vpack.c.b16 %v6529, %v6527
    %v6560 = vpack.c.b16 %v6530, %v6528
    %v6561 = vpack.c.b16 %v6533, %v6531
    %v6562 = vpack.c.b16 %v6534, %v6532
    %v6563 = vpack.c.b16 %v6537, %v6535
    %v6564 = vpack.c.b16 %v6538, %v6536
    %v6565 = vpack.c.b16 %v6541, %v6539
    %v6566 = vpack.c.b16 %v6542, %v6540
    %v6567 = vpack.c.b16 %v6545, %v6543
    %v6568 = vpack.c.b16 %v6546, %v6544
    %v6569 = vpack.c.b16 %v6549, %v6547
    %v6570 = vpack.c.b16 %v6550, %v6548
    %v6571 = vpack.c.b16 %v6553, %v6551
    %v6572 = vpack.c.b16 %v6554, %v6552
    %v6573 = vpack.c.b16 %v6557, %v6555
    %v6574 = vpack.c.b16 %v6558, %v6556
    %6591 = vmatprep.subr.bf16.mxu0 %v6574
    %6592 = vmatpush1.bf16.msra.mxu0 %v6573
    %6593 = vmatprep.subr.bf16.mxu0 %v6572
    %6594 = vmatpush1.bf16.msra.mxu0 %v6571
    %6595 = vmatprep.subr.bf16.mxu0 %v6570
    %6596 = vmatpush1.bf16.msra.mxu0 %v6569
    %6597 = vmatprep.subr.bf16.mxu0 %v6568
    %6598 = vmatpush1.bf16.msra.mxu0 %v6567
    %6599 = vmatprep.subr.bf16.mxu0 %v6566
    %6600 = vmatpush1.bf16.msra.mxu0 %v6565
    %6601 = vmatprep.subr.bf16.mxu0 %v6564
    %6602 = vmatpush1.bf16.msra.mxu0 %v6563
    %6603 = vmatprep.subr.bf16.mxu0 %v6562
    %6604 = vmatpush1.bf16.msra.mxu0 %v6561
    %6605 = vmatprep.subr.bf16.mxu0 %v6560
    %6606 = vmatpush1.bf16.msra.mxu0 %v6559
    %6607 = vmatprep.subr.bf16.mxu0 0
    %6608 = vmatpush2.bf16.msra.mxu0 0
    %6609 = vmatprep.subr.bf16.mxu0 0
    %6610 = vmatpush2.bf16.msra.mxu0 0
    %6611 = vmatprep.subr.bf16.mxu0 0
    %6612 = vmatpush2.bf16.msra.mxu0 0
    %6613 = vmatprep.subr.bf16.mxu0 0
    %6614 = vmatpush2.bf16.msra.mxu0 0
    %6615 = vmatprep.subr.bf16.mxu0 0
    %6616 = vmatpush2.bf16.msra.mxu0 0
    %6617 = vmatprep.subr.bf16.mxu0 0
    %6618 = vmatpush2.bf16.msra.mxu0 0
    %6619 = vmatprep.subr.bf16.mxu0 0
    %6620 = vmatpush2.bf16.msra.mxu0 0
    %6621 = vmatprep.subr.bf16.mxu0 0
    %6622 = vmatpush2.bf16.msra.mxu0 0
    %6623 = vmatprep.mubr.bf16.mxu0 0
    %6624 = vmatmul.mubr.bf16.gmra.mxu0 %v6353
    %v6625 = vpop.f32.mrf.mxu0
    %v6626 = vadd.f32 %v6505, %v6625
    %v6627 = vpop.f32.mrf.mxu0
    %v6628 = vadd.f32 %v6507, %v6627
    %v6629 = vpop.f32.mrf.mxu0
    %v6630 = vpop.f32.mrf.mxu0
    %6631 = vdwg.mxu0
    %s6632 = scalar_lea.vmem [#allocation4], 2
    %v6633 = vld [vmem:[%s6632] ss:$4 sm:$0x3]
    %v6634 = vpack.c.bf16 %v6633, %v6633
    %s6635 = scalar_lea.vmem %s7, 256
    %v6636 = vld [vmem:[%s6635] sm:$0xff]
    %v6637 = vld [vmem:[%s6635 + $0x8] sm:$0xff]
    %v6638 = vld [vmem:[%s6635 + $0x10] sm:$0xff]
    %v6639 = vld [vmem:[%s6635 + $0x18] sm:$0xff]
    %v6640 = vld [vmem:[%s6635 + $0x20] sm:$0xff]
    %v6641 = vld [vmem:[%s6635 + $0x28] sm:$0xff]
    %v6642 = vld [vmem:[%s6635 + $0x30] sm:$0xff]
    %v6643 = vld [vmem:[%s6635 + $0x38] sm:$0xff]
    %v6644 = vld [vmem:[%s6635 + $0x40] sm:$0xff]
    %v6645 = vld [vmem:[%s6635 + $0x48] sm:$0xff]
    %v6646 = vld [vmem:[%s6635 + $0x50] sm:$0xff]
    %v6647 = vld [vmem:[%s6635 + $0x58] sm:$0xff]
    %v6648 = vld [vmem:[%s6635 + $0x60] sm:$0xff]
    %v6649 = vld [vmem:[%s6635 + $0x68] sm:$0xff]
    %v6650 = vld [vmem:[%s6635 + $0x70] sm:$0xff]
    %v6651 = vld [vmem:[%s6635 + $0x78] sm:$0xff]
    %v6668 = vunpack.c.l.b16 %v6636
    %v6669 = vunpack.c.h.b16 %v6636
    %v6670 = vunpack.c.l.b16 %v6637
    %v6671 = vunpack.c.h.b16 %v6637
    %v6672 = vunpack.c.l.b16 %v6638
    %v6673 = vunpack.c.h.b16 %v6638
    %v6674 = vunpack.c.l.b16 %v6639
    %v6675 = vunpack.c.h.b16 %v6639
    %v6676 = vunpack.c.l.b16 %v6640
    %v6677 = vunpack.c.h.b16 %v6640
    %v6678 = vunpack.c.l.b16 %v6641
    %v6679 = vunpack.c.h.b16 %v6641
    %v6680 = vunpack.c.l.b16 %v6642
    %v6681 = vunpack.c.h.b16 %v6642
    %v6682 = vunpack.c.l.b16 %v6643
    %v6683 = vunpack.c.h.b16 %v6643
    %v6684 = vunpack.c.l.b16 %v6644
    %v6685 = vunpack.c.h.b16 %v6644
    %v6686 = vunpack.c.l.b16 %v6645
    %v6687 = vunpack.c.h.b16 %v6645
    %v6688 = vunpack.c.l.b16 %v6646
    %v6689 = vunpack.c.h.b16 %v6646
    %v6690 = vunpack.c.l.b16 %v6647
    %v6691 = vunpack.c.h.b16 %v6647
    %v6692 = vunpack.c.l.b16 %v6648
    %v6693 = vunpack.c.h.b16 %v6648
    %v6694 = vunpack.c.l.b16 %v6649
    %v6695 = vunpack.c.h.b16 %v6649
    %v6696 = vunpack.c.l.b16 %v6650
    %v6697 = vunpack.c.h.b16 %v6650
    %v6698 = vunpack.c.l.b16 %v6651
    %v6699 = vunpack.c.h.b16 %v6651
    %v6700 = vpack.c.b16 %v6670, %v6668
    %v6701 = vpack.c.b16 %v6671, %v6669
    %v6702 = vpack.c.b16 %v6674, %v6672
    %v6703 = vpack.c.b16 %v6675, %v6673
    %v6704 = vpack.c.b16 %v6678, %v6676
    %v6705 = vpack.c.b16 %v6679, %v6677
    %v6706 = vpack.c.b16 %v6682, %v6680
    %v6707 = vpack.c.b16 %v6683, %v6681
    %v6708 = vpack.c.b16 %v6686, %v6684
    %v6709 = vpack.c.b16 %v6687, %v6685
    %v6710 = vpack.c.b16 %v6690, %v6688
    %v6711 = vpack.c.b16 %v6691, %v6689
    %v6712 = vpack.c.b16 %v6694, %v6692
    %v6713 = vpack.c.b16 %v6695, %v6693
    %v6714 = vpack.c.b16 %v6698, %v6696
    %v6715 = vpack.c.b16 %v6699, %v6697
    %6732 = vmatprep.subr.bf16.mxu0 %v6715
    %6733 = vmatpush1.bf16.msra.mxu0 %v6714
    %6734 = vmatprep.subr.bf16.mxu0 %v6713
    %6735 = vmatpush1.bf16.msra.mxu0 %v6712
    %6736 = vmatprep.subr.bf16.mxu0 %v6711
    %6737 = vmatpush1.bf16.msra.mxu0 %v6710
    %6738 = vmatprep.subr.bf16.mxu0 %v6709
    %6739 = vmatpush1.bf16.msra.mxu0 %v6708
    %6740 = vmatprep.subr.bf16.mxu0 %v6707
    %6741 = vmatpush1.bf16.msra.mxu0 %v6706
    %6742 = vmatprep.subr.bf16.mxu0 %v6705
    %6743 = vmatpush1.bf16.msra.mxu0 %v6704
    %6744 = vmatprep.subr.bf16.mxu0 %v6703
    %6745 = vmatpush1.bf16.msra.mxu0 %v6702
    %6746 = vmatprep.subr.bf16.mxu0 %v6701
    %6747 = vmatpush1.bf16.msra.mxu0 %v6700
    %6748 = vmatprep.subr.bf16.mxu0 0
    %6749 = vmatpush2.bf16.msra.mxu0 0
    %6750 = vmatprep.subr.bf16.mxu0 0
    %6751 = vmatpush2.bf16.msra.mxu0 0
    %6752 = vmatprep.subr.bf16.mxu0 0
    %6753 = vmatpush2.bf16.msra.mxu0 0
    %6754 = vmatprep.subr.bf16.mxu0 0
    %6755 = vmatpush2.bf16.msra.mxu0 0
    %6756 = vmatprep.subr.bf16.mxu0 0
    %6757 = vmatpush2.bf16.msra.mxu0 0
    %6758 = vmatprep.subr.bf16.mxu0 0
    %6759 = vmatpush2.bf16.msra.mxu0 0
    %6760 = vmatprep.subr.bf16.mxu0 0
    %6761 = vmatpush2.bf16.msra.mxu0 0
    %6762 = vmatprep.subr.bf16.mxu0 0
    %6763 = vmatpush2.bf16.msra.mxu0 0
    %6764 = vmatprep.mubr.bf16.mxu0 0
    %6765 = vmatmul.mubr.bf16.gmra.mxu0 %v6634
    %v6766 = vpop.f32.mrf.mxu0
    %v6767 = vadd.f32 0.0, %v6766
    %v6768 = vpop.f32.mrf.mxu0
    %v6769 = vadd.f32 0.0, %v6768
    %v6770 = vpop.f32.mrf.mxu0
    %v6771 = vpop.f32.mrf.mxu0
    %6772 = vdwg.mxu0
    %v6773 = vadd.f32 %v6626, %v6767
    %v6774 = vadd.f32 %v6628, %v6769
    %s6775 = scalar_lea.vmem [#allocation4], 3
    %v6776 = vld [vmem:[%s6775] ss:$4 sm:$0x3]
    %v6777 = vpack.c.bf16 %v6776, %v6776
    %s6778 = scalar_lea.vmem %s7, 384
    %v6779 = vld [vmem:[%s6778] sm:$0xff]
    %v6780 = vld [vmem:[%s6778 + $0x8] sm:$0xff]
    %v6781 = vld [vmem:[%s6778 + $0x10] sm:$0xff]
    %v6782 = vld [vmem:[%s6778 + $0x18] sm:$0xff]
    %v6783 = vld [vmem:[%s6778 + $0x20] sm:$0xff]
    %v6784 = vld [vmem:[%s6778 + $0x28] sm:$0xff]
    %v6785 = vld [vmem:[%s6778 + $0x30] sm:$0xff]
    %v6786 = vld [vmem:[%s6778 + $0x38] sm:$0xff]
    %v6787 = vld [vmem:[%s6778 + $0x40] sm:$0xff]
    %v6788 = vld [vmem:[%s6778 + $0x48] sm:$0xff]
    %v6789 = vld [vmem:[%s6778 + $0x50] sm:$0xff]
    %v6790 = vld [vmem:[%s6778 + $0x58] sm:$0xff]
    %v6791 = vld [vmem:[%s6778 + $0x60] sm:$0xff]
    %v6792 = vld [vmem:[%s6778 + $0x68] sm:$0xff]
    %v6793 = vld [vmem:[%s6778 + $0x70] sm:$0xff]
    %v6794 = vld [vmem:[%s6778 + $0x78] sm:$0xff]
    %v6811 = vunpack.c.l.b16 %v6779
    %v6812 = vunpack.c.h.b16 %v6779
    %v6813 = vunpack.c.l.b16 %v6780
    %v6814 = vunpack.c.h.b16 %v6780
    %v6815 = vunpack.c.l.b16 %v6781
    %v6816 = vunpack.c.h.b16 %v6781
    %v6817 = vunpack.c.l.b16 %v6782
    %v6818 = vunpack.c.h.b16 %v6782
    %v6819 = vunpack.c.l.b16 %v6783
    %v6820 = vunpack.c.h.b16 %v6783
    %v6821 = vunpack.c.l.b16 %v6784
    %v6822 = vunpack.c.h.b16 %v6784
    %v6823 = vunpack.c.l.b16 %v6785
    %v6824 = vunpack.c.h.b16 %v6785
    %v6825 = vunpack.c.l.b16 %v6786
    %v6826 = vunpack.c.h.b16 %v6786
    %v6827 = vunpack.c.l.b16 %v6787
    %v6828 = vunpack.c.h.b16 %v6787
    %v6829 = vunpack.c.l.b16 %v6788
    %v6830 = vunpack.c.h.b16 %v6788
    %v6831 = vunpack.c.l.b16 %v6789
    %v6832 = vunpack.c.h.b16 %v6789
    %v6833 = vunpack.c.l.b16 %v6790
    %v6834 = vunpack.c.h.b16 %v6790
    %v6835 = vunpack.c.l.b16 %v6791
    %v6836 = vunpack.c.h.b16 %v6791
    %v6837 = vunpack.c.l.b16 %v6792
    %v6838 = vunpack.c.h.b16 %v6792
    %v6839 = vunpack.c.l.b16 %v6793
    %v6840 = vunpack.c.h.b16 %v6793
    %v6841 = vunpack.c.l.b16 %v6794
    %v6842 = vunpack.c.h.b16 %v6794
    %v6843 = vpack.c.b16 %v6813, %v6811
    %v6844 = vpack.c.b16 %v6814, %v6812
    %v6845 = vpack.c.b16 %v6817, %v6815
    %v6846 = vpack.c.b16 %v6818, %v6816
    %v6847 = vpack.c.b16 %v6821, %v6819
    %v6848 = vpack.c.b16 %v6822, %v6820
    %v6849 = vpack.c.b16 %v6825, %v6823
    %v6850 = vpack.c.b16 %v6826, %v6824
    %v6851 = vpack.c.b16 %v6829, %v6827
    %v6852 = vpack.c.b16 %v6830, %v6828
    %v6853 = vpack.c.b16 %v6833, %v6831
    %v6854 = vpack.c.b16 %v6834, %v6832
    %v6855 = vpack.c.b16 %v6837, %v6835
    %v6856 = vpack.c.b16 %v6838, %v6836
    %v6857 = vpack.c.b16 %v6841, %v6839
    %v6858 = vpack.c.b16 %v6842, %v6840
    %6875 = vmatprep.subr.bf16.mxu0 %v6858
    %6876 = vmatpush1.bf16.msra.mxu0 %v6857
    %6877 = vmatprep.subr.bf16.mxu0 %v6856
    %6878 = vmatpush1.bf16.msra.mxu0 %v6855
    %6879 = vmatprep.subr.bf16.mxu0 %v6854
    %6880 = vmatpush1.bf16.msra.mxu0 %v6853
    %6881 = vmatprep.subr.bf16.mxu0 %v6852
    %6882 = vmatpush1.bf16.msra.mxu0 %v6851
    %6883 = vmatprep.subr.bf16.mxu0 %v6850
    %6884 = vmatpush1.bf16.msra.mxu0 %v6849
    %6885 = vmatprep.subr.bf16.mxu0 %v6848
    %6886 = vmatpush1.bf16.msra.mxu0 %v6847
    %6887 = vmatprep.subr.bf16.mxu0 %v6846
    %6888 = vmatpush1.bf16.msra.mxu0 %v6845
    %6889 = vmatprep.subr.bf16.mxu0 %v6844
    %6890 = vmatpush1.bf16.msra.mxu0 %v6843
    %6891 = vmatprep.subr.bf16.mxu0 0
    %6892 = vmatpush2.bf16.msra.mxu0 0
    %6893 = vmatprep.subr.bf16.mxu0 0
    %6894 = vmatpush2.bf16.msra.mxu0 0
    %6895 = vmatprep.subr.bf16.mxu0 0
    %6896 = vmatpush2.bf16.msra.mxu0 0
    %6897 = vmatprep.subr.bf16.mxu0 0
    %6898 = vmatpush2.bf16.msra.mxu0 0
    %6899 = vmatprep.subr.bf16.mxu0 0
    %6900 = vmatpush2.bf16.msra.mxu0 0
    %6901 = vmatprep.subr.bf16.mxu0 0
    %6902 = vmatpush2.bf16.msra.mxu0 0
    %6903 = vmatprep.subr.bf16.mxu0 0
    %6904 = vmatpush2.bf16.msra.mxu0 0
    %6905 = vmatprep.subr.bf16.mxu0 0
    %6906 = vmatpush2.bf16.msra.mxu0 0
    %6907 = vmatprep.mubr.bf16.mxu0 0
    %6908 = vmatmul.mubr.bf16.gmra.mxu0 %v6777
    %v6909 = vpop.f32.mrf.mxu0
    %v6910 = vadd.f32 0.0, %v6909
    %v6911 = vpop.f32.mrf.mxu0
    %v6912 = vadd.f32 0.0, %v6911
    %v6913 = vpop.f32.mrf.mxu0
    %v6914 = vpop.f32.mrf.mxu0
    %6915 = vdwg.mxu0
    %v6916 = vadd.f32 %v6773, %v6910
    %v6917 = vadd.f32 %v6774, %v6912
    %v6918 = vld [vmem:[%s8] sm:$0x3]
    %v6920 = vlaneseq
    %v6921 = vshrl.u32 %v6920, 7
    %v6922 = vsub.s32 0, %v6921
    %v6923 = vrot.slane %v6918, %v6922
    %v6924 = vlaneseq
    %v6925 = vshrl.u32 %v6924, 7
    %v6926 = vsub.s32 1, %v6925
    %v6927 = vrot.slane %v6918, %v6926
    %v6930 = vadd.f32 %v6916, %v6923
    %v6931 = vadd.f32 %v6917, %v6927
    %v6932 = vmax.f32 %v6930, 0.0
    %v6933 = vmax.f32 %v6931, 0.0
    %v6934 = vpack.c.bf16 %v6932, %v6932
    %v6935 = vpack.c.bf16 %v6933, %v6933
    %v6936 = vld [vmem:[#allocation10] sm:$0xff]
    %v6937 = vld [vmem:[#allocation10 + $0x8] sm:$0xf]
    %v6938 = vld [vmem:[#allocation10 + $0xc] sm:$0xff]
    %v6939 = vld [vmem:[#allocation10 + $0x14] sm:$0xf]
    %v6940 = vld [vmem:[#allocation10 + $0x18] sm:$0xff]
    %v6941 = vld [vmem:[#allocation10 + $0x20] sm:$0xf]
    %v6942 = vld [vmem:[#allocation10 + $0x24] sm:$0xff]
    %v6943 = vld [vmem:[#allocation10 + $0x2c] sm:$0xf]
    %v6944 = vld [vmem:[#allocation10 + $0x30] sm:$0xff]
    %v6945 = vld [vmem:[#allocation10 + $0x38] sm:$0xf]
    %v6946 = vld [vmem:[#allocation10 + $0x3c] sm:$0xff]
    %v6947 = vld [vmem:[#allocation10 + $0x44] sm:$0xf]
    %v6948 = vld [vmem:[#allocation10 + $0x48] sm:$0xff]
    %v6949 = vld [vmem:[#allocation10 + $0x50] sm:$0xf]
    %v6950 = vld [vmem:[#allocation10 + $0x54] sm:$0xff]
    %v6951 = vld [vmem:[#allocation10 + $0x5c] sm:$0xf]
    %v6952 = vld [vmem:[#allocation10 + $0x60] sm:$0xff]
    %v6953 = vld [vmem:[#allocation10 + $0x68] sm:$0xf]
    %v6954 = vld [vmem:[#allocation10 + $0x6c] sm:$0xff]
    %v6955 = vld [vmem:[#allocation10 + $0x74] sm:$0xf]
    %v6956 = vld [vmem:[#allocation10 + $0x78] sm:$0xff]
    %v6957 = vld [vmem:[#allocation10 + $0x80] sm:$0xf]
    %v6958 = vld [vmem:[#allocation10 + $0x84] sm:$0xff]
    %v6959 = vld [vmem:[#allocation10 + $0x8c] sm:$0xf]
    %v6960 = vld [vmem:[#allocation10 + $0x90] sm:$0xff]
    %v6961 = vld [vmem:[#allocation10 + $0x98] sm:$0xf]
    %v6962 = vld [vmem:[#allocation10 + $0x9c] sm:$0xff]
    %v6963 = vld [vmem:[#allocation10 + $0xa4] sm:$0xf]
    %v6964 = vld [vmem:[#allocation10 + $0xa8] sm:$0xff]
    %v6965 = vld [vmem:[#allocation10 + $0xb0] sm:$0xf]
    %v6966 = vld [vmem:[#allocation10 + $0xb4] sm:$0xff]
    %v6967 = vld [vmem:[#allocation10 + $0xbc] sm:$0xf]
    %v6968 = vld [vmem:[#allocation10 + $0xc0] sm:$0xff]
    %v6969 = vld [vmem:[#allocation10 + $0xc8] sm:$0xf]
    %v6970 = vld [vmem:[#allocation10 + $0xcc] sm:$0xff]
    %v6971 = vld [vmem:[#allocation10 + $0xd4] sm:$0xf]
    %v6972 = vld [vmem:[#allocation10 + $0xd8] sm:$0xff]
    %v6973 = vld [vmem:[#allocation10 + $0xe0] sm:$0xf]
    %v6974 = vld [vmem:[#allocation10 + $0xe4] sm:$0xff]
    %v6975 = vld [vmem:[#allocation10 + $0xec] sm:$0xf]
    %v6976 = vld [vmem:[#allocation10 + $0xf0] sm:$0xff]
    %v6977 = vld [vmem:[#allocation10 + $0xf8] sm:$0xf]
    %v6978 = vld [vmem:[#allocation10 + $0xfc] sm:$0xff]
    %v6979 = vld [vmem:[#allocation10 + $0x104] sm:$0xf]
    %v6980 = vld [vmem:[#allocation10 + $0x108] sm:$0xff]
    %v6981 = vld [vmem:[#allocation10 + $0x110] sm:$0xf]
    %v6982 = vld [vmem:[#allocation10 + $0x114] sm:$0xff]
    %v6983 = vld [vmem:[#allocation10 + $0x11c] sm:$0xf]
    %v6984 = vld [vmem:[#allocation10 + $0x120] sm:$0xff]
    %v6985 = vld [vmem:[#allocation10 + $0x128] sm:$0xf]
    %v6986 = vld [vmem:[#allocation10 + $0x12c] sm:$0xff]
    %v6987 = vld [vmem:[#allocation10 + $0x134] sm:$0xf]
    %v6988 = vld [vmem:[#allocation10 + $0x138] sm:$0xff]
    %v6989 = vld [vmem:[#allocation10 + $0x140] sm:$0xf]
    %v6990 = vld [vmem:[#allocation10 + $0x144] sm:$0xff]
    %v6991 = vld [vmem:[#allocation10 + $0x14c] sm:$0xf]
    %v6992 = vld [vmem:[#allocation10 + $0x150] sm:$0xff]
    %v6993 = vld [vmem:[#allocation10 + $0x158] sm:$0xf]
    %v6994 = vld [vmem:[#allocation10 + $0x15c] sm:$0xff]
    %v6995 = vld [vmem:[#allocation10 + $0x164] sm:$0xf]
    %v6996 = vld [vmem:[#allocation10 + $0x168] sm:$0xff]
    %v6997 = vld [vmem:[#allocation10 + $0x170] sm:$0xf]
    %v6998 = vld [vmem:[#allocation10 + $0x174] sm:$0xff]
    %v6999 = vld [vmem:[#allocation10 + $0x17c] sm:$0xf]
    %v7000 = vld [vmem:[%s10] sm:$0x7]
    %v7002 = vlaneseq
    %v7003 = vshrl.u32 %v7002, 7
    %v7004 = vsub.s32 0, %v7003
    %v7005 = vrot.slane %v7000, %v7004
    %v7006 = vlaneseq
    %v7007 = vshrl.u32 %v7006, 7
    %v7008 = vsub.s32 1, %v7007
    %v7009 = vrot.slane %v7000, %v7008
    %v7010 = vlaneseq
    %v7011 = vshrl.u32 %v7010, 7
    %v7012 = vsub.s32 2, %v7011
    %v7013 = vrot.slane %v7000, %v7012
    %v7081 = vunpack.c.l.b16 %v6936
    %v7082 = vunpack.c.h.b16 %v6936
    %v7083 = vunpack.c.l.b16 %v6937
    %v7084 = vunpack.c.l.b16 %v6938
    %v7085 = vunpack.c.h.b16 %v6938
    %v7086 = vunpack.c.l.b16 %v6939
    %v7087 = vunpack.c.l.b16 %v6940
    %v7088 = vunpack.c.h.b16 %v6940
    %v7089 = vunpack.c.l.b16 %v6941
    %v7090 = vunpack.c.l.b16 %v6942
    %v7091 = vunpack.c.h.b16 %v6942
    %v7092 = vunpack.c.l.b16 %v6943
    %v7093 = vunpack.c.l.b16 %v6944
    %v7094 = vunpack.c.h.b16 %v6944
    %v7095 = vunpack.c.l.b16 %v6945
    %v7096 = vunpack.c.l.b16 %v6946
    %v7097 = vunpack.c.h.b16 %v6946
    %v7098 = vunpack.c.l.b16 %v6947
    %v7099 = vunpack.c.l.b16 %v6948
    %v7100 = vunpack.c.h.b16 %v6948
    %v7101 = vunpack.c.l.b16 %v6949
    %v7102 = vunpack.c.l.b16 %v6950
    %v7103 = vunpack.c.h.b16 %v6950
    %v7104 = vunpack.c.l.b16 %v6951
    %v7105 = vunpack.c.l.b16 %v6952
    %v7106 = vunpack.c.h.b16 %v6952
    %v7107 = vunpack.c.l.b16 %v6953
    %v7108 = vunpack.c.l.b16 %v6954
    %v7109 = vunpack.c.h.b16 %v6954
    %v7110 = vunpack.c.l.b16 %v6955
    %v7111 = vunpack.c.l.b16 %v6956
    %v7112 = vunpack.c.h.b16 %v6956
    %v7113 = vunpack.c.l.b16 %v6957
    %v7114 = vunpack.c.l.b16 %v6958
    %v7115 = vunpack.c.h.b16 %v6958
    %v7116 = vunpack.c.l.b16 %v6959
    %v7117 = vunpack.c.l.b16 %v6960
    %v7118 = vunpack.c.h.b16 %v6960
    %v7119 = vunpack.c.l.b16 %v6961
    %v7120 = vunpack.c.l.b16 %v6962
    %v7121 = vunpack.c.h.b16 %v6962
    %v7122 = vunpack.c.l.b16 %v6963
    %v7123 = vunpack.c.l.b16 %v6964
    %v7124 = vunpack.c.h.b16 %v6964
    %v7125 = vunpack.c.l.b16 %v6965
    %v7126 = vunpack.c.l.b16 %v6966
    %v7127 = vunpack.c.h.b16 %v6966
    %v7128 = vunpack.c.l.b16 %v6967
    %v7129 = vunpack.c.l.b16 %v6968
    %v7130 = vunpack.c.h.b16 %v6968
    %v7131 = vunpack.c.l.b16 %v6969
    %v7132 = vunpack.c.l.b16 %v6970
    %v7133 = vunpack.c.h.b16 %v6970
    %v7134 = vunpack.c.l.b16 %v6971
    %v7135 = vunpack.c.l.b16 %v6972
    %v7136 = vunpack.c.h.b16 %v6972
    %v7137 = vunpack.c.l.b16 %v6973
    %v7138 = vunpack.c.l.b16 %v6974
    %v7139 = vunpack.c.h.b16 %v6974
    %v7140 = vunpack.c.l.b16 %v6975
    %v7141 = vunpack.c.l.b16 %v6976
    %v7142 = vunpack.c.h.b16 %v6976
    %v7143 = vunpack.c.l.b16 %v6977
    %v7144 = vunpack.c.l.b16 %v6978
    %v7145 = vunpack.c.h.b16 %v6978
    %v7146 = vunpack.c.l.b16 %v6979
    %v7147 = vunpack.c.l.b16 %v6980
    %v7148 = vunpack.c.h.b16 %v6980
    %v7149 = vunpack.c.l.b16 %v6981
    %v7150 = vunpack.c.l.b16 %v6982
    %v7151 = vunpack.c.h.b16 %v6982
    %v7152 = vunpack.c.l.b16 %v6983
    %v7153 = vunpack.c.l.b16 %v6984
    %v7154 = vunpack.c.h.b16 %v6984
    %v7155 = vunpack.c.l.b16 %v6985
    %v7156 = vunpack.c.l.b16 %v6986
    %v7157 = vunpack.c.h.b16 %v6986
    %v7158 = vunpack.c.l.b16 %v6987
    %v7159 = vunpack.c.l.b16 %v6988
    %v7160 = vunpack.c.h.b16 %v6988
    %v7161 = vunpack.c.l.b16 %v6989
    %v7162 = vunpack.c.l.b16 %v6990
    %v7163 = vunpack.c.h.b16 %v6990
    %v7164 = vunpack.c.l.b16 %v6991
    %v7165 = vunpack.c.l.b16 %v6992
    %v7166 = vunpack.c.h.b16 %v6992
    %v7167 = vunpack.c.l.b16 %v6993
    %v7168 = vunpack.c.l.b16 %v6994
    %v7169 = vunpack.c.h.b16 %v6994
    %v7170 = vunpack.c.l.b16 %v6995
    %v7171 = vunpack.c.l.b16 %v6996
    %v7172 = vunpack.c.h.b16 %v6996
    %v7173 = vunpack.c.l.b16 %v6997
    %v7174 = vunpack.c.l.b16 %v6998
    %v7175 = vunpack.c.h.b16 %v6998
    %v7176 = vunpack.c.l.b16 %v6999
    %v7177 = vpack.c.b16 %v7084, %v7081
    %v7178 = vpack.c.b16 %v7085, %v7082
    %v7179 = vpack.c.b16 %v7086, %v7083
    %v7180 = vpack.c.b16 %v7090, %v7087
    %v7181 = vpack.c.b16 %v7091, %v7088
    %v7182 = vpack.c.b16 %v7092, %v7089
    %v7183 = vpack.c.b16 %v7096, %v7093
    %v7184 = vpack.c.b16 %v7097, %v7094
    %v7185 = vpack.c.b16 %v7098, %v7095
    %v7186 = vpack.c.b16 %v7102, %v7099
    %v7187 = vpack.c.b16 %v7103, %v7100
    %v7188 = vpack.c.b16 %v7104, %v7101
    %v7189 = vpack.c.b16 %v7108, %v7105
    %v7190 = vpack.c.b16 %v7109, %v7106
    %v7191 = vpack.c.b16 %v7110, %v7107
    %v7192 = vpack.c.b16 %v7114, %v7111
    %v7193 = vpack.c.b16 %v7115, %v7112
    %v7194 = vpack.c.b16 %v7116, %v7113
    %v7195 = vpack.c.b16 %v7120, %v7117
    %v7196 = vpack.c.b16 %v7121, %v7118
    %v7197 = vpack.c.b16 %v7122, %v7119
    %v7198 = vpack.c.b16 %v7126, %v7123
    %v7199 = vpack.c.b16 %v7127, %v7124
    %v7200 = vpack.c.b16 %v7128, %v7125
    %v7201 = vpack.c.b16 %v7132, %v7129
    %v7202 = vpack.c.b16 %v7133, %v7130
    %v7203 = vpack.c.b16 %v7134, %v7131
    %v7204 = vpack.c.b16 %v7138, %v7135
    %v7205 = vpack.c.b16 %v7139, %v7136
    %v7206 = vpack.c.b16 %v7140, %v7137
    %v7207 = vpack.c.b16 %v7144, %v7141
    %v7208 = vpack.c.b16 %v7145, %v7142
    %v7209 = vpack.c.b16 %v7146, %v7143
    %v7210 = vpack.c.b16 %v7150, %v7147
    %v7211 = vpack.c.b16 %v7151, %v7148
    %v7212 = vpack.c.b16 %v7152, %v7149
    %v7213 = vpack.c.b16 %v7156, %v7153
    %v7214 = vpack.c.b16 %v7157, %v7154
    %v7215 = vpack.c.b16 %v7158, %v7155
    %v7216 = vpack.c.b16 %v7162, %v7159
    %v7217 = vpack.c.b16 %v7163, %v7160
    %v7218 = vpack.c.b16 %v7164, %v7161
    %v7219 = vpack.c.b16 %v7168, %v7165
    %v7220 = vpack.c.b16 %v7169, %v7166
    %v7221 = vpack.c.b16 %v7170, %v7167
    %v7222 = vpack.c.b16 %v7174, %v7171
    %v7223 = vpack.c.b16 %v7175, %v7172
    %v7224 = vpack.c.b16 %v7176, %v7173
    %7273 = vmatprep.subr.bf16.mxu0 %v7199
    %7274 = vmatpush1.bf16.msra.mxu0 %v7198
    %7275 = vmatprep.subr.bf16.mxu0 %v7196
    %7276 = vmatpush1.bf16.msra.mxu0 %v7195
    %7277 = vmatprep.subr.bf16.mxu0 %v7193
    %7278 = vmatpush1.bf16.msra.mxu0 %v7192
    %7279 = vmatprep.subr.bf16.mxu0 %v7190
    %7280 = vmatpush1.bf16.msra.mxu0 %v7189
    %7281 = vmatprep.subr.bf16.mxu0 %v7187
    %7282 = vmatpush1.bf16.msra.mxu0 %v7186
    %7283 = vmatprep.subr.bf16.mxu0 %v7184
    %7284 = vmatpush1.bf16.msra.mxu0 %v7183
    %7285 = vmatprep.subr.bf16.mxu0 %v7181
    %7286 = vmatpush1.bf16.msra.mxu0 %v7180
    %7287 = vmatprep.subr.bf16.mxu0 %v7178
    %7288 = vmatpush1.bf16.msra.mxu0 %v7177
    %7289 = vmatprep.subr.bf16.mxu0 %v7223
    %7290 = vmatpush2.bf16.msra.mxu0 %v7222
    %7291 = vmatprep.subr.bf16.mxu0 %v7220
    %7292 = vmatpush2.bf16.msra.mxu0 %v7219
    %7293 = vmatprep.subr.bf16.mxu0 %v7217
    %7294 = vmatpush2.bf16.msra.mxu0 %v7216
    %7295 = vmatprep.subr.bf16.mxu0 %v7214
    %7296 = vmatpush2.bf16.msra.mxu0 %v7213
    %7297 = vmatprep.subr.bf16.mxu0 %v7211
    %7298 = vmatpush2.bf16.msra.mxu0 %v7210
    %7299 = vmatprep.subr.bf16.mxu0 %v7208
    %7300 = vmatpush2.bf16.msra.mxu0 %v7207
    %7301 = vmatprep.subr.bf16.mxu0 %v7205
    %7302 = vmatpush2.bf16.msra.mxu0 %v7204
    %7303 = vmatprep.subr.bf16.mxu0 %v7202
    %7304 = vmatpush2.bf16.msra.mxu0 %v7201
    %7305 = vmatprep.mubr.bf16.mxu0 %v6935
    %7306 = vmatmul.mubr.bf16.gmra.mxu0 %v6934
    %v7307 = vpop.f32.mrf.mxu0
    %v7308 = vadd.f32 %v7005, %v7307
    %v7309 = vpop.f32.mrf.mxu0
    %v7310 = vadd.f32 %v7009, %v7309
    %v7311 = vpop.f32.mrf.mxu0
    %v7312 = vpop.f32.mrf.mxu0
    %7313 = vdwg.mxu0
    %7314 = vmatprep.subr.bf16.mxu0 0
    %7315 = vmatpush1.bf16.msra.mxu0 %v7200
    %7316 = vmatprep.subr.bf16.mxu0 0
    %7317 = vmatpush1.bf16.msra.mxu0 %v7197
    %7318 = vmatprep.subr.bf16.mxu0 0
    %7319 = vmatpush1.bf16.msra.mxu0 %v7194
    %7320 = vmatprep.subr.bf16.mxu0 0
    %7321 = vmatpush1.bf16.msra.mxu0 %v7191
    %7322 = vmatprep.subr.bf16.mxu0 0
    %7323 = vmatpush1.bf16.msra.mxu0 %v7188
    %7324 = vmatprep.subr.bf16.mxu0 0
    %7325 = vmatpush1.bf16.msra.mxu0 %v7185
    %7326 = vmatprep.subr.bf16.mxu0 0
    %7327 = vmatpush1.bf16.msra.mxu0 %v7182
    %7328 = vmatprep.subr.bf16.mxu0 0
    %7329 = vmatpush1.bf16.msra.mxu0 %v7179
    %7330 = vmatprep.subr.bf16.mxu0 0
    %7331 = vmatpush2.bf16.msra.mxu0 %v7224
    %7332 = vmatprep.subr.bf16.mxu0 0
    %7333 = vmatpush2.bf16.msra.mxu0 %v7221
    %7334 = vmatprep.subr.bf16.mxu0 0
    %7335 = vmatpush2.bf16.msra.mxu0 %v7218
    %7336 = vmatprep.subr.bf16.mxu0 0
    %7337 = vmatpush2.bf16.msra.mxu0 %v7215
    %7338 = vmatprep.subr.bf16.mxu0 0
    %7339 = vmatpush2.bf16.msra.mxu0 %v7212
    %7340 = vmatprep.subr.bf16.mxu0 0
    %7341 = vmatpush2.bf16.msra.mxu0 %v7209
    %7342 = vmatprep.subr.bf16.mxu0 0
    %7343 = vmatpush2.bf16.msra.mxu0 %v7206
    %7344 = vmatprep.subr.bf16.mxu0 0
    %7345 = vmatpush2.bf16.msra.mxu0 %v7203
    %7346 = vmatprep.mubr.bf16.mxu0 %v6935
    %7347 = vmatmul.mubr.bf16.gmra.mxu0 %v6934
    %v7348 = vpop.f32.mrf.mxu0
    %v7349 = vadd.f32 %v7013, %v7348
    %v7350 = vpop.f32.mrf.mxu0
    %v7351 = vpop.f32.mrf.mxu0
    %v7352 = vpop.f32.mrf.mxu0
    %7353 = vdwg.mxu0
    %v7357 = vcombine.low %v7308, %v7310
    %v7359 = vunpack.c.l.s4 1983009808
    %v7360 = vunpack.c.0.s8 %v7359
    %v7361 = vlaneseq
    %v7362 = vshrl.u32 %v7361, 7
    %v7363 = vsub.s32 %v7360, %v7362
    %v7364 = vrot.slane %v7357, %v7363
    %v7366 = vunpack.c.l.s4 1983009808
    %v7367 = vunpack.c.0.s8 %v7366
    %v7368 = vlaneseq
    %v7369 = vshrl.u32 %v7368, 7
    %v7370 = vsub.s32 %v7367, %v7369
    %v7371 = vrot.slane %v7349, %v7370
    %v7372 = vcombine.low %v7364, %v7371
    %7374 = vst [vmem:[%s11] sm:$0x3f] %v7372
    // Predicated region
    $region61: #{simple_cnn_forward.1} parent=1 // pred_check
      _
    $region62: #{simple_cnn_forward.1} parent=1 // pred_check_branch
      %7376 = sbr.rel (0) target = $region64
    $region63: #{simple_cnn_forward.1} parent=1 // pred_region
      _
    $region64: #{simple_cnn_forward.1} parent=1 // pred_fallthru
      _
    // Predicated region
    $region65: #{simple_cnn_forward.1} parent=1 // pred_check
      _
    $region66: #{simple_cnn_forward.1} parent=1 // pred_check_branch
      %7378 = sbr.rel (0) target = $region68
    $region67: #{simple_cnn_forward.1} parent=1 // pred_region
      _
    $region68: #{simple_cnn_forward.1} parent=1 // pred_fallthru
      _
    %7379 = vsyncpa [#allocation9], 1
    %7380 = vsyncpa [#allocation11], 1

</llo_original>
